<compile_context>
chip_gen: v5e
topology: v5e:2x2
jax: 0.10.0
libtpu: 0.0.40
codegen_flags: <defaults>
</compile_context>

<pallas_src>
import jax
import jax.numpy as jnp
import numpy as np
from jax.experimental import pallas as pl
from jax.experimental.pallas import tpu as pltpu

IN_FEAT = 4096
HID = 512

_VMEM_LIMIT = 48 * 1024 * 1024  # fits v5e/v6e (128 MiB) and v7x (64 MiB) physical VMEM


# --------------------------------------------------------------------------
# Kernel 1: embedding linear  y = x @ W^T + b   (row-tiled, full-K resident)
# --------------------------------------------------------------------------
def _embed_kernel(x_ref, w_ref, b_ref, o_ref):
    acc = jnp.dot(x_ref[...].astype(jnp.bfloat16), w_ref[...],
                  preferred_element_type=jnp.float32)
    o_ref[...] = (acc + b_ref[...]).astype(o_ref.dtype)


def _pick_row_tile(n, cap=256):
    if n <= cap:
        return n
    for t in (cap, 128, 64, 32, 16, 8):
        if n % t == 0:
            return t
    return n


def embed_linear(x, w_t, b):
    """x: (N, K) f32, w_t: (K, M) bf16, b: (1, M) f32 -> (N, M) bf16."""
    N, K = x.shape
    _, M = w_t.shape
    tm = _pick_row_tile(N)
    return pl.pallas_call(
        _embed_kernel,
        out_shape=jax.ShapeDtypeStruct((N, M), jnp.bfloat16),
        grid_spec=pltpu.PrefetchScalarGridSpec(
            num_scalar_prefetch=0,
            grid=(N // tm,),
            in_specs=[
                pl.BlockSpec((tm, K), lambda i: (i, 0)),
                pl.BlockSpec((K, M), lambda i: (0, 0)),   # weight resident
                pl.BlockSpec((1, M), lambda i: (0, 0)),
            ],
            out_specs=pl.BlockSpec((tm, M), lambda i: (i, 0)),
        ),
        compiler_params=pltpu.CompilerParams(
            dimension_semantics=("parallel",),
            vmem_limit_bytes=_VMEM_LIMIT),
    )(x, w_t, b)


# --------------------------------------------------------------------------
# Kernel 2: fused LSTM recurrence
#   grid = (B//Bt [parallel], S//T [arbitrary])
#   emb_tm: (S, B, H) bf16, W_ih_T/W_hh_T: (H, 4H) bf16, b: (1, 4H) f32
#   -> out_tm (S, B, H) f32 (all hidden states), h_fin (B, H) f32
# --------------------------------------------------------------------------
def _lstm_kernel(x_ref, wih_ref, whh_ref, b_ref, out_ref, hfin_ref,
                 h_scr, c_scr):
    ti = pl.program_id(1)

    @pl.when(ti == 0)
    def _():
        h_scr[...] = jnp.zeros_like(h_scr)
        c_scr[...] = jnp.zeros_like(c_scr)

    n_t = x_ref.shape[0]
    bias = b_ref[...]                       # (1, 4H) f32, loaded once per block

    for tt in range(n_t):                   # static unroll over the time block
        x_t = x_ref[tt]                     # (Bt, H) bf16
        gates = (jnp.dot(x_t, wih_ref[...],
                         preferred_element_type=jnp.float32)
                 + jnp.dot(h_scr[...].astype(jnp.bfloat16), whh_ref[...],
                           preferred_element_type=jnp.float32)
                 + bias)
        # PyTorch gate order: i, f, g, o
        i = jax.nn.sigmoid(gates[:, 0 * HID:1 * HID])
        f = jax.nn.sigmoid(gates[:, 1 * HID:2 * HID])
        g = jnp.tanh(gates[:, 2 * HID:3 * HID])
        o = jax.nn.sigmoid(gates[:, 3 * HID:4 * HID])

        c_new = f * c_scr[...] + i * g
        h_new = o * jnp.tanh(c_new)

        c_scr[...] = c_new
        h_scr[...] = h_new
        out_ref[tt] = h_new.astype(out_ref.dtype)

    @pl.when(ti == pl.num_programs(1) - 1)
    def _():
        hfin_ref[...] = h_scr[...].astype(hfin_ref.dtype)


def _pick_time_tile(s):
    for t in (16, 8):                       # T must divide S (no padded last block)
        if s % t == 0:
            return t
    return s


def _pick_batch_tile(b):
    for t in (64, 32, 16, 8):               # multiple-of-8 tile, or the full batch
        if b % t == 0:
            return t
    return b


def lstm_fused(emb_tm, w_ih_t, w_hh_t, b_gates):
    """emb_tm: (S, B, H) bf16 -> (out_tm (S,B,H) f32, h_fin (B,H) f32)."""
    S, B, H = emb_tm.shape
    G = 4 * H
    T = _pick_time_tile(S)
    Bt = _pick_batch_tile(B)
    return pl.pallas_call(
        _lstm_kernel,
        out_shape=(jax.ShapeDtypeStruct((S, B, H), jnp.float32),
                   jax.ShapeDtypeStruct((B, H), jnp.float32)),
        grid_spec=pltpu.PrefetchScalarGridSpec(
            num_scalar_prefetch=0,
            grid=(B // Bt, S // T),
            in_specs=[
                pl.BlockSpec((T, Bt, H), lambda bi, ti: (ti, bi, 0)),
                pl.BlockSpec((H, G), lambda bi, ti: (0, 0)),   # W_ih resident
                pl.BlockSpec((H, G), lambda bi, ti: (0, 0)),   # W_hh resident
                pl.BlockSpec((1, G), lambda bi, ti: (0, 0)),   # folded bias
            ],
            out_specs=(
                pl.BlockSpec((T, Bt, H), lambda bi, ti: (ti, bi, 0)),
                pl.BlockSpec((Bt, H), lambda bi, ti: (bi, 0)),
            ),
            scratch_shapes=[pltpu.VMEM((Bt, H), jnp.float32),   # h state
                            pltpu.VMEM((Bt, H), jnp.float32)],  # c state
        ),
        compiler_params=pltpu.CompilerParams(
            dimension_semantics=("parallel", "arbitrary"),
            vmem_limit_bytes=_VMEM_LIMIT),
    )(emb_tm, w_ih_t, w_hh_t, b_gates)


# --------------------------------------------------------------------------
# Parameter init (PyTorch-style uniform bounds); weights stored bf16 (MXU
# native path on v5e/v6e/v7x), biases f32 (added into the f32 accumulator).
# --------------------------------------------------------------------------
def init_params(key):
    k = jax.random.split(key, 6)
    be = 1.0 / np.sqrt(IN_FEAT)   # Linear(4096, 512)
    bl = 1.0 / np.sqrt(HID)       # LSTM(512, 512)
    u = lambda kk, shape, b: jax.random.uniform(kk, shape, jnp.float32, -b, b)
    return {
        "W_emb_T": u(k[0], (IN_FEAT, HID), be).astype(jnp.bfloat16),
        "b_emb":   u(k[1], (1, HID), be),
        "W_ih_T":  u(k[2], (HID, 4 * HID), bl).astype(jnp.bfloat16),
        "b_ih":    u(k[3], (1, 4 * HID), bl),
        "W_hh_T":  u(k[4], (HID, 4 * HID), bl).astype(jnp.bfloat16),
        "b_hh":    u(k[5], (1, 4 * HID), bl),
    }


# --------------------------------------------------------------------------
# Forward pass (matches EncoderLSTM.forward): returns (output, hidden_state)
# --------------------------------------------------------------------------
def encoder_lstm_forward(x, params):
    B, S, F = x.shape
    x_flat = x.reshape(B * S, F)
    emb = embed_linear(x_flat, params["W_emb_T"], params["b_emb"])   # (B*S, 512) bf16
    # TODO(synk): Dropout(p=0.35) is inference-mode identity here; training-mode
    # dropout would draw a mask with pltpu.prng_seed / pltpu.prng_random_bits.
    emb_tm = emb.reshape(B, S, HID).transpose(1, 0, 2)               # (S, B, 512) bf16
    b_gates = params["b_ih"] + params["b_hh"]                        # fold biases once
    out_tm, h_fin = lstm_fused(emb_tm, params["W_ih_T"], params["W_hh_T"], b_gates)
    output = out_tm.transpose(1, 0, 2)                               # (B, S, 512) batch_first
    hidden_state = h_fin[None]                                       # (1, B, 512)
    return output, hidden_state


# --------------------------------------------------------------------------
# Pure-JAX f32 reference (same bf16-rounded weight values, HIGHEST precision)
# --------------------------------------------------------------------------
def ref_forward(x, params):
    B, S, F = x.shape
    hp = jax.lax.Precision.HIGHEST
    w_emb = params["W_emb_T"].astype(jnp.float32)
    w_ih = params["W_ih_T"].astype(jnp.float32)
    w_hh = params["W_hh_T"].astype(jnp.float32)
    emb = (jnp.dot(x.reshape(B * S, F), w_emb, precision=hp)
           + params["b_emb"]).reshape(B, S, HID)

    def step(carry, xt):
        h, c = carry
        gates = (jnp.dot(xt, w_ih, precision=hp) + params["b_ih"]
                 + jnp.dot(h, w_hh, precision=hp) + params["b_hh"])
        i = jax.nn.sigmoid(gates[:, :HID])
        f = jax.nn.sigmoid(gates[:, HID:2 * HID])
        g = jnp.tanh(gates[:, 2 * HID:3 * HID])
        o = jax.nn.sigmoid(gates[:, 3 * HID:])
        c = f * c + i * g
        h = o * jnp.tanh(c)
        return (h, c), h

    h0 = jnp.zeros((B, HID), jnp.float32)
    c0 = jnp.zeros((B, HID), jnp.float32)
    (hT, _), ys = jax.lax.scan(step, (h0, c0), emb.transpose(1, 0, 2))
    return ys.transpose(1, 0, 2), hT[None]


if __name__ == "__main__":
    key = jax.random.PRNGKey(0)
    kx, kp = jax.random.split(key)
    B, S = 2, 32   # S=32 -> time tile T=16, 2 sequential grid steps carrying h/c state
    x = jax.random.normal(kx, (B, S, IN_FEAT), jnp.float32)
    params = init_params(kp)

    output, hidden = encoder_lstm_forward(x, params)
    jax.block_until_ready((output, hidden))

    ref_out, ref_hid = ref_forward(x, params)
    # Tolerance widened vs pure-f32 version: MXU operands are bf16 (f32 accumulate).
    np.testing.assert_allclose(np.asarray(output), np.asarray(ref_out),
                               rtol=2e-2, atol=2e-2)
    np.testing.assert_allclose(np.asarray(hidden), np.asarray(ref_hid),
                               rtol=2e-2, atol=2e-2)

    assert output.shape == (B, S, HID)
    assert hidden.shape == (1, B, HID)
    print("KERNEL_OK")
</pallas_src>

<mosaic_0001>
module attributes {stable_mosaic.version = 11 : i64} {
  func.func @_embed_kernel(%arg0: i32, %arg1: memref<64x4096xf32, #tpu.memory_space<vmem>>, %arg2: memref<4096x512xbf16, #tpu.memory_space<vmem>>, %arg3: memref<1x512xf32, #tpu.memory_space<vmem>>, %arg4: memref<64x512xbf16, #tpu.memory_space<vmem>>) attributes {dimension_semantics = [#tpu.dimension_semantics<parallel>], iteration_bounds = array<i64: 1>, scalar_prefetch = 0 : i64, scratch_operands = 0 : i64, tpu.core_type = #tpu.core_type<tc>, window_params = [{transform_indices = @transform_0, window_bounds = array<i64: 64, 4096>}, {pipeline_mode = #tpu.pipeline_mode<synchronous>, transform_indices = @transform_1, window_bounds = array<i64: 4096, 512>}, {pipeline_mode = #tpu.pipeline_mode<synchronous>, transform_indices = @transform_2, window_bounds = array<i64: 1, 512>}, {transform_indices = @transform_3, window_bounds = array<i64: 64, 512>}]} {
    %c0 = arith.constant 0 : index
    %c0_0 = arith.constant 0 : index
    %0 = vector.load %arg1[%c0, %c0_0] : memref<64x4096xf32, #tpu.memory_space<vmem>>, vector<64x4096xf32>
    %1 = arith.truncf %0 : vector<64x4096xf32> to vector<64x4096xbf16>
    %c0_1 = arith.constant 0 : index
    %c0_2 = arith.constant 0 : index
    %2 = vector.load %arg2[%c0_1, %c0_2] : memref<4096x512xbf16, #tpu.memory_space<vmem>>, vector<4096x512xbf16>
    %cst = arith.constant dense<0.000000e+00> : vector<64x512xf32>
    %3 = tpu.matmul %1, %2, %cst {dimension_numbers = #tpu.dot_dimension_numbers<[1], [0], [0], [1], [0, 0, 1, 1], [], []>} : vector<64x4096xbf16>, vector<4096x512xbf16>, vector<64x512xf32> -> vector<64x512xf32>
    %c0_3 = arith.constant 0 : index
    %c0_4 = arith.constant 0 : index
    %4 = vector.load %arg3[%c0_3, %c0_4] : memref<1x512xf32, #tpu.memory_space<vmem>>, vector<1x512xf32>
    %5 = vector.broadcast %4 : vector<1x512xf32> to vector<64x512xf32>
    %6 = arith.addf %3, %5 : vector<64x512xf32>
    %7 = arith.truncf %6 : vector<64x512xf32> to vector<64x512xbf16>
    %c0_5 = arith.constant 0 : index
    %c0_6 = arith.constant 0 : index
    %8 = vector.load %arg4[%c0_5, %c0_6] : memref<64x512xbf16, #tpu.memory_space<vmem>>, vector<64x512xbf16>
    tpu.vector_store %arg4[%c0_5, %c0_6], %7 {strides = array<i32>} : memref<64x512xbf16, #tpu.memory_space<vmem>>, vector<64x512xbf16>,
    return
  }
  func.func @transform_0(%arg0: i32) -> (i32, i32) {
    %c0_i32 = arith.constant 0 : i32
    %c0_i32_0 = arith.constant 0 : i32
    return %arg0, %c0_i32 : i32, i32
  }
  func.func @transform_1(%arg0: i32) -> (i32, i32) {
    %c0_i32 = arith.constant 0 : i32
    %c0_i32_0 = arith.constant 0 : i32
    %c0_i32_1 = arith.constant 0 : i32
    return %c0_i32, %c0_i32_0 : i32, i32
  }
  func.func @transform_2(%arg0: i32) -> (i32, i32) {
    %c0_i32 = arith.constant 0 : i32
    %c0_i32_0 = arith.constant 0 : i32
    %c0_i32_1 = arith.constant 0 : i32
    return %c0_i32, %c0_i32_0 : i32, i32
  }
  func.func @transform_3(%arg0: i32) -> (i32, i32) {
    %c0_i32 = arith.constant 0 : i32
    %c0_i32_0 = arith.constant 0 : i32
    return %arg0, %c0_i32 : i32, i32
  }
}

</mosaic_0001>

<llo_original>
// kernel: tpu_custom_call.1
$region0: #{tpu_custom_call.1}
  #allocation0 [shape = 'u32[]', space=smem, size = 0x4, offset = 0x4, fixed_abs, tag = 'smem constant byte address 0x4 - core index']
  #allocation1 [shape = 'u32[72,128]{1,0:T(1,128)}', space=vmem, size = 0x9000, scoped, tag = 'internal scratch']
  %s0 = inlined_call_operand.hbm [shape: f32[64,4096], index: 0, kind: input, shape index: {}]
  %s1 = inlined_call_operand.hbm [shape: bf16[4096,512], index: 1, kind: input, shape index: {}]
  %s2 = inlined_call_operand.hbm [shape: f32[1,512], index: 2, kind: input, shape index: {}]
  %s3 = inlined_call_operand.hbm [shape: bf16[64,512], index: 3, kind: output, shape index: {}]
  %s4 = sld [smem:[#allocation0]]
  $region34: #{tpu_custom_call.1} parent=0
    _
  %s6 = ssub.s32 1, %s4
  %s7 = scalar_select 0, %s6, %s4
  $region1: #{tpu_custom_call.1} parent=0
    #allocation2 [shape = 'u8[1048576]{0}', space=vmem, size = 0x100000, scoped, tag = 'input window, operand 0, single buffered']
    #allocation3 [shape = 's32[1]{0}', space=sflag, size = 0x4, scoped, tag = 'scoped memory for tpu_custom_call.1']
    #allocation4 [shape = 's32[1]{0}', space=sflag, size = 0x4, scoped, tag = 'scoped memory for tpu_custom_call.1']
    #allocation5 [shape = 'u8[4194304]{0}', space=vmem, size = 0x400000, scoped, tag = 'input window, operand 1, single buffered']
    #allocation6 [shape = 's32[1]{0}', space=sflag, size = 0x4, scoped, tag = 'scoped memory for tpu_custom_call.1']
    #allocation7 [shape = 'u8[2048]{0}', space=vmem, size = 0x800, scoped, tag = 'input window, operand 2, single buffered']
    #allocation8 [shape = 'u8[65536]{0}', space=vmem, size = 0x10000, scoped, tag = 'output window, operand 0, single buffered']
    %8 = vsyncpa [#allocation3], 0
    %9 = vsyncpa [#allocation6], 0
    %10 = vsyncpa [#allocation4], 0
    // Predicated region
    $region2: #{tpu_custom_call.1} parent=1 // pred_check
      _
    $region3: #{tpu_custom_call.1} parent=1 // pred_check_branch
      %12 = sbr.rel (0) target = $region5
    $region4: #{tpu_custom_call.1} parent=1 // pred_region
      %14 = vsyncadd [#allocation3], 0
      %s15 = sshll.u32 %s0, 4
      %s16 = int_to_ptr.hbm [resolvable:$true] %s15
      %s17 = sshll.u32 [#allocation2], 4
      %s18 = int_to_ptr.vmem [resolvable:$true] %s17
      %23 = dma.hbm_to_vmem [thread:$0]  %s16, 32768, %s18, [#allocation3], 4096, 4096, 256
    $region5: #{tpu_custom_call.1} parent=1 // pred_fallthru
      _
    // Predicated region
    $region6: #{tpu_custom_call.1} parent=1 // pred_check
      _
    $region7: #{tpu_custom_call.1} parent=1 // pred_check_branch
      %25 = sbr.rel (0) target = $region9
    $region8: #{tpu_custom_call.1} parent=1 // pred_region
      %27 = vsyncadd [#allocation6], 0
      %s28 = sshll.u32 %s1, 4
      %s29 = int_to_ptr.hbm [resolvable:$true] %s28
      %s30 = sshll.u32 [#allocation5], 4
      %s31 = int_to_ptr.vmem [resolvable:$true] %s30
      %36 = dma.hbm_to_vmem [thread:$0]  %s29, 131072, %s31, [#allocation6], 256, 256, 16
    $region9: #{tpu_custom_call.1} parent=1 // pred_fallthru
      _
    // Predicated region
    $region10: #{tpu_custom_call.1} parent=1 // pred_check
      _
    $region11: #{tpu_custom_call.1} parent=1 // pred_check_branch
      %38 = sbr.rel (0) target = $region13
    $region12: #{tpu_custom_call.1} parent=1 // pred_region
      %40 = vsyncadd [#allocation6], 0
      %s42 = sshll.u32 %s2, 4
      %s43 = int_to_ptr.hbm [resolvable:$true] %s42
      %s44 = sshll.u32 [#allocation7], 4
      %s45 = int_to_ptr.vmem [resolvable:$true] %s44
      %47 = dma.hbm_to_vmem [thread:$0]  %s43, 64, %s45, [#allocation6]
    $region13: #{tpu_custom_call.1} parent=1 // pred_fallthru
      _
    // Predicated region
    $region14: #{tpu_custom_call.1} parent=1 // pred_check
      _
    $region15: #{tpu_custom_call.1} parent=1 // pred_check_branch
      %49 = sbr.rel (0) target = $region17
    $region16: #{tpu_custom_call.1} parent=1 // pred_region
      %51 = dma.done [#allocation3], 32768
    $region17: #{tpu_custom_call.1} parent=1 // pred_fallthru
      _
    // Predicated region
    $region18: #{tpu_custom_call.1} parent=1 // pred_check
      _
    $region19: #{tpu_custom_call.1} parent=1 // pred_check_branch
      %53 = sbr.rel (0) target = $region21
    $region20: #{tpu_custom_call.1} parent=1 // pred_region
      %55 = dma.done [#allocation6], 131072
    $region21: #{tpu_custom_call.1} parent=1 // pred_fallthru
      _
    // Predicated region
    $region22: #{tpu_custom_call.1} parent=1 // pred_check
      _
    $region23: #{tpu_custom_call.1} parent=1 // pred_check_branch
      %57 = sbr.rel (0) target = $region25
    $region24: #{tpu_custom_call.1} parent=1 // pred_region
      %59 = dma.done [#allocation6], 64
    $region25: #{tpu_custom_call.1} parent=1 // pred_fallthru
      _
    %v60 = vld [vmem:[#allocation2] sm:$0xff]
    %v61 = vld [vmem:[#allocation2 + $0x8] sm:$0xff]
    %v62 = vld [vmem:[#allocation2 + $0x10] sm:$0xff]
    %v63 = vld [vmem:[#allocation2 + $0x18] sm:$0xff]
    %v64 = vld [vmem:[#allocation2 + $0x20] sm:$0xff]
    %v65 = vld [vmem:[#allocation2 + $0x28] sm:$0xff]
    %v66 = vld [vmem:[#allocation2 + $0x30] sm:$0xff]
    %v67 = vld [vmem:[#allocation2 + $0x38] sm:$0xff]
    %v68 = vld [vmem:[#allocation2 + $0x40] sm:$0xff]
    %v69 = vld [vmem:[#allocation2 + $0x48] sm:$0xff]
    %v70 = vld [vmem:[#allocation2 + $0x50] sm:$0xff]
    %v71 = vld [vmem:[#allocation2 + $0x58] sm:$0xff]
    %v72 = vld [vmem:[#allocation2 + $0x60] sm:$0xff]
    %v73 = vld [vmem:[#allocation2 + $0x68] sm:$0xff]
    %v74 = vld [vmem:[#allocation2 + $0x70] sm:$0xff]
    %v75 = vld [vmem:[#allocation2 + $0x78] sm:$0xff]
    %v76 = vld [vmem:[#allocation2 + $0x80] sm:$0xff]
    %v77 = vld [vmem:[#allocation2 + $0x88] sm:$0xff]
    %v78 = vld [vmem:[#allocation2 + $0x90] sm:$0xff]
    %v79 = vld [vmem:[#allocation2 + $0x98] sm:$0xff]
    %v80 = vld [vmem:[#allocation2 + $0xa0] sm:$0xff]
    %v81 = vld [vmem:[#allocation2 + $0xa8] sm:$0xff]
    %v82 = vld [vmem:[#allocation2 + $0xb0] sm:$0xff]
    %v83 = vld [vmem:[#allocation2 + $0xb8] sm:$0xff]
    %v84 = vld [vmem:[#allocation2 + $0xc0] sm:$0xff]
    %v85 = vld [vmem:[#allocation2 + $0xc8] sm:$0xff]
    %v86 = vld [vmem:[#allocation2 + $0xd0] sm:$0xff]
    %v87 = vld [vmem:[#allocation2 + $0xd8] sm:$0xff]
    %v88 = vld [vmem:[#allocation2 + $0xe0] sm:$0xff]
    %v89 = vld [vmem:[#allocation2 + $0xe8] sm:$0xff]
    %v90 = vld [vmem:[#allocation2 + $0xf0] sm:$0xff]
    %v91 = vld [vmem:[#allocation2 + $0xf8] sm:$0xff]
    %v92 = vld [vmem:[#allocation2 + $0x100] sm:$0xff]
    %v93 = vld [vmem:[#allocation2 + $0x108] sm:$0xff]
    %v94 = vld [vmem:[#allocation2 + $0x110] sm:$0xff]
    %v95 = vld [vmem:[#allocation2 + $0x118] sm:$0xff]
    %v96 = vld [vmem:[#allocation2 + $0x120] sm:$0xff]
    %v97 = vld [vmem:[#allocation2 + $0x128] sm:$0xff]
    %v98 = vld [vmem:[#allocation2 + $0x130] sm:$0xff]
    %v99 = vld [vmem:[#allocation2 + $0x138] sm:$0xff]
    %v100 = vld [vmem:[#allocation2 + $0x140] sm:$0xff]
    %v101 = vld [vmem:[#allocation2 + $0x148] sm:$0xff]
    %v102 = vld [vmem:[#allocation2 + $0x150] sm:$0xff]
    %v103 = vld [vmem:[#allocation2 + $0x158] sm:$0xff]
    %v104 = vld [vmem:[#allocation2 + $0x160] sm:$0xff]
    %v105 = vld [vmem:[#allocation2 + $0x168] sm:$0xff]
    %v106 = vld [vmem:[#allocation2 + $0x170] sm:$0xff]
    %v107 = vld [vmem:[#allocation2 + $0x178] sm:$0xff]
    %v108 = vld [vmem:[#allocation2 + $0x180] sm:$0xff]
    %v109 = vld [vmem:[#allocation2 + $0x188] sm:$0xff]
    %v110 = vld [vmem:[#allocation2 + $0x190] sm:$0xff]
    %v111 = vld [vmem:[#allocation2 + $0x198] sm:$0xff]
    %v112 = vld [vmem:[#allocation2 + $0x1a0] sm:$0xff]
    %v113 = vld [vmem:[#allocation2 + $0x1a8] sm:$0xff]
    %v114 = vld [vmem:[#allocation2 + $0x1b0] sm:$0xff]
    %v115 = vld [vmem:[#allocation2 + $0x1b8] sm:$0xff]
    %v116 = vld [vmem:[#allocation2 + $0x1c0] sm:$0xff]
    %v117 = vld [vmem:[#allocation2 + $0x1c8] sm:$0xff]
    %v118 = vld [vmem:[#allocation2 + $0x1d0] sm:$0xff]
    %v119 = vld [vmem:[#allocation2 + $0x1d8] sm:$0xff]
    %v120 = vld [vmem:[#allocation2 + $0x1e0] sm:$0xff]
    %v121 = vld [vmem:[#allocation2 + $0x1e8] sm:$0xff]
    %v122 = vld [vmem:[#allocation2 + $0x1f0] sm:$0xff]
    %v123 = vld [vmem:[#allocation2 + $0x1f8] sm:$0xff]
    %v124 = vld [vmem:[#allocation2 + $0x200] sm:$0xff]
    %v125 = vld [vmem:[#allocation2 + $0x208] sm:$0xff]
    %v126 = vld [vmem:[#allocation2 + $0x210] sm:$0xff]
    %v127 = vld [vmem:[#allocation2 + $0x218] sm:$0xff]
    %v128 = vld [vmem:[#allocation2 + $0x220] sm:$0xff]
    %v129 = vld [vmem:[#allocation2 + $0x228] sm:$0xff]
    %v130 = vld [vmem:[#allocation2 + $0x230] sm:$0xff]
    %v131 = vld [vmem:[#allocation2 + $0x238] sm:$0xff]
    %v132 = vld [vmem:[#allocation2 + $0x240] sm:$0xff]
    %v133 = vld [vmem:[#allocation2 + $0x248] sm:$0xff]
    %v134 = vld [vmem:[#allocation2 + $0x250] sm:$0xff]
    %v135 = vld [vmem:[#allocation2 + $0x258] sm:$0xff]
    %v136 = vld [vmem:[#allocation2 + $0x260] sm:$0xff]
    %v137 = vld [vmem:[#allocation2 + $0x268] sm:$0xff]
    %v138 = vld [vmem:[#allocation2 + $0x270] sm:$0xff]
    %v139 = vld [vmem:[#allocation2 + $0x278] sm:$0xff]
    %v140 = vld [vmem:[#allocation2 + $0x280] sm:$0xff]
    %v141 = vld [vmem:[#allocation2 + $0x288] sm:$0xff]
    %v142 = vld [vmem:[#allocation2 + $0x290] sm:$0xff]
    %v143 = vld [vmem:[#allocation2 + $0x298] sm:$0xff]
    %v144 = vld [vmem:[#allocation2 + $0x2a0] sm:$0xff]
    %v145 = vld [vmem:[#allocation2 + $0x2a8] sm:$0xff]
    %v146 = vld [vmem:[#allocation2 + $0x2b0] sm:$0xff]
    %v147 = vld [vmem:[#allocation2 + $0x2b8] sm:$0xff]
    %v148 = vld [vmem:[#allocation2 + $0x2c0] sm:$0xff]
    %v149 = vld [vmem:[#allocation2 + $0x2c8] sm:$0xff]
    %v150 = vld [vmem:[#allocation2 + $0x2d0] sm:$0xff]
    %v151 = vld [vmem:[#allocation2 + $0x2d8] sm:$0xff]
    %v152 = vld [vmem:[#allocation2 + $0x2e0] sm:$0xff]
    %v153 = vld [vmem:[#allocation2 + $0x2e8] sm:$0xff]
    %v154 = vld [vmem:[#allocation2 + $0x2f0] sm:$0xff]
    %v155 = vld [vmem:[#allocation2 + $0x2f8] sm:$0xff]
    %v156 = vld [vmem:[#allocation2 + $0x300] sm:$0xff]
    %v157 = vld [vmem:[#allocation2 + $0x308] sm:$0xff]
    %v158 = vld [vmem:[#allocation2 + $0x310] sm:$0xff]
    %v159 = vld [vmem:[#allocation2 + $0x318] sm:$0xff]
    %v160 = vld [vmem:[#allocation2 + $0x320] sm:$0xff]
    %v161 = vld [vmem:[#allocation2 + $0x328] sm:$0xff]
    %v162 = vld [vmem:[#allocation2 + $0x330] sm:$0xff]
    %v163 = vld [vmem:[#allocation2 + $0x338] sm:$0xff]
    %v164 = vld [vmem:[#allocation2 + $0x340] sm:$0xff]
    %v165 = vld [vmem:[#allocation2 + $0x348] sm:$0xff]
    %v166 = vld [vmem:[#allocation2 + $0x350] sm:$0xff]
    %v167 = vld [vmem:[#allocation2 + $0x358] sm:$0xff]
    %v168 = vld [vmem:[#allocation2 + $0x360] sm:$0xff]
    %v169 = vld [vmem:[#allocation2 + $0x368] sm:$0xff]
    %v170 = vld [vmem:[#allocation2 + $0x370] sm:$0xff]
    %v171 = vld [vmem:[#allocation2 + $0x378] sm:$0xff]
    %v172 = vld [vmem:[#allocation2 + $0x380] sm:$0xff]
    %v173 = vld [vmem:[#allocation2 + $0x388] sm:$0xff]
    %v174 = vld [vmem:[#allocation2 + $0x390] sm:$0xff]
    %v175 = vld [vmem:[#allocation2 + $0x398] sm:$0xff]
    %v176 = vld [vmem:[#allocation2 + $0x3a0] sm:$0xff]
    %v177 = vld [vmem:[#allocation2 + $0x3a8] sm:$0xff]
    %v178 = vld [vmem:[#allocation2 + $0x3b0] sm:$0xff]
    %v179 = vld [vmem:[#allocation2 + $0x3b8] sm:$0xff]
    %v180 = vld [vmem:[#allocation2 + $0x3c0] sm:$0xff]
    %v181 = vld [vmem:[#allocation2 + $0x3c8] sm:$0xff]
    %v182 = vld [vmem:[#allocation2 + $0x3d0] sm:$0xff]
    %v183 = vld [vmem:[#allocation2 + $0x3d8] sm:$0xff]
    %v184 = vld [vmem:[#allocation2 + $0x3e0] sm:$0xff]
    %v185 = vld [vmem:[#allocation2 + $0x3e8] sm:$0xff]
    %v186 = vld [vmem:[#allocation2 + $0x3f0] sm:$0xff]
    %v187 = vld [vmem:[#allocation2 + $0x3f8] sm:$0xff]
    %v188 = vld [vmem:[#allocation2 + $0x400] sm:$0xff]
    %v189 = vld [vmem:[#allocation2 + $0x408] sm:$0xff]
    %v190 = vld [vmem:[#allocation2 + $0x410] sm:$0xff]
    %v191 = vld [vmem:[#allocation2 + $0x418] sm:$0xff]
    %v192 = vld [vmem:[#allocation2 + $0x420] sm:$0xff]
    %v193 = vld [vmem:[#allocation2 + $0x428] sm:$0xff]
    %v194 = vld [vmem:[#allocation2 + $0x430] sm:$0xff]
    %v195 = vld [vmem:[#allocation2 + $0x438] sm:$0xff]
    %v196 = vld [vmem:[#allocation2 + $0x440] sm:$0xff]
    %v197 = vld [vmem:[#allocation2 + $0x448] sm:$0xff]
    %v198 = vld [vmem:[#allocation2 + $0x450] sm:$0xff]
    %v199 = vld [vmem:[#allocation2 + $0x458] sm:$0xff]
    %v200 = vld [vmem:[#allocation2 + $0x460] sm:$0xff]
    %v201 = vld [vmem:[#allocation2 + $0x468] sm:$0xff]
    %v202 = vld [vmem:[#allocation2 + $0x470] sm:$0xff]
    %v203 = vld [vmem:[#allocation2 + $0x478] sm:$0xff]
    %v204 = vld [vmem:[#allocation2 + $0x480] sm:$0xff]
    %v205 = vld [vmem:[#allocation2 + $0x488] sm:$0xff]
    %v206 = vld [vmem:[#allocation2 + $0x490] sm:$0xff]
    %v207 = vld [vmem:[#allocation2 + $0x498] sm:$0xff]
    %v208 = vld [vmem:[#allocation2 + $0x4a0] sm:$0xff]
    %v209 = vld [vmem:[#allocation2 + $0x4a8] sm:$0xff]
    %v210 = vld [vmem:[#allocation2 + $0x4b0] sm:$0xff]
    %v211 = vld [vmem:[#allocation2 + $0x4b8] sm:$0xff]
    %v212 = vld [vmem:[#allocation2 + $0x4c0] sm:$0xff]
    %v213 = vld [vmem:[#allocation2 + $0x4c8] sm:$0xff]
    %v214 = vld [vmem:[#allocation2 + $0x4d0] sm:$0xff]
    %v215 = vld [vmem:[#allocation2 + $0x4d8] sm:$0xff]
    %v216 = vld [vmem:[#allocation2 + $0x4e0] sm:$0xff]
    %v217 = vld [vmem:[#allocation2 + $0x4e8] sm:$0xff]
    %v218 = vld [vmem:[#allocation2 + $0x4f0] sm:$0xff]
    %v219 = vld [vmem:[#allocation2 + $0x4f8] sm:$0xff]
    %v220 = vld [vmem:[#allocation2 + $0x500] sm:$0xff]
    %v221 = vld [vmem:[#allocation2 + $0x508] sm:$0xff]
    %v222 = vld [vmem:[#allocation2 + $0x510] sm:$0xff]
    %v223 = vld [vmem:[#allocation2 + $0x518] sm:$0xff]
    %v224 = vld [vmem:[#allocation2 + $0x520] sm:$0xff]
    %v225 = vld [vmem:[#allocation2 + $0x528] sm:$0xff]
    %v226 = vld [vmem:[#allocation2 + $0x530] sm:$0xff]
    %v227 = vld [vmem:[#allocation2 + $0x538] sm:$0xff]
    %v228 = vld [vmem:[#allocation2 + $0x540] sm:$0xff]
    %v229 = vld [vmem:[#allocation2 + $0x548] sm:$0xff]
    %v230 = vld [vmem:[#allocation2 + $0x550] sm:$0xff]
    %v231 = vld [vmem:[#allocation2 + $0x558] sm:$0xff]
    %v232 = vld [vmem:[#allocation2 + $0x560] sm:$0xff]
    %v233 = vld [vmem:[#allocation2 + $0x568] sm:$0xff]
    %v234 = vld [vmem:[#allocation2 + $0x570] sm:$0xff]
    %v235 = vld [vmem:[#allocation2 + $0x578] sm:$0xff]
    %v236 = vld [vmem:[#allocation2 + $0x580] sm:$0xff]
    %v237 = vld [vmem:[#allocation2 + $0x588] sm:$0xff]
    %v238 = vld [vmem:[#allocation2 + $0x590] sm:$0xff]
    %v239 = vld [vmem:[#allocation2 + $0x598] sm:$0xff]
    %v240 = vld [vmem:[#allocation2 + $0x5a0] sm:$0xff]
    %v241 = vld [vmem:[#allocation2 + $0x5a8] sm:$0xff]
    %v242 = vld [vmem:[#allocation2 + $0x5b0] sm:$0xff]
    %v243 = vld [vmem:[#allocation2 + $0x5b8] sm:$0xff]
    %v244 = vld [vmem:[#allocation2 + $0x5c0] sm:$0xff]
    %v245 = vld [vmem:[#allocation2 + $0x5c8] sm:$0xff]
    %v246 = vld [vmem:[#allocation2 + $0x5d0] sm:$0xff]
    %v247 = vld [vmem:[#allocation2 + $0x5d8] sm:$0xff]
    %v248 = vld [vmem:[#allocation2 + $0x5e0] sm:$0xff]
    %v249 = vld [vmem:[#allocation2 + $0x5e8] sm:$0xff]
    %v250 = vld [vmem:[#allocation2 + $0x5f0] sm:$0xff]
    %v251 = vld [vmem:[#allocation2 + $0x5f8] sm:$0xff]
    %v252 = vld [vmem:[#allocation2 + $0x600] sm:$0xff]
    %v253 = vld [vmem:[#allocation2 + $0x608] sm:$0xff]
    %v254 = vld [vmem:[#allocation2 + $0x610] sm:$0xff]
    %v255 = vld [vmem:[#allocation2 + $0x618] sm:$0xff]
    %v256 = vld [vmem:[#allocation2 + $0x620] sm:$0xff]
    %v257 = vld [vmem:[#allocation2 + $0x628] sm:$0xff]
    %v258 = vld [vmem:[#allocation2 + $0x630] sm:$0xff]
    %v259 = vld [vmem:[#allocation2 + $0x638] sm:$0xff]
    %v260 = vld [vmem:[#allocation2 + $0x640] sm:$0xff]
    %v261 = vld [vmem:[#allocation2 + $0x648] sm:$0xff]
    %v262 = vld [vmem:[#allocation2 + $0x650] sm:$0xff]
    %v263 = vld [vmem:[#allocation2 + $0x658] sm:$0xff]
    %v264 = vld [vmem:[#allocation2 + $0x660] sm:$0xff]
    %v265 = vld [vmem:[#allocation2 + $0x668] sm:$0xff]
    %v266 = vld [vmem:[#allocation2 + $0x670] sm:$0xff]
    %v267 = vld [vmem:[#allocation2 + $0x678] sm:$0xff]
    %v268 = vld [vmem:[#allocation2 + $0x680] sm:$0xff]
    %v269 = vld [vmem:[#allocation2 + $0x688] sm:$0xff]
    %v270 = vld [vmem:[#allocation2 + $0x690] sm:$0xff]
    %v271 = vld [vmem:[#allocation2 + $0x698] sm:$0xff]
    %v272 = vld [vmem:[#allocation2 + $0x6a0] sm:$0xff]
    %v273 = vld [vmem:[#allocation2 + $0x6a8] sm:$0xff]
    %v274 = vld [vmem:[#allocation2 + $0x6b0] sm:$0xff]
    %v275 = vld [vmem:[#allocation2 + $0x6b8] sm:$0xff]
    %v276 = vld [vmem:[#allocation2 + $0x6c0] sm:$0xff]
    %v277 = vld [vmem:[#allocation2 + $0x6c8] sm:$0xff]
    %v278 = vld [vmem:[#allocation2 + $0x6d0] sm:$0xff]
    %v279 = vld [vmem:[#allocation2 + $0x6d8] sm:$0xff]
    %v280 = vld [vmem:[#allocation2 + $0x6e0] sm:$0xff]
    %v281 = vld [vmem:[#allocation2 + $0x6e8] sm:$0xff]
    %v282 = vld [vmem:[#allocation2 + $0x6f0] sm:$0xff]
    %v283 = vld [vmem:[#allocation2 + $0x6f8] sm:$0xff]
    %v284 = vld [vmem:[#allocation2 + $0x700] sm:$0xff]
    %v285 = vld [vmem:[#allocation2 + $0x708] sm:$0xff]
    %v286 = vld [vmem:[#allocation2 + $0x710] sm:$0xff]
    %v287 = vld [vmem:[#allocation2 + $0x718] sm:$0xff]
    %v288 = vld [vmem:[#allocation2 + $0x720] sm:$0xff]
    %v289 = vld [vmem:[#allocation2 + $0x728] sm:$0xff]
    %v290 = vld [vmem:[#allocation2 + $0x730] sm:$0xff]
    %v291 = vld [vmem:[#allocation2 + $0x738] sm:$0xff]
    %v292 = vld [vmem:[#allocation2 + $0x740] sm:$0xff]
    %v293 = vld [vmem:[#allocation2 + $0x748] sm:$0xff]
    %v294 = vld [vmem:[#allocation2 + $0x750] sm:$0xff]
    %v295 = vld [vmem:[#allocation2 + $0x758] sm:$0xff]
    %v296 = vld [vmem:[#allocation2 + $0x760] sm:$0xff]
    %v297 = vld [vmem:[#allocation2 + $0x768] sm:$0xff]
    %v298 = vld [vmem:[#allocation2 + $0x770] sm:$0xff]
    %v299 = vld [vmem:[#allocation2 + $0x778] sm:$0xff]
    %v300 = vld [vmem:[#allocation2 + $0x780] sm:$0xff]
    %v301 = vld [vmem:[#allocation2 + $0x788] sm:$0xff]
    %v302 = vld [vmem:[#allocation2 + $0x790] sm:$0xff]
    %v303 = vld [vmem:[#allocation2 + $0x798] sm:$0xff]
    %v304 = vld [vmem:[#allocation2 + $0x7a0] sm:$0xff]
    %v305 = vld [vmem:[#allocation2 + $0x7a8] sm:$0xff]
    %v306 = vld [vmem:[#allocation2 + $0x7b0] sm:$0xff]
    %v307 = vld [vmem:[#allocation2 + $0x7b8] sm:$0xff]
    %v308 = vld [vmem:[#allocation2 + $0x7c0] sm:$0xff]
    %v309 = vld [vmem:[#allocation2 + $0x7c8] sm:$0xff]
    %v310 = vld [vmem:[#allocation2 + $0x7d0] sm:$0xff]
    %v311 = vld [vmem:[#allocation2 + $0x7d8] sm:$0xff]
    %v312 = vld [vmem:[#allocation2 + $0x7e0] sm:$0xff]
    %v313 = vld [vmem:[#allocation2 + $0x7e8] sm:$0xff]
    %v314 = vld [vmem:[#allocation2 + $0x7f0] sm:$0xff]
    %v315 = vld [vmem:[#allocation2 + $0x7f8] sm:$0xff]
    %v316 = vpack.c.bf16 %v92, %v60
    %v317 = vpack.c.bf16 %v93, %v61
    %v318 = vpack.c.bf16 %v94, %v62
    %v319 = vpack.c.bf16 %v95, %v63
    %v320 = vpack.c.bf16 %v96, %v64
    %v321 = vpack.c.bf16 %v97, %v65
    %v322 = vpack.c.bf16 %v98, %v66
    %v323 = vpack.c.bf16 %v99, %v67
    %v324 = vpack.c.bf16 %v100, %v68
    %v325 = vpack.c.bf16 %v101, %v69
    %v326 = vpack.c.bf16 %v102, %v70
    %v327 = vpack.c.bf16 %v103, %v71
    %v328 = vpack.c.bf16 %v104, %v72
    %v329 = vpack.c.bf16 %v105, %v73
    %v330 = vpack.c.bf16 %v106, %v74
    %v331 = vpack.c.bf16 %v107, %v75
    %v332 = vpack.c.bf16 %v108, %v76
    %v333 = vpack.c.bf16 %v109, %v77
    %v334 = vpack.c.bf16 %v110, %v78
    %v335 = vpack.c.bf16 %v111, %v79
    %v336 = vpack.c.bf16 %v112, %v80
    %v337 = vpack.c.bf16 %v113, %v81
    %v338 = vpack.c.bf16 %v114, %v82
    %v339 = vpack.c.bf16 %v115, %v83
    %v340 = vpack.c.bf16 %v116, %v84
    %v341 = vpack.c.bf16 %v117, %v85
    %v342 = vpack.c.bf16 %v118, %v86
    %v343 = vpack.c.bf16 %v119, %v87
    %v344 = vpack.c.bf16 %v120, %v88
    %v345 = vpack.c.bf16 %v121, %v89
    %v346 = vpack.c.bf16 %v122, %v90
    %v347 = vpack.c.bf16 %v123, %v91
    %v348 = vpack.c.bf16 %v156, %v124
    %v349 = vpack.c.bf16 %v157, %v125
    %v350 = vpack.c.bf16 %v158, %v126
    %v351 = vpack.c.bf16 %v159, %v127
    %v352 = vpack.c.bf16 %v160, %v128
    %v353 = vpack.c.bf16 %v161, %v129
    %v354 = vpack.c.bf16 %v162, %v130
    %v355 = vpack.c.bf16 %v163, %v131
    %v356 = vpack.c.bf16 %v164, %v132
    %v357 = vpack.c.bf16 %v165, %v133
    %v358 = vpack.c.bf16 %v166, %v134
    %v359 = vpack.c.bf16 %v167, %v135
    %v360 = vpack.c.bf16 %v168, %v136
    %v361 = vpack.c.bf16 %v169, %v137
    %v362 = vpack.c.bf16 %v170, %v138
    %v363 = vpack.c.bf16 %v171, %v139
    %v364 = vpack.c.bf16 %v172, %v140
    %v365 = vpack.c.bf16 %v173, %v141
    %v366 = vpack.c.bf16 %v174, %v142
    %v367 = vpack.c.bf16 %v175, %v143
    %v368 = vpack.c.bf16 %v176, %v144
    %v369 = vpack.c.bf16 %v177, %v145
    %v370 = vpack.c.bf16 %v178, %v146
    %v371 = vpack.c.bf16 %v179, %v147
    %v372 = vpack.c.bf16 %v180, %v148
    %v373 = vpack.c.bf16 %v181, %v149
    %v374 = vpack.c.bf16 %v182, %v150
    %v375 = vpack.c.bf16 %v183, %v151
    %v376 = vpack.c.bf16 %v184, %v152
    %v377 = vpack.c.bf16 %v185, %v153
    %v378 = vpack.c.bf16 %v186, %v154
    %v379 = vpack.c.bf16 %v187, %v155
    %v380 = vpack.c.bf16 %v220, %v188
    %v381 = vpack.c.bf16 %v221, %v189
    %v382 = vpack.c.bf16 %v222, %v190
    %v383 = vpack.c.bf16 %v223, %v191
    %v384 = vpack.c.bf16 %v224, %v192
    %v385 = vpack.c.bf16 %v225, %v193
    %v386 = vpack.c.bf16 %v226, %v194
    %v387 = vpack.c.bf16 %v227, %v195
    %v388 = vpack.c.bf16 %v228, %v196
    %v389 = vpack.c.bf16 %v229, %v197
    %v390 = vpack.c.bf16 %v230, %v198
    %v391 = vpack.c.bf16 %v231, %v199
    %v392 = vpack.c.bf16 %v232, %v200
    %v393 = vpack.c.bf16 %v233, %v201
    %v394 = vpack.c.bf16 %v234, %v202
    %v395 = vpack.c.bf16 %v235, %v203
    %v396 = vpack.c.bf16 %v236, %v204
    %v397 = vpack.c.bf16 %v237, %v205
    %v398 = vpack.c.bf16 %v238, %v206
    %v399 = vpack.c.bf16 %v239, %v207
    %v400 = vpack.c.bf16 %v240, %v208
    %v401 = vpack.c.bf16 %v241, %v209
    %v402 = vpack.c.bf16 %v242, %v210
    %v403 = vpack.c.bf16 %v243, %v211
    %v404 = vpack.c.bf16 %v244, %v212
    %v405 = vpack.c.bf16 %v245, %v213
    %v406 = vpack.c.bf16 %v246, %v214
    %v407 = vpack.c.bf16 %v247, %v215
    %v408 = vpack.c.bf16 %v248, %v216
    %v409 = vpack.c.bf16 %v249, %v217
    %v410 = vpack.c.bf16 %v250, %v218
    %v411 = vpack.c.bf16 %v251, %v219
    %v412 = vpack.c.bf16 %v284, %v252
    %v413 = vpack.c.bf16 %v285, %v253
    %v414 = vpack.c.bf16 %v286, %v254
    %v415 = vpack.c.bf16 %v287, %v255
    %v416 = vpack.c.bf16 %v288, %v256
    %v417 = vpack.c.bf16 %v289, %v257
    %v418 = vpack.c.bf16 %v290, %v258
    %v419 = vpack.c.bf16 %v291, %v259
    %v420 = vpack.c.bf16 %v292, %v260
    %v421 = vpack.c.bf16 %v293, %v261
    %v422 = vpack.c.bf16 %v294, %v262
    %v423 = vpack.c.bf16 %v295, %v263
    %v424 = vpack.c.bf16 %v296, %v264
    %v425 = vpack.c.bf16 %v297, %v265
    %v426 = vpack.c.bf16 %v298, %v266
    %v427 = vpack.c.bf16 %v299, %v267
    %v428 = vpack.c.bf16 %v300, %v268
    %v429 = vpack.c.bf16 %v301, %v269
    %v430 = vpack.c.bf16 %v302, %v270
    %v431 = vpack.c.bf16 %v303, %v271
    %v432 = vpack.c.bf16 %v304, %v272
    %v433 = vpack.c.bf16 %v305, %v273
    %v434 = vpack.c.bf16 %v306, %v274
    %v435 = vpack.c.bf16 %v307, %v275
    %v436 = vpack.c.bf16 %v308, %v276
    %v437 = vpack.c.bf16 %v309, %v277
    %v438 = vpack.c.bf16 %v310, %v278
    %v439 = vpack.c.bf16 %v311, %v279
    %v440 = vpack.c.bf16 %v312, %v280
    %v441 = vpack.c.bf16 %v313, %v281
    %v442 = vpack.c.bf16 %v314, %v282
    %v443 = vpack.c.bf16 %v315, %v283
    %v444 = vld [vmem:[#allocation5] sm:$0xff]
    %v445 = vld [vmem:[#allocation5 + $0x8] sm:$0xff]
    %v446 = vld [vmem:[#allocation5 + $0x10] sm:$0xff]
    %v447 = vld [vmem:[#allocation5 + $0x18] sm:$0xff]
    %v448 = vld [vmem:[#allocation5 + $0x20] sm:$0xff]
    %v449 = vld [vmem:[#allocation5 + $0x28] sm:$0xff]
    %v450 = vld [vmem:[#allocation5 + $0x30] sm:$0xff]
    %v451 = vld [vmem:[#allocation5 + $0x38] sm:$0xff]
    %v452 = vld [vmem:[#allocation5 + $0x40] sm:$0xff]
    %v453 = vld [vmem:[#allocation5 + $0x48] sm:$0xff]
    %v454 = vld [vmem:[#allocation5 + $0x50] sm:$0xff]
    %v455 = vld [vmem:[#allocation5 + $0x58] sm:$0xff]
    %v456 = vld [vmem:[#allocation5 + $0x60] sm:$0xff]
    %v457 = vld [vmem:[#allocation5 + $0x68] sm:$0xff]
    %v458 = vld [vmem:[#allocation5 + $0x70] sm:$0xff]
    %v459 = vld [vmem:[#allocation5 + $0x78] sm:$0xff]
    %v460 = vld [vmem:[#allocation5 + $0x80] sm:$0xff]
    %v461 = vld [vmem:[#allocation5 + $0x88] sm:$0xff]
    %v462 = vld [vmem:[#allocation5 + $0x90] sm:$0xff]
    %v463 = vld [vmem:[#allocation5 + $0x98] sm:$0xff]
    %v464 = vld [vmem:[#allocation5 + $0xa0] sm:$0xff]
    %v465 = vld [vmem:[#allocation5 + $0xa8] sm:$0xff]
    %v466 = vld [vmem:[#allocation5 + $0xb0] sm:$0xff]
    %v467 = vld [vmem:[#allocation5 + $0xb8] sm:$0xff]
    %v468 = vld [vmem:[#allocation5 + $0xc0] sm:$0xff]
    %v469 = vld [vmem:[#allocation5 + $0xc8] sm:$0xff]
    %v470 = vld [vmem:[#allocation5 + $0xd0] sm:$0xff]
    %v471 = vld [vmem:[#allocation5 + $0xd8] sm:$0xff]
    %v472 = vld [vmem:[#allocation5 + $0xe0] sm:$0xff]
    %v473 = vld [vmem:[#allocation5 + $0xe8] sm:$0xff]
    %v474 = vld [vmem:[#allocation5 + $0xf0] sm:$0xff]
    %v475 = vld [vmem:[#allocation5 + $0xf8] sm:$0xff]
    %v476 = vld [vmem:[#allocation5 + $0x100] sm:$0xff]
    %v477 = vld [vmem:[#allocation5 + $0x108] sm:$0xff]
    %v478 = vld [vmem:[#allocation5 + $0x110] sm:$0xff]
    %v479 = vld [vmem:[#allocation5 + $0x118] sm:$0xff]
    %v480 = vld [vmem:[#allocation5 + $0x120] sm:$0xff]
    %v481 = vld [vmem:[#allocation5 + $0x128] sm:$0xff]
    %v482 = vld [vmem:[#allocation5 + $0x130] sm:$0xff]
    %v483 = vld [vmem:[#allocation5 + $0x138] sm:$0xff]
    %v484 = vld [vmem:[#allocation5 + $0x140] sm:$0xff]
    %v485 = vld [vmem:[#allocation5 + $0x148] sm:$0xff]
    %v486 = vld [vmem:[#allocation5 + $0x150] sm:$0xff]
    %v487 = vld [vmem:[#allocation5 + $0x158] sm:$0xff]
    %v488 = vld [vmem:[#allocation5 + $0x160] sm:$0xff]
    %v489 = vld [vmem:[#allocation5 + $0x168] sm:$0xff]
    %v490 = vld [vmem:[#allocation5 + $0x170] sm:$0xff]
    %v491 = vld [vmem:[#allocation5 + $0x178] sm:$0xff]
    %v492 = vld [vmem:[#allocation5 + $0x180] sm:$0xff]
    %v493 = vld [vmem:[#allocation5 + $0x188] sm:$0xff]
    %v494 = vld [vmem:[#allocation5 + $0x190] sm:$0xff]
    %v495 = vld [vmem:[#allocation5 + $0x198] sm:$0xff]
    %v496 = vld [vmem:[#allocation5 + $0x1a0] sm:$0xff]
    %v497 = vld [vmem:[#allocation5 + $0x1a8] sm:$0xff]
    %v498 = vld [vmem:[#allocation5 + $0x1b0] sm:$0xff]
    %v499 = vld [vmem:[#allocation5 + $0x1b8] sm:$0xff]
    %v500 = vld [vmem:[#allocation5 + $0x1c0] sm:$0xff]
    %v501 = vld [vmem:[#allocation5 + $0x1c8] sm:$0xff]
    %v502 = vld [vmem:[#allocation5 + $0x1d0] sm:$0xff]
    %v503 = vld [vmem:[#allocation5 + $0x1d8] sm:$0xff]
    %v504 = vld [vmem:[#allocation5 + $0x1e0] sm:$0xff]
    %v505 = vld [vmem:[#allocation5 + $0x1e8] sm:$0xff]
    %v506 = vld [vmem:[#allocation5 + $0x1f0] sm:$0xff]
    %v507 = vld [vmem:[#allocation5 + $0x1f8] sm:$0xff]
    %v508 = vld [vmem:[#allocation5 + $0x200] sm:$0xff]
    %v509 = vld [vmem:[#allocation5 + $0x208] sm:$0xff]
    %v510 = vld [vmem:[#allocation5 + $0x210] sm:$0xff]
    %v511 = vld [vmem:[#allocation5 + $0x218] sm:$0xff]
    %v512 = vld [vmem:[#allocation5 + $0x220] sm:$0xff]
    %v513 = vld [vmem:[#allocation5 + $0x228] sm:$0xff]
    %v514 = vld [vmem:[#allocation5 + $0x230] sm:$0xff]
    %v515 = vld [vmem:[#allocation5 + $0x238] sm:$0xff]
    %v516 = vld [vmem:[#allocation5 + $0x240] sm:$0xff]
    %v517 = vld [vmem:[#allocation5 + $0x248] sm:$0xff]
    %v518 = vld [vmem:[#allocation5 + $0x250] sm:$0xff]
    %v519 = vld [vmem:[#allocation5 + $0x258] sm:$0xff]
    %v520 = vld [vmem:[#allocation5 + $0x260] sm:$0xff]
    %v521 = vld [vmem:[#allocation5 + $0x268] sm:$0xff]
    %v522 = vld [vmem:[#allocation5 + $0x270] sm:$0xff]
    %v523 = vld [vmem:[#allocation5 + $0x278] sm:$0xff]
    %v524 = vld [vmem:[#allocation5 + $0x280] sm:$0xff]
    %v525 = vld [vmem:[#allocation5 + $0x288] sm:$0xff]
    %v526 = vld [vmem:[#allocation5 + $0x290] sm:$0xff]
    %v527 = vld [vmem:[#allocation5 + $0x298] sm:$0xff]
    %v528 = vld [vmem:[#allocation5 + $0x2a0] sm:$0xff]
    %v529 = vld [vmem:[#allocation5 + $0x2a8] sm:$0xff]
    %v530 = vld [vmem:[#allocation5 + $0x2b0] sm:$0xff]
    %v531 = vld [vmem:[#allocation5 + $0x2b8] sm:$0xff]
    %v532 = vld [vmem:[#allocation5 + $0x2c0] sm:$0xff]
    %v533 = vld [vmem:[#allocation5 + $0x2c8] sm:$0xff]
    %v534 = vld [vmem:[#allocation5 + $0x2d0] sm:$0xff]
    %v535 = vld [vmem:[#allocation5 + $0x2d8] sm:$0xff]
    %v536 = vld [vmem:[#allocation5 + $0x2e0] sm:$0xff]
    %v537 = vld [vmem:[#allocation5 + $0x2e8] sm:$0xff]
    %v538 = vld [vmem:[#allocation5 + $0x2f0] sm:$0xff]
    %v539 = vld [vmem:[#allocation5 + $0x2f8] sm:$0xff]
    %v540 = vld [vmem:[#allocation5 + $0x300] sm:$0xff]
    %v541 = vld [vmem:[#allocation5 + $0x308] sm:$0xff]
    %v542 = vld [vmem:[#allocation5 + $0x310] sm:$0xff]
    %v543 = vld [vmem:[#allocation5 + $0x318] sm:$0xff]
    %v544 = vld [vmem:[#allocation5 + $0x320] sm:$0xff]
    %v545 = vld [vmem:[#allocation5 + $0x328] sm:$0xff]
    %v546 = vld [vmem:[#allocation5 + $0x330] sm:$0xff]
    %v547 = vld [vmem:[#allocation5 + $0x338] sm:$0xff]
    %v548 = vld [vmem:[#allocation5 + $0x340] sm:$0xff]
    %v549 = vld [vmem:[#allocation5 + $0x348] sm:$0xff]
    %v550 = vld [vmem:[#allocation5 + $0x350] sm:$0xff]
    %v551 = vld [vmem:[#allocation5 + $0x358] sm:$0xff]
    %v552 = vld [vmem:[#allocation5 + $0x360] sm:$0xff]
    %v553 = vld [vmem:[#allocation5 + $0x368] sm:$0xff]
    %v554 = vld [vmem:[#allocation5 + $0x370] sm:$0xff]
    %v555 = vld [vmem:[#allocation5 + $0x378] sm:$0xff]
    %v556 = vld [vmem:[#allocation5 + $0x380] sm:$0xff]
    %v557 = vld [vmem:[#allocation5 + $0x388] sm:$0xff]
    %v558 = vld [vmem:[#allocation5 + $0x390] sm:$0xff]
    %v559 = vld [vmem:[#allocation5 + $0x398] sm:$0xff]
    %v560 = vld [vmem:[#allocation5 + $0x3a0] sm:$0xff]
    %v561 = vld [vmem:[#allocation5 + $0x3a8] sm:$0xff]
    %v562 = vld [vmem:[#allocation5 + $0x3b0] sm:$0xff]
    %v563 = vld [vmem:[#allocation5 + $0x3b8] sm:$0xff]
    %v564 = vld [vmem:[#allocation5 + $0x3c0] sm:$0xff]
    %v565 = vld [vmem:[#allocation5 + $0x3c8] sm:$0xff]
    %v566 = vld [vmem:[#allocation5 + $0x3d0] sm:$0xff]
    %v567 = vld [vmem:[#allocation5 + $0x3d8] sm:$0xff]
    %v568 = vld [vmem:[#allocation5 + $0x3e0] sm:$0xff]
    %v569 = vld [vmem:[#allocation5 + $0x3e8] sm:$0xff]
    %v570 = vld [vmem:[#allocation5 + $0x3f0] sm:$0xff]
    %v571 = vld [vmem:[#allocation5 + $0x3f8] sm:$0xff]
    %v572 = vld [vmem:[#allocation5 + $0x400] sm:$0xff]
    %v573 = vld [vmem:[#allocation5 + $0x408] sm:$0xff]
    %v574 = vld [vmem:[#allocation5 + $0x410] sm:$0xff]
    %v575 = vld [vmem:[#allocation5 + $0x418] sm:$0xff]
    %v576 = vld [vmem:[#allocation5 + $0x420] sm:$0xff]
    %v577 = vld [vmem:[#allocation5 + $0x428] sm:$0xff]
    %v578 = vld [vmem:[#allocation5 + $0x430] sm:$0xff]
    %v579 = vld [vmem:[#allocation5 + $0x438] sm:$0xff]
    %v580 = vld [vmem:[#allocation5 + $0x440] sm:$0xff]
    %v581 = vld [vmem:[#allocation5 + $0x448] sm:$0xff]
    %v582 = vld [vmem:[#allocation5 + $0x450] sm:$0xff]
    %v583 = vld [vmem:[#allocation5 + $0x458] sm:$0xff]
    %v584 = vld [vmem:[#allocation5 + $0x460] sm:$0xff]
    %v585 = vld [vmem:[#allocation5 + $0x468] sm:$0xff]
    %v586 = vld [vmem:[#allocation5 + $0x470] sm:$0xff]
    %v587 = vld [vmem:[#allocation5 + $0x478] sm:$0xff]
    %v588 = vld [vmem:[#allocation5 + $0x480] sm:$0xff]
    %v589 = vld [vmem:[#allocation5 + $0x488] sm:$0xff]
    %v590 = vld [vmem:[#allocation5 + $0x490] sm:$0xff]
    %v591 = vld [vmem:[#allocation5 + $0x498] sm:$0xff]
    %v592 = vld [vmem:[#allocation5 + $0x4a0] sm:$0xff]
    %v593 = vld [vmem:[#allocation5 + $0x4a8] sm:$0xff]
    %v594 = vld [vmem:[#allocation5 + $0x4b0] sm:$0xff]
    %v595 = vld [vmem:[#allocation5 + $0x4b8] sm:$0xff]
    %v596 = vld [vmem:[#allocation5 + $0x4c0] sm:$0xff]
    %v597 = vld [vmem:[#allocation5 + $0x4c8] sm:$0xff]
    %v598 = vld [vmem:[#allocation5 + $0x4d0] sm:$0xff]
    %v599 = vld [vmem:[#allocation5 + $0x4d8] sm:$0xff]
    %v600 = vld [vmem:[#allocation5 + $0x4e0] sm:$0xff]
    %v601 = vld [vmem:[#allocation5 + $0x4e8] sm:$0xff]
    %v602 = vld [vmem:[#allocation5 + $0x4f0] sm:$0xff]
    %v603 = vld [vmem:[#allocation5 + $0x4f8] sm:$0xff]
    %v604 = vld [vmem:[#allocation5 + $0x500] sm:$0xff]
    %v605 = vld [vmem:[#allocation5 + $0x508] sm:$0xff]
    %v606 = vld [vmem:[#allocation5 + $0x510] sm:$0xff]
    %v607 = vld [vmem:[#allocation5 + $0x518] sm:$0xff]
    %v608 = vld [vmem:[#allocation5 + $0x520] sm:$0xff]
    %v609 = vld [vmem:[#allocation5 + $0x528] sm:$0xff]
    %v610 = vld [vmem:[#allocation5 + $0x530] sm:$0xff]
    %v611 = vld [vmem:[#allocation5 + $0x538] sm:$0xff]
    %v612 = vld [vmem:[#allocation5 + $0x540] sm:$0xff]
    %v613 = vld [vmem:[#allocation5 + $0x548] sm:$0xff]
    %v614 = vld [vmem:[#allocation5 + $0x550] sm:$0xff]
    %v615 = vld [vmem:[#allocation5 + $0x558] sm:$0xff]
    %v616 = vld [vmem:[#allocation5 + $0x560] sm:$0xff]
    %v617 = vld [vmem:[#allocation5 + $0x568] sm:$0xff]
    %v618 = vld [vmem:[#allocation5 + $0x570] sm:$0xff]
    %v619 = vld [vmem:[#allocation5 + $0x578] sm:$0xff]
    %v620 = vld [vmem:[#allocation5 + $0x580] sm:$0xff]
    %v621 = vld [vmem:[#allocation5 + $0x588] sm:$0xff]
    %v622 = vld [vmem:[#allocation5 + $0x590] sm:$0xff]
    %v623 = vld [vmem:[#allocation5 + $0x598] sm:$0xff]
    %v624 = vld [vmem:[#allocation5 + $0x5a0] sm:$0xff]
    %v625 = vld [vmem:[#allocation5 + $0x5a8] sm:$0xff]
    %v626 = vld [vmem:[#allocation5 + $0x5b0] sm:$0xff]
    %v627 = vld [vmem:[#allocation5 + $0x5b8] sm:$0xff]
    %v628 = vld [vmem:[#allocation5 + $0x5c0] sm:$0xff]
    %v629 = vld [vmem:[#allocation5 + $0x5c8] sm:$0xff]
    %v630 = vld [vmem:[#allocation5 + $0x5d0] sm:$0xff]
    %v631 = vld [vmem:[#allocation5 + $0x5d8] sm:$0xff]
    %v632 = vld [vmem:[#allocation5 + $0x5e0] sm:$0xff]
    %v633 = vld [vmem:[#allocation5 + $0x5e8] sm:$0xff]
    %v634 = vld [vmem:[#allocation5 + $0x5f0] sm:$0xff]
    %v635 = vld [vmem:[#allocation5 + $0x5f8] sm:$0xff]
    %v636 = vld [vmem:[#allocation5 + $0x600] sm:$0xff]
    %v637 = vld [vmem:[#allocation5 + $0x608] sm:$0xff]
    %v638 = vld [vmem:[#allocation5 + $0x610] sm:$0xff]
    %v639 = vld [vmem:[#allocation5 + $0x618] sm:$0xff]
    %v640 = vld [vmem:[#allocation5 + $0x620] sm:$0xff]
    %v641 = vld [vmem:[#allocation5 + $0x628] sm:$0xff]
    %v642 = vld [vmem:[#allocation5 + $0x630] sm:$0xff]
    %v643 = vld [vmem:[#allocation5 + $0x638] sm:$0xff]
    %v644 = vld [vmem:[#allocation5 + $0x640] sm:$0xff]
    %v645 = vld [vmem:[#allocation5 + $0x648] sm:$0xff]
    %v646 = vld [vmem:[#allocation5 + $0x650] sm:$0xff]
    %v647 = vld [vmem:[#allocation5 + $0x658] sm:$0xff]
    %v648 = vld [vmem:[#allocation5 + $0x660] sm:$0xff]
    %v649 = vld [vmem:[#allocation5 + $0x668] sm:$0xff]
    %v650 = vld [vmem:[#allocation5 + $0x670] sm:$0xff]
    %v651 = vld [vmem:[#allocation5 + $0x678] sm:$0xff]
    %v652 = vld [vmem:[#allocation5 + $0x680] sm:$0xff]
    %v653 = vld [vmem:[#allocation5 + $0x688] sm:$0xff]
    %v654 = vld [vmem:[#allocation5 + $0x690] sm:$0xff]
    %v655 = vld [vmem:[#allocation5 + $0x698] sm:$0xff]
    %v656 = vld [vmem:[#allocation5 + $0x6a0] sm:$0xff]
    %v657 = vld [vmem:[#allocation5 + $0x6a8] sm:$0xff]
    %v658 = vld [vmem:[#allocation5 + $0x6b0] sm:$0xff]
    %v659 = vld [vmem:[#allocation5 + $0x6b8] sm:$0xff]
    %v660 = vld [vmem:[#allocation5 + $0x6c0] sm:$0xff]
    %v661 = vld [vmem:[#allocation5 + $0x6c8] sm:$0xff]
    %v662 = vld [vmem:[#allocation5 + $0x6d0] sm:$0xff]
    %v663 = vld [vmem:[#allocation5 + $0x6d8] sm:$0xff]
    %v664 = vld [vmem:[#allocation5 + $0x6e0] sm:$0xff]
    %v665 = vld [vmem:[#allocation5 + $0x6e8] sm:$0xff]
    %v666 = vld [vmem:[#allocation5 + $0x6f0] sm:$0xff]
    %v667 = vld [vmem:[#allocation5 + $0x6f8] sm:$0xff]
    %v668 = vld [vmem:[#allocation5 + $0x700] sm:$0xff]
    %v669 = vld [vmem:[#allocation5 + $0x708] sm:$0xff]
    %v670 = vld [vmem:[#allocation5 + $0x710] sm:$0xff]
    %v671 = vld [vmem:[#allocation5 + $0x718] sm:$0xff]
    %v672 = vld [vmem:[#allocation5 + $0x720] sm:$0xff]
    %v673 = vld [vmem:[#allocation5 + $0x728] sm:$0xff]
    %v674 = vld [vmem:[#allocation5 + $0x730] sm:$0xff]
    %v675 = vld [vmem:[#allocation5 + $0x738] sm:$0xff]
    %v676 = vld [vmem:[#allocation5 + $0x740] sm:$0xff]
    %v677 = vld [vmem:[#allocation5 + $0x748] sm:$0xff]
    %v678 = vld [vmem:[#allocation5 + $0x750] sm:$0xff]
    %v679 = vld [vmem:[#allocation5 + $0x758] sm:$0xff]
    %v680 = vld [vmem:[#allocation5 + $0x760] sm:$0xff]
    %v681 = vld [vmem:[#allocation5 + $0x768] sm:$0xff]
    %v682 = vld [vmem:[#allocation5 + $0x770] sm:$0xff]
    %v683 = vld [vmem:[#allocation5 + $0x778] sm:$0xff]
    %v684 = vld [vmem:[#allocation5 + $0x780] sm:$0xff]
    %v685 = vld [vmem:[#allocation5 + $0x788] sm:$0xff]
    %v686 = vld [vmem:[#allocation5 + $0x790] sm:$0xff]
    %v687 = vld [vmem:[#allocation5 + $0x798] sm:$0xff]
    %v688 = vld [vmem:[#allocation5 + $0x7a0] sm:$0xff]
    %v689 = vld [vmem:[#allocation5 + $0x7a8] sm:$0xff]
    %v690 = vld [vmem:[#allocation5 + $0x7b0] sm:$0xff]
    %v691 = vld [vmem:[#allocation5 + $0x7b8] sm:$0xff]
    %v692 = vld [vmem:[#allocation5 + $0x7c0] sm:$0xff]
    %v693 = vld [vmem:[#allocation5 + $0x7c8] sm:$0xff]
    %v694 = vld [vmem:[#allocation5 + $0x7d0] sm:$0xff]
    %v695 = vld [vmem:[#allocation5 + $0x7d8] sm:$0xff]
    %v696 = vld [vmem:[#allocation5 + $0x7e0] sm:$0xff]
    %v697 = vld [vmem:[#allocation5 + $0x7e8] sm:$0xff]
    %v698 = vld [vmem:[#allocation5 + $0x7f0] sm:$0xff]
    %v699 = vld [vmem:[#allocation5 + $0x7f8] sm:$0xff]
    %v700 = vld [vmem:[#allocation5 + $0x800] sm:$0xff]
    %v701 = vld [vmem:[#allocation5 + $0x808] sm:$0xff]
    %v702 = vld [vmem:[#allocation5 + $0x810] sm:$0xff]
    %v703 = vld [vmem:[#allocation5 + $0x818] sm:$0xff]
    %v704 = vld [vmem:[#allocation5 + $0x820] sm:$0xff]
    %v705 = vld [vmem:[#allocation5 + $0x828] sm:$0xff]
    %v706 = vld [vmem:[#allocation5 + $0x830] sm:$0xff]
    %v707 = vld [vmem:[#allocation5 + $0x838] sm:$0xff]
    %v708 = vld [vmem:[#allocation5 + $0x840] sm:$0xff]
    %v709 = vld [vmem:[#allocation5 + $0x848] sm:$0xff]
    %v710 = vld [vmem:[#allocation5 + $0x850] sm:$0xff]
    %v711 = vld [vmem:[#allocation5 + $0x858] sm:$0xff]
    %v712 = vld [vmem:[#allocation5 + $0x860] sm:$0xff]
    %v713 = vld [vmem:[#allocation5 + $0x868] sm:$0xff]
    %v714 = vld [vmem:[#allocation5 + $0x870] sm:$0xff]
    %v715 = vld [vmem:[#allocation5 + $0x878] sm:$0xff]
    %v716 = vld [vmem:[#allocation5 + $0x880] sm:$0xff]
    %v717 = vld [vmem:[#allocation5 + $0x888] sm:$0xff]
    %v718 = vld [vmem:[#allocation5 + $0x890] sm:$0xff]
    %v719 = vld [vmem:[#allocation5 + $0x898] sm:$0xff]
    %v720 = vld [vmem:[#allocation5 + $0x8a0] sm:$0xff]
    %v721 = vld [vmem:[#allocation5 + $0x8a8] sm:$0xff]
    %v722 = vld [vmem:[#allocation5 + $0x8b0] sm:$0xff]
    %v723 = vld [vmem:[#allocation5 + $0x8b8] sm:$0xff]
    %v724 = vld [vmem:[#allocation5 + $0x8c0] sm:$0xff]
    %v725 = vld [vmem:[#allocation5 + $0x8c8] sm:$0xff]
    %v726 = vld [vmem:[#allocation5 + $0x8d0] sm:$0xff]
    %v727 = vld [vmem:[#allocation5 + $0x8d8] sm:$0xff]
    %v728 = vld [vmem:[#allocation5 + $0x8e0] sm:$0xff]
    %v729 = vld [vmem:[#allocation5 + $0x8e8] sm:$0xff]
    %v730 = vld [vmem:[#allocation5 + $0x8f0] sm:$0xff]
    %v731 = vld [vmem:[#allocation5 + $0x8f8] sm:$0xff]
    %v732 = vld [vmem:[#allocation5 + $0x900] sm:$0xff]
    %v733 = vld [vmem:[#allocation5 + $0x908] sm:$0xff]
    %v734 = vld [vmem:[#allocation5 + $0x910] sm:$0xff]
    %v735 = vld [vmem:[#allocation5 + $0x918] sm:$0xff]
    %v736 = vld [vmem:[#allocation5 + $0x920] sm:$0xff]
    %v737 = vld [vmem:[#allocation5 + $0x928] sm:$0xff]
    %v738 = vld [vmem:[#allocation5 + $0x930] sm:$0xff]
    %v739 = vld [vmem:[#allocation5 + $0x938] sm:$0xff]
    %v740 = vld [vmem:[#allocation5 + $0x940] sm:$0xff]
    %v741 = vld [vmem:[#allocation5 + $0x948] sm:$0xff]
    %v742 = vld [vmem:[#allocation5 + $0x950] sm:$0xff]
    %v743 = vld [vmem:[#allocation5 + $0x958] sm:$0xff]
    %v744 = vld [vmem:[#allocation5 + $0x960] sm:$0xff]
    %v745 = vld [vmem:[#allocation5 + $0x968] sm:$0xff]
    %v746 = vld [vmem:[#allocation5 + $0x970] sm:$0xff]
    %v747 = vld [vmem:[#allocation5 + $0x978] sm:$0xff]
    %v748 = vld [vmem:[#allocation5 + $0x980] sm:$0xff]
    %v749 = vld [vmem:[#allocation5 + $0x988] sm:$0xff]
    %v750 = vld [vmem:[#allocation5 + $0x990] sm:$0xff]
    %v751 = vld [vmem:[#allocation5 + $0x998] sm:$0xff]
    %v752 = vld [vmem:[#allocation5 + $0x9a0] sm:$0xff]
    %v753 = vld [vmem:[#allocation5 + $0x9a8] sm:$0xff]
    %v754 = vld [vmem:[#allocation5 + $0x9b0] sm:$0xff]
    %v755 = vld [vmem:[#allocation5 + $0x9b8] sm:$0xff]
    %v756 = vld [vmem:[#allocation5 + $0x9c0] sm:$0xff]
    %v757 = vld [vmem:[#allocation5 + $0x9c8] sm:$0xff]
    %v758 = vld [vmem:[#allocation5 + $0x9d0] sm:$0xff]
    %v759 = vld [vmem:[#allocation5 + $0x9d8] sm:$0xff]
    %v760 = vld [vmem:[#allocation5 + $0x9e0] sm:$0xff]
    %v761 = vld [vmem:[#allocation5 + $0x9e8] sm:$0xff]
    %v762 = vld [vmem:[#allocation5 + $0x9f0] sm:$0xff]
    %v763 = vld [vmem:[#allocation5 + $0x9f8] sm:$0xff]
    %v764 = vld [vmem:[#allocation5 + $0xa00] sm:$0xff]
    %v765 = vld [vmem:[#allocation5 + $0xa08] sm:$0xff]
    %v766 = vld [vmem:[#allocation5 + $0xa10] sm:$0xff]
    %v767 = vld [vmem:[#allocation5 + $0xa18] sm:$0xff]
    %v768 = vld [vmem:[#allocation5 + $0xa20] sm:$0xff]
    %v769 = vld [vmem:[#allocation5 + $0xa28] sm:$0xff]
    %v770 = vld [vmem:[#allocation5 + $0xa30] sm:$0xff]
    %v771 = vld [vmem:[#allocation5 + $0xa38] sm:$0xff]
    %v772 = vld [vmem:[#allocation5 + $0xa40] sm:$0xff]
    %v773 = vld [vmem:[#allocation5 + $0xa48] sm:$0xff]
    %v774 = vld [vmem:[#allocation5 + $0xa50] sm:$0xff]
    %v775 = vld [vmem:[#allocation5 + $0xa58] sm:$0xff]
    %v776 = vld [vmem:[#allocation5 + $0xa60] sm:$0xff]
    %v777 = vld [vmem:[#allocation5 + $0xa68] sm:$0xff]
    %v778 = vld [vmem:[#allocation5 + $0xa70] sm:$0xff]
    %v779 = vld [vmem:[#allocation5 + $0xa78] sm:$0xff]
    %v780 = vld [vmem:[#allocation5 + $0xa80] sm:$0xff]
    %v781 = vld [vmem:[#allocation5 + $0xa88] sm:$0xff]
    %v782 = vld [vmem:[#allocation5 + $0xa90] sm:$0xff]
    %v783 = vld [vmem:[#allocation5 + $0xa98] sm:$0xff]
    %v784 = vld [vmem:[#allocation5 + $0xaa0] sm:$0xff]
    %v785 = vld [vmem:[#allocation5 + $0xaa8] sm:$0xff]
    %v786 = vld [vmem:[#allocation5 + $0xab0] sm:$0xff]
    %v787 = vld [vmem:[#allocation5 + $0xab8] sm:$0xff]
    %v788 = vld [vmem:[#allocation5 + $0xac0] sm:$0xff]
    %v789 = vld [vmem:[#allocation5 + $0xac8] sm:$0xff]
    %v790 = vld [vmem:[#allocation5 + $0xad0] sm:$0xff]
    %v791 = vld [vmem:[#allocation5 + $0xad8] sm:$0xff]
    %v792 = vld [vmem:[#allocation5 + $0xae0] sm:$0xff]
    %v793 = vld [vmem:[#allocation5 + $0xae8] sm:$0xff]
    %v794 = vld [vmem:[#allocation5 + $0xaf0] sm:$0xff]
    %v795 = vld [vmem:[#allocation5 + $0xaf8] sm:$0xff]
    %v796 = vld [vmem:[#allocation5 + $0xb00] sm:$0xff]
    %v797 = vld [vmem:[#allocation5 + $0xb08] sm:$0xff]
    %v798 = vld [vmem:[#allocation5 + $0xb10] sm:$0xff]
    %v799 = vld [vmem:[#allocation5 + $0xb18] sm:$0xff]
    %v800 = vld [vmem:[#allocation5 + $0xb20] sm:$0xff]
    %v801 = vld [vmem:[#allocation5 + $0xb28] sm:$0xff]
    %v802 = vld [vmem:[#allocation5 + $0xb30] sm:$0xff]
    %v803 = vld [vmem:[#allocation5 + $0xb38] sm:$0xff]
    %v804 = vld [vmem:[#allocation5 + $0xb40] sm:$0xff]
    %v805 = vld [vmem:[#allocation5 + $0xb48] sm:$0xff]
    %v806 = vld [vmem:[#allocation5 + $0xb50] sm:$0xff]
    %v807 = vld [vmem:[#allocation5 + $0xb58] sm:$0xff]
    %v808 = vld [vmem:[#allocation5 + $0xb60] sm:$0xff]
    %v809 = vld [vmem:[#allocation5 + $0xb68] sm:$0xff]
    %v810 = vld [vmem:[#allocation5 + $0xb70] sm:$0xff]
    %v811 = vld [vmem:[#allocation5 + $0xb78] sm:$0xff]
    %v812 = vld [vmem:[#allocation5 + $0xb80] sm:$0xff]
    %v813 = vld [vmem:[#allocation5 + $0xb88] sm:$0xff]
    %v814 = vld [vmem:[#allocation5 + $0xb90] sm:$0xff]
    %v815 = vld [vmem:[#allocation5 + $0xb98] sm:$0xff]
    %v816 = vld [vmem:[#allocation5 + $0xba0] sm:$0xff]
    %v817 = vld [vmem:[#allocation5 + $0xba8] sm:$0xff]
    %v818 = vld [vmem:[#allocation5 + $0xbb0] sm:$0xff]
    %v819 = vld [vmem:[#allocation5 + $0xbb8] sm:$0xff]
    %v820 = vld [vmem:[#allocation5 + $0xbc0] sm:$0xff]
    %v821 = vld [vmem:[#allocation5 + $0xbc8] sm:$0xff]
    %v822 = vld [vmem:[#allocation5 + $0xbd0] sm:$0xff]
    %v823 = vld [vmem:[#allocation5 + $0xbd8] sm:$0xff]
    %v824 = vld [vmem:[#allocation5 + $0xbe0] sm:$0xff]
    %v825 = vld [vmem:[#allocation5 + $0xbe8] sm:$0xff]
    %v826 = vld [vmem:[#allocation5 + $0xbf0] sm:$0xff]
    %v827 = vld [vmem:[#allocation5 + $0xbf8] sm:$0xff]
    %v828 = vld [vmem:[#allocation5 + $0xc00] sm:$0xff]
    %v829 = vld [vmem:[#allocation5 + $0xc08] sm:$0xff]
    %v830 = vld [vmem:[#allocation5 + $0xc10] sm:$0xff]
    %v831 = vld [vmem:[#allocation5 + $0xc18] sm:$0xff]
    %v832 = vld [vmem:[#allocation5 + $0xc20] sm:$0xff]
    %v833 = vld [vmem:[#allocation5 + $0xc28] sm:$0xff]
    %v834 = vld [vmem:[#allocation5 + $0xc30] sm:$0xff]
    %v835 = vld [vmem:[#allocation5 + $0xc38] sm:$0xff]
    %v836 = vld [vmem:[#allocation5 + $0xc40] sm:$0xff]
    %v837 = vld [vmem:[#allocation5 + $0xc48] sm:$0xff]
    %v838 = vld [vmem:[#allocation5 + $0xc50] sm:$0xff]
    %v839 = vld [vmem:[#allocation5 + $0xc58] sm:$0xff]
    %v840 = vld [vmem:[#allocation5 + $0xc60] sm:$0xff]
    %v841 = vld [vmem:[#allocation5 + $0xc68] sm:$0xff]
    %v842 = vld [vmem:[#allocation5 + $0xc70] sm:$0xff]
    %v843 = vld [vmem:[#allocation5 + $0xc78] sm:$0xff]
    %v844 = vld [vmem:[#allocation5 + $0xc80] sm:$0xff]
    %v845 = vld [vmem:[#allocation5 + $0xc88] sm:$0xff]
    %v846 = vld [vmem:[#allocation5 + $0xc90] sm:$0xff]
    %v847 = vld [vmem:[#allocation5 + $0xc98] sm:$0xff]
    %v848 = vld [vmem:[#allocation5 + $0xca0] sm:$0xff]
    %v849 = vld [vmem:[#allocation5 + $0xca8] sm:$0xff]
    %v850 = vld [vmem:[#allocation5 + $0xcb0] sm:$0xff]
    %v851 = vld [vmem:[#allocation5 + $0xcb8] sm:$0xff]
    %v852 = vld [vmem:[#allocation5 + $0xcc0] sm:$0xff]
    %v853 = vld [vmem:[#allocation5 + $0xcc8] sm:$0xff]
    %v854 = vld [vmem:[#allocation5 + $0xcd0] sm:$0xff]
    %v855 = vld [vmem:[#allocation5 + $0xcd8] sm:$0xff]
    %v856 = vld [vmem:[#allocation5 + $0xce0] sm:$0xff]
    %v857 = vld [vmem:[#allocation5 + $0xce8] sm:$0xff]
    %v858 = vld [vmem:[#allocation5 + $0xcf0] sm:$0xff]
    %v859 = vld [vmem:[#allocation5 + $0xcf8] sm:$0xff]
    %v860 = vld [vmem:[#allocation5 + $0xd00] sm:$0xff]
    %v861 = vld [vmem:[#allocation5 + $0xd08] sm:$0xff]
    %v862 = vld [vmem:[#allocation5 + $0xd10] sm:$0xff]
    %v863 = vld [vmem:[#allocation5 + $0xd18] sm:$0xff]
    %v864 = vld [vmem:[#allocation5 + $0xd20] sm:$0xff]
    %v865 = vld [vmem:[#allocation5 + $0xd28] sm:$0xff]
    %v866 = vld [vmem:[#allocation5 + $0xd30] sm:$0xff]
    %v867 = vld [vmem:[#allocation5 + $0xd38] sm:$0xff]
    %v868 = vld [vmem:[#allocation5 + $0xd40] sm:$0xff]
    %v869 = vld [vmem:[#allocation5 + $0xd48] sm:$0xff]
    %v870 = vld [vmem:[#allocation5 + $0xd50] sm:$0xff]
    %v871 = vld [vmem:[#allocation5 + $0xd58] sm:$0xff]
    %v872 = vld [vmem:[#allocation5 + $0xd60] sm:$0xff]
    %v873 = vld [vmem:[#allocation5 + $0xd68] sm:$0xff]
    %v874 = vld [vmem:[#allocation5 + $0xd70] sm:$0xff]
    %v875 = vld [vmem:[#allocation5 + $0xd78] sm:$0xff]
    %v876 = vld [vmem:[#allocation5 + $0xd80] sm:$0xff]
    %v877 = vld [vmem:[#allocation5 + $0xd88] sm:$0xff]
    %v878 = vld [vmem:[#allocation5 + $0xd90] sm:$0xff]
    %v879 = vld [vmem:[#allocation5 + $0xd98] sm:$0xff]
    %v880 = vld [vmem:[#allocation5 + $0xda0] sm:$0xff]
    %v881 = vld [vmem:[#allocation5 + $0xda8] sm:$0xff]
    %v882 = vld [vmem:[#allocation5 + $0xdb0] sm:$0xff]
    %v883 = vld [vmem:[#allocation5 + $0xdb8] sm:$0xff]
    %v884 = vld [vmem:[#allocation5 + $0xdc0] sm:$0xff]
    %v885 = vld [vmem:[#allocation5 + $0xdc8] sm:$0xff]
    %v886 = vld [vmem:[#allocation5 + $0xdd0] sm:$0xff]
    %v887 = vld [vmem:[#allocation5 + $0xdd8] sm:$0xff]
    %v888 = vld [vmem:[#allocation5 + $0xde0] sm:$0xff]
    %v889 = vld [vmem:[#allocation5 + $0xde8] sm:$0xff]
    %v890 = vld [vmem:[#allocation5 + $0xdf0] sm:$0xff]
    %v891 = vld [vmem:[#allocation5 + $0xdf8] sm:$0xff]
    %v892 = vld [vmem:[#allocation5 + $0xe00] sm:$0xff]
    %v893 = vld [vmem:[#allocation5 + $0xe08] sm:$0xff]
    %v894 = vld [vmem:[#allocation5 + $0xe10] sm:$0xff]
    %v895 = vld [vmem:[#allocation5 + $0xe18] sm:$0xff]
    %v896 = vld [vmem:[#allocation5 + $0xe20] sm:$0xff]
    %v897 = vld [vmem:[#allocation5 + $0xe28] sm:$0xff]
    %v898 = vld [vmem:[#allocation5 + $0xe30] sm:$0xff]
    %v899 = vld [vmem:[#allocation5 + $0xe38] sm:$0xff]
    %v900 = vld [vmem:[#allocation5 + $0xe40] sm:$0xff]
    %v901 = vld [vmem:[#allocation5 + $0xe48] sm:$0xff]
    %v902 = vld [vmem:[#allocation5 + $0xe50] sm:$0xff]
    %v903 = vld [vmem:[#allocation5 + $0xe58] sm:$0xff]
    %v904 = vld [vmem:[#allocation5 + $0xe60] sm:$0xff]
    %v905 = vld [vmem:[#allocation5 + $0xe68] sm:$0xff]
    %v906 = vld [vmem:[#allocation5 + $0xe70] sm:$0xff]
    %v907 = vld [vmem:[#allocation5 + $0xe78] sm:$0xff]
    %v908 = vld [vmem:[#allocation5 + $0xe80] sm:$0xff]
    %v909 = vld [vmem:[#allocation5 + $0xe88] sm:$0xff]
    %v910 = vld [vmem:[#allocation5 + $0xe90] sm:$0xff]
    %v911 = vld [vmem:[#allocation5 + $0xe98] sm:$0xff]
    %v912 = vld [vmem:[#allocation5 + $0xea0] sm:$0xff]
    %v913 = vld [vmem:[#allocation5 + $0xea8] sm:$0xff]
    %v914 = vld [vmem:[#allocation5 + $0xeb0] sm:$0xff]
    %v915 = vld [vmem:[#allocation5 + $0xeb8] sm:$0xff]
    %v916 = vld [vmem:[#allocation5 + $0xec0] sm:$0xff]
    %v917 = vld [vmem:[#allocation5 + $0xec8] sm:$0xff]
    %v918 = vld [vmem:[#allocation5 + $0xed0] sm:$0xff]
    %v919 = vld [vmem:[#allocation5 + $0xed8] sm:$0xff]
    %v920 = vld [vmem:[#allocation5 + $0xee0] sm:$0xff]
    %v921 = vld [vmem:[#allocation5 + $0xee8] sm:$0xff]
    %v922 = vld [vmem:[#allocation5 + $0xef0] sm:$0xff]
    %v923 = vld [vmem:[#allocation5 + $0xef8] sm:$0xff]
    %v924 = vld [vmem:[#allocation5 + $0xf00] sm:$0xff]
    %v925 = vld [vmem:[#allocation5 + $0xf08] sm:$0xff]
    %v926 = vld [vmem:[#allocation5 + $0xf10] sm:$0xff]
    %v927 = vld [vmem:[#allocation5 + $0xf18] sm:$0xff]
    %v928 = vld [vmem:[#allocation5 + $0xf20] sm:$0xff]
    %v929 = vld [vmem:[#allocation5 + $0xf28] sm:$0xff]
    %v930 = vld [vmem:[#allocation5 + $0xf30] sm:$0xff]
    %v931 = vld [vmem:[#allocation5 + $0xf38] sm:$0xff]
    %v932 = vld [vmem:[#allocation5 + $0xf40] sm:$0xff]
    %v933 = vld [vmem:[#allocation5 + $0xf48] sm:$0xff]
    %v934 = vld [vmem:[#allocation5 + $0xf50] sm:$0xff]
    %v935 = vld [vmem:[#allocation5 + $0xf58] sm:$0xff]
    %v936 = vld [vmem:[#allocation5 + $0xf60] sm:$0xff]
    %v937 = vld [vmem:[#allocation5 + $0xf68] sm:$0xff]
    %v938 = vld [vmem:[#allocation5 + $0xf70] sm:$0xff]
    %v939 = vld [vmem:[#allocation5 + $0xf78] sm:$0xff]
    %v940 = vld [vmem:[#allocation5 + $0xf80] sm:$0xff]
    %v941 = vld [vmem:[#allocation5 + $0xf88] sm:$0xff]
    %v942 = vld [vmem:[#allocation5 + $0xf90] sm:$0xff]
    %v943 = vld [vmem:[#allocation5 + $0xf98] sm:$0xff]
    %v944 = vld [vmem:[#allocation5 + $0xfa0] sm:$0xff]
    %v945 = vld [vmem:[#allocation5 + $0xfa8] sm:$0xff]
    %v946 = vld [vmem:[#allocation5 + $0xfb0] sm:$0xff]
    %v947 = vld [vmem:[#allocation5 + $0xfb8] sm:$0xff]
    %v948 = vld [vmem:[#allocation5 + $0xfc0] sm:$0xff]
    %v949 = vld [vmem:[#allocation5 + $0xfc8] sm:$0xff]
    %v950 = vld [vmem:[#allocation5 + $0xfd0] sm:$0xff]
    %v951 = vld [vmem:[#allocation5 + $0xfd8] sm:$0xff]
    %v952 = vld [vmem:[#allocation5 + $0xfe0] sm:$0xff]
    %v953 = vld [vmem:[#allocation5 + $0xfe8] sm:$0xff]
    %v954 = vld [vmem:[#allocation5 + $0xff0] sm:$0xff]
    %v955 = vld [vmem:[#allocation5 + $0xff8] sm:$0xff]
    %v956 = vld [vmem:[#allocation5 + $0x1000] sm:$0xff]
    %v957 = vld [vmem:[#allocation5 + $0x1008] sm:$0xff]
    %v958 = vld [vmem:[#allocation5 + $0x1010] sm:$0xff]
    %v959 = vld [vmem:[#allocation5 + $0x1018] sm:$0xff]
    %v960 = vld [vmem:[#allocation5 + $0x1020] sm:$0xff]
    %v961 = vld [vmem:[#allocation5 + $0x1028] sm:$0xff]
    %v962 = vld [vmem:[#allocation5 + $0x1030] sm:$0xff]
    %v963 = vld [vmem:[#allocation5 + $0x1038] sm:$0xff]
    %v964 = vld [vmem:[#allocation5 + $0x1040] sm:$0xff]
    %v965 = vld [vmem:[#allocation5 + $0x1048] sm:$0xff]
    %v966 = vld [vmem:[#allocation5 + $0x1050] sm:$0xff]
    %v967 = vld [vmem:[#allocation5 + $0x1058] sm:$0xff]
    %v968 = vld [vmem:[#allocation5 + $0x1060] sm:$0xff]
    %v969 = vld [vmem:[#allocation5 + $0x1068] sm:$0xff]
    %v970 = vld [vmem:[#allocation5 + $0x1070] sm:$0xff]
    %v971 = vld [vmem:[#allocation5 + $0x1078] sm:$0xff]
    %v972 = vld [vmem:[#allocation5 + $0x1080] sm:$0xff]
    %v973 = vld [vmem:[#allocation5 + $0x1088] sm:$0xff]
    %v974 = vld [vmem:[#allocation5 + $0x1090] sm:$0xff]
    %v975 = vld [vmem:[#allocation5 + $0x1098] sm:$0xff]
    %v976 = vld [vmem:[#allocation5 + $0x10a0] sm:$0xff]
    %v977 = vld [vmem:[#allocation5 + $0x10a8] sm:$0xff]
    %v978 = vld [vmem:[#allocation5 + $0x10b0] sm:$0xff]
    %v979 = vld [vmem:[#allocation5 + $0x10b8] sm:$0xff]
    %v980 = vld [vmem:[#allocation5 + $0x10c0] sm:$0xff]
    %v981 = vld [vmem:[#allocation5 + $0x10c8] sm:$0xff]
    %v982 = vld [vmem:[#allocation5 + $0x10d0] sm:$0xff]
    %v983 = vld [vmem:[#allocation5 + $0x10d8] sm:$0xff]
    %v984 = vld [vmem:[#allocation5 + $0x10e0] sm:$0xff]
    %v985 = vld [vmem:[#allocation5 + $0x10e8] sm:$0xff]
    %v986 = vld [vmem:[#allocation5 + $0x10f0] sm:$0xff]
    %v987 = vld [vmem:[#allocation5 + $0x10f8] sm:$0xff]
    %v988 = vld [vmem:[#allocation5 + $0x1100] sm:$0xff]
    %v989 = vld [vmem:[#allocation5 + $0x1108] sm:$0xff]
    %v990 = vld [vmem:[#allocation5 + $0x1110] sm:$0xff]
    %v991 = vld [vmem:[#allocation5 + $0x1118] sm:$0xff]
    %v992 = vld [vmem:[#allocation5 + $0x1120] sm:$0xff]
    %v993 = vld [vmem:[#allocation5 + $0x1128] sm:$0xff]
    %v994 = vld [vmem:[#allocation5 + $0x1130] sm:$0xff]
    %v995 = vld [vmem:[#allocation5 + $0x1138] sm:$0xff]
    %v996 = vld [vmem:[#allocation5 + $0x1140] sm:$0xff]
    %v997 = vld [vmem:[#allocation5 + $0x1148] sm:$0xff]
    %v998 = vld [vmem:[#allocation5 + $0x1150] sm:$0xff]
    %v999 = vld [vmem:[#allocation5 + $0x1158] sm:$0xff]
    %v1000 = vld [vmem:[#allocation5 + $0x1160] sm:$0xff]
    %v1001 = vld [vmem:[#allocation5 + $0x1168] sm:$0xff]
    %v1002 = vld [vmem:[#allocation5 + $0x1170] sm:$0xff]
    %v1003 = vld [vmem:[#allocation5 + $0x1178] sm:$0xff]
    %v1004 = vld [vmem:[#allocation5 + $0x1180] sm:$0xff]
    %v1005 = vld [vmem:[#allocation5 + $0x1188] sm:$0xff]
    %v1006 = vld [vmem:[#allocation5 + $0x1190] sm:$0xff]
    %v1007 = vld [vmem:[#allocation5 + $0x1198] sm:$0xff]
    %v1008 = vld [vmem:[#allocation5 + $0x11a0] sm:$0xff]
    %v1009 = vld [vmem:[#allocation5 + $0x11a8] sm:$0xff]
    %v1010 = vld [vmem:[#allocation5 + $0x11b0] sm:$0xff]
    %v1011 = vld [vmem:[#allocation5 + $0x11b8] sm:$0xff]
    %v1012 = vld [vmem:[#allocation5 + $0x11c0] sm:$0xff]
    %v1013 = vld [vmem:[#allocation5 + $0x11c8] sm:$0xff]
    %v1014 = vld [vmem:[#allocation5 + $0x11d0] sm:$0xff]
    %v1015 = vld [vmem:[#allocation5 + $0x11d8] sm:$0xff]
    %v1016 = vld [vmem:[#allocation5 + $0x11e0] sm:$0xff]
    %v1017 = vld [vmem:[#allocation5 + $0x11e8] sm:$0xff]
    %v1018 = vld [vmem:[#allocation5 + $0x11f0] sm:$0xff]
    %v1019 = vld [vmem:[#allocation5 + $0x11f8] sm:$0xff]
    %v1020 = vld [vmem:[#allocation5 + $0x1200] sm:$0xff]
    %v1021 = vld [vmem:[#allocation5 + $0x1208] sm:$0xff]
    %v1022 = vld [vmem:[#allocation5 + $0x1210] sm:$0xff]
    %v1023 = vld [vmem:[#allocation5 + $0x1218] sm:$0xff]
    %v1024 = vld [vmem:[#allocation5 + $0x1220] sm:$0xff]
    %v1025 = vld [vmem:[#allocation5 + $0x1228] sm:$0xff]
    %v1026 = vld [vmem:[#allocation5 + $0x1230] sm:$0xff]
    %v1027 = vld [vmem:[#allocation5 + $0x1238] sm:$0xff]
    %v1028 = vld [vmem:[#allocation5 + $0x1240] sm:$0xff]
    %v1029 = vld [vmem:[#allocation5 + $0x1248] sm:$0xff]
    %v1030 = vld [vmem:[#allocation5 + $0x1250] sm:$0xff]
    %v1031 = vld [vmem:[#allocation5 + $0x1258] sm:$0xff]
    %v1032 = vld [vmem:[#allocation5 + $0x1260] sm:$0xff]
    %v1033 = vld [vmem:[#allocation5 + $0x1268] sm:$0xff]
    %v1034 = vld [vmem:[#allocation5 + $0x1270] sm:$0xff]
    %v1035 = vld [vmem:[#allocation5 + $0x1278] sm:$0xff]
    %v1036 = vld [vmem:[#allocation5 + $0x1280] sm:$0xff]
    %v1037 = vld [vmem:[#allocation5 + $0x1288] sm:$0xff]
    %v1038 = vld [vmem:[#allocation5 + $0x1290] sm:$0xff]
    %v1039 = vld [vmem:[#allocation5 + $0x1298] sm:$0xff]
    %v1040 = vld [vmem:[#allocation5 + $0x12a0] sm:$0xff]
    %v1041 = vld [vmem:[#allocation5 + $0x12a8] sm:$0xff]
    %v1042 = vld [vmem:[#allocation5 + $0x12b0] sm:$0xff]
    %v1043 = vld [vmem:[#allocation5 + $0x12b8] sm:$0xff]
    %v1044 = vld [vmem:[#allocation5 + $0x12c0] sm:$0xff]
    %v1045 = vld [vmem:[#allocation5 + $0x12c8] sm:$0xff]
    %v1046 = vld [vmem:[#allocation5 + $0x12d0] sm:$0xff]
    %v1047 = vld [vmem:[#allocation5 + $0x12d8] sm:$0xff]
    %v1048 = vld [vmem:[#allocation5 + $0x12e0] sm:$0xff]
    %v1049 = vld [vmem:[#allocation5 + $0x12e8] sm:$0xff]
    %v1050 = vld [vmem:[#allocation5 + $0x12f0] sm:$0xff]
    %v1051 = vld [vmem:[#allocation5 + $0x12f8] sm:$0xff]
    %v1052 = vld [vmem:[#allocation5 + $0x1300] sm:$0xff]
    %v1053 = vld [vmem:[#allocation5 + $0x1308] sm:$0xff]
    %v1054 = vld [vmem:[#allocation5 + $0x1310] sm:$0xff]
    %v1055 = vld [vmem:[#allocation5 + $0x1318] sm:$0xff]
    %v1056 = vld [vmem:[#allocation5 + $0x1320] sm:$0xff]
    %v1057 = vld [vmem:[#allocation5 + $0x1328] sm:$0xff]
    %v1058 = vld [vmem:[#allocation5 + $0x1330] sm:$0xff]
    %v1059 = vld [vmem:[#allocation5 + $0x1338] sm:$0xff]
    %v1060 = vld [vmem:[#allocation5 + $0x1340] sm:$0xff]
    %v1061 = vld [vmem:[#allocation5 + $0x1348] sm:$0xff]
    %v1062 = vld [vmem:[#allocation5 + $0x1350] sm:$0xff]
    %v1063 = vld [vmem:[#allocation5 + $0x1358] sm:$0xff]
    %v1064 = vld [vmem:[#allocation5 + $0x1360] sm:$0xff]
    %v1065 = vld [vmem:[#allocation5 + $0x1368] sm:$0xff]
    %v1066 = vld [vmem:[#allocation5 + $0x1370] sm:$0xff]
    %v1067 = vld [vmem:[#allocation5 + $0x1378] sm:$0xff]
    %v1068 = vld [vmem:[#allocation5 + $0x1380] sm:$0xff]
    %v1069 = vld [vmem:[#allocation5 + $0x1388] sm:$0xff]
    %v1070 = vld [vmem:[#allocation5 + $0x1390] sm:$0xff]
    %v1071 = vld [vmem:[#allocation5 + $0x1398] sm:$0xff]
    %v1072 = vld [vmem:[#allocation5 + $0x13a0] sm:$0xff]
    %v1073 = vld [vmem:[#allocation5 + $0x13a8] sm:$0xff]
    %v1074 = vld [vmem:[#allocation5 + $0x13b0] sm:$0xff]
    %v1075 = vld [vmem:[#allocation5 + $0x13b8] sm:$0xff]
    %v1076 = vld [vmem:[#allocation5 + $0x13c0] sm:$0xff]
    %v1077 = vld [vmem:[#allocation5 + $0x13c8] sm:$0xff]
    %v1078 = vld [vmem:[#allocation5 + $0x13d0] sm:$0xff]
    %v1079 = vld [vmem:[#allocation5 + $0x13d8] sm:$0xff]
    %v1080 = vld [vmem:[#allocation5 + $0x13e0] sm:$0xff]
    %v1081 = vld [vmem:[#allocation5 + $0x13e8] sm:$0xff]
    %v1082 = vld [vmem:[#allocation5 + $0x13f0] sm:$0xff]
    %v1083 = vld [vmem:[#allocation5 + $0x13f8] sm:$0xff]
    %v1084 = vld [vmem:[#allocation5 + $0x1400] sm:$0xff]
    %v1085 = vld [vmem:[#allocation5 + $0x1408] sm:$0xff]
    %v1086 = vld [vmem:[#allocation5 + $0x1410] sm:$0xff]
    %v1087 = vld [vmem:[#allocation5 + $0x1418] sm:$0xff]
    %v1088 = vld [vmem:[#allocation5 + $0x1420] sm:$0xff]
    %v1089 = vld [vmem:[#allocation5 + $0x1428] sm:$0xff]
    %v1090 = vld [vmem:[#allocation5 + $0x1430] sm:$0xff]
    %v1091 = vld [vmem:[#allocation5 + $0x1438] sm:$0xff]
    %v1092 = vld [vmem:[#allocation5 + $0x1440] sm:$0xff]
    %v1093 = vld [vmem:[#allocation5 + $0x1448] sm:$0xff]
    %v1094 = vld [vmem:[#allocation5 + $0x1450] sm:$0xff]
    %v1095 = vld [vmem:[#allocation5 + $0x1458] sm:$0xff]
    %v1096 = vld [vmem:[#allocation5 + $0x1460] sm:$0xff]
    %v1097 = vld [vmem:[#allocation5 + $0x1468] sm:$0xff]
    %v1098 = vld [vmem:[#allocation5 + $0x1470] sm:$0xff]
    %v1099 = vld [vmem:[#allocation5 + $0x1478] sm:$0xff]
    %v1100 = vld [vmem:[#allocation5 + $0x1480] sm:$0xff]
    %v1101 = vld [vmem:[#allocation5 + $0x1488] sm:$0xff]
    %v1102 = vld [vmem:[#allocation5 + $0x1490] sm:$0xff]
    %v1103 = vld [vmem:[#allocation5 + $0x1498] sm:$0xff]
    %v1104 = vld [vmem:[#allocation5 + $0x14a0] sm:$0xff]
    %v1105 = vld [vmem:[#allocation5 + $0x14a8] sm:$0xff]
    %v1106 = vld [vmem:[#allocation5 + $0x14b0] sm:$0xff]
    %v1107 = vld [vmem:[#allocation5 + $0x14b8] sm:$0xff]
    %v1108 = vld [vmem:[#allocation5 + $0x14c0] sm:$0xff]
    %v1109 = vld [vmem:[#allocation5 + $0x14c8] sm:$0xff]
    %v1110 = vld [vmem:[#allocation5 + $0x14d0] sm:$0xff]
    %v1111 = vld [vmem:[#allocation5 + $0x14d8] sm:$0xff]
    %v1112 = vld [vmem:[#allocation5 + $0x14e0] sm:$0xff]
    %v1113 = vld [vmem:[#allocation5 + $0x14e8] sm:$0xff]
    %v1114 = vld [vmem:[#allocation5 + $0x14f0] sm:$0xff]
    %v1115 = vld [vmem:[#allocation5 + $0x14f8] sm:$0xff]
    %v1116 = vld [vmem:[#allocation5 + $0x1500] sm:$0xff]
    %v1117 = vld [vmem:[#allocation5 + $0x1508] sm:$0xff]
    %v1118 = vld [vmem:[#allocation5 + $0x1510] sm:$0xff]
    %v1119 = vld [vmem:[#allocation5 + $0x1518] sm:$0xff]
    %v1120 = vld [vmem:[#allocation5 + $0x1520] sm:$0xff]
    %v1121 = vld [vmem:[#allocation5 + $0x1528] sm:$0xff]
    %v1122 = vld [vmem:[#allocation5 + $0x1530] sm:$0xff]
    %v1123 = vld [vmem:[#allocation5 + $0x1538] sm:$0xff]
    %v1124 = vld [vmem:[#allocation5 + $0x1540] sm:$0xff]
    %v1125 = vld [vmem:[#allocation5 + $0x1548] sm:$0xff]
    %v1126 = vld [vmem:[#allocation5 + $0x1550] sm:$0xff]
    %v1127 = vld [vmem:[#allocation5 + $0x1558] sm:$0xff]
    %v1128 = vld [vmem:[#allocation5 + $0x1560] sm:$0xff]
    %v1129 = vld [vmem:[#allocation5 + $0x1568] sm:$0xff]
    %v1130 = vld [vmem:[#allocation5 + $0x1570] sm:$0xff]
    %v1131 = vld [vmem:[#allocation5 + $0x1578] sm:$0xff]
    %v1132 = vld [vmem:[#allocation5 + $0x1580] sm:$0xff]
    %v1133 = vld [vmem:[#allocation5 + $0x1588] sm:$0xff]
    %v1134 = vld [vmem:[#allocation5 + $0x1590] sm:$0xff]
    %v1135 = vld [vmem:[#allocation5 + $0x1598] sm:$0xff]
    %v1136 = vld [vmem:[#allocation5 + $0x15a0] sm:$0xff]
    %v1137 = vld [vmem:[#allocation5 + $0x15a8] sm:$0xff]
    %v1138 = vld [vmem:[#allocation5 + $0x15b0] sm:$0xff]
    %v1139 = vld [vmem:[#allocation5 + $0x15b8] sm:$0xff]
    %v1140 = vld [vmem:[#allocation5 + $0x15c0] sm:$0xff]
    %v1141 = vld [vmem:[#allocation5 + $0x15c8] sm:$0xff]
    %v1142 = vld [vmem:[#allocation5 + $0x15d0] sm:$0xff]
    %v1143 = vld [vmem:[#allocation5 + $0x15d8] sm:$0xff]
    %v1144 = vld [vmem:[#allocation5 + $0x15e0] sm:$0xff]
    %v1145 = vld [vmem:[#allocation5 + $0x15e8] sm:$0xff]
    %v1146 = vld [vmem:[#allocation5 + $0x15f0] sm:$0xff]
    %v1147 = vld [vmem:[#allocation5 + $0x15f8] sm:$0xff]
    %v1148 = vld [vmem:[#allocation5 + $0x1600] sm:$0xff]
    %v1149 = vld [vmem:[#allocation5 + $0x1608] sm:$0xff]
    %v1150 = vld [vmem:[#allocation5 + $0x1610] sm:$0xff]
    %v1151 = vld [vmem:[#allocation5 + $0x1618] sm:$0xff]
    %v1152 = vld [vmem:[#allocation5 + $0x1620] sm:$0xff]
    %v1153 = vld [vmem:[#allocation5 + $0x1628] sm:$0xff]
    %v1154 = vld [vmem:[#allocation5 + $0x1630] sm:$0xff]
    %v1155 = vld [vmem:[#allocation5 + $0x1638] sm:$0xff]
    %v1156 = vld [vmem:[#allocation5 + $0x1640] sm:$0xff]
    %v1157 = vld [vmem:[#allocation5 + $0x1648] sm:$0xff]
    %v1158 = vld [vmem:[#allocation5 + $0x1650] sm:$0xff]
    %v1159 = vld [vmem:[#allocation5 + $0x1658] sm:$0xff]
    %v1160 = vld [vmem:[#allocation5 + $0x1660] sm:$0xff]
    %v1161 = vld [vmem:[#allocation5 + $0x1668] sm:$0xff]
    %v1162 = vld [vmem:[#allocation5 + $0x1670] sm:$0xff]
    %v1163 = vld [vmem:[#allocation5 + $0x1678] sm:$0xff]
    %v1164 = vld [vmem:[#allocation5 + $0x1680] sm:$0xff]
    %v1165 = vld [vmem:[#allocation5 + $0x1688] sm:$0xff]
    %v1166 = vld [vmem:[#allocation5 + $0x1690] sm:$0xff]
    %v1167 = vld [vmem:[#allocation5 + $0x1698] sm:$0xff]
    %v1168 = vld [vmem:[#allocation5 + $0x16a0] sm:$0xff]
    %v1169 = vld [vmem:[#allocation5 + $0x16a8] sm:$0xff]
    %v1170 = vld [vmem:[#allocation5 + $0x16b0] sm:$0xff]
    %v1171 = vld [vmem:[#allocation5 + $0x16b8] sm:$0xff]
    %v1172 = vld [vmem:[#allocation5 + $0x16c0] sm:$0xff]
    %v1173 = vld [vmem:[#allocation5 + $0x16c8] sm:$0xff]
    %v1174 = vld [vmem:[#allocation5 + $0x16d0] sm:$0xff]
    %v1175 = vld [vmem:[#allocation5 + $0x16d8] sm:$0xff]
    %v1176 = vld [vmem:[#allocation5 + $0x16e0] sm:$0xff]
    %v1177 = vld [vmem:[#allocation5 + $0x16e8] sm:$0xff]
    %v1178 = vld [vmem:[#allocation5 + $0x16f0] sm:$0xff]
    %v1179 = vld [vmem:[#allocation5 + $0x16f8] sm:$0xff]
    %v1180 = vld [vmem:[#allocation5 + $0x1700] sm:$0xff]
    %v1181 = vld [vmem:[#allocation5 + $0x1708] sm:$0xff]
    %v1182 = vld [vmem:[#allocation5 + $0x1710] sm:$0xff]
    %v1183 = vld [vmem:[#allocation5 + $0x1718] sm:$0xff]
    %v1184 = vld [vmem:[#allocation5 + $0x1720] sm:$0xff]
    %v1185 = vld [vmem:[#allocation5 + $0x1728] sm:$0xff]
    %v1186 = vld [vmem:[#allocation5 + $0x1730] sm:$0xff]
    %v1187 = vld [vmem:[#allocation5 + $0x1738] sm:$0xff]
    %v1188 = vld [vmem:[#allocation5 + $0x1740] sm:$0xff]
    %v1189 = vld [vmem:[#allocation5 + $0x1748] sm:$0xff]
    %v1190 = vld [vmem:[#allocation5 + $0x1750] sm:$0xff]
    %v1191 = vld [vmem:[#allocation5 + $0x1758] sm:$0xff]
    %v1192 = vld [vmem:[#allocation5 + $0x1760] sm:$0xff]
    %v1193 = vld [vmem:[#allocation5 + $0x1768] sm:$0xff]
    %v1194 = vld [vmem:[#allocation5 + $0x1770] sm:$0xff]
    %v1195 = vld [vmem:[#allocation5 + $0x1778] sm:$0xff]
    %v1196 = vld [vmem:[#allocation5 + $0x1780] sm:$0xff]
    %v1197 = vld [vmem:[#allocation5 + $0x1788] sm:$0xff]
    %v1198 = vld [vmem:[#allocation5 + $0x1790] sm:$0xff]
    %v1199 = vld [vmem:[#allocation5 + $0x1798] sm:$0xff]
    %v1200 = vld [vmem:[#allocation5 + $0x17a0] sm:$0xff]
    %v1201 = vld [vmem:[#allocation5 + $0x17a8] sm:$0xff]
    %v1202 = vld [vmem:[#allocation5 + $0x17b0] sm:$0xff]
    %v1203 = vld [vmem:[#allocation5 + $0x17b8] sm:$0xff]
    %v1204 = vld [vmem:[#allocation5 + $0x17c0] sm:$0xff]
    %v1205 = vld [vmem:[#allocation5 + $0x17c8] sm:$0xff]
    %v1206 = vld [vmem:[#allocation5 + $0x17d0] sm:$0xff]
    %v1207 = vld [vmem:[#allocation5 + $0x17d8] sm:$0xff]
    %v1208 = vld [vmem:[#allocation5 + $0x17e0] sm:$0xff]
    %v1209 = vld [vmem:[#allocation5 + $0x17e8] sm:$0xff]
    %v1210 = vld [vmem:[#allocation5 + $0x17f0] sm:$0xff]
    %v1211 = vld [vmem:[#allocation5 + $0x17f8] sm:$0xff]
    %v1212 = vld [vmem:[#allocation5 + $0x1800] sm:$0xff]
    %v1213 = vld [vmem:[#allocation5 + $0x1808] sm:$0xff]
    %v1214 = vld [vmem:[#allocation5 + $0x1810] sm:$0xff]
    %v1215 = vld [vmem:[#allocation5 + $0x1818] sm:$0xff]
    %v1216 = vld [vmem:[#allocation5 + $0x1820] sm:$0xff]
    %v1217 = vld [vmem:[#allocation5 + $0x1828] sm:$0xff]
    %v1218 = vld [vmem:[#allocation5 + $0x1830] sm:$0xff]
    %v1219 = vld [vmem:[#allocation5 + $0x1838] sm:$0xff]
    %v1220 = vld [vmem:[#allocation5 + $0x1840] sm:$0xff]
    %v1221 = vld [vmem:[#allocation5 + $0x1848] sm:$0xff]
    %v1222 = vld [vmem:[#allocation5 + $0x1850] sm:$0xff]
    %v1223 = vld [vmem:[#allocation5 + $0x1858] sm:$0xff]
    %v1224 = vld [vmem:[#allocation5 + $0x1860] sm:$0xff]
    %v1225 = vld [vmem:[#allocation5 + $0x1868] sm:$0xff]
    %v1226 = vld [vmem:[#allocation5 + $0x1870] sm:$0xff]
    %v1227 = vld [vmem:[#allocation5 + $0x1878] sm:$0xff]
    %v1228 = vld [vmem:[#allocation5 + $0x1880] sm:$0xff]
    %v1229 = vld [vmem:[#allocation5 + $0x1888] sm:$0xff]
    %v1230 = vld [vmem:[#allocation5 + $0x1890] sm:$0xff]
    %v1231 = vld [vmem:[#allocation5 + $0x1898] sm:$0xff]
    %v1232 = vld [vmem:[#allocation5 + $0x18a0] sm:$0xff]
    %v1233 = vld [vmem:[#allocation5 + $0x18a8] sm:$0xff]
    %v1234 = vld [vmem:[#allocation5 + $0x18b0] sm:$0xff]
    %v1235 = vld [vmem:[#allocation5 + $0x18b8] sm:$0xff]
    %v1236 = vld [vmem:[#allocation5 + $0x18c0] sm:$0xff]
    %v1237 = vld [vmem:[#allocation5 + $0x18c8] sm:$0xff]
    %v1238 = vld [vmem:[#allocation5 + $0x18d0] sm:$0xff]
    %v1239 = vld [vmem:[#allocation5 + $0x18d8] sm:$0xff]
    %v1240 = vld [vmem:[#allocation5 + $0x18e0] sm:$0xff]
    %v1241 = vld [vmem:[#allocation5 + $0x18e8] sm:$0xff]
    %v1242 = vld [vmem:[#allocation5 + $0x18f0] sm:$0xff]
    %v1243 = vld [vmem:[#allocation5 + $0x18f8] sm:$0xff]
    %v1244 = vld [vmem:[#allocation5 + $0x1900] sm:$0xff]
    %v1245 = vld [vmem:[#allocation5 + $0x1908] sm:$0xff]
    %v1246 = vld [vmem:[#allocation5 + $0x1910] sm:$0xff]
    %v1247 = vld [vmem:[#allocation5 + $0x1918] sm:$0xff]
    %v1248 = vld [vmem:[#allocation5 + $0x1920] sm:$0xff]
    %v1249 = vld [vmem:[#allocation5 + $0x1928] sm:$0xff]
    %v1250 = vld [vmem:[#allocation5 + $0x1930] sm:$0xff]
    %v1251 = vld [vmem:[#allocation5 + $0x1938] sm:$0xff]
    %v1252 = vld [vmem:[#allocation5 + $0x1940] sm:$0xff]
    %v1253 = vld [vmem:[#allocation5 + $0x1948] sm:$0xff]
    %v1254 = vld [vmem:[#allocation5 + $0x1950] sm:$0xff]
    %v1255 = vld [vmem:[#allocation5 + $0x1958] sm:$0xff]
    %v1256 = vld [vmem:[#allocation5 + $0x1960] sm:$0xff]
    %v1257 = vld [vmem:[#allocation5 + $0x1968] sm:$0xff]
    %v1258 = vld [vmem:[#allocation5 + $0x1970] sm:$0xff]
    %v1259 = vld [vmem:[#allocation5 + $0x1978] sm:$0xff]
    %v1260 = vld [vmem:[#allocation5 + $0x1980] sm:$0xff]
    %v1261 = vld [vmem:[#allocation5 + $0x1988] sm:$0xff]
    %v1262 = vld [vmem:[#allocation5 + $0x1990] sm:$0xff]
    %v1263 = vld [vmem:[#allocation5 + $0x1998] sm:$0xff]
    %v1264 = vld [vmem:[#allocation5 + $0x19a0] sm:$0xff]
    %v1265 = vld [vmem:[#allocation5 + $0x19a8] sm:$0xff]
    %v1266 = vld [vmem:[#allocation5 + $0x19b0] sm:$0xff]
    %v1267 = vld [vmem:[#allocation5 + $0x19b8] sm:$0xff]
    %v1268 = vld [vmem:[#allocation5 + $0x19c0] sm:$0xff]
    %v1269 = vld [vmem:[#allocation5 + $0x19c8] sm:$0xff]
    %v1270 = vld [vmem:[#allocation5 + $0x19d0] sm:$0xff]
    %v1271 = vld [vmem:[#allocation5 + $0x19d8] sm:$0xff]
    %v1272 = vld [vmem:[#allocation5 + $0x19e0] sm:$0xff]
    %v1273 = vld [vmem:[#allocation5 + $0x19e8] sm:$0xff]
    %v1274 = vld [vmem:[#allocation5 + $0x19f0] sm:$0xff]
    %v1275 = vld [vmem:[#allocation5 + $0x19f8] sm:$0xff]
    %v1276 = vld [vmem:[#allocation5 + $0x1a00] sm:$0xff]
    %v1277 = vld [vmem:[#allocation5 + $0x1a08] sm:$0xff]
    %v1278 = vld [vmem:[#allocation5 + $0x1a10] sm:$0xff]
    %v1279 = vld [vmem:[#allocation5 + $0x1a18] sm:$0xff]
    %v1280 = vld [vmem:[#allocation5 + $0x1a20] sm:$0xff]
    %v1281 = vld [vmem:[#allocation5 + $0x1a28] sm:$0xff]
    %v1282 = vld [vmem:[#allocation5 + $0x1a30] sm:$0xff]
    %v1283 = vld [vmem:[#allocation5 + $0x1a38] sm:$0xff]
    %v1284 = vld [vmem:[#allocation5 + $0x1a40] sm:$0xff]
    %v1285 = vld [vmem:[#allocation5 + $0x1a48] sm:$0xff]
    %v1286 = vld [vmem:[#allocation5 + $0x1a50] sm:$0xff]
    %v1287 = vld [vmem:[#allocation5 + $0x1a58] sm:$0xff]
    %v1288 = vld [vmem:[#allocation5 + $0x1a60] sm:$0xff]
    %v1289 = vld [vmem:[#allocation5 + $0x1a68] sm:$0xff]
    %v1290 = vld [vmem:[#allocation5 + $0x1a70] sm:$0xff]
    %v1291 = vld [vmem:[#allocation5 + $0x1a78] sm:$0xff]
    %v1292 = vld [vmem:[#allocation5 + $0x1a80] sm:$0xff]
    %v1293 = vld [vmem:[#allocation5 + $0x1a88] sm:$0xff]
    %v1294 = vld [vmem:[#allocation5 + $0x1a90] sm:$0xff]
    %v1295 = vld [vmem:[#allocation5 + $0x1a98] sm:$0xff]
    %v1296 = vld [vmem:[#allocation5 + $0x1aa0] sm:$0xff]
    %v1297 = vld [vmem:[#allocation5 + $0x1aa8] sm:$0xff]
    %v1298 = vld [vmem:[#allocation5 + $0x1ab0] sm:$0xff]
    %v1299 = vld [vmem:[#allocation5 + $0x1ab8] sm:$0xff]
    %v1300 = vld [vmem:[#allocation5 + $0x1ac0] sm:$0xff]
    %v1301 = vld [vmem:[#allocation5 + $0x1ac8] sm:$0xff]
    %v1302 = vld [vmem:[#allocation5 + $0x1ad0] sm:$0xff]
    %v1303 = vld [vmem:[#allocation5 + $0x1ad8] sm:$0xff]
    %v1304 = vld [vmem:[#allocation5 + $0x1ae0] sm:$0xff]
    %v1305 = vld [vmem:[#allocation5 + $0x1ae8] sm:$0xff]
    %v1306 = vld [vmem:[#allocation5 + $0x1af0] sm:$0xff]
    %v1307 = vld [vmem:[#allocation5 + $0x1af8] sm:$0xff]
    %v1308 = vld [vmem:[#allocation5 + $0x1b00] sm:$0xff]
    %v1309 = vld [vmem:[#allocation5 + $0x1b08] sm:$0xff]
    %v1310 = vld [vmem:[#allocation5 + $0x1b10] sm:$0xff]
    %v1311 = vld [vmem:[#allocation5 + $0x1b18] sm:$0xff]
    %v1312 = vld [vmem:[#allocation5 + $0x1b20] sm:$0xff]
    %v1313 = vld [vmem:[#allocation5 + $0x1b28] sm:$0xff]
    %v1314 = vld [vmem:[#allocation5 + $0x1b30] sm:$0xff]
    %v1315 = vld [vmem:[#allocation5 + $0x1b38] sm:$0xff]
    %v1316 = vld [vmem:[#allocation5 + $0x1b40] sm:$0xff]
    %v1317 = vld [vmem:[#allocation5 + $0x1b48] sm:$0xff]
    %v1318 = vld [vmem:[#allocation5 + $0x1b50] sm:$0xff]
    %v1319 = vld [vmem:[#allocation5 + $0x1b58] sm:$0xff]
    %v1320 = vld [vmem:[#allocation5 + $0x1b60] sm:$0xff]
    %v1321 = vld [vmem:[#allocation5 + $0x1b68] sm:$0xff]
    %v1322 = vld [vmem:[#allocation5 + $0x1b70] sm:$0xff]
    %v1323 = vld [vmem:[#allocation5 + $0x1b78] sm:$0xff]
    %v1324 = vld [vmem:[#allocation5 + $0x1b80] sm:$0xff]
    %v1325 = vld [vmem:[#allocation5 + $0x1b88] sm:$0xff]
    %v1326 = vld [vmem:[#allocation5 + $0x1b90] sm:$0xff]
    %v1327 = vld [vmem:[#allocation5 + $0x1b98] sm:$0xff]
    %v1328 = vld [vmem:[#allocation5 + $0x1ba0] sm:$0xff]
    %v1329 = vld [vmem:[#allocation5 + $0x1ba8] sm:$0xff]
    %v1330 = vld [vmem:[#allocation5 + $0x1bb0] sm:$0xff]
    %v1331 = vld [vmem:[#allocation5 + $0x1bb8] sm:$0xff]
    %v1332 = vld [vmem:[#allocation5 + $0x1bc0] sm:$0xff]
    %v1333 = vld [vmem:[#allocation5 + $0x1bc8] sm:$0xff]
    %v1334 = vld [vmem:[#allocation5 + $0x1bd0] sm:$0xff]
    %v1335 = vld [vmem:[#allocation5 + $0x1bd8] sm:$0xff]
    %v1336 = vld [vmem:[#allocation5 + $0x1be0] sm:$0xff]
    %v1337 = vld [vmem:[#allocation5 + $0x1be8] sm:$0xff]
    %v1338 = vld [vmem:[#allocation5 + $0x1bf0] sm:$0xff]
    %v1339 = vld [vmem:[#allocation5 + $0x1bf8] sm:$0xff]
    %v1340 = vld [vmem:[#allocation5 + $0x1c00] sm:$0xff]
    %v1341 = vld [vmem:[#allocation5 + $0x1c08] sm:$0xff]
    %v1342 = vld [vmem:[#allocation5 + $0x1c10] sm:$0xff]
    %v1343 = vld [vmem:[#allocation5 + $0x1c18] sm:$0xff]
    %v1344 = vld [vmem:[#allocation5 + $0x1c20] sm:$0xff]
    %v1345 = vld [vmem:[#allocation5 + $0x1c28] sm:$0xff]
    %v1346 = vld [vmem:[#allocation5 + $0x1c30] sm:$0xff]
    %v1347 = vld [vmem:[#allocation5 + $0x1c38] sm:$0xff]
    %v1348 = vld [vmem:[#allocation5 + $0x1c40] sm:$0xff]
    %v1349 = vld [vmem:[#allocation5 + $0x1c48] sm:$0xff]
    %v1350 = vld [vmem:[#allocation5 + $0x1c50] sm:$0xff]
    %v1351 = vld [vmem:[#allocation5 + $0x1c58] sm:$0xff]
    %v1352 = vld [vmem:[#allocation5 + $0x1c60] sm:$0xff]
    %v1353 = vld [vmem:[#allocation5 + $0x1c68] sm:$0xff]
    %v1354 = vld [vmem:[#allocation5 + $0x1c70] sm:$0xff]
    %v1355 = vld [vmem:[#allocation5 + $0x1c78] sm:$0xff]
    %v1356 = vld [vmem:[#allocation5 + $0x1c80] sm:$0xff]
    %v1357 = vld [vmem:[#allocation5 + $0x1c88] sm:$0xff]
    %v1358 = vld [vmem:[#allocation5 + $0x1c90] sm:$0xff]
    %v1359 = vld [vmem:[#allocation5 + $0x1c98] sm:$0xff]
    %v1360 = vld [vmem:[#allocation5 + $0x1ca0] sm:$0xff]
    %v1361 = vld [vmem:[#allocation5 + $0x1ca8] sm:$0xff]
    %v1362 = vld [vmem:[#allocation5 + $0x1cb0] sm:$0xff]
    %v1363 = vld [vmem:[#allocation5 + $0x1cb8] sm:$0xff]
    %v1364 = vld [vmem:[#allocation5 + $0x1cc0] sm:$0xff]
    %v1365 = vld [vmem:[#allocation5 + $0x1cc8] sm:$0xff]
    %v1366 = vld [vmem:[#allocation5 + $0x1cd0] sm:$0xff]
    %v1367 = vld [vmem:[#allocation5 + $0x1cd8] sm:$0xff]
    %v1368 = vld [vmem:[#allocation5 + $0x1ce0] sm:$0xff]
    %v1369 = vld [vmem:[#allocation5 + $0x1ce8] sm:$0xff]
    %v1370 = vld [vmem:[#allocation5 + $0x1cf0] sm:$0xff]
    %v1371 = vld [vmem:[#allocation5 + $0x1cf8] sm:$0xff]
    %v1372 = vld [vmem:[#allocation5 + $0x1d00] sm:$0xff]
    %v1373 = vld [vmem:[#allocation5 + $0x1d08] sm:$0xff]
    %v1374 = vld [vmem:[#allocation5 + $0x1d10] sm:$0xff]
    %v1375 = vld [vmem:[#allocation5 + $0x1d18] sm:$0xff]
    %v1376 = vld [vmem:[#allocation5 + $0x1d20] sm:$0xff]
    %v1377 = vld [vmem:[#allocation5 + $0x1d28] sm:$0xff]
    %v1378 = vld [vmem:[#allocation5 + $0x1d30] sm:$0xff]
    %v1379 = vld [vmem:[#allocation5 + $0x1d38] sm:$0xff]
    %v1380 = vld [vmem:[#allocation5 + $0x1d40] sm:$0xff]
    %v1381 = vld [vmem:[#allocation5 + $0x1d48] sm:$0xff]
    %v1382 = vld [vmem:[#allocation5 + $0x1d50] sm:$0xff]
    %v1383 = vld [vmem:[#allocation5 + $0x1d58] sm:$0xff]
    %v1384 = vld [vmem:[#allocation5 + $0x1d60] sm:$0xff]
    %v1385 = vld [vmem:[#allocation5 + $0x1d68] sm:$0xff]
    %v1386 = vld [vmem:[#allocation5 + $0x1d70] sm:$0xff]
    %v1387 = vld [vmem:[#allocation5 + $0x1d78] sm:$0xff]
    %v1388 = vld [vmem:[#allocation5 + $0x1d80] sm:$0xff]
    %v1389 = vld [vmem:[#allocation5 + $0x1d88] sm:$0xff]
    %v1390 = vld [vmem:[#allocation5 + $0x1d90] sm:$0xff]
    %v1391 = vld [vmem:[#allocation5 + $0x1d98] sm:$0xff]
    %v1392 = vld [vmem:[#allocation5 + $0x1da0] sm:$0xff]
    %v1393 = vld [vmem:[#allocation5 + $0x1da8] sm:$0xff]
    %v1394 = vld [vmem:[#allocation5 + $0x1db0] sm:$0xff]
    %v1395 = vld [vmem:[#allocation5 + $0x1db8] sm:$0xff]
    %v1396 = vld [vmem:[#allocation5 + $0x1dc0] sm:$0xff]
    %v1397 = vld [vmem:[#allocation5 + $0x1dc8] sm:$0xff]
    %v1398 = vld [vmem:[#allocation5 + $0x1dd0] sm:$0xff]
    %v1399 = vld [vmem:[#allocation5 + $0x1dd8] sm:$0xff]
    %v1400 = vld [vmem:[#allocation5 + $0x1de0] sm:$0xff]
    %v1401 = vld [vmem:[#allocation5 + $0x1de8] sm:$0xff]
    %v1402 = vld [vmem:[#allocation5 + $0x1df0] sm:$0xff]
    %v1403 = vld [vmem:[#allocation5 + $0x1df8] sm:$0xff]
    %v1404 = vld [vmem:[#allocation5 + $0x1e00] sm:$0xff]
    %v1405 = vld [vmem:[#allocation5 + $0x1e08] sm:$0xff]
    %v1406 = vld [vmem:[#allocation5 + $0x1e10] sm:$0xff]
    %v1407 = vld [vmem:[#allocation5 + $0x1e18] sm:$0xff]
    %v1408 = vld [vmem:[#allocation5 + $0x1e20] sm:$0xff]
    %v1409 = vld [vmem:[#allocation5 + $0x1e28] sm:$0xff]
    %v1410 = vld [vmem:[#allocation5 + $0x1e30] sm:$0xff]
    %v1411 = vld [vmem:[#allocation5 + $0x1e38] sm:$0xff]
    %v1412 = vld [vmem:[#allocation5 + $0x1e40] sm:$0xff]
    %v1413 = vld [vmem:[#allocation5 + $0x1e48] sm:$0xff]
    %v1414 = vld [vmem:[#allocation5 + $0x1e50] sm:$0xff]
    %v1415 = vld [vmem:[#allocation5 + $0x1e58] sm:$0xff]
    %v1416 = vld [vmem:[#allocation5 + $0x1e60] sm:$0xff]
    %v1417 = vld [vmem:[#allocation5 + $0x1e68] sm:$0xff]
    %v1418 = vld [vmem:[#allocation5 + $0x1e70] sm:$0xff]
    %v1419 = vld [vmem:[#allocation5 + $0x1e78] sm:$0xff]
    %v1420 = vld [vmem:[#allocation5 + $0x1e80] sm:$0xff]
    %v1421 = vld [vmem:[#allocation5 + $0x1e88] sm:$0xff]
    %v1422 = vld [vmem:[#allocation5 + $0x1e90] sm:$0xff]
    %v1423 = vld [vmem:[#allocation5 + $0x1e98] sm:$0xff]
    %v1424 = vld [vmem:[#allocation5 + $0x1ea0] sm:$0xff]
    %v1425 = vld [vmem:[#allocation5 + $0x1ea8] sm:$0xff]
    %v1426 = vld [vmem:[#allocation5 + $0x1eb0] sm:$0xff]
    %v1427 = vld [vmem:[#allocation5 + $0x1eb8] sm:$0xff]
    %v1428 = vld [vmem:[#allocation5 + $0x1ec0] sm:$0xff]
    %v1429 = vld [vmem:[#allocation5 + $0x1ec8] sm:$0xff]
    %v1430 = vld [vmem:[#allocation5 + $0x1ed0] sm:$0xff]
    %v1431 = vld [vmem:[#allocation5 + $0x1ed8] sm:$0xff]
    %v1432 = vld [vmem:[#allocation5 + $0x1ee0] sm:$0xff]
    %v1433 = vld [vmem:[#allocation5 + $0x1ee8] sm:$0xff]
    %v1434 = vld [vmem:[#allocation5 + $0x1ef0] sm:$0xff]
    %v1435 = vld [vmem:[#allocation5 + $0x1ef8] sm:$0xff]
    %v1436 = vld [vmem:[#allocation5 + $0x1f00] sm:$0xff]
    %v1437 = vld [vmem:[#allocation5 + $0x1f08] sm:$0xff]
    %v1438 = vld [vmem:[#allocation5 + $0x1f10] sm:$0xff]
    %v1439 = vld [vmem:[#allocation5 + $0x1f18] sm:$0xff]
    %v1440 = vld [vmem:[#allocation5 + $0x1f20] sm:$0xff]
    %v1441 = vld [vmem:[#allocation5 + $0x1f28] sm:$0xff]
    %v1442 = vld [vmem:[#allocation5 + $0x1f30] sm:$0xff]
    %v1443 = vld [vmem:[#allocation5 + $0x1f38] sm:$0xff]
    %v1444 = vld [vmem:[#allocation5 + $0x1f40] sm:$0xff]
    %v1445 = vld [vmem:[#allocation5 + $0x1f48] sm:$0xff]
    %v1446 = vld [vmem:[#allocation5 + $0x1f50] sm:$0xff]
    %v1447 = vld [vmem:[#allocation5 + $0x1f58] sm:$0xff]
    %v1448 = vld [vmem:[#allocation5 + $0x1f60] sm:$0xff]
    %v1449 = vld [vmem:[#allocation5 + $0x1f68] sm:$0xff]
    %v1450 = vld [vmem:[#allocation5 + $0x1f70] sm:$0xff]
    %v1451 = vld [vmem:[#allocation5 + $0x1f78] sm:$0xff]
    %v1452 = vld [vmem:[#allocation5 + $0x1f80] sm:$0xff]
    %v1453 = vld [vmem:[#allocation5 + $0x1f88] sm:$0xff]
    %v1454 = vld [vmem:[#allocation5 + $0x1f90] sm:$0xff]
    %v1455 = vld [vmem:[#allocation5 + $0x1f98] sm:$0xff]
    %v1456 = vld [vmem:[#allocation5 + $0x1fa0] sm:$0xff]
    %v1457 = vld [vmem:[#allocation5 + $0x1fa8] sm:$0xff]
    %v1458 = vld [vmem:[#allocation5 + $0x1fb0] sm:$0xff]
    %v1459 = vld [vmem:[#allocation5 + $0x1fb8] sm:$0xff]
    %v1460 = vld [vmem:[#allocation5 + $0x1fc0] sm:$0xff]
    %v1461 = vld [vmem:[#allocation5 + $0x1fc8] sm:$0xff]
    %v1462 = vld [vmem:[#allocation5 + $0x1fd0] sm:$0xff]
    %v1463 = vld [vmem:[#allocation5 + $0x1fd8] sm:$0xff]
    %v1464 = vld [vmem:[#allocation5 + $0x1fe0] sm:$0xff]
    %v1465 = vld [vmem:[#allocation5 + $0x1fe8] sm:$0xff]
    %v1466 = vld [vmem:[#allocation5 + $0x1ff0] sm:$0xff]
    %v1467 = vld [vmem:[#allocation5 + $0x1ff8] sm:$0xff]
    %v1468 = vld [vmem:[#allocation7] sm:$0xf]
    %v1470 = vperm.slane %v1468, 0
    %v1471 = vperm.slane %v1468, 1
    %v1472 = vperm.slane %v1468, 2
    %v1473 = vperm.slane %v1468, 3
    %v2502 = vunpack.c.l.b16 %v444
    %v2503 = vunpack.c.h.b16 %v444
    %v2504 = vunpack.c.l.b16 %v445
    %v2505 = vunpack.c.h.b16 %v445
    %v2506 = vunpack.c.l.b16 %v446
    %v2507 = vunpack.c.h.b16 %v446
    %v2508 = vunpack.c.l.b16 %v447
    %v2509 = vunpack.c.h.b16 %v447
    %v2510 = vunpack.c.l.b16 %v448
    %v2511 = vunpack.c.h.b16 %v448
    %v2512 = vunpack.c.l.b16 %v449
    %v2513 = vunpack.c.h.b16 %v449
    %v2514 = vunpack.c.l.b16 %v450
    %v2515 = vunpack.c.h.b16 %v450
    %v2516 = vunpack.c.l.b16 %v451
    %v2517 = vunpack.c.h.b16 %v451
    %v2518 = vunpack.c.l.b16 %v452
    %v2519 = vunpack.c.h.b16 %v452
    %v2520 = vunpack.c.l.b16 %v453
    %v2521 = vunpack.c.h.b16 %v453
    %v2522 = vunpack.c.l.b16 %v454
    %v2523 = vunpack.c.h.b16 %v454
    %v2524 = vunpack.c.l.b16 %v455
    %v2525 = vunpack.c.h.b16 %v455
    %v2526 = vunpack.c.l.b16 %v456
    %v2527 = vunpack.c.h.b16 %v456
    %v2528 = vunpack.c.l.b16 %v457
    %v2529 = vunpack.c.h.b16 %v457
    %v2530 = vunpack.c.l.b16 %v458
    %v2531 = vunpack.c.h.b16 %v458
    %v2532 = vunpack.c.l.b16 %v459
    %v2533 = vunpack.c.h.b16 %v459
    %v2534 = vunpack.c.l.b16 %v460
    %v2535 = vunpack.c.h.b16 %v460
    %v2536 = vunpack.c.l.b16 %v461
    %v2537 = vunpack.c.h.b16 %v461
    %v2538 = vunpack.c.l.b16 %v462
    %v2539 = vunpack.c.h.b16 %v462
    %v2540 = vunpack.c.l.b16 %v463
    %v2541 = vunpack.c.h.b16 %v463
    %v2542 = vunpack.c.l.b16 %v464
    %v2543 = vunpack.c.h.b16 %v464
    %v2544 = vunpack.c.l.b16 %v465
    %v2545 = vunpack.c.h.b16 %v465
    %v2546 = vunpack.c.l.b16 %v466
    %v2547 = vunpack.c.h.b16 %v466
    %v2548 = vunpack.c.l.b16 %v467
    %v2549 = vunpack.c.h.b16 %v467
    %v2550 = vunpack.c.l.b16 %v468
    %v2551 = vunpack.c.h.b16 %v468
    %v2552 = vunpack.c.l.b16 %v469
    %v2553 = vunpack.c.h.b16 %v469
    %v2554 = vunpack.c.l.b16 %v470
    %v2555 = vunpack.c.h.b16 %v470
    %v2556 = vunpack.c.l.b16 %v471
    %v2557 = vunpack.c.h.b16 %v471
    %v2558 = vunpack.c.l.b16 %v472
    %v2559 = vunpack.c.h.b16 %v472
    %v2560 = vunpack.c.l.b16 %v473
    %v2561 = vunpack.c.h.b16 %v473
    %v2562 = vunpack.c.l.b16 %v474
    %v2563 = vunpack.c.h.b16 %v474
    %v2564 = vunpack.c.l.b16 %v475
    %v2565 = vunpack.c.h.b16 %v475
    %v2566 = vunpack.c.l.b16 %v476
    %v2567 = vunpack.c.h.b16 %v476
    %v2568 = vunpack.c.l.b16 %v477
    %v2569 = vunpack.c.h.b16 %v477
    %v2570 = vunpack.c.l.b16 %v478
    %v2571 = vunpack.c.h.b16 %v478
    %v2572 = vunpack.c.l.b16 %v479
    %v2573 = vunpack.c.h.b16 %v479
    %v2574 = vunpack.c.l.b16 %v480
    %v2575 = vunpack.c.h.b16 %v480
    %v2576 = vunpack.c.l.b16 %v481
    %v2577 = vunpack.c.h.b16 %v481
    %v2578 = vunpack.c.l.b16 %v482
    %v2579 = vunpack.c.h.b16 %v482
    %v2580 = vunpack.c.l.b16 %v483
    %v2581 = vunpack.c.h.b16 %v483
    %v2582 = vunpack.c.l.b16 %v484
    %v2583 = vunpack.c.h.b16 %v484
    %v2584 = vunpack.c.l.b16 %v485
    %v2585 = vunpack.c.h.b16 %v485
    %v2586 = vunpack.c.l.b16 %v486
    %v2587 = vunpack.c.h.b16 %v486
    %v2588 = vunpack.c.l.b16 %v487
    %v2589 = vunpack.c.h.b16 %v487
    %v2590 = vunpack.c.l.b16 %v488
    %v2591 = vunpack.c.h.b16 %v488
    %v2592 = vunpack.c.l.b16 %v489
    %v2593 = vunpack.c.h.b16 %v489
    %v2594 = vunpack.c.l.b16 %v490
    %v2595 = vunpack.c.h.b16 %v490
    %v2596 = vunpack.c.l.b16 %v491
    %v2597 = vunpack.c.h.b16 %v491
    %v2598 = vunpack.c.l.b16 %v492
    %v2599 = vunpack.c.h.b16 %v492
    %v2600 = vunpack.c.l.b16 %v493
    %v2601 = vunpack.c.h.b16 %v493
    %v2602 = vunpack.c.l.b16 %v494
    %v2603 = vunpack.c.h.b16 %v494
    %v2604 = vunpack.c.l.b16 %v495
    %v2605 = vunpack.c.h.b16 %v495
    %v2606 = vunpack.c.l.b16 %v496
    %v2607 = vunpack.c.h.b16 %v496
    %v2608 = vunpack.c.l.b16 %v497
    %v2609 = vunpack.c.h.b16 %v497
    %v2610 = vunpack.c.l.b16 %v498
    %v2611 = vunpack.c.h.b16 %v498
    %v2612 = vunpack.c.l.b16 %v499
    %v2613 = vunpack.c.h.b16 %v499
    %v2614 = vunpack.c.l.b16 %v500
    %v2615 = vunpack.c.h.b16 %v500
    %v2616 = vunpack.c.l.b16 %v501
    %v2617 = vunpack.c.h.b16 %v501
    %v2618 = vunpack.c.l.b16 %v502
    %v2619 = vunpack.c.h.b16 %v502
    %v2620 = vunpack.c.l.b16 %v503
    %v2621 = vunpack.c.h.b16 %v503
    %v2622 = vunpack.c.l.b16 %v504
    %v2623 = vunpack.c.h.b16 %v504
    %v2624 = vunpack.c.l.b16 %v505
    %v2625 = vunpack.c.h.b16 %v505
    %v2626 = vunpack.c.l.b16 %v506
    %v2627 = vunpack.c.h.b16 %v506
    %v2628 = vunpack.c.l.b16 %v507
    %v2629 = vunpack.c.h.b16 %v507
    %v2630 = vunpack.c.l.b16 %v508
    %v2631 = vunpack.c.h.b16 %v508
    %v2632 = vunpack.c.l.b16 %v509
    %v2633 = vunpack.c.h.b16 %v509
    %v2634 = vunpack.c.l.b16 %v510
    %v2635 = vunpack.c.h.b16 %v510
    %v2636 = vunpack.c.l.b16 %v511
    %v2637 = vunpack.c.h.b16 %v511
    %v2638 = vunpack.c.l.b16 %v512
    %v2639 = vunpack.c.h.b16 %v512
    %v2640 = vunpack.c.l.b16 %v513
    %v2641 = vunpack.c.h.b16 %v513
    %v2642 = vunpack.c.l.b16 %v514
    %v2643 = vunpack.c.h.b16 %v514
    %v2644 = vunpack.c.l.b16 %v515
    %v2645 = vunpack.c.h.b16 %v515
    %v2646 = vunpack.c.l.b16 %v516
    %v2647 = vunpack.c.h.b16 %v516
    %v2648 = vunpack.c.l.b16 %v517
    %v2649 = vunpack.c.h.b16 %v517
    %v2650 = vunpack.c.l.b16 %v518
    %v2651 = vunpack.c.h.b16 %v518
    %v2652 = vunpack.c.l.b16 %v519
    %v2653 = vunpack.c.h.b16 %v519
    %v2654 = vunpack.c.l.b16 %v520
    %v2655 = vunpack.c.h.b16 %v520
    %v2656 = vunpack.c.l.b16 %v521
    %v2657 = vunpack.c.h.b16 %v521
    %v2658 = vunpack.c.l.b16 %v522
    %v2659 = vunpack.c.h.b16 %v522
    %v2660 = vunpack.c.l.b16 %v523
    %v2661 = vunpack.c.h.b16 %v523
    %v2662 = vunpack.c.l.b16 %v524
    %v2663 = vunpack.c.h.b16 %v524
    %v2664 = vunpack.c.l.b16 %v525
    %v2665 = vunpack.c.h.b16 %v525
    %v2666 = vunpack.c.l.b16 %v526
    %v2667 = vunpack.c.h.b16 %v526
    %v2668 = vunpack.c.l.b16 %v527
    %v2669 = vunpack.c.h.b16 %v527
    %v2670 = vunpack.c.l.b16 %v528
    %v2671 = vunpack.c.h.b16 %v528
    %v2672 = vunpack.c.l.b16 %v529
    %v2673 = vunpack.c.h.b16 %v529
    %v2674 = vunpack.c.l.b16 %v530
    %v2675 = vunpack.c.h.b16 %v530
    %v2676 = vunpack.c.l.b16 %v531
    %v2677 = vunpack.c.h.b16 %v531
    %v2678 = vunpack.c.l.b16 %v532
    %v2679 = vunpack.c.h.b16 %v532
    %v2680 = vunpack.c.l.b16 %v533
    %v2681 = vunpack.c.h.b16 %v533
    %v2682 = vunpack.c.l.b16 %v534
    %v2683 = vunpack.c.h.b16 %v534
    %v2684 = vunpack.c.l.b16 %v535
    %v2685 = vunpack.c.h.b16 %v535
    %v2686 = vunpack.c.l.b16 %v536
    %v2687 = vunpack.c.h.b16 %v536
    %v2688 = vunpack.c.l.b16 %v537
    %v2689 = vunpack.c.h.b16 %v537
    %v2690 = vunpack.c.l.b16 %v538
    %v2691 = vunpack.c.h.b16 %v538
    %v2692 = vunpack.c.l.b16 %v539
    %v2693 = vunpack.c.h.b16 %v539
    %v2694 = vunpack.c.l.b16 %v540
    %v2695 = vunpack.c.h.b16 %v540
    %v2696 = vunpack.c.l.b16 %v541
    %v2697 = vunpack.c.h.b16 %v541
    %v2698 = vunpack.c.l.b16 %v542
    %v2699 = vunpack.c.h.b16 %v542
    %v2700 = vunpack.c.l.b16 %v543
    %v2701 = vunpack.c.h.b16 %v543
    %v2702 = vunpack.c.l.b16 %v544
    %v2703 = vunpack.c.h.b16 %v544
    %v2704 = vunpack.c.l.b16 %v545
    %v2705 = vunpack.c.h.b16 %v545
    %v2706 = vunpack.c.l.b16 %v546
    %v2707 = vunpack.c.h.b16 %v546
    %v2708 = vunpack.c.l.b16 %v547
    %v2709 = vunpack.c.h.b16 %v547
    %v2710 = vunpack.c.l.b16 %v548
    %v2711 = vunpack.c.h.b16 %v548
    %v2712 = vunpack.c.l.b16 %v549
    %v2713 = vunpack.c.h.b16 %v549
    %v2714 = vunpack.c.l.b16 %v550
    %v2715 = vunpack.c.h.b16 %v550
    %v2716 = vunpack.c.l.b16 %v551
    %v2717 = vunpack.c.h.b16 %v551
    %v2718 = vunpack.c.l.b16 %v552
    %v2719 = vunpack.c.h.b16 %v552
    %v2720 = vunpack.c.l.b16 %v553
    %v2721 = vunpack.c.h.b16 %v553
    %v2722 = vunpack.c.l.b16 %v554
    %v2723 = vunpack.c.h.b16 %v554
    %v2724 = vunpack.c.l.b16 %v555
    %v2725 = vunpack.c.h.b16 %v555
    %v2726 = vunpack.c.l.b16 %v556
    %v2727 = vunpack.c.h.b16 %v556
    %v2728 = vunpack.c.l.b16 %v557
    %v2729 = vunpack.c.h.b16 %v557
    %v2730 = vunpack.c.l.b16 %v558
    %v2731 = vunpack.c.h.b16 %v558
    %v2732 = vunpack.c.l.b16 %v559
    %v2733 = vunpack.c.h.b16 %v559
    %v2734 = vunpack.c.l.b16 %v560
    %v2735 = vunpack.c.h.b16 %v560
    %v2736 = vunpack.c.l.b16 %v561
    %v2737 = vunpack.c.h.b16 %v561
    %v2738 = vunpack.c.l.b16 %v562
    %v2739 = vunpack.c.h.b16 %v562
    %v2740 = vunpack.c.l.b16 %v563
    %v2741 = vunpack.c.h.b16 %v563
    %v2742 = vunpack.c.l.b16 %v564
    %v2743 = vunpack.c.h.b16 %v564
    %v2744 = vunpack.c.l.b16 %v565
    %v2745 = vunpack.c.h.b16 %v565
    %v2746 = vunpack.c.l.b16 %v566
    %v2747 = vunpack.c.h.b16 %v566
    %v2748 = vunpack.c.l.b16 %v567
    %v2749 = vunpack.c.h.b16 %v567
    %v2750 = vunpack.c.l.b16 %v568
    %v2751 = vunpack.c.h.b16 %v568
    %v2752 = vunpack.c.l.b16 %v569
    %v2753 = vunpack.c.h.b16 %v569
    %v2754 = vunpack.c.l.b16 %v570
    %v2755 = vunpack.c.h.b16 %v570
    %v2756 = vunpack.c.l.b16 %v571
    %v2757 = vunpack.c.h.b16 %v571
    %v2758 = vunpack.c.l.b16 %v572
    %v2759 = vunpack.c.h.b16 %v572
    %v2760 = vunpack.c.l.b16 %v573
    %v2761 = vunpack.c.h.b16 %v573
    %v2762 = vunpack.c.l.b16 %v574
    %v2763 = vunpack.c.h.b16 %v574
    %v2764 = vunpack.c.l.b16 %v575
    %v2765 = vunpack.c.h.b16 %v575
    %v2766 = vunpack.c.l.b16 %v576
    %v2767 = vunpack.c.h.b16 %v576
    %v2768 = vunpack.c.l.b16 %v577
    %v2769 = vunpack.c.h.b16 %v577
    %v2770 = vunpack.c.l.b16 %v578
    %v2771 = vunpack.c.h.b16 %v578
    %v2772 = vunpack.c.l.b16 %v579
    %v2773 = vunpack.c.h.b16 %v579
    %v2774 = vunpack.c.l.b16 %v580
    %v2775 = vunpack.c.h.b16 %v580
    %v2776 = vunpack.c.l.b16 %v581
    %v2777 = vunpack.c.h.b16 %v581
    %v2778 = vunpack.c.l.b16 %v582
    %v2779 = vunpack.c.h.b16 %v582
    %v2780 = vunpack.c.l.b16 %v583
    %v2781 = vunpack.c.h.b16 %v583
    %v2782 = vunpack.c.l.b16 %v584
    %v2783 = vunpack.c.h.b16 %v584
    %v2784 = vunpack.c.l.b16 %v585
    %v2785 = vunpack.c.h.b16 %v585
    %v2786 = vunpack.c.l.b16 %v586
    %v2787 = vunpack.c.h.b16 %v586
    %v2788 = vunpack.c.l.b16 %v587
    %v2789 = vunpack.c.h.b16 %v587
    %v2790 = vunpack.c.l.b16 %v588
    %v2791 = vunpack.c.h.b16 %v588
    %v2792 = vunpack.c.l.b16 %v589
    %v2793 = vunpack.c.h.b16 %v589
    %v2794 = vunpack.c.l.b16 %v590
    %v2795 = vunpack.c.h.b16 %v590
    %v2796 = vunpack.c.l.b16 %v591
    %v2797 = vunpack.c.h.b16 %v591
    %v2798 = vunpack.c.l.b16 %v592
    %v2799 = vunpack.c.h.b16 %v592
    %v2800 = vunpack.c.l.b16 %v593
    %v2801 = vunpack.c.h.b16 %v593
    %v2802 = vunpack.c.l.b16 %v594
    %v2803 = vunpack.c.h.b16 %v594
    %v2804 = vunpack.c.l.b16 %v595
    %v2805 = vunpack.c.h.b16 %v595
    %v2806 = vunpack.c.l.b16 %v596
    %v2807 = vunpack.c.h.b16 %v596
    %v2808 = vunpack.c.l.b16 %v597
    %v2809 = vunpack.c.h.b16 %v597
    %v2810 = vunpack.c.l.b16 %v598
    %v2811 = vunpack.c.h.b16 %v598
    %v2812 = vunpack.c.l.b16 %v599
    %v2813 = vunpack.c.h.b16 %v599
    %v2814 = vunpack.c.l.b16 %v600
    %v2815 = vunpack.c.h.b16 %v600
    %v2816 = vunpack.c.l.b16 %v601
    %v2817 = vunpack.c.h.b16 %v601
    %v2818 = vunpack.c.l.b16 %v602
    %v2819 = vunpack.c.h.b16 %v602
    %v2820 = vunpack.c.l.b16 %v603
    %v2821 = vunpack.c.h.b16 %v603
    %v2822 = vunpack.c.l.b16 %v604
    %v2823 = vunpack.c.h.b16 %v604
    %v2824 = vunpack.c.l.b16 %v605
    %v2825 = vunpack.c.h.b16 %v605
    %v2826 = vunpack.c.l.b16 %v606
    %v2827 = vunpack.c.h.b16 %v606
    %v2828 = vunpack.c.l.b16 %v607
    %v2829 = vunpack.c.h.b16 %v607
    %v2830 = vunpack.c.l.b16 %v608
    %v2831 = vunpack.c.h.b16 %v608
    %v2832 = vunpack.c.l.b16 %v609
    %v2833 = vunpack.c.h.b16 %v609
    %v2834 = vunpack.c.l.b16 %v610
    %v2835 = vunpack.c.h.b16 %v610
    %v2836 = vunpack.c.l.b16 %v611
    %v2837 = vunpack.c.h.b16 %v611
    %v2838 = vunpack.c.l.b16 %v612
    %v2839 = vunpack.c.h.b16 %v612
    %v2840 = vunpack.c.l.b16 %v613
    %v2841 = vunpack.c.h.b16 %v613
    %v2842 = vunpack.c.l.b16 %v614
    %v2843 = vunpack.c.h.b16 %v614
    %v2844 = vunpack.c.l.b16 %v615
    %v2845 = vunpack.c.h.b16 %v615
    %v2846 = vunpack.c.l.b16 %v616
    %v2847 = vunpack.c.h.b16 %v616
    %v2848 = vunpack.c.l.b16 %v617
    %v2849 = vunpack.c.h.b16 %v617
    %v2850 = vunpack.c.l.b16 %v618
    %v2851 = vunpack.c.h.b16 %v618
    %v2852 = vunpack.c.l.b16 %v619
    %v2853 = vunpack.c.h.b16 %v619
    %v2854 = vunpack.c.l.b16 %v620
    %v2855 = vunpack.c.h.b16 %v620
    %v2856 = vunpack.c.l.b16 %v621
    %v2857 = vunpack.c.h.b16 %v621
    %v2858 = vunpack.c.l.b16 %v622
    %v2859 = vunpack.c.h.b16 %v622
    %v2860 = vunpack.c.l.b16 %v623
    %v2861 = vunpack.c.h.b16 %v623
    %v2862 = vunpack.c.l.b16 %v624
    %v2863 = vunpack.c.h.b16 %v624
    %v2864 = vunpack.c.l.b16 %v625
    %v2865 = vunpack.c.h.b16 %v625
    %v2866 = vunpack.c.l.b16 %v626
    %v2867 = vunpack.c.h.b16 %v626
    %v2868 = vunpack.c.l.b16 %v627
    %v2869 = vunpack.c.h.b16 %v627
    %v2870 = vunpack.c.l.b16 %v628
    %v2871 = vunpack.c.h.b16 %v628
    %v2872 = vunpack.c.l.b16 %v629
    %v2873 = vunpack.c.h.b16 %v629
    %v2874 = vunpack.c.l.b16 %v630
    %v2875 = vunpack.c.h.b16 %v630
    %v2876 = vunpack.c.l.b16 %v631
    %v2877 = vunpack.c.h.b16 %v631
    %v2878 = vunpack.c.l.b16 %v632
    %v2879 = vunpack.c.h.b16 %v632
    %v2880 = vunpack.c.l.b16 %v633
    %v2881 = vunpack.c.h.b16 %v633
    %v2882 = vunpack.c.l.b16 %v634
    %v2883 = vunpack.c.h.b16 %v634
    %v2884 = vunpack.c.l.b16 %v635
    %v2885 = vunpack.c.h.b16 %v635
    %v2886 = vunpack.c.l.b16 %v636
    %v2887 = vunpack.c.h.b16 %v636
    %v2888 = vunpack.c.l.b16 %v637
    %v2889 = vunpack.c.h.b16 %v637
    %v2890 = vunpack.c.l.b16 %v638
    %v2891 = vunpack.c.h.b16 %v638
    %v2892 = vunpack.c.l.b16 %v639
    %v2893 = vunpack.c.h.b16 %v639
    %v2894 = vunpack.c.l.b16 %v640
    %v2895 = vunpack.c.h.b16 %v640
    %v2896 = vunpack.c.l.b16 %v641
    %v2897 = vunpack.c.h.b16 %v641
    %v2898 = vunpack.c.l.b16 %v642
    %v2899 = vunpack.c.h.b16 %v642
    %v2900 = vunpack.c.l.b16 %v643
    %v2901 = vunpack.c.h.b16 %v643
    %v2902 = vunpack.c.l.b16 %v644
    %v2903 = vunpack.c.h.b16 %v644
    %v2904 = vunpack.c.l.b16 %v645
    %v2905 = vunpack.c.h.b16 %v645
    %v2906 = vunpack.c.l.b16 %v646
    %v2907 = vunpack.c.h.b16 %v646
    %v2908 = vunpack.c.l.b16 %v647
    %v2909 = vunpack.c.h.b16 %v647
    %v2910 = vunpack.c.l.b16 %v648
    %v2911 = vunpack.c.h.b16 %v648
    %v2912 = vunpack.c.l.b16 %v649
    %v2913 = vunpack.c.h.b16 %v649
    %v2914 = vunpack.c.l.b16 %v650
    %v2915 = vunpack.c.h.b16 %v650
    %v2916 = vunpack.c.l.b16 %v651
    %v2917 = vunpack.c.h.b16 %v651
    %v2918 = vunpack.c.l.b16 %v652
    %v2919 = vunpack.c.h.b16 %v652
    %v2920 = vunpack.c.l.b16 %v653
    %v2921 = vunpack.c.h.b16 %v653
    %v2922 = vunpack.c.l.b16 %v654
    %v2923 = vunpack.c.h.b16 %v654
    %v2924 = vunpack.c.l.b16 %v655
    %v2925 = vunpack.c.h.b16 %v655
    %v2926 = vunpack.c.l.b16 %v656
    %v2927 = vunpack.c.h.b16 %v656
    %v2928 = vunpack.c.l.b16 %v657
    %v2929 = vunpack.c.h.b16 %v657
    %v2930 = vunpack.c.l.b16 %v658
    %v2931 = vunpack.c.h.b16 %v658
    %v2932 = vunpack.c.l.b16 %v659
    %v2933 = vunpack.c.h.b16 %v659
    %v2934 = vunpack.c.l.b16 %v660
    %v2935 = vunpack.c.h.b16 %v660
    %v2936 = vunpack.c.l.b16 %v661
    %v2937 = vunpack.c.h.b16 %v661
    %v2938 = vunpack.c.l.b16 %v662
    %v2939 = vunpack.c.h.b16 %v662
    %v2940 = vunpack.c.l.b16 %v663
    %v2941 = vunpack.c.h.b16 %v663
    %v2942 = vunpack.c.l.b16 %v664
    %v2943 = vunpack.c.h.b16 %v664
    %v2944 = vunpack.c.l.b16 %v665
    %v2945 = vunpack.c.h.b16 %v665
    %v2946 = vunpack.c.l.b16 %v666
    %v2947 = vunpack.c.h.b16 %v666
    %v2948 = vunpack.c.l.b16 %v667
    %v2949 = vunpack.c.h.b16 %v667
    %v2950 = vunpack.c.l.b16 %v668
    %v2951 = vunpack.c.h.b16 %v668
    %v2952 = vunpack.c.l.b16 %v669
    %v2953 = vunpack.c.h.b16 %v669
    %v2954 = vunpack.c.l.b16 %v670
    %v2955 = vunpack.c.h.b16 %v670
    %v2956 = vunpack.c.l.b16 %v671
    %v2957 = vunpack.c.h.b16 %v671
    %v2958 = vunpack.c.l.b16 %v672
    %v2959 = vunpack.c.h.b16 %v672
    %v2960 = vunpack.c.l.b16 %v673
    %v2961 = vunpack.c.h.b16 %v673
    %v2962 = vunpack.c.l.b16 %v674
    %v2963 = vunpack.c.h.b16 %v674
    %v2964 = vunpack.c.l.b16 %v675
    %v2965 = vunpack.c.h.b16 %v675
    %v2966 = vunpack.c.l.b16 %v676
    %v2967 = vunpack.c.h.b16 %v676
    %v2968 = vunpack.c.l.b16 %v677
    %v2969 = vunpack.c.h.b16 %v677
    %v2970 = vunpack.c.l.b16 %v678
    %v2971 = vunpack.c.h.b16 %v678
    %v2972 = vunpack.c.l.b16 %v679
    %v2973 = vunpack.c.h.b16 %v679
    %v2974 = vunpack.c.l.b16 %v680
    %v2975 = vunpack.c.h.b16 %v680
    %v2976 = vunpack.c.l.b16 %v681
    %v2977 = vunpack.c.h.b16 %v681
    %v2978 = vunpack.c.l.b16 %v682
    %v2979 = vunpack.c.h.b16 %v682
    %v2980 = vunpack.c.l.b16 %v683
    %v2981 = vunpack.c.h.b16 %v683
    %v2982 = vunpack.c.l.b16 %v684
    %v2983 = vunpack.c.h.b16 %v684
    %v2984 = vunpack.c.l.b16 %v685
    %v2985 = vunpack.c.h.b16 %v685
    %v2986 = vunpack.c.l.b16 %v686
    %v2987 = vunpack.c.h.b16 %v686
    %v2988 = vunpack.c.l.b16 %v687
    %v2989 = vunpack.c.h.b16 %v687
    %v2990 = vunpack.c.l.b16 %v688
    %v2991 = vunpack.c.h.b16 %v688
    %v2992 = vunpack.c.l.b16 %v689
    %v2993 = vunpack.c.h.b16 %v689
    %v2994 = vunpack.c.l.b16 %v690
    %v2995 = vunpack.c.h.b16 %v690
    %v2996 = vunpack.c.l.b16 %v691
    %v2997 = vunpack.c.h.b16 %v691
    %v2998 = vunpack.c.l.b16 %v692
    %v2999 = vunpack.c.h.b16 %v692
    %v3000 = vunpack.c.l.b16 %v693
    %v3001 = vunpack.c.h.b16 %v693
    %v3002 = vunpack.c.l.b16 %v694
    %v3003 = vunpack.c.h.b16 %v694
    %v3004 = vunpack.c.l.b16 %v695
    %v3005 = vunpack.c.h.b16 %v695
    %v3006 = vunpack.c.l.b16 %v696
    %v3007 = vunpack.c.h.b16 %v696
    %v3008 = vunpack.c.l.b16 %v697
    %v3009 = vunpack.c.h.b16 %v697
    %v3010 = vunpack.c.l.b16 %v698
    %v3011 = vunpack.c.h.b16 %v698
    %v3012 = vunpack.c.l.b16 %v699
    %v3013 = vunpack.c.h.b16 %v699
    %v3014 = vunpack.c.l.b16 %v700
    %v3015 = vunpack.c.h.b16 %v700
    %v3016 = vunpack.c.l.b16 %v701
    %v3017 = vunpack.c.h.b16 %v701
    %v3018 = vunpack.c.l.b16 %v702
    %v3019 = vunpack.c.h.b16 %v702
    %v3020 = vunpack.c.l.b16 %v703
    %v3021 = vunpack.c.h.b16 %v703
    %v3022 = vunpack.c.l.b16 %v704
    %v3023 = vunpack.c.h.b16 %v704
    %v3024 = vunpack.c.l.b16 %v705
    %v3025 = vunpack.c.h.b16 %v705
    %v3026 = vunpack.c.l.b16 %v706
    %v3027 = vunpack.c.h.b16 %v706
    %v3028 = vunpack.c.l.b16 %v707
    %v3029 = vunpack.c.h.b16 %v707
    %v3030 = vunpack.c.l.b16 %v708
    %v3031 = vunpack.c.h.b16 %v708
    %v3032 = vunpack.c.l.b16 %v709
    %v3033 = vunpack.c.h.b16 %v709
    %v3034 = vunpack.c.l.b16 %v710
    %v3035 = vunpack.c.h.b16 %v710
    %v3036 = vunpack.c.l.b16 %v711
    %v3037 = vunpack.c.h.b16 %v711
    %v3038 = vunpack.c.l.b16 %v712
    %v3039 = vunpack.c.h.b16 %v712
    %v3040 = vunpack.c.l.b16 %v713
    %v3041 = vunpack.c.h.b16 %v713
    %v3042 = vunpack.c.l.b16 %v714
    %v3043 = vunpack.c.h.b16 %v714
    %v3044 = vunpack.c.l.b16 %v715
    %v3045 = vunpack.c.h.b16 %v715
    %v3046 = vunpack.c.l.b16 %v716
    %v3047 = vunpack.c.h.b16 %v716
    %v3048 = vunpack.c.l.b16 %v717
    %v3049 = vunpack.c.h.b16 %v717
    %v3050 = vunpack.c.l.b16 %v718
    %v3051 = vunpack.c.h.b16 %v718
    %v3052 = vunpack.c.l.b16 %v719
    %v3053 = vunpack.c.h.b16 %v719
    %v3054 = vunpack.c.l.b16 %v720
    %v3055 = vunpack.c.h.b16 %v720
    %v3056 = vunpack.c.l.b16 %v721
    %v3057 = vunpack.c.h.b16 %v721
    %v3058 = vunpack.c.l.b16 %v722
    %v3059 = vunpack.c.h.b16 %v722
    %v3060 = vunpack.c.l.b16 %v723
    %v3061 = vunpack.c.h.b16 %v723
    %v3062 = vunpack.c.l.b16 %v724
    %v3063 = vunpack.c.h.b16 %v724
    %v3064 = vunpack.c.l.b16 %v725
    %v3065 = vunpack.c.h.b16 %v725
    %v3066 = vunpack.c.l.b16 %v726
    %v3067 = vunpack.c.h.b16 %v726
    %v3068 = vunpack.c.l.b16 %v727
    %v3069 = vunpack.c.h.b16 %v727
    %v3070 = vunpack.c.l.b16 %v728
    %v3071 = vunpack.c.h.b16 %v728
    %v3072 = vunpack.c.l.b16 %v729
    %v3073 = vunpack.c.h.b16 %v729
    %v3074 = vunpack.c.l.b16 %v730
    %v3075 = vunpack.c.h.b16 %v730
    %v3076 = vunpack.c.l.b16 %v731
    %v3077 = vunpack.c.h.b16 %v731
    %v3078 = vunpack.c.l.b16 %v732
    %v3079 = vunpack.c.h.b16 %v732
    %v3080 = vunpack.c.l.b16 %v733
    %v3081 = vunpack.c.h.b16 %v733
    %v3082 = vunpack.c.l.b16 %v734
    %v3083 = vunpack.c.h.b16 %v734
    %v3084 = vunpack.c.l.b16 %v735
    %v3085 = vunpack.c.h.b16 %v735
    %v3086 = vunpack.c.l.b16 %v736
    %v3087 = vunpack.c.h.b16 %v736
    %v3088 = vunpack.c.l.b16 %v737
    %v3089 = vunpack.c.h.b16 %v737
    %v3090 = vunpack.c.l.b16 %v738
    %v3091 = vunpack.c.h.b16 %v738
    %v3092 = vunpack.c.l.b16 %v739
    %v3093 = vunpack.c.h.b16 %v739
    %v3094 = vunpack.c.l.b16 %v740
    %v3095 = vunpack.c.h.b16 %v740
    %v3096 = vunpack.c.l.b16 %v741
    %v3097 = vunpack.c.h.b16 %v741
    %v3098 = vunpack.c.l.b16 %v742
    %v3099 = vunpack.c.h.b16 %v742
    %v3100 = vunpack.c.l.b16 %v743
    %v3101 = vunpack.c.h.b16 %v743
    %v3102 = vunpack.c.l.b16 %v744
    %v3103 = vunpack.c.h.b16 %v744
    %v3104 = vunpack.c.l.b16 %v745
    %v3105 = vunpack.c.h.b16 %v745
    %v3106 = vunpack.c.l.b16 %v746
    %v3107 = vunpack.c.h.b16 %v746
    %v3108 = vunpack.c.l.b16 %v747
    %v3109 = vunpack.c.h.b16 %v747
    %v3110 = vunpack.c.l.b16 %v748
    %v3111 = vunpack.c.h.b16 %v748
    %v3112 = vunpack.c.l.b16 %v749
    %v3113 = vunpack.c.h.b16 %v749
    %v3114 = vunpack.c.l.b16 %v750
    %v3115 = vunpack.c.h.b16 %v750
    %v3116 = vunpack.c.l.b16 %v751
    %v3117 = vunpack.c.h.b16 %v751
    %v3118 = vunpack.c.l.b16 %v752
    %v3119 = vunpack.c.h.b16 %v752
    %v3120 = vunpack.c.l.b16 %v753
    %v3121 = vunpack.c.h.b16 %v753
    %v3122 = vunpack.c.l.b16 %v754
    %v3123 = vunpack.c.h.b16 %v754
    %v3124 = vunpack.c.l.b16 %v755
    %v3125 = vunpack.c.h.b16 %v755
    %v3126 = vunpack.c.l.b16 %v756
    %v3127 = vunpack.c.h.b16 %v756
    %v3128 = vunpack.c.l.b16 %v757
    %v3129 = vunpack.c.h.b16 %v757
    %v3130 = vunpack.c.l.b16 %v758
    %v3131 = vunpack.c.h.b16 %v758
    %v3132 = vunpack.c.l.b16 %v759
    %v3133 = vunpack.c.h.b16 %v759
    %v3134 = vunpack.c.l.b16 %v760
    %v3135 = vunpack.c.h.b16 %v760
    %v3136 = vunpack.c.l.b16 %v761
    %v3137 = vunpack.c.h.b16 %v761
    %v3138 = vunpack.c.l.b16 %v762
    %v3139 = vunpack.c.h.b16 %v762
    %v3140 = vunpack.c.l.b16 %v763
    %v3141 = vunpack.c.h.b16 %v763
    %v3142 = vunpack.c.l.b16 %v764
    %v3143 = vunpack.c.h.b16 %v764
    %v3144 = vunpack.c.l.b16 %v765
    %v3145 = vunpack.c.h.b16 %v765
    %v3146 = vunpack.c.l.b16 %v766
    %v3147 = vunpack.c.h.b16 %v766
    %v3148 = vunpack.c.l.b16 %v767
    %v3149 = vunpack.c.h.b16 %v767
    %v3150 = vunpack.c.l.b16 %v768
    %v3151 = vunpack.c.h.b16 %v768
    %v3152 = vunpack.c.l.b16 %v769
    %v3153 = vunpack.c.h.b16 %v769
    %v3154 = vunpack.c.l.b16 %v770
    %v3155 = vunpack.c.h.b16 %v770
    %v3156 = vunpack.c.l.b16 %v771
    %v3157 = vunpack.c.h.b16 %v771
    %v3158 = vunpack.c.l.b16 %v772
    %v3159 = vunpack.c.h.b16 %v772
    %v3160 = vunpack.c.l.b16 %v773
    %v3161 = vunpack.c.h.b16 %v773
    %v3162 = vunpack.c.l.b16 %v774
    %v3163 = vunpack.c.h.b16 %v774
    %v3164 = vunpack.c.l.b16 %v775
    %v3165 = vunpack.c.h.b16 %v775
    %v3166 = vunpack.c.l.b16 %v776
    %v3167 = vunpack.c.h.b16 %v776
    %v3168 = vunpack.c.l.b16 %v777
    %v3169 = vunpack.c.h.b16 %v777
    %v3170 = vunpack.c.l.b16 %v778
    %v3171 = vunpack.c.h.b16 %v778
    %v3172 = vunpack.c.l.b16 %v779
    %v3173 = vunpack.c.h.b16 %v779
    %v3174 = vunpack.c.l.b16 %v780
    %v3175 = vunpack.c.h.b16 %v780
    %v3176 = vunpack.c.l.b16 %v781
    %v3177 = vunpack.c.h.b16 %v781
    %v3178 = vunpack.c.l.b16 %v782
    %v3179 = vunpack.c.h.b16 %v782
    %v3180 = vunpack.c.l.b16 %v783
    %v3181 = vunpack.c.h.b16 %v783
    %v3182 = vunpack.c.l.b16 %v784
    %v3183 = vunpack.c.h.b16 %v784
    %v3184 = vunpack.c.l.b16 %v785
    %v3185 = vunpack.c.h.b16 %v785
    %v3186 = vunpack.c.l.b16 %v786
    %v3187 = vunpack.c.h.b16 %v786
    %v3188 = vunpack.c.l.b16 %v787
    %v3189 = vunpack.c.h.b16 %v787
    %v3190 = vunpack.c.l.b16 %v788
    %v3191 = vunpack.c.h.b16 %v788
    %v3192 = vunpack.c.l.b16 %v789
    %v3193 = vunpack.c.h.b16 %v789
    %v3194 = vunpack.c.l.b16 %v790
    %v3195 = vunpack.c.h.b16 %v790
    %v3196 = vunpack.c.l.b16 %v791
    %v3197 = vunpack.c.h.b16 %v791
    %v3198 = vunpack.c.l.b16 %v792
    %v3199 = vunpack.c.h.b16 %v792
    %v3200 = vunpack.c.l.b16 %v793
    %v3201 = vunpack.c.h.b16 %v793
    %v3202 = vunpack.c.l.b16 %v794
    %v3203 = vunpack.c.h.b16 %v794
    %v3204 = vunpack.c.l.b16 %v795
    %v3205 = vunpack.c.h.b16 %v795
    %v3206 = vunpack.c.l.b16 %v796
    %v3207 = vunpack.c.h.b16 %v796
    %v3208 = vunpack.c.l.b16 %v797
    %v3209 = vunpack.c.h.b16 %v797
    %v3210 = vunpack.c.l.b16 %v798
    %v3211 = vunpack.c.h.b16 %v798
    %v3212 = vunpack.c.l.b16 %v799
    %v3213 = vunpack.c.h.b16 %v799
    %v3214 = vunpack.c.l.b16 %v800
    %v3215 = vunpack.c.h.b16 %v800
    %v3216 = vunpack.c.l.b16 %v801
    %v3217 = vunpack.c.h.b16 %v801
    %v3218 = vunpack.c.l.b16 %v802
    %v3219 = vunpack.c.h.b16 %v802
    %v3220 = vunpack.c.l.b16 %v803
    %v3221 = vunpack.c.h.b16 %v803
    %v3222 = vunpack.c.l.b16 %v804
    %v3223 = vunpack.c.h.b16 %v804
    %v3224 = vunpack.c.l.b16 %v805
    %v3225 = vunpack.c.h.b16 %v805
    %v3226 = vunpack.c.l.b16 %v806
    %v3227 = vunpack.c.h.b16 %v806
    %v3228 = vunpack.c.l.b16 %v807
    %v3229 = vunpack.c.h.b16 %v807
    %v3230 = vunpack.c.l.b16 %v808
    %v3231 = vunpack.c.h.b16 %v808
    %v3232 = vunpack.c.l.b16 %v809
    %v3233 = vunpack.c.h.b16 %v809
    %v3234 = vunpack.c.l.b16 %v810
    %v3235 = vunpack.c.h.b16 %v810
    %v3236 = vunpack.c.l.b16 %v811
    %v3237 = vunpack.c.h.b16 %v811
    %v3238 = vunpack.c.l.b16 %v812
    %v3239 = vunpack.c.h.b16 %v812
    %v3240 = vunpack.c.l.b16 %v813
    %v3241 = vunpack.c.h.b16 %v813
    %v3242 = vunpack.c.l.b16 %v814
    %v3243 = vunpack.c.h.b16 %v814
    %v3244 = vunpack.c.l.b16 %v815
    %v3245 = vunpack.c.h.b16 %v815
    %v3246 = vunpack.c.l.b16 %v816
    %v3247 = vunpack.c.h.b16 %v816
    %v3248 = vunpack.c.l.b16 %v817
    %v3249 = vunpack.c.h.b16 %v817
    %v3250 = vunpack.c.l.b16 %v818
    %v3251 = vunpack.c.h.b16 %v818
    %v3252 = vunpack.c.l.b16 %v819
    %v3253 = vunpack.c.h.b16 %v819
    %v3254 = vunpack.c.l.b16 %v820
    %v3255 = vunpack.c.h.b16 %v820
    %v3256 = vunpack.c.l.b16 %v821
    %v3257 = vunpack.c.h.b16 %v821
    %v3258 = vunpack.c.l.b16 %v822
    %v3259 = vunpack.c.h.b16 %v822
    %v3260 = vunpack.c.l.b16 %v823
    %v3261 = vunpack.c.h.b16 %v823
    %v3262 = vunpack.c.l.b16 %v824
    %v3263 = vunpack.c.h.b16 %v824
    %v3264 = vunpack.c.l.b16 %v825
    %v3265 = vunpack.c.h.b16 %v825
    %v3266 = vunpack.c.l.b16 %v826
    %v3267 = vunpack.c.h.b16 %v826
    %v3268 = vunpack.c.l.b16 %v827
    %v3269 = vunpack.c.h.b16 %v827
    %v3270 = vunpack.c.l.b16 %v828
    %v3271 = vunpack.c.h.b16 %v828
    %v3272 = vunpack.c.l.b16 %v829
    %v3273 = vunpack.c.h.b16 %v829
    %v3274 = vunpack.c.l.b16 %v830
    %v3275 = vunpack.c.h.b16 %v830
    %v3276 = vunpack.c.l.b16 %v831
    %v3277 = vunpack.c.h.b16 %v831
    %v3278 = vunpack.c.l.b16 %v832
    %v3279 = vunpack.c.h.b16 %v832
    %v3280 = vunpack.c.l.b16 %v833
    %v3281 = vunpack.c.h.b16 %v833
    %v3282 = vunpack.c.l.b16 %v834
    %v3283 = vunpack.c.h.b16 %v834
    %v3284 = vunpack.c.l.b16 %v835
    %v3285 = vunpack.c.h.b16 %v835
    %v3286 = vunpack.c.l.b16 %v836
    %v3287 = vunpack.c.h.b16 %v836
    %v3288 = vunpack.c.l.b16 %v837
    %v3289 = vunpack.c.h.b16 %v837
    %v3290 = vunpack.c.l.b16 %v838
    %v3291 = vunpack.c.h.b16 %v838
    %v3292 = vunpack.c.l.b16 %v839
    %v3293 = vunpack.c.h.b16 %v839
    %v3294 = vunpack.c.l.b16 %v840
    %v3295 = vunpack.c.h.b16 %v840
    %v3296 = vunpack.c.l.b16 %v841
    %v3297 = vunpack.c.h.b16 %v841
    %v3298 = vunpack.c.l.b16 %v842
    %v3299 = vunpack.c.h.b16 %v842
    %v3300 = vunpack.c.l.b16 %v843
    %v3301 = vunpack.c.h.b16 %v843
    %v3302 = vunpack.c.l.b16 %v844
    %v3303 = vunpack.c.h.b16 %v844
    %v3304 = vunpack.c.l.b16 %v845
    %v3305 = vunpack.c.h.b16 %v845
    %v3306 = vunpack.c.l.b16 %v846
    %v3307 = vunpack.c.h.b16 %v846
    %v3308 = vunpack.c.l.b16 %v847
    %v3309 = vunpack.c.h.b16 %v847
    %v3310 = vunpack.c.l.b16 %v848
    %v3311 = vunpack.c.h.b16 %v848
    %v3312 = vunpack.c.l.b16 %v849
    %v3313 = vunpack.c.h.b16 %v849
    %v3314 = vunpack.c.l.b16 %v850
    %v3315 = vunpack.c.h.b16 %v850
    %v3316 = vunpack.c.l.b16 %v851
    %v3317 = vunpack.c.h.b16 %v851
    %v3318 = vunpack.c.l.b16 %v852
    %v3319 = vunpack.c.h.b16 %v852
    %v3320 = vunpack.c.l.b16 %v853
    %v3321 = vunpack.c.h.b16 %v853
    %v3322 = vunpack.c.l.b16 %v854
    %v3323 = vunpack.c.h.b16 %v854
    %v3324 = vunpack.c.l.b16 %v855
    %v3325 = vunpack.c.h.b16 %v855
    %v3326 = vunpack.c.l.b16 %v856
    %v3327 = vunpack.c.h.b16 %v856
    %v3328 = vunpack.c.l.b16 %v857
    %v3329 = vunpack.c.h.b16 %v857
    %v3330 = vunpack.c.l.b16 %v858
    %v3331 = vunpack.c.h.b16 %v858
    %v3332 = vunpack.c.l.b16 %v859
    %v3333 = vunpack.c.h.b16 %v859
    %v3334 = vunpack.c.l.b16 %v860
    %v3335 = vunpack.c.h.b16 %v860
    %v3336 = vunpack.c.l.b16 %v861
    %v3337 = vunpack.c.h.b16 %v861
    %v3338 = vunpack.c.l.b16 %v862
    %v3339 = vunpack.c.h.b16 %v862
    %v3340 = vunpack.c.l.b16 %v863
    %v3341 = vunpack.c.h.b16 %v863
    %v3342 = vunpack.c.l.b16 %v864
    %v3343 = vunpack.c.h.b16 %v864
    %v3344 = vunpack.c.l.b16 %v865
    %v3345 = vunpack.c.h.b16 %v865
    %v3346 = vunpack.c.l.b16 %v866
    %v3347 = vunpack.c.h.b16 %v866
    %v3348 = vunpack.c.l.b16 %v867
    %v3349 = vunpack.c.h.b16 %v867
    %v3350 = vunpack.c.l.b16 %v868
    %v3351 = vunpack.c.h.b16 %v868
    %v3352 = vunpack.c.l.b16 %v869
    %v3353 = vunpack.c.h.b16 %v869
    %v3354 = vunpack.c.l.b16 %v870
    %v3355 = vunpack.c.h.b16 %v870
    %v3356 = vunpack.c.l.b16 %v871
    %v3357 = vunpack.c.h.b16 %v871
    %v3358 = vunpack.c.l.b16 %v872
    %v3359 = vunpack.c.h.b16 %v872
    %v3360 = vunpack.c.l.b16 %v873
    %v3361 = vunpack.c.h.b16 %v873
    %v3362 = vunpack.c.l.b16 %v874
    %v3363 = vunpack.c.h.b16 %v874
    %v3364 = vunpack.c.l.b16 %v875
    %v3365 = vunpack.c.h.b16 %v875
    %v3366 = vunpack.c.l.b16 %v876
    %v3367 = vunpack.c.h.b16 %v876
    %v3368 = vunpack.c.l.b16 %v877
    %v3369 = vunpack.c.h.b16 %v877
    %v3370 = vunpack.c.l.b16 %v878
    %v3371 = vunpack.c.h.b16 %v878
    %v3372 = vunpack.c.l.b16 %v879
    %v3373 = vunpack.c.h.b16 %v879
    %v3374 = vunpack.c.l.b16 %v880
    %v3375 = vunpack.c.h.b16 %v880
    %v3376 = vunpack.c.l.b16 %v881
    %v3377 = vunpack.c.h.b16 %v881
    %v3378 = vunpack.c.l.b16 %v882
    %v3379 = vunpack.c.h.b16 %v882
    %v3380 = vunpack.c.l.b16 %v883
    %v3381 = vunpack.c.h.b16 %v883
    %v3382 = vunpack.c.l.b16 %v884
    %v3383 = vunpack.c.h.b16 %v884
    %v3384 = vunpack.c.l.b16 %v885
    %v3385 = vunpack.c.h.b16 %v885
    %v3386 = vunpack.c.l.b16 %v886
    %v3387 = vunpack.c.h.b16 %v886
    %v3388 = vunpack.c.l.b16 %v887
    %v3389 = vunpack.c.h.b16 %v887
    %v3390 = vunpack.c.l.b16 %v888
    %v3391 = vunpack.c.h.b16 %v888
    %v3392 = vunpack.c.l.b16 %v889
    %v3393 = vunpack.c.h.b16 %v889
    %v3394 = vunpack.c.l.b16 %v890
    %v3395 = vunpack.c.h.b16 %v890
    %v3396 = vunpack.c.l.b16 %v891
    %v3397 = vunpack.c.h.b16 %v891
    %v3398 = vunpack.c.l.b16 %v892
    %v3399 = vunpack.c.h.b16 %v892
    %v3400 = vunpack.c.l.b16 %v893
    %v3401 = vunpack.c.h.b16 %v893
    %v3402 = vunpack.c.l.b16 %v894
    %v3403 = vunpack.c.h.b16 %v894
    %v3404 = vunpack.c.l.b16 %v895
    %v3405 = vunpack.c.h.b16 %v895
    %v3406 = vunpack.c.l.b16 %v896
    %v3407 = vunpack.c.h.b16 %v896
    %v3408 = vunpack.c.l.b16 %v897
    %v3409 = vunpack.c.h.b16 %v897
    %v3410 = vunpack.c.l.b16 %v898
    %v3411 = vunpack.c.h.b16 %v898
    %v3412 = vunpack.c.l.b16 %v899
    %v3413 = vunpack.c.h.b16 %v899
    %v3414 = vunpack.c.l.b16 %v900
    %v3415 = vunpack.c.h.b16 %v900
    %v3416 = vunpack.c.l.b16 %v901
    %v3417 = vunpack.c.h.b16 %v901
    %v3418 = vunpack.c.l.b16 %v902
    %v3419 = vunpack.c.h.b16 %v902
    %v3420 = vunpack.c.l.b16 %v903
    %v3421 = vunpack.c.h.b16 %v903
    %v3422 = vunpack.c.l.b16 %v904
    %v3423 = vunpack.c.h.b16 %v904
    %v3424 = vunpack.c.l.b16 %v905
    %v3425 = vunpack.c.h.b16 %v905
    %v3426 = vunpack.c.l.b16 %v906
    %v3427 = vunpack.c.h.b16 %v906
    %v3428 = vunpack.c.l.b16 %v907
    %v3429 = vunpack.c.h.b16 %v907
    %v3430 = vunpack.c.l.b16 %v908
    %v3431 = vunpack.c.h.b16 %v908
    %v3432 = vunpack.c.l.b16 %v909
    %v3433 = vunpack.c.h.b16 %v909
    %v3434 = vunpack.c.l.b16 %v910
    %v3435 = vunpack.c.h.b16 %v910
    %v3436 = vunpack.c.l.b16 %v911
    %v3437 = vunpack.c.h.b16 %v911
    %v3438 = vunpack.c.l.b16 %v912
    %v3439 = vunpack.c.h.b16 %v912
    %v3440 = vunpack.c.l.b16 %v913
    %v3441 = vunpack.c.h.b16 %v913
    %v3442 = vunpack.c.l.b16 %v914
    %v3443 = vunpack.c.h.b16 %v914
    %v3444 = vunpack.c.l.b16 %v915
    %v3445 = vunpack.c.h.b16 %v915
    %v3446 = vunpack.c.l.b16 %v916
    %v3447 = vunpack.c.h.b16 %v916
    %v3448 = vunpack.c.l.b16 %v917
    %v3449 = vunpack.c.h.b16 %v917
    %v3450 = vunpack.c.l.b16 %v918
    %v3451 = vunpack.c.h.b16 %v918
    %v3452 = vunpack.c.l.b16 %v919
    %v3453 = vunpack.c.h.b16 %v919
    %v3454 = vunpack.c.l.b16 %v920
    %v3455 = vunpack.c.h.b16 %v920
    %v3456 = vunpack.c.l.b16 %v921
    %v3457 = vunpack.c.h.b16 %v921
    %v3458 = vunpack.c.l.b16 %v922
    %v3459 = vunpack.c.h.b16 %v922
    %v3460 = vunpack.c.l.b16 %v923
    %v3461 = vunpack.c.h.b16 %v923
    %v3462 = vunpack.c.l.b16 %v924
    %v3463 = vunpack.c.h.b16 %v924
    %v3464 = vunpack.c.l.b16 %v925
    %v3465 = vunpack.c.h.b16 %v925
    %v3466 = vunpack.c.l.b16 %v926
    %v3467 = vunpack.c.h.b16 %v926
    %v3468 = vunpack.c.l.b16 %v927
    %v3469 = vunpack.c.h.b16 %v927
    %v3470 = vunpack.c.l.b16 %v928
    %v3471 = vunpack.c.h.b16 %v928
    %v3472 = vunpack.c.l.b16 %v929
    %v3473 = vunpack.c.h.b16 %v929
    %v3474 = vunpack.c.l.b16 %v930
    %v3475 = vunpack.c.h.b16 %v930
    %v3476 = vunpack.c.l.b16 %v931
    %v3477 = vunpack.c.h.b16 %v931
    %v3478 = vunpack.c.l.b16 %v932
    %v3479 = vunpack.c.h.b16 %v932
    %v3480 = vunpack.c.l.b16 %v933
    %v3481 = vunpack.c.h.b16 %v933
    %v3482 = vunpack.c.l.b16 %v934
    %v3483 = vunpack.c.h.b16 %v934
    %v3484 = vunpack.c.l.b16 %v935
    %v3485 = vunpack.c.h.b16 %v935
    %v3486 = vunpack.c.l.b16 %v936
    %v3487 = vunpack.c.h.b16 %v936
    %v3488 = vunpack.c.l.b16 %v937
    %v3489 = vunpack.c.h.b16 %v937
    %v3490 = vunpack.c.l.b16 %v938
    %v3491 = vunpack.c.h.b16 %v938
    %v3492 = vunpack.c.l.b16 %v939
    %v3493 = vunpack.c.h.b16 %v939
    %v3494 = vunpack.c.l.b16 %v940
    %v3495 = vunpack.c.h.b16 %v940
    %v3496 = vunpack.c.l.b16 %v941
    %v3497 = vunpack.c.h.b16 %v941
    %v3498 = vunpack.c.l.b16 %v942
    %v3499 = vunpack.c.h.b16 %v942
    %v3500 = vunpack.c.l.b16 %v943
    %v3501 = vunpack.c.h.b16 %v943
    %v3502 = vunpack.c.l.b16 %v944
    %v3503 = vunpack.c.h.b16 %v944
    %v3504 = vunpack.c.l.b16 %v945
    %v3505 = vunpack.c.h.b16 %v945
    %v3506 = vunpack.c.l.b16 %v946
    %v3507 = vunpack.c.h.b16 %v946
    %v3508 = vunpack.c.l.b16 %v947
    %v3509 = vunpack.c.h.b16 %v947
    %v3510 = vunpack.c.l.b16 %v948
    %v3511 = vunpack.c.h.b16 %v948
    %v3512 = vunpack.c.l.b16 %v949
    %v3513 = vunpack.c.h.b16 %v949
    %v3514 = vunpack.c.l.b16 %v950
    %v3515 = vunpack.c.h.b16 %v950
    %v3516 = vunpack.c.l.b16 %v951
    %v3517 = vunpack.c.h.b16 %v951
    %v3518 = vunpack.c.l.b16 %v952
    %v3519 = vunpack.c.h.b16 %v952
    %v3520 = vunpack.c.l.b16 %v953
    %v3521 = vunpack.c.h.b16 %v953
    %v3522 = vunpack.c.l.b16 %v954
    %v3523 = vunpack.c.h.b16 %v954
    %v3524 = vunpack.c.l.b16 %v955
    %v3525 = vunpack.c.h.b16 %v955
    %v3526 = vunpack.c.l.b16 %v956
    %v3527 = vunpack.c.h.b16 %v956
    %v3528 = vunpack.c.l.b16 %v957
    %v3529 = vunpack.c.h.b16 %v957
    %v3530 = vunpack.c.l.b16 %v958
    %v3531 = vunpack.c.h.b16 %v958
    %v3532 = vunpack.c.l.b16 %v959
    %v3533 = vunpack.c.h.b16 %v959
    %v3534 = vunpack.c.l.b16 %v960
    %v3535 = vunpack.c.h.b16 %v960
    %v3536 = vunpack.c.l.b16 %v961
    %v3537 = vunpack.c.h.b16 %v961
    %v3538 = vunpack.c.l.b16 %v962
    %v3539 = vunpack.c.h.b16 %v962
    %v3540 = vunpack.c.l.b16 %v963
    %v3541 = vunpack.c.h.b16 %v963
    %v3542 = vunpack.c.l.b16 %v964
    %v3543 = vunpack.c.h.b16 %v964
    %v3544 = vunpack.c.l.b16 %v965
    %v3545 = vunpack.c.h.b16 %v965
    %v3546 = vunpack.c.l.b16 %v966
    %v3547 = vunpack.c.h.b16 %v966
    %v3548 = vunpack.c.l.b16 %v967
    %v3549 = vunpack.c.h.b16 %v967
    %v3550 = vunpack.c.l.b16 %v968
    %v3551 = vunpack.c.h.b16 %v968
    %v3552 = vunpack.c.l.b16 %v969
    %v3553 = vunpack.c.h.b16 %v969
    %v3554 = vunpack.c.l.b16 %v970
    %v3555 = vunpack.c.h.b16 %v970
    %v3556 = vunpack.c.l.b16 %v971
    %v3557 = vunpack.c.h.b16 %v971
    %v3558 = vunpack.c.l.b16 %v972
    %v3559 = vunpack.c.h.b16 %v972
    %v3560 = vunpack.c.l.b16 %v973
    %v3561 = vunpack.c.h.b16 %v973
    %v3562 = vunpack.c.l.b16 %v974
    %v3563 = vunpack.c.h.b16 %v974
    %v3564 = vunpack.c.l.b16 %v975
    %v3565 = vunpack.c.h.b16 %v975
    %v3566 = vunpack.c.l.b16 %v976
    %v3567 = vunpack.c.h.b16 %v976
    %v3568 = vunpack.c.l.b16 %v977
    %v3569 = vunpack.c.h.b16 %v977
    %v3570 = vunpack.c.l.b16 %v978
    %v3571 = vunpack.c.h.b16 %v978
    %v3572 = vunpack.c.l.b16 %v979
    %v3573 = vunpack.c.h.b16 %v979
    %v3574 = vunpack.c.l.b16 %v980
    %v3575 = vunpack.c.h.b16 %v980
    %v3576 = vunpack.c.l.b16 %v981
    %v3577 = vunpack.c.h.b16 %v981
    %v3578 = vunpack.c.l.b16 %v982
    %v3579 = vunpack.c.h.b16 %v982
    %v3580 = vunpack.c.l.b16 %v983
    %v3581 = vunpack.c.h.b16 %v983
    %v3582 = vunpack.c.l.b16 %v984
    %v3583 = vunpack.c.h.b16 %v984
    %v3584 = vunpack.c.l.b16 %v985
    %v3585 = vunpack.c.h.b16 %v985
    %v3586 = vunpack.c.l.b16 %v986
    %v3587 = vunpack.c.h.b16 %v986
    %v3588 = vunpack.c.l.b16 %v987
    %v3589 = vunpack.c.h.b16 %v987
    %v3590 = vunpack.c.l.b16 %v988
    %v3591 = vunpack.c.h.b16 %v988
    %v3592 = vunpack.c.l.b16 %v989
    %v3593 = vunpack.c.h.b16 %v989
    %v3594 = vunpack.c.l.b16 %v990
    %v3595 = vunpack.c.h.b16 %v990
    %v3596 = vunpack.c.l.b16 %v991
    %v3597 = vunpack.c.h.b16 %v991
    %v3598 = vunpack.c.l.b16 %v992
    %v3599 = vunpack.c.h.b16 %v992
    %v3600 = vunpack.c.l.b16 %v993
    %v3601 = vunpack.c.h.b16 %v993
    %v3602 = vunpack.c.l.b16 %v994
    %v3603 = vunpack.c.h.b16 %v994
    %v3604 = vunpack.c.l.b16 %v995
    %v3605 = vunpack.c.h.b16 %v995
    %v3606 = vunpack.c.l.b16 %v996
    %v3607 = vunpack.c.h.b16 %v996
    %v3608 = vunpack.c.l.b16 %v997
    %v3609 = vunpack.c.h.b16 %v997
    %v3610 = vunpack.c.l.b16 %v998
    %v3611 = vunpack.c.h.b16 %v998
    %v3612 = vunpack.c.l.b16 %v999
    %v3613 = vunpack.c.h.b16 %v999
    %v3614 = vunpack.c.l.b16 %v1000
    %v3615 = vunpack.c.h.b16 %v1000
    %v3616 = vunpack.c.l.b16 %v1001
    %v3617 = vunpack.c.h.b16 %v1001
    %v3618 = vunpack.c.l.b16 %v1002
    %v3619 = vunpack.c.h.b16 %v1002
    %v3620 = vunpack.c.l.b16 %v1003
    %v3621 = vunpack.c.h.b16 %v1003
    %v3622 = vunpack.c.l.b16 %v1004
    %v3623 = vunpack.c.h.b16 %v1004
    %v3624 = vunpack.c.l.b16 %v1005
    %v3625 = vunpack.c.h.b16 %v1005
    %v3626 = vunpack.c.l.b16 %v1006
    %v3627 = vunpack.c.h.b16 %v1006
    %v3628 = vunpack.c.l.b16 %v1007
    %v3629 = vunpack.c.h.b16 %v1007
    %v3630 = vunpack.c.l.b16 %v1008
    %v3631 = vunpack.c.h.b16 %v1008
    %v3632 = vunpack.c.l.b16 %v1009
    %v3633 = vunpack.c.h.b16 %v1009
    %v3634 = vunpack.c.l.b16 %v1010
    %v3635 = vunpack.c.h.b16 %v1010
    %v3636 = vunpack.c.l.b16 %v1011
    %v3637 = vunpack.c.h.b16 %v1011
    %v3638 = vunpack.c.l.b16 %v1012
    %v3639 = vunpack.c.h.b16 %v1012
    %v3640 = vunpack.c.l.b16 %v1013
    %v3641 = vunpack.c.h.b16 %v1013
    %v3642 = vunpack.c.l.b16 %v1014
    %v3643 = vunpack.c.h.b16 %v1014
    %v3644 = vunpack.c.l.b16 %v1015
    %v3645 = vunpack.c.h.b16 %v1015
    %v3646 = vunpack.c.l.b16 %v1016
    %v3647 = vunpack.c.h.b16 %v1016
    %v3648 = vunpack.c.l.b16 %v1017
    %v3649 = vunpack.c.h.b16 %v1017
    %v3650 = vunpack.c.l.b16 %v1018
    %v3651 = vunpack.c.h.b16 %v1018
    %v3652 = vunpack.c.l.b16 %v1019
    %v3653 = vunpack.c.h.b16 %v1019
    %v3654 = vunpack.c.l.b16 %v1020
    %v3655 = vunpack.c.h.b16 %v1020
    %v3656 = vunpack.c.l.b16 %v1021
    %v3657 = vunpack.c.h.b16 %v1021
    %v3658 = vunpack.c.l.b16 %v1022
    %v3659 = vunpack.c.h.b16 %v1022
    %v3660 = vunpack.c.l.b16 %v1023
    %v3661 = vunpack.c.h.b16 %v1023
    %v3662 = vunpack.c.l.b16 %v1024
    %v3663 = vunpack.c.h.b16 %v1024
    %v3664 = vunpack.c.l.b16 %v1025
    %v3665 = vunpack.c.h.b16 %v1025
    %v3666 = vunpack.c.l.b16 %v1026
    %v3667 = vunpack.c.h.b16 %v1026
    %v3668 = vunpack.c.l.b16 %v1027
    %v3669 = vunpack.c.h.b16 %v1027
    %v3670 = vunpack.c.l.b16 %v1028
    %v3671 = vunpack.c.h.b16 %v1028
    %v3672 = vunpack.c.l.b16 %v1029
    %v3673 = vunpack.c.h.b16 %v1029
    %v3674 = vunpack.c.l.b16 %v1030
    %v3675 = vunpack.c.h.b16 %v1030
    %v3676 = vunpack.c.l.b16 %v1031
    %v3677 = vunpack.c.h.b16 %v1031
    %v3678 = vunpack.c.l.b16 %v1032
    %v3679 = vunpack.c.h.b16 %v1032
    %v3680 = vunpack.c.l.b16 %v1033
    %v3681 = vunpack.c.h.b16 %v1033
    %v3682 = vunpack.c.l.b16 %v1034
    %v3683 = vunpack.c.h.b16 %v1034
    %v3684 = vunpack.c.l.b16 %v1035
    %v3685 = vunpack.c.h.b16 %v1035
    %v3686 = vunpack.c.l.b16 %v1036
    %v3687 = vunpack.c.h.b16 %v1036
    %v3688 = vunpack.c.l.b16 %v1037
    %v3689 = vunpack.c.h.b16 %v1037
    %v3690 = vunpack.c.l.b16 %v1038
    %v3691 = vunpack.c.h.b16 %v1038
    %v3692 = vunpack.c.l.b16 %v1039
    %v3693 = vunpack.c.h.b16 %v1039
    %v3694 = vunpack.c.l.b16 %v1040
    %v3695 = vunpack.c.h.b16 %v1040
    %v3696 = vunpack.c.l.b16 %v1041
    %v3697 = vunpack.c.h.b16 %v1041
    %v3698 = vunpack.c.l.b16 %v1042
    %v3699 = vunpack.c.h.b16 %v1042
    %v3700 = vunpack.c.l.b16 %v1043
    %v3701 = vunpack.c.h.b16 %v1043
    %v3702 = vunpack.c.l.b16 %v1044
    %v3703 = vunpack.c.h.b16 %v1044
    %v3704 = vunpack.c.l.b16 %v1045
    %v3705 = vunpack.c.h.b16 %v1045
    %v3706 = vunpack.c.l.b16 %v1046
    %v3707 = vunpack.c.h.b16 %v1046
    %v3708 = vunpack.c.l.b16 %v1047
    %v3709 = vunpack.c.h.b16 %v1047
    %v3710 = vunpack.c.l.b16 %v1048
    %v3711 = vunpack.c.h.b16 %v1048
    %v3712 = vunpack.c.l.b16 %v1049
    %v3713 = vunpack.c.h.b16 %v1049
    %v3714 = vunpack.c.l.b16 %v1050
    %v3715 = vunpack.c.h.b16 %v1050
    %v3716 = vunpack.c.l.b16 %v1051
    %v3717 = vunpack.c.h.b16 %v1051
    %v3718 = vunpack.c.l.b16 %v1052
    %v3719 = vunpack.c.h.b16 %v1052
    %v3720 = vunpack.c.l.b16 %v1053
    %v3721 = vunpack.c.h.b16 %v1053
    %v3722 = vunpack.c.l.b16 %v1054
    %v3723 = vunpack.c.h.b16 %v1054
    %v3724 = vunpack.c.l.b16 %v1055
    %v3725 = vunpack.c.h.b16 %v1055
    %v3726 = vunpack.c.l.b16 %v1056
    %v3727 = vunpack.c.h.b16 %v1056
    %v3728 = vunpack.c.l.b16 %v1057
    %v3729 = vunpack.c.h.b16 %v1057
    %v3730 = vunpack.c.l.b16 %v1058
    %v3731 = vunpack.c.h.b16 %v1058
    %v3732 = vunpack.c.l.b16 %v1059
    %v3733 = vunpack.c.h.b16 %v1059
    %v3734 = vunpack.c.l.b16 %v1060
    %v3735 = vunpack.c.h.b16 %v1060
    %v3736 = vunpack.c.l.b16 %v1061
    %v3737 = vunpack.c.h.b16 %v1061
    %v3738 = vunpack.c.l.b16 %v1062
    %v3739 = vunpack.c.h.b16 %v1062
    %v3740 = vunpack.c.l.b16 %v1063
    %v3741 = vunpack.c.h.b16 %v1063
    %v3742 = vunpack.c.l.b16 %v1064
    %v3743 = vunpack.c.h.b16 %v1064
    %v3744 = vunpack.c.l.b16 %v1065
    %v3745 = vunpack.c.h.b16 %v1065
    %v3746 = vunpack.c.l.b16 %v1066
    %v3747 = vunpack.c.h.b16 %v1066
    %v3748 = vunpack.c.l.b16 %v1067
    %v3749 = vunpack.c.h.b16 %v1067
    %v3750 = vunpack.c.l.b16 %v1068
    %v3751 = vunpack.c.h.b16 %v1068
    %v3752 = vunpack.c.l.b16 %v1069
    %v3753 = vunpack.c.h.b16 %v1069
    %v3754 = vunpack.c.l.b16 %v1070
    %v3755 = vunpack.c.h.b16 %v1070
    %v3756 = vunpack.c.l.b16 %v1071
    %v3757 = vunpack.c.h.b16 %v1071
    %v3758 = vunpack.c.l.b16 %v1072
    %v3759 = vunpack.c.h.b16 %v1072
    %v3760 = vunpack.c.l.b16 %v1073
    %v3761 = vunpack.c.h.b16 %v1073
    %v3762 = vunpack.c.l.b16 %v1074
    %v3763 = vunpack.c.h.b16 %v1074
    %v3764 = vunpack.c.l.b16 %v1075
    %v3765 = vunpack.c.h.b16 %v1075
    %v3766 = vunpack.c.l.b16 %v1076
    %v3767 = vunpack.c.h.b16 %v1076
    %v3768 = vunpack.c.l.b16 %v1077
    %v3769 = vunpack.c.h.b16 %v1077
    %v3770 = vunpack.c.l.b16 %v1078
    %v3771 = vunpack.c.h.b16 %v1078
    %v3772 = vunpack.c.l.b16 %v1079
    %v3773 = vunpack.c.h.b16 %v1079
    %v3774 = vunpack.c.l.b16 %v1080
    %v3775 = vunpack.c.h.b16 %v1080
    %v3776 = vunpack.c.l.b16 %v1081
    %v3777 = vunpack.c.h.b16 %v1081
    %v3778 = vunpack.c.l.b16 %v1082
    %v3779 = vunpack.c.h.b16 %v1082
    %v3780 = vunpack.c.l.b16 %v1083
    %v3781 = vunpack.c.h.b16 %v1083
    %v3782 = vunpack.c.l.b16 %v1084
    %v3783 = vunpack.c.h.b16 %v1084
    %v3784 = vunpack.c.l.b16 %v1085
    %v3785 = vunpack.c.h.b16 %v1085
    %v3786 = vunpack.c.l.b16 %v1086
    %v3787 = vunpack.c.h.b16 %v1086
    %v3788 = vunpack.c.l.b16 %v1087
    %v3789 = vunpack.c.h.b16 %v1087
    %v3790 = vunpack.c.l.b16 %v1088
    %v3791 = vunpack.c.h.b16 %v1088
    %v3792 = vunpack.c.l.b16 %v1089
    %v3793 = vunpack.c.h.b16 %v1089
    %v3794 = vunpack.c.l.b16 %v1090
    %v3795 = vunpack.c.h.b16 %v1090
    %v3796 = vunpack.c.l.b16 %v1091
    %v3797 = vunpack.c.h.b16 %v1091
    %v3798 = vunpack.c.l.b16 %v1092
    %v3799 = vunpack.c.h.b16 %v1092
    %v3800 = vunpack.c.l.b16 %v1093
    %v3801 = vunpack.c.h.b16 %v1093
    %v3802 = vunpack.c.l.b16 %v1094
    %v3803 = vunpack.c.h.b16 %v1094
    %v3804 = vunpack.c.l.b16 %v1095
    %v3805 = vunpack.c.h.b16 %v1095
    %v3806 = vunpack.c.l.b16 %v1096
    %v3807 = vunpack.c.h.b16 %v1096
    %v3808 = vunpack.c.l.b16 %v1097
    %v3809 = vunpack.c.h.b16 %v1097
    %v3810 = vunpack.c.l.b16 %v1098
    %v3811 = vunpack.c.h.b16 %v1098
    %v3812 = vunpack.c.l.b16 %v1099
    %v3813 = vunpack.c.h.b16 %v1099
    %v3814 = vunpack.c.l.b16 %v1100
    %v3815 = vunpack.c.h.b16 %v1100
    %v3816 = vunpack.c.l.b16 %v1101
    %v3817 = vunpack.c.h.b16 %v1101
    %v3818 = vunpack.c.l.b16 %v1102
    %v3819 = vunpack.c.h.b16 %v1102
    %v3820 = vunpack.c.l.b16 %v1103
    %v3821 = vunpack.c.h.b16 %v1103
    %v3822 = vunpack.c.l.b16 %v1104
    %v3823 = vunpack.c.h.b16 %v1104
    %v3824 = vunpack.c.l.b16 %v1105
    %v3825 = vunpack.c.h.b16 %v1105
    %v3826 = vunpack.c.l.b16 %v1106
    %v3827 = vunpack.c.h.b16 %v1106
    %v3828 = vunpack.c.l.b16 %v1107
    %v3829 = vunpack.c.h.b16 %v1107
    %v3830 = vunpack.c.l.b16 %v1108
    %v3831 = vunpack.c.h.b16 %v1108
    %v3832 = vunpack.c.l.b16 %v1109
    %v3833 = vunpack.c.h.b16 %v1109
    %v3834 = vunpack.c.l.b16 %v1110
    %v3835 = vunpack.c.h.b16 %v1110
    %v3836 = vunpack.c.l.b16 %v1111
    %v3837 = vunpack.c.h.b16 %v1111
    %v3838 = vunpack.c.l.b16 %v1112
    %v3839 = vunpack.c.h.b16 %v1112
    %v3840 = vunpack.c.l.b16 %v1113
    %v3841 = vunpack.c.h.b16 %v1113
    %v3842 = vunpack.c.l.b16 %v1114
    %v3843 = vunpack.c.h.b16 %v1114
    %v3844 = vunpack.c.l.b16 %v1115
    %v3845 = vunpack.c.h.b16 %v1115
    %v3846 = vunpack.c.l.b16 %v1116
    %v3847 = vunpack.c.h.b16 %v1116
    %v3848 = vunpack.c.l.b16 %v1117
    %v3849 = vunpack.c.h.b16 %v1117
    %v3850 = vunpack.c.l.b16 %v1118
    %v3851 = vunpack.c.h.b16 %v1118
    %v3852 = vunpack.c.l.b16 %v1119
    %v3853 = vunpack.c.h.b16 %v1119
    %v3854 = vunpack.c.l.b16 %v1120
    %v3855 = vunpack.c.h.b16 %v1120
    %v3856 = vunpack.c.l.b16 %v1121
    %v3857 = vunpack.c.h.b16 %v1121
    %v3858 = vunpack.c.l.b16 %v1122
    %v3859 = vunpack.c.h.b16 %v1122
    %v3860 = vunpack.c.l.b16 %v1123
    %v3861 = vunpack.c.h.b16 %v1123
    %v3862 = vunpack.c.l.b16 %v1124
    %v3863 = vunpack.c.h.b16 %v1124
    %v3864 = vunpack.c.l.b16 %v1125
    %v3865 = vunpack.c.h.b16 %v1125
    %v3866 = vunpack.c.l.b16 %v1126
    %v3867 = vunpack.c.h.b16 %v1126
    %v3868 = vunpack.c.l.b16 %v1127
    %v3869 = vunpack.c.h.b16 %v1127
    %v3870 = vunpack.c.l.b16 %v1128
    %v3871 = vunpack.c.h.b16 %v1128
    %v3872 = vunpack.c.l.b16 %v1129
    %v3873 = vunpack.c.h.b16 %v1129
    %v3874 = vunpack.c.l.b16 %v1130
    %v3875 = vunpack.c.h.b16 %v1130
    %v3876 = vunpack.c.l.b16 %v1131
    %v3877 = vunpack.c.h.b16 %v1131
    %v3878 = vunpack.c.l.b16 %v1132
    %v3879 = vunpack.c.h.b16 %v1132
    %v3880 = vunpack.c.l.b16 %v1133
    %v3881 = vunpack.c.h.b16 %v1133
    %v3882 = vunpack.c.l.b16 %v1134
    %v3883 = vunpack.c.h.b16 %v1134
    %v3884 = vunpack.c.l.b16 %v1135
    %v3885 = vunpack.c.h.b16 %v1135
    %v3886 = vunpack.c.l.b16 %v1136
    %v3887 = vunpack.c.h.b16 %v1136
    %v3888 = vunpack.c.l.b16 %v1137
    %v3889 = vunpack.c.h.b16 %v1137
    %v3890 = vunpack.c.l.b16 %v1138
    %v3891 = vunpack.c.h.b16 %v1138
    %v3892 = vunpack.c.l.b16 %v1139
    %v3893 = vunpack.c.h.b16 %v1139
    %v3894 = vunpack.c.l.b16 %v1140
    %v3895 = vunpack.c.h.b16 %v1140
    %v3896 = vunpack.c.l.b16 %v1141
    %v3897 = vunpack.c.h.b16 %v1141
    %v3898 = vunpack.c.l.b16 %v1142
    %v3899 = vunpack.c.h.b16 %v1142
    %v3900 = vunpack.c.l.b16 %v1143
    %v3901 = vunpack.c.h.b16 %v1143
    %v3902 = vunpack.c.l.b16 %v1144
    %v3903 = vunpack.c.h.b16 %v1144
    %v3904 = vunpack.c.l.b16 %v1145
    %v3905 = vunpack.c.h.b16 %v1145
    %v3906 = vunpack.c.l.b16 %v1146
    %v3907 = vunpack.c.h.b16 %v1146
    %v3908 = vunpack.c.l.b16 %v1147
    %v3909 = vunpack.c.h.b16 %v1147
    %v3910 = vunpack.c.l.b16 %v1148
    %v3911 = vunpack.c.h.b16 %v1148
    %v3912 = vunpack.c.l.b16 %v1149
    %v3913 = vunpack.c.h.b16 %v1149
    %v3914 = vunpack.c.l.b16 %v1150
    %v3915 = vunpack.c.h.b16 %v1150
    %v3916 = vunpack.c.l.b16 %v1151
    %v3917 = vunpack.c.h.b16 %v1151
    %v3918 = vunpack.c.l.b16 %v1152
    %v3919 = vunpack.c.h.b16 %v1152
    %v3920 = vunpack.c.l.b16 %v1153
    %v3921 = vunpack.c.h.b16 %v1153
    %v3922 = vunpack.c.l.b16 %v1154
    %v3923 = vunpack.c.h.b16 %v1154
    %v3924 = vunpack.c.l.b16 %v1155
    %v3925 = vunpack.c.h.b16 %v1155
    %v3926 = vunpack.c.l.b16 %v1156
    %v3927 = vunpack.c.h.b16 %v1156
    %v3928 = vunpack.c.l.b16 %v1157
    %v3929 = vunpack.c.h.b16 %v1157
    %v3930 = vunpack.c.l.b16 %v1158
    %v3931 = vunpack.c.h.b16 %v1158
    %v3932 = vunpack.c.l.b16 %v1159
    %v3933 = vunpack.c.h.b16 %v1159
    %v3934 = vunpack.c.l.b16 %v1160
    %v3935 = vunpack.c.h.b16 %v1160
    %v3936 = vunpack.c.l.b16 %v1161
    %v3937 = vunpack.c.h.b16 %v1161
    %v3938 = vunpack.c.l.b16 %v1162
    %v3939 = vunpack.c.h.b16 %v1162
    %v3940 = vunpack.c.l.b16 %v1163
    %v3941 = vunpack.c.h.b16 %v1163
    %v3942 = vunpack.c.l.b16 %v1164
    %v3943 = vunpack.c.h.b16 %v1164
    %v3944 = vunpack.c.l.b16 %v1165
    %v3945 = vunpack.c.h.b16 %v1165
    %v3946 = vunpack.c.l.b16 %v1166
    %v3947 = vunpack.c.h.b16 %v1166
    %v3948 = vunpack.c.l.b16 %v1167
    %v3949 = vunpack.c.h.b16 %v1167
    %v3950 = vunpack.c.l.b16 %v1168
    %v3951 = vunpack.c.h.b16 %v1168
    %v3952 = vunpack.c.l.b16 %v1169
    %v3953 = vunpack.c.h.b16 %v1169
    %v3954 = vunpack.c.l.b16 %v1170
    %v3955 = vunpack.c.h.b16 %v1170
    %v3956 = vunpack.c.l.b16 %v1171
    %v3957 = vunpack.c.h.b16 %v1171
    %v3958 = vunpack.c.l.b16 %v1172
    %v3959 = vunpack.c.h.b16 %v1172
    %v3960 = vunpack.c.l.b16 %v1173
    %v3961 = vunpack.c.h.b16 %v1173
    %v3962 = vunpack.c.l.b16 %v1174
    %v3963 = vunpack.c.h.b16 %v1174
    %v3964 = vunpack.c.l.b16 %v1175
    %v3965 = vunpack.c.h.b16 %v1175
    %v3966 = vunpack.c.l.b16 %v1176
    %v3967 = vunpack.c.h.b16 %v1176
    %v3968 = vunpack.c.l.b16 %v1177
    %v3969 = vunpack.c.h.b16 %v1177
    %v3970 = vunpack.c.l.b16 %v1178
    %v3971 = vunpack.c.h.b16 %v1178
    %v3972 = vunpack.c.l.b16 %v1179
    %v3973 = vunpack.c.h.b16 %v1179
    %v3974 = vunpack.c.l.b16 %v1180
    %v3975 = vunpack.c.h.b16 %v1180
    %v3976 = vunpack.c.l.b16 %v1181
    %v3977 = vunpack.c.h.b16 %v1181
    %v3978 = vunpack.c.l.b16 %v1182
    %v3979 = vunpack.c.h.b16 %v1182
    %v3980 = vunpack.c.l.b16 %v1183
    %v3981 = vunpack.c.h.b16 %v1183
    %v3982 = vunpack.c.l.b16 %v1184
    %v3983 = vunpack.c.h.b16 %v1184
    %v3984 = vunpack.c.l.b16 %v1185
    %v3985 = vunpack.c.h.b16 %v1185
    %v3986 = vunpack.c.l.b16 %v1186
    %v3987 = vunpack.c.h.b16 %v1186
    %v3988 = vunpack.c.l.b16 %v1187
    %v3989 = vunpack.c.h.b16 %v1187
    %v3990 = vunpack.c.l.b16 %v1188
    %v3991 = vunpack.c.h.b16 %v1188
    %v3992 = vunpack.c.l.b16 %v1189
    %v3993 = vunpack.c.h.b16 %v1189
    %v3994 = vunpack.c.l.b16 %v1190
    %v3995 = vunpack.c.h.b16 %v1190
    %v3996 = vunpack.c.l.b16 %v1191
    %v3997 = vunpack.c.h.b16 %v1191
    %v3998 = vunpack.c.l.b16 %v1192
    %v3999 = vunpack.c.h.b16 %v1192
    %v4000 = vunpack.c.l.b16 %v1193
    %v4001 = vunpack.c.h.b16 %v1193
    %v4002 = vunpack.c.l.b16 %v1194
    %v4003 = vunpack.c.h.b16 %v1194
    %v4004 = vunpack.c.l.b16 %v1195
    %v4005 = vunpack.c.h.b16 %v1195
    %v4006 = vunpack.c.l.b16 %v1196
    %v4007 = vunpack.c.h.b16 %v1196
    %v4008 = vunpack.c.l.b16 %v1197
    %v4009 = vunpack.c.h.b16 %v1197
    %v4010 = vunpack.c.l.b16 %v1198
    %v4011 = vunpack.c.h.b16 %v1198
    %v4012 = vunpack.c.l.b16 %v1199
    %v4013 = vunpack.c.h.b16 %v1199
    %v4014 = vunpack.c.l.b16 %v1200
    %v4015 = vunpack.c.h.b16 %v1200
    %v4016 = vunpack.c.l.b16 %v1201
    %v4017 = vunpack.c.h.b16 %v1201
    %v4018 = vunpack.c.l.b16 %v1202
    %v4019 = vunpack.c.h.b16 %v1202
    %v4020 = vunpack.c.l.b16 %v1203
    %v4021 = vunpack.c.h.b16 %v1203
    %v4022 = vunpack.c.l.b16 %v1204
    %v4023 = vunpack.c.h.b16 %v1204
    %v4024 = vunpack.c.l.b16 %v1205
    %v4025 = vunpack.c.h.b16 %v1205
    %v4026 = vunpack.c.l.b16 %v1206
    %v4027 = vunpack.c.h.b16 %v1206
    %v4028 = vunpack.c.l.b16 %v1207
    %v4029 = vunpack.c.h.b16 %v1207
    %v4030 = vunpack.c.l.b16 %v1208
    %v4031 = vunpack.c.h.b16 %v1208
    %v4032 = vunpack.c.l.b16 %v1209
    %v4033 = vunpack.c.h.b16 %v1209
    %v4034 = vunpack.c.l.b16 %v1210
    %v4035 = vunpack.c.h.b16 %v1210
    %v4036 = vunpack.c.l.b16 %v1211
    %v4037 = vunpack.c.h.b16 %v1211
    %v4038 = vunpack.c.l.b16 %v1212
    %v4039 = vunpack.c.h.b16 %v1212
    %v4040 = vunpack.c.l.b16 %v1213
    %v4041 = vunpack.c.h.b16 %v1213
    %v4042 = vunpack.c.l.b16 %v1214
    %v4043 = vunpack.c.h.b16 %v1214
    %v4044 = vunpack.c.l.b16 %v1215
    %v4045 = vunpack.c.h.b16 %v1215
    %v4046 = vunpack.c.l.b16 %v1216
    %v4047 = vunpack.c.h.b16 %v1216
    %v4048 = vunpack.c.l.b16 %v1217
    %v4049 = vunpack.c.h.b16 %v1217
    %v4050 = vunpack.c.l.b16 %v1218
    %v4051 = vunpack.c.h.b16 %v1218
    %v4052 = vunpack.c.l.b16 %v1219
    %v4053 = vunpack.c.h.b16 %v1219
    %v4054 = vunpack.c.l.b16 %v1220
    %v4055 = vunpack.c.h.b16 %v1220
    %v4056 = vunpack.c.l.b16 %v1221
    %v4057 = vunpack.c.h.b16 %v1221
    %v4058 = vunpack.c.l.b16 %v1222
    %v4059 = vunpack.c.h.b16 %v1222
    %v4060 = vunpack.c.l.b16 %v1223
    %v4061 = vunpack.c.h.b16 %v1223
    %v4062 = vunpack.c.l.b16 %v1224
    %v4063 = vunpack.c.h.b16 %v1224
    %v4064 = vunpack.c.l.b16 %v1225
    %v4065 = vunpack.c.h.b16 %v1225
    %v4066 = vunpack.c.l.b16 %v1226
    %v4067 = vunpack.c.h.b16 %v1226
    %v4068 = vunpack.c.l.b16 %v1227
    %v4069 = vunpack.c.h.b16 %v1227
    %v4070 = vunpack.c.l.b16 %v1228
    %v4071 = vunpack.c.h.b16 %v1228
    %v4072 = vunpack.c.l.b16 %v1229
    %v4073 = vunpack.c.h.b16 %v1229
    %v4074 = vunpack.c.l.b16 %v1230
    %v4075 = vunpack.c.h.b16 %v1230
    %v4076 = vunpack.c.l.b16 %v1231
    %v4077 = vunpack.c.h.b16 %v1231
    %v4078 = vunpack.c.l.b16 %v1232
    %v4079 = vunpack.c.h.b16 %v1232
    %v4080 = vunpack.c.l.b16 %v1233
    %v4081 = vunpack.c.h.b16 %v1233
    %v4082 = vunpack.c.l.b16 %v1234
    %v4083 = vunpack.c.h.b16 %v1234
    %v4084 = vunpack.c.l.b16 %v1235
    %v4085 = vunpack.c.h.b16 %v1235
    %v4086 = vunpack.c.l.b16 %v1236
    %v4087 = vunpack.c.h.b16 %v1236
    %v4088 = vunpack.c.l.b16 %v1237
    %v4089 = vunpack.c.h.b16 %v1237
    %v4090 = vunpack.c.l.b16 %v1238
    %v4091 = vunpack.c.h.b16 %v1238
    %v4092 = vunpack.c.l.b16 %v1239
    %v4093 = vunpack.c.h.b16 %v1239
    %v4094 = vunpack.c.l.b16 %v1240
    %v4095 = vunpack.c.h.b16 %v1240
    %v4096 = vunpack.c.l.b16 %v1241
    %v4097 = vunpack.c.h.b16 %v1241
    %v4098 = vunpack.c.l.b16 %v1242
    %v4099 = vunpack.c.h.b16 %v1242
    %v4100 = vunpack.c.l.b16 %v1243
    %v4101 = vunpack.c.h.b16 %v1243
    %v4102 = vunpack.c.l.b16 %v1244
    %v4103 = vunpack.c.h.b16 %v1244
    %v4104 = vunpack.c.l.b16 %v1245
    %v4105 = vunpack.c.h.b16 %v1245
    %v4106 = vunpack.c.l.b16 %v1246
    %v4107 = vunpack.c.h.b16 %v1246
    %v4108 = vunpack.c.l.b16 %v1247
    %v4109 = vunpack.c.h.b16 %v1247
    %v4110 = vunpack.c.l.b16 %v1248
    %v4111 = vunpack.c.h.b16 %v1248
    %v4112 = vunpack.c.l.b16 %v1249
    %v4113 = vunpack.c.h.b16 %v1249
    %v4114 = vunpack.c.l.b16 %v1250
    %v4115 = vunpack.c.h.b16 %v1250
    %v4116 = vunpack.c.l.b16 %v1251
    %v4117 = vunpack.c.h.b16 %v1251
    %v4118 = vunpack.c.l.b16 %v1252
    %v4119 = vunpack.c.h.b16 %v1252
    %v4120 = vunpack.c.l.b16 %v1253
    %v4121 = vunpack.c.h.b16 %v1253
    %v4122 = vunpack.c.l.b16 %v1254
    %v4123 = vunpack.c.h.b16 %v1254
    %v4124 = vunpack.c.l.b16 %v1255
    %v4125 = vunpack.c.h.b16 %v1255
    %v4126 = vunpack.c.l.b16 %v1256
    %v4127 = vunpack.c.h.b16 %v1256
    %v4128 = vunpack.c.l.b16 %v1257
    %v4129 = vunpack.c.h.b16 %v1257
    %v4130 = vunpack.c.l.b16 %v1258
    %v4131 = vunpack.c.h.b16 %v1258
    %v4132 = vunpack.c.l.b16 %v1259
    %v4133 = vunpack.c.h.b16 %v1259
    %v4134 = vunpack.c.l.b16 %v1260
    %v4135 = vunpack.c.h.b16 %v1260
    %v4136 = vunpack.c.l.b16 %v1261
    %v4137 = vunpack.c.h.b16 %v1261
    %v4138 = vunpack.c.l.b16 %v1262
    %v4139 = vunpack.c.h.b16 %v1262
    %v4140 = vunpack.c.l.b16 %v1263
    %v4141 = vunpack.c.h.b16 %v1263
    %v4142 = vunpack.c.l.b16 %v1264
    %v4143 = vunpack.c.h.b16 %v1264
    %v4144 = vunpack.c.l.b16 %v1265
    %v4145 = vunpack.c.h.b16 %v1265
    %v4146 = vunpack.c.l.b16 %v1266
    %v4147 = vunpack.c.h.b16 %v1266
    %v4148 = vunpack.c.l.b16 %v1267
    %v4149 = vunpack.c.h.b16 %v1267
    %v4150 = vunpack.c.l.b16 %v1268
    %v4151 = vunpack.c.h.b16 %v1268
    %v4152 = vunpack.c.l.b16 %v1269
    %v4153 = vunpack.c.h.b16 %v1269
    %v4154 = vunpack.c.l.b16 %v1270
    %v4155 = vunpack.c.h.b16 %v1270
    %v4156 = vunpack.c.l.b16 %v1271
    %v4157 = vunpack.c.h.b16 %v1271
    %v4158 = vunpack.c.l.b16 %v1272
    %v4159 = vunpack.c.h.b16 %v1272
    %v4160 = vunpack.c.l.b16 %v1273
    %v4161 = vunpack.c.h.b16 %v1273
    %v4162 = vunpack.c.l.b16 %v1274
    %v4163 = vunpack.c.h.b16 %v1274
    %v4164 = vunpack.c.l.b16 %v1275
    %v4165 = vunpack.c.h.b16 %v1275
    %v4166 = vunpack.c.l.b16 %v1276
    %v4167 = vunpack.c.h.b16 %v1276
    %v4168 = vunpack.c.l.b16 %v1277
    %v4169 = vunpack.c.h.b16 %v1277
    %v4170 = vunpack.c.l.b16 %v1278
    %v4171 = vunpack.c.h.b16 %v1278
    %v4172 = vunpack.c.l.b16 %v1279
    %v4173 = vunpack.c.h.b16 %v1279
    %v4174 = vunpack.c.l.b16 %v1280
    %v4175 = vunpack.c.h.b16 %v1280
    %v4176 = vunpack.c.l.b16 %v1281
    %v4177 = vunpack.c.h.b16 %v1281
    %v4178 = vunpack.c.l.b16 %v1282
    %v4179 = vunpack.c.h.b16 %v1282
    %v4180 = vunpack.c.l.b16 %v1283
    %v4181 = vunpack.c.h.b16 %v1283
    %v4182 = vunpack.c.l.b16 %v1284
    %v4183 = vunpack.c.h.b16 %v1284
    %v4184 = vunpack.c.l.b16 %v1285
    %v4185 = vunpack.c.h.b16 %v1285
    %v4186 = vunpack.c.l.b16 %v1286
    %v4187 = vunpack.c.h.b16 %v1286
    %v4188 = vunpack.c.l.b16 %v1287
    %v4189 = vunpack.c.h.b16 %v1287
    %v4190 = vunpack.c.l.b16 %v1288
    %v4191 = vunpack.c.h.b16 %v1288
    %v4192 = vunpack.c.l.b16 %v1289
    %v4193 = vunpack.c.h.b16 %v1289
    %v4194 = vunpack.c.l.b16 %v1290
    %v4195 = vunpack.c.h.b16 %v1290
    %v4196 = vunpack.c.l.b16 %v1291
    %v4197 = vunpack.c.h.b16 %v1291
    %v4198 = vunpack.c.l.b16 %v1292
    %v4199 = vunpack.c.h.b16 %v1292
    %v4200 = vunpack.c.l.b16 %v1293
    %v4201 = vunpack.c.h.b16 %v1293
    %v4202 = vunpack.c.l.b16 %v1294
    %v4203 = vunpack.c.h.b16 %v1294
    %v4204 = vunpack.c.l.b16 %v1295
    %v4205 = vunpack.c.h.b16 %v1295
    %v4206 = vunpack.c.l.b16 %v1296
    %v4207 = vunpack.c.h.b16 %v1296
    %v4208 = vunpack.c.l.b16 %v1297
    %v4209 = vunpack.c.h.b16 %v1297
    %v4210 = vunpack.c.l.b16 %v1298
    %v4211 = vunpack.c.h.b16 %v1298
    %v4212 = vunpack.c.l.b16 %v1299
    %v4213 = vunpack.c.h.b16 %v1299
    %v4214 = vunpack.c.l.b16 %v1300
    %v4215 = vunpack.c.h.b16 %v1300
    %v4216 = vunpack.c.l.b16 %v1301
    %v4217 = vunpack.c.h.b16 %v1301
    %v4218 = vunpack.c.l.b16 %v1302
    %v4219 = vunpack.c.h.b16 %v1302
    %v4220 = vunpack.c.l.b16 %v1303
    %v4221 = vunpack.c.h.b16 %v1303
    %v4222 = vunpack.c.l.b16 %v1304
    %v4223 = vunpack.c.h.b16 %v1304
    %v4224 = vunpack.c.l.b16 %v1305
    %v4225 = vunpack.c.h.b16 %v1305
    %v4226 = vunpack.c.l.b16 %v1306
    %v4227 = vunpack.c.h.b16 %v1306
    %v4228 = vunpack.c.l.b16 %v1307
    %v4229 = vunpack.c.h.b16 %v1307
    %v4230 = vunpack.c.l.b16 %v1308
    %v4231 = vunpack.c.h.b16 %v1308
    %v4232 = vunpack.c.l.b16 %v1309
    %v4233 = vunpack.c.h.b16 %v1309
    %v4234 = vunpack.c.l.b16 %v1310
    %v4235 = vunpack.c.h.b16 %v1310
    %v4236 = vunpack.c.l.b16 %v1311
    %v4237 = vunpack.c.h.b16 %v1311
    %v4238 = vunpack.c.l.b16 %v1312
    %v4239 = vunpack.c.h.b16 %v1312
    %v4240 = vunpack.c.l.b16 %v1313
    %v4241 = vunpack.c.h.b16 %v1313
    %v4242 = vunpack.c.l.b16 %v1314
    %v4243 = vunpack.c.h.b16 %v1314
    %v4244 = vunpack.c.l.b16 %v1315
    %v4245 = vunpack.c.h.b16 %v1315
    %v4246 = vunpack.c.l.b16 %v1316
    %v4247 = vunpack.c.h.b16 %v1316
    %v4248 = vunpack.c.l.b16 %v1317
    %v4249 = vunpack.c.h.b16 %v1317
    %v4250 = vunpack.c.l.b16 %v1318
    %v4251 = vunpack.c.h.b16 %v1318
    %v4252 = vunpack.c.l.b16 %v1319
    %v4253 = vunpack.c.h.b16 %v1319
    %v4254 = vunpack.c.l.b16 %v1320
    %v4255 = vunpack.c.h.b16 %v1320
    %v4256 = vunpack.c.l.b16 %v1321
    %v4257 = vunpack.c.h.b16 %v1321
    %v4258 = vunpack.c.l.b16 %v1322
    %v4259 = vunpack.c.h.b16 %v1322
    %v4260 = vunpack.c.l.b16 %v1323
    %v4261 = vunpack.c.h.b16 %v1323
    %v4262 = vunpack.c.l.b16 %v1324
    %v4263 = vunpack.c.h.b16 %v1324
    %v4264 = vunpack.c.l.b16 %v1325
    %v4265 = vunpack.c.h.b16 %v1325
    %v4266 = vunpack.c.l.b16 %v1326
    %v4267 = vunpack.c.h.b16 %v1326
    %v4268 = vunpack.c.l.b16 %v1327
    %v4269 = vunpack.c.h.b16 %v1327
    %v4270 = vunpack.c.l.b16 %v1328
    %v4271 = vunpack.c.h.b16 %v1328
    %v4272 = vunpack.c.l.b16 %v1329
    %v4273 = vunpack.c.h.b16 %v1329
    %v4274 = vunpack.c.l.b16 %v1330
    %v4275 = vunpack.c.h.b16 %v1330
    %v4276 = vunpack.c.l.b16 %v1331
    %v4277 = vunpack.c.h.b16 %v1331
    %v4278 = vunpack.c.l.b16 %v1332
    %v4279 = vunpack.c.h.b16 %v1332
    %v4280 = vunpack.c.l.b16 %v1333
    %v4281 = vunpack.c.h.b16 %v1333
    %v4282 = vunpack.c.l.b16 %v1334
    %v4283 = vunpack.c.h.b16 %v1334
    %v4284 = vunpack.c.l.b16 %v1335
    %v4285 = vunpack.c.h.b16 %v1335
    %v4286 = vunpack.c.l.b16 %v1336
    %v4287 = vunpack.c.h.b16 %v1336
    %v4288 = vunpack.c.l.b16 %v1337
    %v4289 = vunpack.c.h.b16 %v1337
    %v4290 = vunpack.c.l.b16 %v1338
    %v4291 = vunpack.c.h.b16 %v1338
    %v4292 = vunpack.c.l.b16 %v1339
    %v4293 = vunpack.c.h.b16 %v1339
    %v4294 = vunpack.c.l.b16 %v1340
    %v4295 = vunpack.c.h.b16 %v1340
    %v4296 = vunpack.c.l.b16 %v1341
    %v4297 = vunpack.c.h.b16 %v1341
    %v4298 = vunpack.c.l.b16 %v1342
    %v4299 = vunpack.c.h.b16 %v1342
    %v4300 = vunpack.c.l.b16 %v1343
    %v4301 = vunpack.c.h.b16 %v1343
    %v4302 = vunpack.c.l.b16 %v1344
    %v4303 = vunpack.c.h.b16 %v1344
    %v4304 = vunpack.c.l.b16 %v1345
    %v4305 = vunpack.c.h.b16 %v1345
    %v4306 = vunpack.c.l.b16 %v1346
    %v4307 = vunpack.c.h.b16 %v1346
    %v4308 = vunpack.c.l.b16 %v1347
    %v4309 = vunpack.c.h.b16 %v1347
    %v4310 = vunpack.c.l.b16 %v1348
    %v4311 = vunpack.c.h.b16 %v1348
    %v4312 = vunpack.c.l.b16 %v1349
    %v4313 = vunpack.c.h.b16 %v1349
    %v4314 = vunpack.c.l.b16 %v1350
    %v4315 = vunpack.c.h.b16 %v1350
    %v4316 = vunpack.c.l.b16 %v1351
    %v4317 = vunpack.c.h.b16 %v1351
    %v4318 = vunpack.c.l.b16 %v1352
    %v4319 = vunpack.c.h.b16 %v1352
    %v4320 = vunpack.c.l.b16 %v1353
    %v4321 = vunpack.c.h.b16 %v1353
    %v4322 = vunpack.c.l.b16 %v1354
    %v4323 = vunpack.c.h.b16 %v1354
    %v4324 = vunpack.c.l.b16 %v1355
    %v4325 = vunpack.c.h.b16 %v1355
    %v4326 = vunpack.c.l.b16 %v1356
    %v4327 = vunpack.c.h.b16 %v1356
    %v4328 = vunpack.c.l.b16 %v1357
    %v4329 = vunpack.c.h.b16 %v1357
    %v4330 = vunpack.c.l.b16 %v1358
    %v4331 = vunpack.c.h.b16 %v1358
    %v4332 = vunpack.c.l.b16 %v1359
    %v4333 = vunpack.c.h.b16 %v1359
    %v4334 = vunpack.c.l.b16 %v1360
    %v4335 = vunpack.c.h.b16 %v1360
    %v4336 = vunpack.c.l.b16 %v1361
    %v4337 = vunpack.c.h.b16 %v1361
    %v4338 = vunpack.c.l.b16 %v1362
    %v4339 = vunpack.c.h.b16 %v1362
    %v4340 = vunpack.c.l.b16 %v1363
    %v4341 = vunpack.c.h.b16 %v1363
    %v4342 = vunpack.c.l.b16 %v1364
    %v4343 = vunpack.c.h.b16 %v1364
    %v4344 = vunpack.c.l.b16 %v1365
    %v4345 = vunpack.c.h.b16 %v1365
    %v4346 = vunpack.c.l.b16 %v1366
    %v4347 = vunpack.c.h.b16 %v1366
    %v4348 = vunpack.c.l.b16 %v1367
    %v4349 = vunpack.c.h.b16 %v1367
    %v4350 = vunpack.c.l.b16 %v1368
    %v4351 = vunpack.c.h.b16 %v1368
    %v4352 = vunpack.c.l.b16 %v1369
    %v4353 = vunpack.c.h.b16 %v1369
    %v4354 = vunpack.c.l.b16 %v1370
    %v4355 = vunpack.c.h.b16 %v1370
    %v4356 = vunpack.c.l.b16 %v1371
    %v4357 = vunpack.c.h.b16 %v1371
    %v4358 = vunpack.c.l.b16 %v1372
    %v4359 = vunpack.c.h.b16 %v1372
    %v4360 = vunpack.c.l.b16 %v1373
    %v4361 = vunpack.c.h.b16 %v1373
    %v4362 = vunpack.c.l.b16 %v1374
    %v4363 = vunpack.c.h.b16 %v1374
    %v4364 = vunpack.c.l.b16 %v1375
    %v4365 = vunpack.c.h.b16 %v1375
    %v4366 = vunpack.c.l.b16 %v1376
    %v4367 = vunpack.c.h.b16 %v1376
    %v4368 = vunpack.c.l.b16 %v1377
    %v4369 = vunpack.c.h.b16 %v1377
    %v4370 = vunpack.c.l.b16 %v1378
    %v4371 = vunpack.c.h.b16 %v1378
    %v4372 = vunpack.c.l.b16 %v1379
    %v4373 = vunpack.c.h.b16 %v1379
    %v4374 = vunpack.c.l.b16 %v1380
    %v4375 = vunpack.c.h.b16 %v1380
    %v4376 = vunpack.c.l.b16 %v1381
    %v4377 = vunpack.c.h.b16 %v1381
    %v4378 = vunpack.c.l.b16 %v1382
    %v4379 = vunpack.c.h.b16 %v1382
    %v4380 = vunpack.c.l.b16 %v1383
    %v4381 = vunpack.c.h.b16 %v1383
    %v4382 = vunpack.c.l.b16 %v1384
    %v4383 = vunpack.c.h.b16 %v1384
    %v4384 = vunpack.c.l.b16 %v1385
    %v4385 = vunpack.c.h.b16 %v1385
    %v4386 = vunpack.c.l.b16 %v1386
    %v4387 = vunpack.c.h.b16 %v1386
    %v4388 = vunpack.c.l.b16 %v1387
    %v4389 = vunpack.c.h.b16 %v1387
    %v4390 = vunpack.c.l.b16 %v1388
    %v4391 = vunpack.c.h.b16 %v1388
    %v4392 = vunpack.c.l.b16 %v1389
    %v4393 = vunpack.c.h.b16 %v1389
    %v4394 = vunpack.c.l.b16 %v1390
    %v4395 = vunpack.c.h.b16 %v1390
    %v4396 = vunpack.c.l.b16 %v1391
    %v4397 = vunpack.c.h.b16 %v1391
    %v4398 = vunpack.c.l.b16 %v1392
    %v4399 = vunpack.c.h.b16 %v1392
    %v4400 = vunpack.c.l.b16 %v1393
    %v4401 = vunpack.c.h.b16 %v1393
    %v4402 = vunpack.c.l.b16 %v1394
    %v4403 = vunpack.c.h.b16 %v1394
    %v4404 = vunpack.c.l.b16 %v1395
    %v4405 = vunpack.c.h.b16 %v1395
    %v4406 = vunpack.c.l.b16 %v1396
    %v4407 = vunpack.c.h.b16 %v1396
    %v4408 = vunpack.c.l.b16 %v1397
    %v4409 = vunpack.c.h.b16 %v1397
    %v4410 = vunpack.c.l.b16 %v1398
    %v4411 = vunpack.c.h.b16 %v1398
    %v4412 = vunpack.c.l.b16 %v1399
    %v4413 = vunpack.c.h.b16 %v1399
    %v4414 = vunpack.c.l.b16 %v1400
    %v4415 = vunpack.c.h.b16 %v1400
    %v4416 = vunpack.c.l.b16 %v1401
    %v4417 = vunpack.c.h.b16 %v1401
    %v4418 = vunpack.c.l.b16 %v1402
    %v4419 = vunpack.c.h.b16 %v1402
    %v4420 = vunpack.c.l.b16 %v1403
    %v4421 = vunpack.c.h.b16 %v1403
    %v4422 = vunpack.c.l.b16 %v1404
    %v4423 = vunpack.c.h.b16 %v1404
    %v4424 = vunpack.c.l.b16 %v1405
    %v4425 = vunpack.c.h.b16 %v1405
    %v4426 = vunpack.c.l.b16 %v1406
    %v4427 = vunpack.c.h.b16 %v1406
    %v4428 = vunpack.c.l.b16 %v1407
    %v4429 = vunpack.c.h.b16 %v1407
    %v4430 = vunpack.c.l.b16 %v1408
    %v4431 = vunpack.c.h.b16 %v1408
    %v4432 = vunpack.c.l.b16 %v1409
    %v4433 = vunpack.c.h.b16 %v1409
    %v4434 = vunpack.c.l.b16 %v1410
    %v4435 = vunpack.c.h.b16 %v1410
    %v4436 = vunpack.c.l.b16 %v1411
    %v4437 = vunpack.c.h.b16 %v1411
    %v4438 = vunpack.c.l.b16 %v1412
    %v4439 = vunpack.c.h.b16 %v1412
    %v4440 = vunpack.c.l.b16 %v1413
    %v4441 = vunpack.c.h.b16 %v1413
    %v4442 = vunpack.c.l.b16 %v1414
    %v4443 = vunpack.c.h.b16 %v1414
    %v4444 = vunpack.c.l.b16 %v1415
    %v4445 = vunpack.c.h.b16 %v1415
    %v4446 = vunpack.c.l.b16 %v1416
    %v4447 = vunpack.c.h.b16 %v1416
    %v4448 = vunpack.c.l.b16 %v1417
    %v4449 = vunpack.c.h.b16 %v1417
    %v4450 = vunpack.c.l.b16 %v1418
    %v4451 = vunpack.c.h.b16 %v1418
    %v4452 = vunpack.c.l.b16 %v1419
    %v4453 = vunpack.c.h.b16 %v1419
    %v4454 = vunpack.c.l.b16 %v1420
    %v4455 = vunpack.c.h.b16 %v1420
    %v4456 = vunpack.c.l.b16 %v1421
    %v4457 = vunpack.c.h.b16 %v1421
    %v4458 = vunpack.c.l.b16 %v1422
    %v4459 = vunpack.c.h.b16 %v1422
    %v4460 = vunpack.c.l.b16 %v1423
    %v4461 = vunpack.c.h.b16 %v1423
    %v4462 = vunpack.c.l.b16 %v1424
    %v4463 = vunpack.c.h.b16 %v1424
    %v4464 = vunpack.c.l.b16 %v1425
    %v4465 = vunpack.c.h.b16 %v1425
    %v4466 = vunpack.c.l.b16 %v1426
    %v4467 = vunpack.c.h.b16 %v1426
    %v4468 = vunpack.c.l.b16 %v1427
    %v4469 = vunpack.c.h.b16 %v1427
    %v4470 = vunpack.c.l.b16 %v1428
    %v4471 = vunpack.c.h.b16 %v1428
    %v4472 = vunpack.c.l.b16 %v1429
    %v4473 = vunpack.c.h.b16 %v1429
    %v4474 = vunpack.c.l.b16 %v1430
    %v4475 = vunpack.c.h.b16 %v1430
    %v4476 = vunpack.c.l.b16 %v1431
    %v4477 = vunpack.c.h.b16 %v1431
    %v4478 = vunpack.c.l.b16 %v1432
    %v4479 = vunpack.c.h.b16 %v1432
    %v4480 = vunpack.c.l.b16 %v1433
    %v4481 = vunpack.c.h.b16 %v1433
    %v4482 = vunpack.c.l.b16 %v1434
    %v4483 = vunpack.c.h.b16 %v1434
    %v4484 = vunpack.c.l.b16 %v1435
    %v4485 = vunpack.c.h.b16 %v1435
    %v4486 = vunpack.c.l.b16 %v1436
    %v4487 = vunpack.c.h.b16 %v1436
    %v4488 = vunpack.c.l.b16 %v1437
    %v4489 = vunpack.c.h.b16 %v1437
    %v4490 = vunpack.c.l.b16 %v1438
    %v4491 = vunpack.c.h.b16 %v1438
    %v4492 = vunpack.c.l.b16 %v1439
    %v4493 = vunpack.c.h.b16 %v1439
    %v4494 = vunpack.c.l.b16 %v1440
    %v4495 = vunpack.c.h.b16 %v1440
    %v4496 = vunpack.c.l.b16 %v1441
    %v4497 = vunpack.c.h.b16 %v1441
    %v4498 = vunpack.c.l.b16 %v1442
    %v4499 = vunpack.c.h.b16 %v1442
    %v4500 = vunpack.c.l.b16 %v1443
    %v4501 = vunpack.c.h.b16 %v1443
    %v4502 = vunpack.c.l.b16 %v1444
    %v4503 = vunpack.c.h.b16 %v1444
    %v4504 = vunpack.c.l.b16 %v1445
    %v4505 = vunpack.c.h.b16 %v1445
    %v4506 = vunpack.c.l.b16 %v1446
    %v4507 = vunpack.c.h.b16 %v1446
    %v4508 = vunpack.c.l.b16 %v1447
    %v4509 = vunpack.c.h.b16 %v1447
    %v4510 = vunpack.c.l.b16 %v1448
    %v4511 = vunpack.c.h.b16 %v1448
    %v4512 = vunpack.c.l.b16 %v1449
    %v4513 = vunpack.c.h.b16 %v1449
    %v4514 = vunpack.c.l.b16 %v1450
    %v4515 = vunpack.c.h.b16 %v1450
    %v4516 = vunpack.c.l.b16 %v1451
    %v4517 = vunpack.c.h.b16 %v1451
    %v4518 = vunpack.c.l.b16 %v1452
    %v4519 = vunpack.c.h.b16 %v1452
    %v4520 = vunpack.c.l.b16 %v1453
    %v4521 = vunpack.c.h.b16 %v1453
    %v4522 = vunpack.c.l.b16 %v1454
    %v4523 = vunpack.c.h.b16 %v1454
    %v4524 = vunpack.c.l.b16 %v1455
    %v4525 = vunpack.c.h.b16 %v1455
    %v4526 = vunpack.c.l.b16 %v1456
    %v4527 = vunpack.c.h.b16 %v1456
    %v4528 = vunpack.c.l.b16 %v1457
    %v4529 = vunpack.c.h.b16 %v1457
    %v4530 = vunpack.c.l.b16 %v1458
    %v4531 = vunpack.c.h.b16 %v1458
    %v4532 = vunpack.c.l.b16 %v1459
    %v4533 = vunpack.c.h.b16 %v1459
    %v4534 = vunpack.c.l.b16 %v1460
    %v4535 = vunpack.c.h.b16 %v1460
    %v4536 = vunpack.c.l.b16 %v1461
    %v4537 = vunpack.c.h.b16 %v1461
    %v4538 = vunpack.c.l.b16 %v1462
    %v4539 = vunpack.c.h.b16 %v1462
    %v4540 = vunpack.c.l.b16 %v1463
    %v4541 = vunpack.c.h.b16 %v1463
    %v4542 = vunpack.c.l.b16 %v1464
    %v4543 = vunpack.c.h.b16 %v1464
    %v4544 = vunpack.c.l.b16 %v1465
    %v4545 = vunpack.c.h.b16 %v1465
    %v4546 = vunpack.c.l.b16 %v1466
    %v4547 = vunpack.c.h.b16 %v1466
    %v4548 = vunpack.c.l.b16 %v1467
    %v4549 = vunpack.c.h.b16 %v1467
    %v4550 = vpack.c.b16 %v2506, %v2502
    %v4551 = vpack.c.b16 %v2507, %v2503
    %v4552 = vpack.c.b16 %v2508, %v2504
    %v4553 = vpack.c.b16 %v2509, %v2505
    %v4554 = vpack.c.b16 %v2514, %v2510
    %v4555 = vpack.c.b16 %v2515, %v2511
    %v4556 = vpack.c.b16 %v2516, %v2512
    %v4557 = vpack.c.b16 %v2517, %v2513
    %v4558 = vpack.c.b16 %v2522, %v2518
    %v4559 = vpack.c.b16 %v2523, %v2519
    %v4560 = vpack.c.b16 %v2524, %v2520
    %v4561 = vpack.c.b16 %v2525, %v2521
    %v4562 = vpack.c.b16 %v2530, %v2526
    %v4563 = vpack.c.b16 %v2531, %v2527
    %v4564 = vpack.c.b16 %v2532, %v2528
    %v4565 = vpack.c.b16 %v2533, %v2529
    %v4566 = vpack.c.b16 %v2538, %v2534
    %v4567 = vpack.c.b16 %v2539, %v2535
    %v4568 = vpack.c.b16 %v2540, %v2536
    %v4569 = vpack.c.b16 %v2541, %v2537
    %v4570 = vpack.c.b16 %v2546, %v2542
    %v4571 = vpack.c.b16 %v2547, %v2543
    %v4572 = vpack.c.b16 %v2548, %v2544
    %v4573 = vpack.c.b16 %v2549, %v2545
    %v4574 = vpack.c.b16 %v2554, %v2550
    %v4575 = vpack.c.b16 %v2555, %v2551
    %v4576 = vpack.c.b16 %v2556, %v2552
    %v4577 = vpack.c.b16 %v2557, %v2553
    %v4578 = vpack.c.b16 %v2562, %v2558
    %v4579 = vpack.c.b16 %v2563, %v2559
    %v4580 = vpack.c.b16 %v2564, %v2560
    %v4581 = vpack.c.b16 %v2565, %v2561
    %v4582 = vpack.c.b16 %v2570, %v2566
    %v4583 = vpack.c.b16 %v2571, %v2567
    %v4584 = vpack.c.b16 %v2572, %v2568
    %v4585 = vpack.c.b16 %v2573, %v2569
    %v4586 = vpack.c.b16 %v2578, %v2574
    %v4587 = vpack.c.b16 %v2579, %v2575
    %v4588 = vpack.c.b16 %v2580, %v2576
    %v4589 = vpack.c.b16 %v2581, %v2577
    %v4590 = vpack.c.b16 %v2586, %v2582
    %v4591 = vpack.c.b16 %v2587, %v2583
    %v4592 = vpack.c.b16 %v2588, %v2584
    %v4593 = vpack.c.b16 %v2589, %v2585
    %v4594 = vpack.c.b16 %v2594, %v2590
    %v4595 = vpack.c.b16 %v2595, %v2591
    %v4596 = vpack.c.b16 %v2596, %v2592
    %v4597 = vpack.c.b16 %v2597, %v2593
    %v4598 = vpack.c.b16 %v2602, %v2598
    %v4599 = vpack.c.b16 %v2603, %v2599
    %v4600 = vpack.c.b16 %v2604, %v2600
    %v4601 = vpack.c.b16 %v2605, %v2601
    %v4602 = vpack.c.b16 %v2610, %v2606
    %v4603 = vpack.c.b16 %v2611, %v2607
    %v4604 = vpack.c.b16 %v2612, %v2608
    %v4605 = vpack.c.b16 %v2613, %v2609
    %v4606 = vpack.c.b16 %v2618, %v2614
    %v4607 = vpack.c.b16 %v2619, %v2615
    %v4608 = vpack.c.b16 %v2620, %v2616
    %v4609 = vpack.c.b16 %v2621, %v2617
    %v4610 = vpack.c.b16 %v2626, %v2622
    %v4611 = vpack.c.b16 %v2627, %v2623
    %v4612 = vpack.c.b16 %v2628, %v2624
    %v4613 = vpack.c.b16 %v2629, %v2625
    %v4614 = vpack.c.b16 %v2634, %v2630
    %v4615 = vpack.c.b16 %v2635, %v2631
    %v4616 = vpack.c.b16 %v2636, %v2632
    %v4617 = vpack.c.b16 %v2637, %v2633
    %v4618 = vpack.c.b16 %v2642, %v2638
    %v4619 = vpack.c.b16 %v2643, %v2639
    %v4620 = vpack.c.b16 %v2644, %v2640
    %v4621 = vpack.c.b16 %v2645, %v2641
    %v4622 = vpack.c.b16 %v2650, %v2646
    %v4623 = vpack.c.b16 %v2651, %v2647
    %v4624 = vpack.c.b16 %v2652, %v2648
    %v4625 = vpack.c.b16 %v2653, %v2649
    %v4626 = vpack.c.b16 %v2658, %v2654
    %v4627 = vpack.c.b16 %v2659, %v2655
    %v4628 = vpack.c.b16 %v2660, %v2656
    %v4629 = vpack.c.b16 %v2661, %v2657
    %v4630 = vpack.c.b16 %v2666, %v2662
    %v4631 = vpack.c.b16 %v2667, %v2663
    %v4632 = vpack.c.b16 %v2668, %v2664
    %v4633 = vpack.c.b16 %v2669, %v2665
    %v4634 = vpack.c.b16 %v2674, %v2670
    %v4635 = vpack.c.b16 %v2675, %v2671
    %v4636 = vpack.c.b16 %v2676, %v2672
    %v4637 = vpack.c.b16 %v2677, %v2673
    %v4638 = vpack.c.b16 %v2682, %v2678
    %v4639 = vpack.c.b16 %v2683, %v2679
    %v4640 = vpack.c.b16 %v2684, %v2680
    %v4641 = vpack.c.b16 %v2685, %v2681
    %v4642 = vpack.c.b16 %v2690, %v2686
    %v4643 = vpack.c.b16 %v2691, %v2687
    %v4644 = vpack.c.b16 %v2692, %v2688
    %v4645 = vpack.c.b16 %v2693, %v2689
    %v4646 = vpack.c.b16 %v2698, %v2694
    %v4647 = vpack.c.b16 %v2699, %v2695
    %v4648 = vpack.c.b16 %v2700, %v2696
    %v4649 = vpack.c.b16 %v2701, %v2697
    %v4650 = vpack.c.b16 %v2706, %v2702
    %v4651 = vpack.c.b16 %v2707, %v2703
    %v4652 = vpack.c.b16 %v2708, %v2704
    %v4653 = vpack.c.b16 %v2709, %v2705
    %v4654 = vpack.c.b16 %v2714, %v2710
    %v4655 = vpack.c.b16 %v2715, %v2711
    %v4656 = vpack.c.b16 %v2716, %v2712
    %v4657 = vpack.c.b16 %v2717, %v2713
    %v4658 = vpack.c.b16 %v2722, %v2718
    %v4659 = vpack.c.b16 %v2723, %v2719
    %v4660 = vpack.c.b16 %v2724, %v2720
    %v4661 = vpack.c.b16 %v2725, %v2721
    %v4662 = vpack.c.b16 %v2730, %v2726
    %v4663 = vpack.c.b16 %v2731, %v2727
    %v4664 = vpack.c.b16 %v2732, %v2728
    %v4665 = vpack.c.b16 %v2733, %v2729
    %v4666 = vpack.c.b16 %v2738, %v2734
    %v4667 = vpack.c.b16 %v2739, %v2735
    %v4668 = vpack.c.b16 %v2740, %v2736
    %v4669 = vpack.c.b16 %v2741, %v2737
    %v4670 = vpack.c.b16 %v2746, %v2742
    %v4671 = vpack.c.b16 %v2747, %v2743
    %v4672 = vpack.c.b16 %v2748, %v2744
    %v4673 = vpack.c.b16 %v2749, %v2745
    %v4674 = vpack.c.b16 %v2754, %v2750
    %v4675 = vpack.c.b16 %v2755, %v2751
    %v4676 = vpack.c.b16 %v2756, %v2752
    %v4677 = vpack.c.b16 %v2757, %v2753
    %v4678 = vpack.c.b16 %v2762, %v2758
    %v4679 = vpack.c.b16 %v2763, %v2759
    %v4680 = vpack.c.b16 %v2764, %v2760
    %v4681 = vpack.c.b16 %v2765, %v2761
    %v4682 = vpack.c.b16 %v2770, %v2766
    %v4683 = vpack.c.b16 %v2771, %v2767
    %v4684 = vpack.c.b16 %v2772, %v2768
    %v4685 = vpack.c.b16 %v2773, %v2769
    %v4686 = vpack.c.b16 %v2778, %v2774
    %v4687 = vpack.c.b16 %v2779, %v2775
    %v4688 = vpack.c.b16 %v2780, %v2776
    %v4689 = vpack.c.b16 %v2781, %v2777
    %v4690 = vpack.c.b16 %v2786, %v2782
    %v4691 = vpack.c.b16 %v2787, %v2783
    %v4692 = vpack.c.b16 %v2788, %v2784
    %v4693 = vpack.c.b16 %v2789, %v2785
    %v4694 = vpack.c.b16 %v2794, %v2790
    %v4695 = vpack.c.b16 %v2795, %v2791
    %v4696 = vpack.c.b16 %v2796, %v2792
    %v4697 = vpack.c.b16 %v2797, %v2793
    %v4698 = vpack.c.b16 %v2802, %v2798
    %v4699 = vpack.c.b16 %v2803, %v2799
    %v4700 = vpack.c.b16 %v2804, %v2800
    %v4701 = vpack.c.b16 %v2805, %v2801
    %v4702 = vpack.c.b16 %v2810, %v2806
    %v4703 = vpack.c.b16 %v2811, %v2807
    %v4704 = vpack.c.b16 %v2812, %v2808
    %v4705 = vpack.c.b16 %v2813, %v2809
    %v4706 = vpack.c.b16 %v2818, %v2814
    %v4707 = vpack.c.b16 %v2819, %v2815
    %v4708 = vpack.c.b16 %v2820, %v2816
    %v4709 = vpack.c.b16 %v2821, %v2817
    %v4710 = vpack.c.b16 %v2826, %v2822
    %v4711 = vpack.c.b16 %v2827, %v2823
    %v4712 = vpack.c.b16 %v2828, %v2824
    %v4713 = vpack.c.b16 %v2829, %v2825
    %v4714 = vpack.c.b16 %v2834, %v2830
    %v4715 = vpack.c.b16 %v2835, %v2831
    %v4716 = vpack.c.b16 %v2836, %v2832
    %v4717 = vpack.c.b16 %v2837, %v2833
    %v4718 = vpack.c.b16 %v2842, %v2838
    %v4719 = vpack.c.b16 %v2843, %v2839
    %v4720 = vpack.c.b16 %v2844, %v2840
    %v4721 = vpack.c.b16 %v2845, %v2841
    %v4722 = vpack.c.b16 %v2850, %v2846
    %v4723 = vpack.c.b16 %v2851, %v2847
    %v4724 = vpack.c.b16 %v2852, %v2848
    %v4725 = vpack.c.b16 %v2853, %v2849
    %v4726 = vpack.c.b16 %v2858, %v2854
    %v4727 = vpack.c.b16 %v2859, %v2855
    %v4728 = vpack.c.b16 %v2860, %v2856
    %v4729 = vpack.c.b16 %v2861, %v2857
    %v4730 = vpack.c.b16 %v2866, %v2862
    %v4731 = vpack.c.b16 %v2867, %v2863
    %v4732 = vpack.c.b16 %v2868, %v2864
    %v4733 = vpack.c.b16 %v2869, %v2865
    %v4734 = vpack.c.b16 %v2874, %v2870
    %v4735 = vpack.c.b16 %v2875, %v2871
    %v4736 = vpack.c.b16 %v2876, %v2872
    %v4737 = vpack.c.b16 %v2877, %v2873
    %v4738 = vpack.c.b16 %v2882, %v2878
    %v4739 = vpack.c.b16 %v2883, %v2879
    %v4740 = vpack.c.b16 %v2884, %v2880
    %v4741 = vpack.c.b16 %v2885, %v2881
    %v4742 = vpack.c.b16 %v2890, %v2886
    %v4743 = vpack.c.b16 %v2891, %v2887
    %v4744 = vpack.c.b16 %v2892, %v2888
    %v4745 = vpack.c.b16 %v2893, %v2889
    %v4746 = vpack.c.b16 %v2898, %v2894
    %v4747 = vpack.c.b16 %v2899, %v2895
    %v4748 = vpack.c.b16 %v2900, %v2896
    %v4749 = vpack.c.b16 %v2901, %v2897
    %v4750 = vpack.c.b16 %v2906, %v2902
    %v4751 = vpack.c.b16 %v2907, %v2903
    %v4752 = vpack.c.b16 %v2908, %v2904
    %v4753 = vpack.c.b16 %v2909, %v2905
    %v4754 = vpack.c.b16 %v2914, %v2910
    %v4755 = vpack.c.b16 %v2915, %v2911
    %v4756 = vpack.c.b16 %v2916, %v2912
    %v4757 = vpack.c.b16 %v2917, %v2913
    %v4758 = vpack.c.b16 %v2922, %v2918
    %v4759 = vpack.c.b16 %v2923, %v2919
    %v4760 = vpack.c.b16 %v2924, %v2920
    %v4761 = vpack.c.b16 %v2925, %v2921
    %v4762 = vpack.c.b16 %v2930, %v2926
    %v4763 = vpack.c.b16 %v2931, %v2927
    %v4764 = vpack.c.b16 %v2932, %v2928
    %v4765 = vpack.c.b16 %v2933, %v2929
    %v4766 = vpack.c.b16 %v2938, %v2934
    %v4767 = vpack.c.b16 %v2939, %v2935
    %v4768 = vpack.c.b16 %v2940, %v2936
    %v4769 = vpack.c.b16 %v2941, %v2937
    %v4770 = vpack.c.b16 %v2946, %v2942
    %v4771 = vpack.c.b16 %v2947, %v2943
    %v4772 = vpack.c.b16 %v2948, %v2944
    %v4773 = vpack.c.b16 %v2949, %v2945
    %v4774 = vpack.c.b16 %v2954, %v2950
    %v4775 = vpack.c.b16 %v2955, %v2951
    %v4776 = vpack.c.b16 %v2956, %v2952
    %v4777 = vpack.c.b16 %v2957, %v2953
    %v4778 = vpack.c.b16 %v2962, %v2958
    %v4779 = vpack.c.b16 %v2963, %v2959
    %v4780 = vpack.c.b16 %v2964, %v2960
    %v4781 = vpack.c.b16 %v2965, %v2961
    %v4782 = vpack.c.b16 %v2970, %v2966
    %v4783 = vpack.c.b16 %v2971, %v2967
    %v4784 = vpack.c.b16 %v2972, %v2968
    %v4785 = vpack.c.b16 %v2973, %v2969
    %v4786 = vpack.c.b16 %v2978, %v2974
    %v4787 = vpack.c.b16 %v2979, %v2975
    %v4788 = vpack.c.b16 %v2980, %v2976
    %v4789 = vpack.c.b16 %v2981, %v2977
    %v4790 = vpack.c.b16 %v2986, %v2982
    %v4791 = vpack.c.b16 %v2987, %v2983
    %v4792 = vpack.c.b16 %v2988, %v2984
    %v4793 = vpack.c.b16 %v2989, %v2985
    %v4794 = vpack.c.b16 %v2994, %v2990
    %v4795 = vpack.c.b16 %v2995, %v2991
    %v4796 = vpack.c.b16 %v2996, %v2992
    %v4797 = vpack.c.b16 %v2997, %v2993
    %v4798 = vpack.c.b16 %v3002, %v2998
    %v4799 = vpack.c.b16 %v3003, %v2999
    %v4800 = vpack.c.b16 %v3004, %v3000
    %v4801 = vpack.c.b16 %v3005, %v3001
    %v4802 = vpack.c.b16 %v3010, %v3006
    %v4803 = vpack.c.b16 %v3011, %v3007
    %v4804 = vpack.c.b16 %v3012, %v3008
    %v4805 = vpack.c.b16 %v3013, %v3009
    %v4806 = vpack.c.b16 %v3018, %v3014
    %v4807 = vpack.c.b16 %v3019, %v3015
    %v4808 = vpack.c.b16 %v3020, %v3016
    %v4809 = vpack.c.b16 %v3021, %v3017
    %v4810 = vpack.c.b16 %v3026, %v3022
    %v4811 = vpack.c.b16 %v3027, %v3023
    %v4812 = vpack.c.b16 %v3028, %v3024
    %v4813 = vpack.c.b16 %v3029, %v3025
    %v4814 = vpack.c.b16 %v3034, %v3030
    %v4815 = vpack.c.b16 %v3035, %v3031
    %v4816 = vpack.c.b16 %v3036, %v3032
    %v4817 = vpack.c.b16 %v3037, %v3033
    %v4818 = vpack.c.b16 %v3042, %v3038
    %v4819 = vpack.c.b16 %v3043, %v3039
    %v4820 = vpack.c.b16 %v3044, %v3040
    %v4821 = vpack.c.b16 %v3045, %v3041
    %v4822 = vpack.c.b16 %v3050, %v3046
    %v4823 = vpack.c.b16 %v3051, %v3047
    %v4824 = vpack.c.b16 %v3052, %v3048
    %v4825 = vpack.c.b16 %v3053, %v3049
    %v4826 = vpack.c.b16 %v3058, %v3054
    %v4827 = vpack.c.b16 %v3059, %v3055
    %v4828 = vpack.c.b16 %v3060, %v3056
    %v4829 = vpack.c.b16 %v3061, %v3057
    %v4830 = vpack.c.b16 %v3066, %v3062
    %v4831 = vpack.c.b16 %v3067, %v3063
    %v4832 = vpack.c.b16 %v3068, %v3064
    %v4833 = vpack.c.b16 %v3069, %v3065
    %v4834 = vpack.c.b16 %v3074, %v3070
    %v4835 = vpack.c.b16 %v3075, %v3071
    %v4836 = vpack.c.b16 %v3076, %v3072
    %v4837 = vpack.c.b16 %v3077, %v3073
    %v4838 = vpack.c.b16 %v3082, %v3078
    %v4839 = vpack.c.b16 %v3083, %v3079
    %v4840 = vpack.c.b16 %v3084, %v3080
    %v4841 = vpack.c.b16 %v3085, %v3081
    %v4842 = vpack.c.b16 %v3090, %v3086
    %v4843 = vpack.c.b16 %v3091, %v3087
    %v4844 = vpack.c.b16 %v3092, %v3088
    %v4845 = vpack.c.b16 %v3093, %v3089
    %v4846 = vpack.c.b16 %v3098, %v3094
    %v4847 = vpack.c.b16 %v3099, %v3095
    %v4848 = vpack.c.b16 %v3100, %v3096
    %v4849 = vpack.c.b16 %v3101, %v3097
    %v4850 = vpack.c.b16 %v3106, %v3102
    %v4851 = vpack.c.b16 %v3107, %v3103
    %v4852 = vpack.c.b16 %v3108, %v3104
    %v4853 = vpack.c.b16 %v3109, %v3105
    %v4854 = vpack.c.b16 %v3114, %v3110
    %v4855 = vpack.c.b16 %v3115, %v3111
    %v4856 = vpack.c.b16 %v3116, %v3112
    %v4857 = vpack.c.b16 %v3117, %v3113
    %v4858 = vpack.c.b16 %v3122, %v3118
    %v4859 = vpack.c.b16 %v3123, %v3119
    %v4860 = vpack.c.b16 %v3124, %v3120
    %v4861 = vpack.c.b16 %v3125, %v3121
    %v4862 = vpack.c.b16 %v3130, %v3126
    %v4863 = vpack.c.b16 %v3131, %v3127
    %v4864 = vpack.c.b16 %v3132, %v3128
    %v4865 = vpack.c.b16 %v3133, %v3129
    %v4866 = vpack.c.b16 %v3138, %v3134
    %v4867 = vpack.c.b16 %v3139, %v3135
    %v4868 = vpack.c.b16 %v3140, %v3136
    %v4869 = vpack.c.b16 %v3141, %v3137
    %v4870 = vpack.c.b16 %v3146, %v3142
    %v4871 = vpack.c.b16 %v3147, %v3143
    %v4872 = vpack.c.b16 %v3148, %v3144
    %v4873 = vpack.c.b16 %v3149, %v3145
    %v4874 = vpack.c.b16 %v3154, %v3150
    %v4875 = vpack.c.b16 %v3155, %v3151
    %v4876 = vpack.c.b16 %v3156, %v3152
    %v4877 = vpack.c.b16 %v3157, %v3153
    %v4878 = vpack.c.b16 %v3162, %v3158
    %v4879 = vpack.c.b16 %v3163, %v3159
    %v4880 = vpack.c.b16 %v3164, %v3160
    %v4881 = vpack.c.b16 %v3165, %v3161
    %v4882 = vpack.c.b16 %v3170, %v3166
    %v4883 = vpack.c.b16 %v3171, %v3167
    %v4884 = vpack.c.b16 %v3172, %v3168
    %v4885 = vpack.c.b16 %v3173, %v3169
    %v4886 = vpack.c.b16 %v3178, %v3174
    %v4887 = vpack.c.b16 %v3179, %v3175
    %v4888 = vpack.c.b16 %v3180, %v3176
    %v4889 = vpack.c.b16 %v3181, %v3177
    %v4890 = vpack.c.b16 %v3186, %v3182
    %v4891 = vpack.c.b16 %v3187, %v3183
    %v4892 = vpack.c.b16 %v3188, %v3184
    %v4893 = vpack.c.b16 %v3189, %v3185
    %v4894 = vpack.c.b16 %v3194, %v3190
    %v4895 = vpack.c.b16 %v3195, %v3191
    %v4896 = vpack.c.b16 %v3196, %v3192
    %v4897 = vpack.c.b16 %v3197, %v3193
    %v4898 = vpack.c.b16 %v3202, %v3198
    %v4899 = vpack.c.b16 %v3203, %v3199
    %v4900 = vpack.c.b16 %v3204, %v3200
    %v4901 = vpack.c.b16 %v3205, %v3201
    %v4902 = vpack.c.b16 %v3210, %v3206
    %v4903 = vpack.c.b16 %v3211, %v3207
    %v4904 = vpack.c.b16 %v3212, %v3208
    %v4905 = vpack.c.b16 %v3213, %v3209
    %v4906 = vpack.c.b16 %v3218, %v3214
    %v4907 = vpack.c.b16 %v3219, %v3215
    %v4908 = vpack.c.b16 %v3220, %v3216
    %v4909 = vpack.c.b16 %v3221, %v3217
    %v4910 = vpack.c.b16 %v3226, %v3222
    %v4911 = vpack.c.b16 %v3227, %v3223
    %v4912 = vpack.c.b16 %v3228, %v3224
    %v4913 = vpack.c.b16 %v3229, %v3225
    %v4914 = vpack.c.b16 %v3234, %v3230
    %v4915 = vpack.c.b16 %v3235, %v3231
    %v4916 = vpack.c.b16 %v3236, %v3232
    %v4917 = vpack.c.b16 %v3237, %v3233
    %v4918 = vpack.c.b16 %v3242, %v3238
    %v4919 = vpack.c.b16 %v3243, %v3239
    %v4920 = vpack.c.b16 %v3244, %v3240
    %v4921 = vpack.c.b16 %v3245, %v3241
    %v4922 = vpack.c.b16 %v3250, %v3246
    %v4923 = vpack.c.b16 %v3251, %v3247
    %v4924 = vpack.c.b16 %v3252, %v3248
    %v4925 = vpack.c.b16 %v3253, %v3249
    %v4926 = vpack.c.b16 %v3258, %v3254
    %v4927 = vpack.c.b16 %v3259, %v3255
    %v4928 = vpack.c.b16 %v3260, %v3256
    %v4929 = vpack.c.b16 %v3261, %v3257
    %v4930 = vpack.c.b16 %v3266, %v3262
    %v4931 = vpack.c.b16 %v3267, %v3263
    %v4932 = vpack.c.b16 %v3268, %v3264
    %v4933 = vpack.c.b16 %v3269, %v3265
    %v4934 = vpack.c.b16 %v3274, %v3270
    %v4935 = vpack.c.b16 %v3275, %v3271
    %v4936 = vpack.c.b16 %v3276, %v3272
    %v4937 = vpack.c.b16 %v3277, %v3273
    %v4938 = vpack.c.b16 %v3282, %v3278
    %v4939 = vpack.c.b16 %v3283, %v3279
    %v4940 = vpack.c.b16 %v3284, %v3280
    %v4941 = vpack.c.b16 %v3285, %v3281
    %v4942 = vpack.c.b16 %v3290, %v3286
    %v4943 = vpack.c.b16 %v3291, %v3287
    %v4944 = vpack.c.b16 %v3292, %v3288
    %v4945 = vpack.c.b16 %v3293, %v3289
    %v4946 = vpack.c.b16 %v3298, %v3294
    %v4947 = vpack.c.b16 %v3299, %v3295
    %v4948 = vpack.c.b16 %v3300, %v3296
    %v4949 = vpack.c.b16 %v3301, %v3297
    %v4950 = vpack.c.b16 %v3306, %v3302
    %v4951 = vpack.c.b16 %v3307, %v3303
    %v4952 = vpack.c.b16 %v3308, %v3304
    %v4953 = vpack.c.b16 %v3309, %v3305
    %v4954 = vpack.c.b16 %v3314, %v3310
    %v4955 = vpack.c.b16 %v3315, %v3311
    %v4956 = vpack.c.b16 %v3316, %v3312
    %v4957 = vpack.c.b16 %v3317, %v3313
    %v4958 = vpack.c.b16 %v3322, %v3318
    %v4959 = vpack.c.b16 %v3323, %v3319
    %v4960 = vpack.c.b16 %v3324, %v3320
    %v4961 = vpack.c.b16 %v3325, %v3321
    %v4962 = vpack.c.b16 %v3330, %v3326
    %v4963 = vpack.c.b16 %v3331, %v3327
    %v4964 = vpack.c.b16 %v3332, %v3328
    %v4965 = vpack.c.b16 %v3333, %v3329
    %v4966 = vpack.c.b16 %v3338, %v3334
    %v4967 = vpack.c.b16 %v3339, %v3335
    %v4968 = vpack.c.b16 %v3340, %v3336
    %v4969 = vpack.c.b16 %v3341, %v3337
    %v4970 = vpack.c.b16 %v3346, %v3342
    %v4971 = vpack.c.b16 %v3347, %v3343
    %v4972 = vpack.c.b16 %v3348, %v3344
    %v4973 = vpack.c.b16 %v3349, %v3345
    %v4974 = vpack.c.b16 %v3354, %v3350
    %v4975 = vpack.c.b16 %v3355, %v3351
    %v4976 = vpack.c.b16 %v3356, %v3352
    %v4977 = vpack.c.b16 %v3357, %v3353
    %v4978 = vpack.c.b16 %v3362, %v3358
    %v4979 = vpack.c.b16 %v3363, %v3359
    %v4980 = vpack.c.b16 %v3364, %v3360
    %v4981 = vpack.c.b16 %v3365, %v3361
    %v4982 = vpack.c.b16 %v3370, %v3366
    %v4983 = vpack.c.b16 %v3371, %v3367
    %v4984 = vpack.c.b16 %v3372, %v3368
    %v4985 = vpack.c.b16 %v3373, %v3369
    %v4986 = vpack.c.b16 %v3378, %v3374
    %v4987 = vpack.c.b16 %v3379, %v3375
    %v4988 = vpack.c.b16 %v3380, %v3376
    %v4989 = vpack.c.b16 %v3381, %v3377
    %v4990 = vpack.c.b16 %v3386, %v3382
    %v4991 = vpack.c.b16 %v3387, %v3383
    %v4992 = vpack.c.b16 %v3388, %v3384
    %v4993 = vpack.c.b16 %v3389, %v3385
    %v4994 = vpack.c.b16 %v3394, %v3390
    %v4995 = vpack.c.b16 %v3395, %v3391
    %v4996 = vpack.c.b16 %v3396, %v3392
    %v4997 = vpack.c.b16 %v3397, %v3393
    %v4998 = vpack.c.b16 %v3402, %v3398
    %v4999 = vpack.c.b16 %v3403, %v3399
    %v5000 = vpack.c.b16 %v3404, %v3400
    %v5001 = vpack.c.b16 %v3405, %v3401
    %v5002 = vpack.c.b16 %v3410, %v3406
    %v5003 = vpack.c.b16 %v3411, %v3407
    %v5004 = vpack.c.b16 %v3412, %v3408
    %v5005 = vpack.c.b16 %v3413, %v3409
    %v5006 = vpack.c.b16 %v3418, %v3414
    %v5007 = vpack.c.b16 %v3419, %v3415
    %v5008 = vpack.c.b16 %v3420, %v3416
    %v5009 = vpack.c.b16 %v3421, %v3417
    %v5010 = vpack.c.b16 %v3426, %v3422
    %v5011 = vpack.c.b16 %v3427, %v3423
    %v5012 = vpack.c.b16 %v3428, %v3424
    %v5013 = vpack.c.b16 %v3429, %v3425
    %v5014 = vpack.c.b16 %v3434, %v3430
    %v5015 = vpack.c.b16 %v3435, %v3431
    %v5016 = vpack.c.b16 %v3436, %v3432
    %v5017 = vpack.c.b16 %v3437, %v3433
    %v5018 = vpack.c.b16 %v3442, %v3438
    %v5019 = vpack.c.b16 %v3443, %v3439
    %v5020 = vpack.c.b16 %v3444, %v3440
    %v5021 = vpack.c.b16 %v3445, %v3441
    %v5022 = vpack.c.b16 %v3450, %v3446
    %v5023 = vpack.c.b16 %v3451, %v3447
    %v5024 = vpack.c.b16 %v3452, %v3448
    %v5025 = vpack.c.b16 %v3453, %v3449
    %v5026 = vpack.c.b16 %v3458, %v3454
    %v5027 = vpack.c.b16 %v3459, %v3455
    %v5028 = vpack.c.b16 %v3460, %v3456
    %v5029 = vpack.c.b16 %v3461, %v3457
    %v5030 = vpack.c.b16 %v3466, %v3462
    %v5031 = vpack.c.b16 %v3467, %v3463
    %v5032 = vpack.c.b16 %v3468, %v3464
    %v5033 = vpack.c.b16 %v3469, %v3465
    %v5034 = vpack.c.b16 %v3474, %v3470
    %v5035 = vpack.c.b16 %v3475, %v3471
    %v5036 = vpack.c.b16 %v3476, %v3472
    %v5037 = vpack.c.b16 %v3477, %v3473
    %v5038 = vpack.c.b16 %v3482, %v3478
    %v5039 = vpack.c.b16 %v3483, %v3479
    %v5040 = vpack.c.b16 %v3484, %v3480
    %v5041 = vpack.c.b16 %v3485, %v3481
    %v5042 = vpack.c.b16 %v3490, %v3486
    %v5043 = vpack.c.b16 %v3491, %v3487
    %v5044 = vpack.c.b16 %v3492, %v3488
    %v5045 = vpack.c.b16 %v3493, %v3489
    %v5046 = vpack.c.b16 %v3498, %v3494
    %v5047 = vpack.c.b16 %v3499, %v3495
    %v5048 = vpack.c.b16 %v3500, %v3496
    %v5049 = vpack.c.b16 %v3501, %v3497
    %v5050 = vpack.c.b16 %v3506, %v3502
    %v5051 = vpack.c.b16 %v3507, %v3503
    %v5052 = vpack.c.b16 %v3508, %v3504
    %v5053 = vpack.c.b16 %v3509, %v3505
    %v5054 = vpack.c.b16 %v3514, %v3510
    %v5055 = vpack.c.b16 %v3515, %v3511
    %v5056 = vpack.c.b16 %v3516, %v3512
    %v5057 = vpack.c.b16 %v3517, %v3513
    %v5058 = vpack.c.b16 %v3522, %v3518
    %v5059 = vpack.c.b16 %v3523, %v3519
    %v5060 = vpack.c.b16 %v3524, %v3520
    %v5061 = vpack.c.b16 %v3525, %v3521
    %v5062 = vpack.c.b16 %v3530, %v3526
    %v5063 = vpack.c.b16 %v3531, %v3527
    %v5064 = vpack.c.b16 %v3532, %v3528
    %v5065 = vpack.c.b16 %v3533, %v3529
    %v5066 = vpack.c.b16 %v3538, %v3534
    %v5067 = vpack.c.b16 %v3539, %v3535
    %v5068 = vpack.c.b16 %v3540, %v3536
    %v5069 = vpack.c.b16 %v3541, %v3537
    %v5070 = vpack.c.b16 %v3546, %v3542
    %v5071 = vpack.c.b16 %v3547, %v3543
    %v5072 = vpack.c.b16 %v3548, %v3544
    %v5073 = vpack.c.b16 %v3549, %v3545
    %v5074 = vpack.c.b16 %v3554, %v3550
    %v5075 = vpack.c.b16 %v3555, %v3551
    %v5076 = vpack.c.b16 %v3556, %v3552
    %v5077 = vpack.c.b16 %v3557, %v3553
    %v5078 = vpack.c.b16 %v3562, %v3558
    %v5079 = vpack.c.b16 %v3563, %v3559
    %v5080 = vpack.c.b16 %v3564, %v3560
    %v5081 = vpack.c.b16 %v3565, %v3561
    %v5082 = vpack.c.b16 %v3570, %v3566
    %v5083 = vpack.c.b16 %v3571, %v3567
    %v5084 = vpack.c.b16 %v3572, %v3568
    %v5085 = vpack.c.b16 %v3573, %v3569
    %v5086 = vpack.c.b16 %v3578, %v3574
    %v5087 = vpack.c.b16 %v3579, %v3575
    %v5088 = vpack.c.b16 %v3580, %v3576
    %v5089 = vpack.c.b16 %v3581, %v3577
    %v5090 = vpack.c.b16 %v3586, %v3582
    %v5091 = vpack.c.b16 %v3587, %v3583
    %v5092 = vpack.c.b16 %v3588, %v3584
    %v5093 = vpack.c.b16 %v3589, %v3585
    %v5094 = vpack.c.b16 %v3594, %v3590
    %v5095 = vpack.c.b16 %v3595, %v3591
    %v5096 = vpack.c.b16 %v3596, %v3592
    %v5097 = vpack.c.b16 %v3597, %v3593
    %v5098 = vpack.c.b16 %v3602, %v3598
    %v5099 = vpack.c.b16 %v3603, %v3599
    %v5100 = vpack.c.b16 %v3604, %v3600
    %v5101 = vpack.c.b16 %v3605, %v3601
    %v5102 = vpack.c.b16 %v3610, %v3606
    %v5103 = vpack.c.b16 %v3611, %v3607
    %v5104 = vpack.c.b16 %v3612, %v3608
    %v5105 = vpack.c.b16 %v3613, %v3609
    %v5106 = vpack.c.b16 %v3618, %v3614
    %v5107 = vpack.c.b16 %v3619, %v3615
    %v5108 = vpack.c.b16 %v3620, %v3616
    %v5109 = vpack.c.b16 %v3621, %v3617
    %v5110 = vpack.c.b16 %v3626, %v3622
    %v5111 = vpack.c.b16 %v3627, %v3623
    %v5112 = vpack.c.b16 %v3628, %v3624
    %v5113 = vpack.c.b16 %v3629, %v3625
    %v5114 = vpack.c.b16 %v3634, %v3630
    %v5115 = vpack.c.b16 %v3635, %v3631
    %v5116 = vpack.c.b16 %v3636, %v3632
    %v5117 = vpack.c.b16 %v3637, %v3633
    %v5118 = vpack.c.b16 %v3642, %v3638
    %v5119 = vpack.c.b16 %v3643, %v3639
    %v5120 = vpack.c.b16 %v3644, %v3640
    %v5121 = vpack.c.b16 %v3645, %v3641
    %v5122 = vpack.c.b16 %v3650, %v3646
    %v5123 = vpack.c.b16 %v3651, %v3647
    %v5124 = vpack.c.b16 %v3652, %v3648
    %v5125 = vpack.c.b16 %v3653, %v3649
    %v5126 = vpack.c.b16 %v3658, %v3654
    %v5127 = vpack.c.b16 %v3659, %v3655
    %v5128 = vpack.c.b16 %v3660, %v3656
    %v5129 = vpack.c.b16 %v3661, %v3657
    %v5130 = vpack.c.b16 %v3666, %v3662
    %v5131 = vpack.c.b16 %v3667, %v3663
    %v5132 = vpack.c.b16 %v3668, %v3664
    %v5133 = vpack.c.b16 %v3669, %v3665
    %v5134 = vpack.c.b16 %v3674, %v3670
    %v5135 = vpack.c.b16 %v3675, %v3671
    %v5136 = vpack.c.b16 %v3676, %v3672
    %v5137 = vpack.c.b16 %v3677, %v3673
    %v5138 = vpack.c.b16 %v3682, %v3678
    %v5139 = vpack.c.b16 %v3683, %v3679
    %v5140 = vpack.c.b16 %v3684, %v3680
    %v5141 = vpack.c.b16 %v3685, %v3681
    %v5142 = vpack.c.b16 %v3690, %v3686
    %v5143 = vpack.c.b16 %v3691, %v3687
    %v5144 = vpack.c.b16 %v3692, %v3688
    %v5145 = vpack.c.b16 %v3693, %v3689
    %v5146 = vpack.c.b16 %v3698, %v3694
    %v5147 = vpack.c.b16 %v3699, %v3695
    %v5148 = vpack.c.b16 %v3700, %v3696
    %v5149 = vpack.c.b16 %v3701, %v3697
    %v5150 = vpack.c.b16 %v3706, %v3702
    %v5151 = vpack.c.b16 %v3707, %v3703
    %v5152 = vpack.c.b16 %v3708, %v3704
    %v5153 = vpack.c.b16 %v3709, %v3705
    %v5154 = vpack.c.b16 %v3714, %v3710
    %v5155 = vpack.c.b16 %v3715, %v3711
    %v5156 = vpack.c.b16 %v3716, %v3712
    %v5157 = vpack.c.b16 %v3717, %v3713
    %v5158 = vpack.c.b16 %v3722, %v3718
    %v5159 = vpack.c.b16 %v3723, %v3719
    %v5160 = vpack.c.b16 %v3724, %v3720
    %v5161 = vpack.c.b16 %v3725, %v3721
    %v5162 = vpack.c.b16 %v3730, %v3726
    %v5163 = vpack.c.b16 %v3731, %v3727
    %v5164 = vpack.c.b16 %v3732, %v3728
    %v5165 = vpack.c.b16 %v3733, %v3729
    %v5166 = vpack.c.b16 %v3738, %v3734
    %v5167 = vpack.c.b16 %v3739, %v3735
    %v5168 = vpack.c.b16 %v3740, %v3736
    %v5169 = vpack.c.b16 %v3741, %v3737
    %v5170 = vpack.c.b16 %v3746, %v3742
    %v5171 = vpack.c.b16 %v3747, %v3743
    %v5172 = vpack.c.b16 %v3748, %v3744
    %v5173 = vpack.c.b16 %v3749, %v3745
    %v5174 = vpack.c.b16 %v3754, %v3750
    %v5175 = vpack.c.b16 %v3755, %v3751
    %v5176 = vpack.c.b16 %v3756, %v3752
    %v5177 = vpack.c.b16 %v3757, %v3753
    %v5178 = vpack.c.b16 %v3762, %v3758
    %v5179 = vpack.c.b16 %v3763, %v3759
    %v5180 = vpack.c.b16 %v3764, %v3760
    %v5181 = vpack.c.b16 %v3765, %v3761
    %v5182 = vpack.c.b16 %v3770, %v3766
    %v5183 = vpack.c.b16 %v3771, %v3767
    %v5184 = vpack.c.b16 %v3772, %v3768
    %v5185 = vpack.c.b16 %v3773, %v3769
    %v5186 = vpack.c.b16 %v3778, %v3774
    %v5187 = vpack.c.b16 %v3779, %v3775
    %v5188 = vpack.c.b16 %v3780, %v3776
    %v5189 = vpack.c.b16 %v3781, %v3777
    %v5190 = vpack.c.b16 %v3786, %v3782
    %v5191 = vpack.c.b16 %v3787, %v3783
    %v5192 = vpack.c.b16 %v3788, %v3784
    %v5193 = vpack.c.b16 %v3789, %v3785
    %v5194 = vpack.c.b16 %v3794, %v3790
    %v5195 = vpack.c.b16 %v3795, %v3791
    %v5196 = vpack.c.b16 %v3796, %v3792
    %v5197 = vpack.c.b16 %v3797, %v3793
    %v5198 = vpack.c.b16 %v3802, %v3798
    %v5199 = vpack.c.b16 %v3803, %v3799
    %v5200 = vpack.c.b16 %v3804, %v3800
    %v5201 = vpack.c.b16 %v3805, %v3801
    %v5202 = vpack.c.b16 %v3810, %v3806
    %v5203 = vpack.c.b16 %v3811, %v3807
    %v5204 = vpack.c.b16 %v3812, %v3808
    %v5205 = vpack.c.b16 %v3813, %v3809
    %v5206 = vpack.c.b16 %v3818, %v3814
    %v5207 = vpack.c.b16 %v3819, %v3815
    %v5208 = vpack.c.b16 %v3820, %v3816
    %v5209 = vpack.c.b16 %v3821, %v3817
    %v5210 = vpack.c.b16 %v3826, %v3822
    %v5211 = vpack.c.b16 %v3827, %v3823
    %v5212 = vpack.c.b16 %v3828, %v3824
    %v5213 = vpack.c.b16 %v3829, %v3825
    %v5214 = vpack.c.b16 %v3834, %v3830
    %v5215 = vpack.c.b16 %v3835, %v3831
    %v5216 = vpack.c.b16 %v3836, %v3832
    %v5217 = vpack.c.b16 %v3837, %v3833
    %v5218 = vpack.c.b16 %v3842, %v3838
    %v5219 = vpack.c.b16 %v3843, %v3839
    %v5220 = vpack.c.b16 %v3844, %v3840
    %v5221 = vpack.c.b16 %v3845, %v3841
    %v5222 = vpack.c.b16 %v3850, %v3846
    %v5223 = vpack.c.b16 %v3851, %v3847
    %v5224 = vpack.c.b16 %v3852, %v3848
    %v5225 = vpack.c.b16 %v3853, %v3849
    %v5226 = vpack.c.b16 %v3858, %v3854
    %v5227 = vpack.c.b16 %v3859, %v3855
    %v5228 = vpack.c.b16 %v3860, %v3856
    %v5229 = vpack.c.b16 %v3861, %v3857
    %v5230 = vpack.c.b16 %v3866, %v3862
    %v5231 = vpack.c.b16 %v3867, %v3863
    %v5232 = vpack.c.b16 %v3868, %v3864
    %v5233 = vpack.c.b16 %v3869, %v3865
    %v5234 = vpack.c.b16 %v3874, %v3870
    %v5235 = vpack.c.b16 %v3875, %v3871
    %v5236 = vpack.c.b16 %v3876, %v3872
    %v5237 = vpack.c.b16 %v3877, %v3873
    %v5238 = vpack.c.b16 %v3882, %v3878
    %v5239 = vpack.c.b16 %v3883, %v3879
    %v5240 = vpack.c.b16 %v3884, %v3880
    %v5241 = vpack.c.b16 %v3885, %v3881
    %v5242 = vpack.c.b16 %v3890, %v3886
    %v5243 = vpack.c.b16 %v3891, %v3887
    %v5244 = vpack.c.b16 %v3892, %v3888
    %v5245 = vpack.c.b16 %v3893, %v3889
    %v5246 = vpack.c.b16 %v3898, %v3894
    %v5247 = vpack.c.b16 %v3899, %v3895
    %v5248 = vpack.c.b16 %v3900, %v3896
    %v5249 = vpack.c.b16 %v3901, %v3897
    %v5250 = vpack.c.b16 %v3906, %v3902
    %v5251 = vpack.c.b16 %v3907, %v3903
    %v5252 = vpack.c.b16 %v3908, %v3904
    %v5253 = vpack.c.b16 %v3909, %v3905
    %v5254 = vpack.c.b16 %v3914, %v3910
    %v5255 = vpack.c.b16 %v3915, %v3911
    %v5256 = vpack.c.b16 %v3916, %v3912
    %v5257 = vpack.c.b16 %v3917, %v3913
    %v5258 = vpack.c.b16 %v3922, %v3918
    %v5259 = vpack.c.b16 %v3923, %v3919
    %v5260 = vpack.c.b16 %v3924, %v3920
    %v5261 = vpack.c.b16 %v3925, %v3921
    %v5262 = vpack.c.b16 %v3930, %v3926
    %v5263 = vpack.c.b16 %v3931, %v3927
    %v5264 = vpack.c.b16 %v3932, %v3928
    %v5265 = vpack.c.b16 %v3933, %v3929
    %v5266 = vpack.c.b16 %v3938, %v3934
    %v5267 = vpack.c.b16 %v3939, %v3935
    %v5268 = vpack.c.b16 %v3940, %v3936
    %v5269 = vpack.c.b16 %v3941, %v3937
    %v5270 = vpack.c.b16 %v3946, %v3942
    %v5271 = vpack.c.b16 %v3947, %v3943
    %v5272 = vpack.c.b16 %v3948, %v3944
    %v5273 = vpack.c.b16 %v3949, %v3945
    %v5274 = vpack.c.b16 %v3954, %v3950
    %v5275 = vpack.c.b16 %v3955, %v3951
    %v5276 = vpack.c.b16 %v3956, %v3952
    %v5277 = vpack.c.b16 %v3957, %v3953
    %v5278 = vpack.c.b16 %v3962, %v3958
    %v5279 = vpack.c.b16 %v3963, %v3959
    %v5280 = vpack.c.b16 %v3964, %v3960
    %v5281 = vpack.c.b16 %v3965, %v3961
    %v5282 = vpack.c.b16 %v3970, %v3966
    %v5283 = vpack.c.b16 %v3971, %v3967
    %v5284 = vpack.c.b16 %v3972, %v3968
    %v5285 = vpack.c.b16 %v3973, %v3969
    %v5286 = vpack.c.b16 %v3978, %v3974
    %v5287 = vpack.c.b16 %v3979, %v3975
    %v5288 = vpack.c.b16 %v3980, %v3976
    %v5289 = vpack.c.b16 %v3981, %v3977
    %v5290 = vpack.c.b16 %v3986, %v3982
    %v5291 = vpack.c.b16 %v3987, %v3983
    %v5292 = vpack.c.b16 %v3988, %v3984
    %v5293 = vpack.c.b16 %v3989, %v3985
    %v5294 = vpack.c.b16 %v3994, %v3990
    %v5295 = vpack.c.b16 %v3995, %v3991
    %v5296 = vpack.c.b16 %v3996, %v3992
    %v5297 = vpack.c.b16 %v3997, %v3993
    %v5298 = vpack.c.b16 %v4002, %v3998
    %v5299 = vpack.c.b16 %v4003, %v3999
    %v5300 = vpack.c.b16 %v4004, %v4000
    %v5301 = vpack.c.b16 %v4005, %v4001
    %v5302 = vpack.c.b16 %v4010, %v4006
    %v5303 = vpack.c.b16 %v4011, %v4007
    %v5304 = vpack.c.b16 %v4012, %v4008
    %v5305 = vpack.c.b16 %v4013, %v4009
    %v5306 = vpack.c.b16 %v4018, %v4014
    %v5307 = vpack.c.b16 %v4019, %v4015
    %v5308 = vpack.c.b16 %v4020, %v4016
    %v5309 = vpack.c.b16 %v4021, %v4017
    %v5310 = vpack.c.b16 %v4026, %v4022
    %v5311 = vpack.c.b16 %v4027, %v4023
    %v5312 = vpack.c.b16 %v4028, %v4024
    %v5313 = vpack.c.b16 %v4029, %v4025
    %v5314 = vpack.c.b16 %v4034, %v4030
    %v5315 = vpack.c.b16 %v4035, %v4031
    %v5316 = vpack.c.b16 %v4036, %v4032
    %v5317 = vpack.c.b16 %v4037, %v4033
    %v5318 = vpack.c.b16 %v4042, %v4038
    %v5319 = vpack.c.b16 %v4043, %v4039
    %v5320 = vpack.c.b16 %v4044, %v4040
    %v5321 = vpack.c.b16 %v4045, %v4041
    %v5322 = vpack.c.b16 %v4050, %v4046
    %v5323 = vpack.c.b16 %v4051, %v4047
    %v5324 = vpack.c.b16 %v4052, %v4048
    %v5325 = vpack.c.b16 %v4053, %v4049
    %v5326 = vpack.c.b16 %v4058, %v4054
    %v5327 = vpack.c.b16 %v4059, %v4055
    %v5328 = vpack.c.b16 %v4060, %v4056
    %v5329 = vpack.c.b16 %v4061, %v4057
    %v5330 = vpack.c.b16 %v4066, %v4062
    %v5331 = vpack.c.b16 %v4067, %v4063
    %v5332 = vpack.c.b16 %v4068, %v4064
    %v5333 = vpack.c.b16 %v4069, %v4065
    %v5334 = vpack.c.b16 %v4074, %v4070
    %v5335 = vpack.c.b16 %v4075, %v4071
    %v5336 = vpack.c.b16 %v4076, %v4072
    %v5337 = vpack.c.b16 %v4077, %v4073
    %v5338 = vpack.c.b16 %v4082, %v4078
    %v5339 = vpack.c.b16 %v4083, %v4079
    %v5340 = vpack.c.b16 %v4084, %v4080
    %v5341 = vpack.c.b16 %v4085, %v4081
    %v5342 = vpack.c.b16 %v4090, %v4086
    %v5343 = vpack.c.b16 %v4091, %v4087
    %v5344 = vpack.c.b16 %v4092, %v4088
    %v5345 = vpack.c.b16 %v4093, %v4089
    %v5346 = vpack.c.b16 %v4098, %v4094
    %v5347 = vpack.c.b16 %v4099, %v4095
    %v5348 = vpack.c.b16 %v4100, %v4096
    %v5349 = vpack.c.b16 %v4101, %v4097
    %v5350 = vpack.c.b16 %v4106, %v4102
    %v5351 = vpack.c.b16 %v4107, %v4103
    %v5352 = vpack.c.b16 %v4108, %v4104
    %v5353 = vpack.c.b16 %v4109, %v4105
    %v5354 = vpack.c.b16 %v4114, %v4110
    %v5355 = vpack.c.b16 %v4115, %v4111
    %v5356 = vpack.c.b16 %v4116, %v4112
    %v5357 = vpack.c.b16 %v4117, %v4113
    %v5358 = vpack.c.b16 %v4122, %v4118
    %v5359 = vpack.c.b16 %v4123, %v4119
    %v5360 = vpack.c.b16 %v4124, %v4120
    %v5361 = vpack.c.b16 %v4125, %v4121
    %v5362 = vpack.c.b16 %v4130, %v4126
    %v5363 = vpack.c.b16 %v4131, %v4127
    %v5364 = vpack.c.b16 %v4132, %v4128
    %v5365 = vpack.c.b16 %v4133, %v4129
    %v5366 = vpack.c.b16 %v4138, %v4134
    %v5367 = vpack.c.b16 %v4139, %v4135
    %v5368 = vpack.c.b16 %v4140, %v4136
    %v5369 = vpack.c.b16 %v4141, %v4137
    %v5370 = vpack.c.b16 %v4146, %v4142
    %v5371 = vpack.c.b16 %v4147, %v4143
    %v5372 = vpack.c.b16 %v4148, %v4144
    %v5373 = vpack.c.b16 %v4149, %v4145
    %v5374 = vpack.c.b16 %v4154, %v4150
    %v5375 = vpack.c.b16 %v4155, %v4151
    %v5376 = vpack.c.b16 %v4156, %v4152
    %v5377 = vpack.c.b16 %v4157, %v4153
    %v5378 = vpack.c.b16 %v4162, %v4158
    %v5379 = vpack.c.b16 %v4163, %v4159
    %v5380 = vpack.c.b16 %v4164, %v4160
    %v5381 = vpack.c.b16 %v4165, %v4161
    %v5382 = vpack.c.b16 %v4170, %v4166
    %v5383 = vpack.c.b16 %v4171, %v4167
    %v5384 = vpack.c.b16 %v4172, %v4168
    %v5385 = vpack.c.b16 %v4173, %v4169
    %v5386 = vpack.c.b16 %v4178, %v4174
    %v5387 = vpack.c.b16 %v4179, %v4175
    %v5388 = vpack.c.b16 %v4180, %v4176
    %v5389 = vpack.c.b16 %v4181, %v4177
    %v5390 = vpack.c.b16 %v4186, %v4182
    %v5391 = vpack.c.b16 %v4187, %v4183
    %v5392 = vpack.c.b16 %v4188, %v4184
    %v5393 = vpack.c.b16 %v4189, %v4185
    %v5394 = vpack.c.b16 %v4194, %v4190
    %v5395 = vpack.c.b16 %v4195, %v4191
    %v5396 = vpack.c.b16 %v4196, %v4192
    %v5397 = vpack.c.b16 %v4197, %v4193
    %v5398 = vpack.c.b16 %v4202, %v4198
    %v5399 = vpack.c.b16 %v4203, %v4199
    %v5400 = vpack.c.b16 %v4204, %v4200
    %v5401 = vpack.c.b16 %v4205, %v4201
    %v5402 = vpack.c.b16 %v4210, %v4206
    %v5403 = vpack.c.b16 %v4211, %v4207
    %v5404 = vpack.c.b16 %v4212, %v4208
    %v5405 = vpack.c.b16 %v4213, %v4209
    %v5406 = vpack.c.b16 %v4218, %v4214
    %v5407 = vpack.c.b16 %v4219, %v4215
    %v5408 = vpack.c.b16 %v4220, %v4216
    %v5409 = vpack.c.b16 %v4221, %v4217
    %v5410 = vpack.c.b16 %v4226, %v4222
    %v5411 = vpack.c.b16 %v4227, %v4223
    %v5412 = vpack.c.b16 %v4228, %v4224
    %v5413 = vpack.c.b16 %v4229, %v4225
    %v5414 = vpack.c.b16 %v4234, %v4230
    %v5415 = vpack.c.b16 %v4235, %v4231
    %v5416 = vpack.c.b16 %v4236, %v4232
    %v5417 = vpack.c.b16 %v4237, %v4233
    %v5418 = vpack.c.b16 %v4242, %v4238
    %v5419 = vpack.c.b16 %v4243, %v4239
    %v5420 = vpack.c.b16 %v4244, %v4240
    %v5421 = vpack.c.b16 %v4245, %v4241
    %v5422 = vpack.c.b16 %v4250, %v4246
    %v5423 = vpack.c.b16 %v4251, %v4247
    %v5424 = vpack.c.b16 %v4252, %v4248
    %v5425 = vpack.c.b16 %v4253, %v4249
    %v5426 = vpack.c.b16 %v4258, %v4254
    %v5427 = vpack.c.b16 %v4259, %v4255
    %v5428 = vpack.c.b16 %v4260, %v4256
    %v5429 = vpack.c.b16 %v4261, %v4257
    %v5430 = vpack.c.b16 %v4266, %v4262
    %v5431 = vpack.c.b16 %v4267, %v4263
    %v5432 = vpack.c.b16 %v4268, %v4264
    %v5433 = vpack.c.b16 %v4269, %v4265
    %v5434 = vpack.c.b16 %v4274, %v4270
    %v5435 = vpack.c.b16 %v4275, %v4271
    %v5436 = vpack.c.b16 %v4276, %v4272
    %v5437 = vpack.c.b16 %v4277, %v4273
    %v5438 = vpack.c.b16 %v4282, %v4278
    %v5439 = vpack.c.b16 %v4283, %v4279
    %v5440 = vpack.c.b16 %v4284, %v4280
    %v5441 = vpack.c.b16 %v4285, %v4281
    %v5442 = vpack.c.b16 %v4290, %v4286
    %v5443 = vpack.c.b16 %v4291, %v4287
    %v5444 = vpack.c.b16 %v4292, %v4288
    %v5445 = vpack.c.b16 %v4293, %v4289
    %v5446 = vpack.c.b16 %v4298, %v4294
    %v5447 = vpack.c.b16 %v4299, %v4295
    %v5448 = vpack.c.b16 %v4300, %v4296
    %v5449 = vpack.c.b16 %v4301, %v4297
    %v5450 = vpack.c.b16 %v4306, %v4302
    %v5451 = vpack.c.b16 %v4307, %v4303
    %v5452 = vpack.c.b16 %v4308, %v4304
    %v5453 = vpack.c.b16 %v4309, %v4305
    %v5454 = vpack.c.b16 %v4314, %v4310
    %v5455 = vpack.c.b16 %v4315, %v4311
    %v5456 = vpack.c.b16 %v4316, %v4312
    %v5457 = vpack.c.b16 %v4317, %v4313
    %v5458 = vpack.c.b16 %v4322, %v4318
    %v5459 = vpack.c.b16 %v4323, %v4319
    %v5460 = vpack.c.b16 %v4324, %v4320
    %v5461 = vpack.c.b16 %v4325, %v4321
    %v5462 = vpack.c.b16 %v4330, %v4326
    %v5463 = vpack.c.b16 %v4331, %v4327
    %v5464 = vpack.c.b16 %v4332, %v4328
    %v5465 = vpack.c.b16 %v4333, %v4329
    %v5466 = vpack.c.b16 %v4338, %v4334
    %v5467 = vpack.c.b16 %v4339, %v4335
    %v5468 = vpack.c.b16 %v4340, %v4336
    %v5469 = vpack.c.b16 %v4341, %v4337
    %v5470 = vpack.c.b16 %v4346, %v4342
    %v5471 = vpack.c.b16 %v4347, %v4343
    %v5472 = vpack.c.b16 %v4348, %v4344
    %v5473 = vpack.c.b16 %v4349, %v4345
    %v5474 = vpack.c.b16 %v4354, %v4350
    %v5475 = vpack.c.b16 %v4355, %v4351
    %v5476 = vpack.c.b16 %v4356, %v4352
    %v5477 = vpack.c.b16 %v4357, %v4353
    %v5478 = vpack.c.b16 %v4362, %v4358
    %v5479 = vpack.c.b16 %v4363, %v4359
    %v5480 = vpack.c.b16 %v4364, %v4360
    %v5481 = vpack.c.b16 %v4365, %v4361
    %v5482 = vpack.c.b16 %v4370, %v4366
    %v5483 = vpack.c.b16 %v4371, %v4367
    %v5484 = vpack.c.b16 %v4372, %v4368
    %v5485 = vpack.c.b16 %v4373, %v4369
    %v5486 = vpack.c.b16 %v4378, %v4374
    %v5487 = vpack.c.b16 %v4379, %v4375
    %v5488 = vpack.c.b16 %v4380, %v4376
    %v5489 = vpack.c.b16 %v4381, %v4377
    %v5490 = vpack.c.b16 %v4386, %v4382
    %v5491 = vpack.c.b16 %v4387, %v4383
    %v5492 = vpack.c.b16 %v4388, %v4384
    %v5493 = vpack.c.b16 %v4389, %v4385
    %v5494 = vpack.c.b16 %v4394, %v4390
    %v5495 = vpack.c.b16 %v4395, %v4391
    %v5496 = vpack.c.b16 %v4396, %v4392
    %v5497 = vpack.c.b16 %v4397, %v4393
    %v5498 = vpack.c.b16 %v4402, %v4398
    %v5499 = vpack.c.b16 %v4403, %v4399
    %v5500 = vpack.c.b16 %v4404, %v4400
    %v5501 = vpack.c.b16 %v4405, %v4401
    %v5502 = vpack.c.b16 %v4410, %v4406
    %v5503 = vpack.c.b16 %v4411, %v4407
    %v5504 = vpack.c.b16 %v4412, %v4408
    %v5505 = vpack.c.b16 %v4413, %v4409
    %v5506 = vpack.c.b16 %v4418, %v4414
    %v5507 = vpack.c.b16 %v4419, %v4415
    %v5508 = vpack.c.b16 %v4420, %v4416
    %v5509 = vpack.c.b16 %v4421, %v4417
    %v5510 = vpack.c.b16 %v4426, %v4422
    %v5511 = vpack.c.b16 %v4427, %v4423
    %v5512 = vpack.c.b16 %v4428, %v4424
    %v5513 = vpack.c.b16 %v4429, %v4425
    %v5514 = vpack.c.b16 %v4434, %v4430
    %v5515 = vpack.c.b16 %v4435, %v4431
    %v5516 = vpack.c.b16 %v4436, %v4432
    %v5517 = vpack.c.b16 %v4437, %v4433
    %v5518 = vpack.c.b16 %v4442, %v4438
    %v5519 = vpack.c.b16 %v4443, %v4439
    %v5520 = vpack.c.b16 %v4444, %v4440
    %v5521 = vpack.c.b16 %v4445, %v4441
    %v5522 = vpack.c.b16 %v4450, %v4446
    %v5523 = vpack.c.b16 %v4451, %v4447
    %v5524 = vpack.c.b16 %v4452, %v4448
    %v5525 = vpack.c.b16 %v4453, %v4449
    %v5526 = vpack.c.b16 %v4458, %v4454
    %v5527 = vpack.c.b16 %v4459, %v4455
    %v5528 = vpack.c.b16 %v4460, %v4456
    %v5529 = vpack.c.b16 %v4461, %v4457
    %v5530 = vpack.c.b16 %v4466, %v4462
    %v5531 = vpack.c.b16 %v4467, %v4463
    %v5532 = vpack.c.b16 %v4468, %v4464
    %v5533 = vpack.c.b16 %v4469, %v4465
    %v5534 = vpack.c.b16 %v4474, %v4470
    %v5535 = vpack.c.b16 %v4475, %v4471
    %v5536 = vpack.c.b16 %v4476, %v4472
    %v5537 = vpack.c.b16 %v4477, %v4473
    %v5538 = vpack.c.b16 %v4482, %v4478
    %v5539 = vpack.c.b16 %v4483, %v4479
    %v5540 = vpack.c.b16 %v4484, %v4480
    %v5541 = vpack.c.b16 %v4485, %v4481
    %v5542 = vpack.c.b16 %v4490, %v4486
    %v5543 = vpack.c.b16 %v4491, %v4487
    %v5544 = vpack.c.b16 %v4492, %v4488
    %v5545 = vpack.c.b16 %v4493, %v4489
    %v5546 = vpack.c.b16 %v4498, %v4494
    %v5547 = vpack.c.b16 %v4499, %v4495
    %v5548 = vpack.c.b16 %v4500, %v4496
    %v5549 = vpack.c.b16 %v4501, %v4497
    %v5550 = vpack.c.b16 %v4506, %v4502
    %v5551 = vpack.c.b16 %v4507, %v4503
    %v5552 = vpack.c.b16 %v4508, %v4504
    %v5553 = vpack.c.b16 %v4509, %v4505
    %v5554 = vpack.c.b16 %v4514, %v4510
    %v5555 = vpack.c.b16 %v4515, %v4511
    %v5556 = vpack.c.b16 %v4516, %v4512
    %v5557 = vpack.c.b16 %v4517, %v4513
    %v5558 = vpack.c.b16 %v4522, %v4518
    %v5559 = vpack.c.b16 %v4523, %v4519
    %v5560 = vpack.c.b16 %v4524, %v4520
    %v5561 = vpack.c.b16 %v4525, %v4521
    %v5562 = vpack.c.b16 %v4530, %v4526
    %v5563 = vpack.c.b16 %v4531, %v4527
    %v5564 = vpack.c.b16 %v4532, %v4528
    %v5565 = vpack.c.b16 %v4533, %v4529
    %v5566 = vpack.c.b16 %v4538, %v4534
    %v5567 = vpack.c.b16 %v4539, %v4535
    %v5568 = vpack.c.b16 %v4540, %v4536
    %v5569 = vpack.c.b16 %v4541, %v4537
    %v5570 = vpack.c.b16 %v4546, %v4542
    %v5571 = vpack.c.b16 %v4547, %v4543
    %v5572 = vpack.c.b16 %v4548, %v4544
    %v5573 = vpack.c.b16 %v4549, %v4545
    %6598 = vmatpush.bf16.msra.mxu0 %v4578
    %6599 = vmatpush.bf16.msra.mxu0 %v4574
    %6600 = vmatpush.bf16.msra.mxu0 %v4570
    %6601 = vmatpush.bf16.msra.mxu0 %v4566
    %6602 = vmatpush.bf16.msra.mxu0 %v4562
    %6603 = vmatpush.bf16.msra.mxu0 %v4558
    %6604 = vmatpush.bf16.msra.mxu0 %v4554
    %6605 = vmatpush.bf16.msra.mxu0 %v4550
    %6606 = vmatmul.bf16.gmra.mxu0 %v316
    %v6607 = vpop.f32.mrf.mxu0
    %v6608 = vadd.f32 %v1470, %v6607
    %v6609 = vpop.f32.mrf.mxu0
    %v6610 = vadd.f32 %v1470, %v6609
    %6611 = vmatmul.bf16.gmra.mxu0 %v348
    %v6612 = vpop.f32.mrf.mxu0
    %v6613 = vadd.f32 %v1470, %v6612
    %v6614 = vpop.f32.mrf.mxu0
    %v6615 = vadd.f32 %v1470, %v6614
    %6616 = vmatmul.bf16.gmra.mxu0 %v380
    %v6617 = vpop.f32.mrf.mxu0
    %v6618 = vadd.f32 %v1470, %v6617
    %v6619 = vpop.f32.mrf.mxu0
    %v6620 = vadd.f32 %v1470, %v6619
    %6621 = vmatmul.bf16.gmra.mxu0 %v412
    %v6622 = vpop.f32.mrf.mxu0
    %v6623 = vadd.f32 %v1470, %v6622
    %v6624 = vpop.f32.mrf.mxu0
    %v6625 = vadd.f32 %v1470, %v6624
    %6626 = vdwg.mxu0
    %6627 = vmatpush.bf16.msra.mxu0 %v4610
    %6628 = vmatpush.bf16.msra.mxu0 %v4606
    %6629 = vmatpush.bf16.msra.mxu0 %v4602
    %6630 = vmatpush.bf16.msra.mxu0 %v4598
    %6631 = vmatpush.bf16.msra.mxu0 %v4594
    %6632 = vmatpush.bf16.msra.mxu0 %v4590
    %6633 = vmatpush.bf16.msra.mxu0 %v4586
    %6634 = vmatpush.bf16.msra.mxu0 %v4582
    %6635 = vmatmul.bf16.gmra.mxu0 %v317
    %v6636 = vpop.f32.mrf.mxu0
    %v6637 = vadd.f32 %v6608, %v6636
    %v6638 = vpop.f32.mrf.mxu0
    %v6639 = vadd.f32 %v6610, %v6638
    %6640 = vmatmul.bf16.gmra.mxu0 %v349
    %v6641 = vpop.f32.mrf.mxu0
    %v6642 = vadd.f32 %v6613, %v6641
    %v6643 = vpop.f32.mrf.mxu0
    %v6644 = vadd.f32 %v6615, %v6643
    %6645 = vmatmul.bf16.gmra.mxu0 %v381
    %v6646 = vpop.f32.mrf.mxu0
    %v6647 = vadd.f32 %v6618, %v6646
    %v6648 = vpop.f32.mrf.mxu0
    %v6649 = vadd.f32 %v6620, %v6648
    %6650 = vmatmul.bf16.gmra.mxu0 %v413
    %v6651 = vpop.f32.mrf.mxu0
    %v6652 = vadd.f32 %v6623, %v6651
    %v6653 = vpop.f32.mrf.mxu0
    %v6654 = vadd.f32 %v6625, %v6653
    %6655 = vdwg.mxu0
    %6656 = vmatpush.bf16.msra.mxu0 %v4642
    %6657 = vmatpush.bf16.msra.mxu0 %v4638
    %6658 = vmatpush.bf16.msra.mxu0 %v4634
    %6659 = vmatpush.bf16.msra.mxu0 %v4630
    %6660 = vmatpush.bf16.msra.mxu0 %v4626
    %6661 = vmatpush.bf16.msra.mxu0 %v4622
    %6662 = vmatpush.bf16.msra.mxu0 %v4618
    %6663 = vmatpush.bf16.msra.mxu0 %v4614
    %6664 = vmatmul.bf16.gmra.mxu0 %v318
    %v6665 = vpop.f32.mrf.mxu0
    %v6666 = vadd.f32 %v6637, %v6665
    %v6667 = vpop.f32.mrf.mxu0
    %v6668 = vadd.f32 %v6639, %v6667
    %6669 = vmatmul.bf16.gmra.mxu0 %v350
    %v6670 = vpop.f32.mrf.mxu0
    %v6671 = vadd.f32 %v6642, %v6670
    %v6672 = vpop.f32.mrf.mxu0
    %v6673 = vadd.f32 %v6644, %v6672
    %6674 = vmatmul.bf16.gmra.mxu0 %v382
    %v6675 = vpop.f32.mrf.mxu0
    %v6676 = vadd.f32 %v6647, %v6675
    %v6677 = vpop.f32.mrf.mxu0
    %v6678 = vadd.f32 %v6649, %v6677
    %6679 = vmatmul.bf16.gmra.mxu0 %v414
    %v6680 = vpop.f32.mrf.mxu0
    %v6681 = vadd.f32 %v6652, %v6680
    %v6682 = vpop.f32.mrf.mxu0
    %v6683 = vadd.f32 %v6654, %v6682
    %6684 = vdwg.mxu0
    %6685 = vmatpush.bf16.msra.mxu0 %v4674
    %6686 = vmatpush.bf16.msra.mxu0 %v4670
    %6687 = vmatpush.bf16.msra.mxu0 %v4666
    %6688 = vmatpush.bf16.msra.mxu0 %v4662
    %6689 = vmatpush.bf16.msra.mxu0 %v4658
    %6690 = vmatpush.bf16.msra.mxu0 %v4654
    %6691 = vmatpush.bf16.msra.mxu0 %v4650
    %6692 = vmatpush.bf16.msra.mxu0 %v4646
    %6693 = vmatmul.bf16.gmra.mxu0 %v319
    %v6694 = vpop.f32.mrf.mxu0
    %v6695 = vadd.f32 %v6666, %v6694
    %v6696 = vpop.f32.mrf.mxu0
    %v6697 = vadd.f32 %v6668, %v6696
    %6698 = vmatmul.bf16.gmra.mxu0 %v351
    %v6699 = vpop.f32.mrf.mxu0
    %v6700 = vadd.f32 %v6671, %v6699
    %v6701 = vpop.f32.mrf.mxu0
    %v6702 = vadd.f32 %v6673, %v6701
    %6703 = vmatmul.bf16.gmra.mxu0 %v383
    %v6704 = vpop.f32.mrf.mxu0
    %v6705 = vadd.f32 %v6676, %v6704
    %v6706 = vpop.f32.mrf.mxu0
    %v6707 = vadd.f32 %v6678, %v6706
    %6708 = vmatmul.bf16.gmra.mxu0 %v415
    %v6709 = vpop.f32.mrf.mxu0
    %v6710 = vadd.f32 %v6681, %v6709
    %v6711 = vpop.f32.mrf.mxu0
    %v6712 = vadd.f32 %v6683, %v6711
    %6713 = vdwg.mxu0
    %6714 = vmatpush.bf16.msra.mxu0 %v4706
    %6715 = vmatpush.bf16.msra.mxu0 %v4702
    %6716 = vmatpush.bf16.msra.mxu0 %v4698
    %6717 = vmatpush.bf16.msra.mxu0 %v4694
    %6718 = vmatpush.bf16.msra.mxu0 %v4690
    %6719 = vmatpush.bf16.msra.mxu0 %v4686
    %6720 = vmatpush.bf16.msra.mxu0 %v4682
    %6721 = vmatpush.bf16.msra.mxu0 %v4678
    %6722 = vmatmul.bf16.gmra.mxu0 %v320
    %v6723 = vpop.f32.mrf.mxu0
    %v6724 = vadd.f32 %v6695, %v6723
    %v6725 = vpop.f32.mrf.mxu0
    %v6726 = vadd.f32 %v6697, %v6725
    %6727 = vmatmul.bf16.gmra.mxu0 %v352
    %v6728 = vpop.f32.mrf.mxu0
    %v6729 = vadd.f32 %v6700, %v6728
    %v6730 = vpop.f32.mrf.mxu0
    %v6731 = vadd.f32 %v6702, %v6730
    %6732 = vmatmul.bf16.gmra.mxu0 %v384
    %v6733 = vpop.f32.mrf.mxu0
    %v6734 = vadd.f32 %v6705, %v6733
    %v6735 = vpop.f32.mrf.mxu0
    %v6736 = vadd.f32 %v6707, %v6735
    %6737 = vmatmul.bf16.gmra.mxu0 %v416
    %v6738 = vpop.f32.mrf.mxu0
    %v6739 = vadd.f32 %v6710, %v6738
    %v6740 = vpop.f32.mrf.mxu0
    %v6741 = vadd.f32 %v6712, %v6740
    %6742 = vdwg.mxu0
    %6743 = vmatpush.bf16.msra.mxu0 %v4738
    %6744 = vmatpush.bf16.msra.mxu0 %v4734
    %6745 = vmatpush.bf16.msra.mxu0 %v4730
    %6746 = vmatpush.bf16.msra.mxu0 %v4726
    %6747 = vmatpush.bf16.msra.mxu0 %v4722
    %6748 = vmatpush.bf16.msra.mxu0 %v4718
    %6749 = vmatpush.bf16.msra.mxu0 %v4714
    %6750 = vmatpush.bf16.msra.mxu0 %v4710
    %6751 = vmatmul.bf16.gmra.mxu0 %v321
    %v6752 = vpop.f32.mrf.mxu0
    %v6753 = vadd.f32 %v6724, %v6752
    %v6754 = vpop.f32.mrf.mxu0
    %v6755 = vadd.f32 %v6726, %v6754
    %6756 = vmatmul.bf16.gmra.mxu0 %v353
    %v6757 = vpop.f32.mrf.mxu0
    %v6758 = vadd.f32 %v6729, %v6757
    %v6759 = vpop.f32.mrf.mxu0
    %v6760 = vadd.f32 %v6731, %v6759
    %6761 = vmatmul.bf16.gmra.mxu0 %v385
    %v6762 = vpop.f32.mrf.mxu0
    %v6763 = vadd.f32 %v6734, %v6762
    %v6764 = vpop.f32.mrf.mxu0
    %v6765 = vadd.f32 %v6736, %v6764
    %6766 = vmatmul.bf16.gmra.mxu0 %v417
    %v6767 = vpop.f32.mrf.mxu0
    %v6768 = vadd.f32 %v6739, %v6767
    %v6769 = vpop.f32.mrf.mxu0
    %v6770 = vadd.f32 %v6741, %v6769
    %6771 = vdwg.mxu0
    %6772 = vmatpush.bf16.msra.mxu0 %v4770
    %6773 = vmatpush.bf16.msra.mxu0 %v4766
    %6774 = vmatpush.bf16.msra.mxu0 %v4762
    %6775 = vmatpush.bf16.msra.mxu0 %v4758
    %6776 = vmatpush.bf16.msra.mxu0 %v4754
    %6777 = vmatpush.bf16.msra.mxu0 %v4750
    %6778 = vmatpush.bf16.msra.mxu0 %v4746
    %6779 = vmatpush.bf16.msra.mxu0 %v4742
    %6780 = vmatmul.bf16.gmra.mxu0 %v322
    %v6781 = vpop.f32.mrf.mxu0
    %v6782 = vadd.f32 %v6753, %v6781
    %v6783 = vpop.f32.mrf.mxu0
    %v6784 = vadd.f32 %v6755, %v6783
    %6785 = vmatmul.bf16.gmra.mxu0 %v354
    %v6786 = vpop.f32.mrf.mxu0
    %v6787 = vadd.f32 %v6758, %v6786
    %v6788 = vpop.f32.mrf.mxu0
    %v6789 = vadd.f32 %v6760, %v6788
    %6790 = vmatmul.bf16.gmra.mxu0 %v386
    %v6791 = vpop.f32.mrf.mxu0
    %v6792 = vadd.f32 %v6763, %v6791
    %v6793 = vpop.f32.mrf.mxu0
    %v6794 = vadd.f32 %v6765, %v6793
    %6795 = vmatmul.bf16.gmra.mxu0 %v418
    %v6796 = vpop.f32.mrf.mxu0
    %v6797 = vadd.f32 %v6768, %v6796
    %v6798 = vpop.f32.mrf.mxu0
    %v6799 = vadd.f32 %v6770, %v6798
    %6800 = vdwg.mxu0
    %6801 = vmatpush.bf16.msra.mxu0 %v4802
    %6802 = vmatpush.bf16.msra.mxu0 %v4798
    %6803 = vmatpush.bf16.msra.mxu0 %v4794
    %6804 = vmatpush.bf16.msra.mxu0 %v4790
    %6805 = vmatpush.bf16.msra.mxu0 %v4786
    %6806 = vmatpush.bf16.msra.mxu0 %v4782
    %6807 = vmatpush.bf16.msra.mxu0 %v4778
    %6808 = vmatpush.bf16.msra.mxu0 %v4774
    %6809 = vmatmul.bf16.gmra.mxu0 %v323
    %v6810 = vpop.f32.mrf.mxu0
    %v6811 = vadd.f32 %v6782, %v6810
    %v6812 = vpop.f32.mrf.mxu0
    %v6813 = vadd.f32 %v6784, %v6812
    %6814 = vmatmul.bf16.gmra.mxu0 %v355
    %v6815 = vpop.f32.mrf.mxu0
    %v6816 = vadd.f32 %v6787, %v6815
    %v6817 = vpop.f32.mrf.mxu0
    %v6818 = vadd.f32 %v6789, %v6817
    %6819 = vmatmul.bf16.gmra.mxu0 %v387
    %v6820 = vpop.f32.mrf.mxu0
    %v6821 = vadd.f32 %v6792, %v6820
    %v6822 = vpop.f32.mrf.mxu0
    %v6823 = vadd.f32 %v6794, %v6822
    %6824 = vmatmul.bf16.gmra.mxu0 %v419
    %v6825 = vpop.f32.mrf.mxu0
    %v6826 = vadd.f32 %v6797, %v6825
    %v6827 = vpop.f32.mrf.mxu0
    %v6828 = vadd.f32 %v6799, %v6827
    %6829 = vdwg.mxu0
    %6830 = vmatpush.bf16.msra.mxu0 %v4834
    %6831 = vmatpush.bf16.msra.mxu0 %v4830
    %6832 = vmatpush.bf16.msra.mxu0 %v4826
    %6833 = vmatpush.bf16.msra.mxu0 %v4822
    %6834 = vmatpush.bf16.msra.mxu0 %v4818
    %6835 = vmatpush.bf16.msra.mxu0 %v4814
    %6836 = vmatpush.bf16.msra.mxu0 %v4810
    %6837 = vmatpush.bf16.msra.mxu0 %v4806
    %6838 = vmatmul.bf16.gmra.mxu0 %v324
    %v6839 = vpop.f32.mrf.mxu0
    %v6840 = vadd.f32 %v6811, %v6839
    %v6841 = vpop.f32.mrf.mxu0
    %v6842 = vadd.f32 %v6813, %v6841
    %6843 = vmatmul.bf16.gmra.mxu0 %v356
    %v6844 = vpop.f32.mrf.mxu0
    %v6845 = vadd.f32 %v6816, %v6844
    %v6846 = vpop.f32.mrf.mxu0
    %v6847 = vadd.f32 %v6818, %v6846
    %6848 = vmatmul.bf16.gmra.mxu0 %v388
    %v6849 = vpop.f32.mrf.mxu0
    %v6850 = vadd.f32 %v6821, %v6849
    %v6851 = vpop.f32.mrf.mxu0
    %v6852 = vadd.f32 %v6823, %v6851
    %6853 = vmatmul.bf16.gmra.mxu0 %v420
    %v6854 = vpop.f32.mrf.mxu0
    %v6855 = vadd.f32 %v6826, %v6854
    %v6856 = vpop.f32.mrf.mxu0
    %v6857 = vadd.f32 %v6828, %v6856
    %6858 = vdwg.mxu0
    %6859 = vmatpush.bf16.msra.mxu0 %v4866
    %6860 = vmatpush.bf16.msra.mxu0 %v4862
    %6861 = vmatpush.bf16.msra.mxu0 %v4858
    %6862 = vmatpush.bf16.msra.mxu0 %v4854
    %6863 = vmatpush.bf16.msra.mxu0 %v4850
    %6864 = vmatpush.bf16.msra.mxu0 %v4846
    %6865 = vmatpush.bf16.msra.mxu0 %v4842
    %6866 = vmatpush.bf16.msra.mxu0 %v4838
    %6867 = vmatmul.bf16.gmra.mxu0 %v325
    %v6868 = vpop.f32.mrf.mxu0
    %v6869 = vadd.f32 %v6840, %v6868
    %v6870 = vpop.f32.mrf.mxu0
    %v6871 = vadd.f32 %v6842, %v6870
    %6872 = vmatmul.bf16.gmra.mxu0 %v357
    %v6873 = vpop.f32.mrf.mxu0
    %v6874 = vadd.f32 %v6845, %v6873
    %v6875 = vpop.f32.mrf.mxu0
    %v6876 = vadd.f32 %v6847, %v6875
    %6877 = vmatmul.bf16.gmra.mxu0 %v389
    %v6878 = vpop.f32.mrf.mxu0
    %v6879 = vadd.f32 %v6850, %v6878
    %v6880 = vpop.f32.mrf.mxu0
    %v6881 = vadd.f32 %v6852, %v6880
    %6882 = vmatmul.bf16.gmra.mxu0 %v421
    %v6883 = vpop.f32.mrf.mxu0
    %v6884 = vadd.f32 %v6855, %v6883
    %v6885 = vpop.f32.mrf.mxu0
    %v6886 = vadd.f32 %v6857, %v6885
    %6887 = vdwg.mxu0
    %6888 = vmatpush.bf16.msra.mxu0 %v4898
    %6889 = vmatpush.bf16.msra.mxu0 %v4894
    %6890 = vmatpush.bf16.msra.mxu0 %v4890
    %6891 = vmatpush.bf16.msra.mxu0 %v4886
    %6892 = vmatpush.bf16.msra.mxu0 %v4882
    %6893 = vmatpush.bf16.msra.mxu0 %v4878
    %6894 = vmatpush.bf16.msra.mxu0 %v4874
    %6895 = vmatpush.bf16.msra.mxu0 %v4870
    %6896 = vmatmul.bf16.gmra.mxu0 %v326
    %v6897 = vpop.f32.mrf.mxu0
    %v6898 = vadd.f32 %v6869, %v6897
    %v6899 = vpop.f32.mrf.mxu0
    %v6900 = vadd.f32 %v6871, %v6899
    %6901 = vmatmul.bf16.gmra.mxu0 %v358
    %v6902 = vpop.f32.mrf.mxu0
    %v6903 = vadd.f32 %v6874, %v6902
    %v6904 = vpop.f32.mrf.mxu0
    %v6905 = vadd.f32 %v6876, %v6904
    %6906 = vmatmul.bf16.gmra.mxu0 %v390
    %v6907 = vpop.f32.mrf.mxu0
    %v6908 = vadd.f32 %v6879, %v6907
    %v6909 = vpop.f32.mrf.mxu0
    %v6910 = vadd.f32 %v6881, %v6909
    %6911 = vmatmul.bf16.gmra.mxu0 %v422
    %v6912 = vpop.f32.mrf.mxu0
    %v6913 = vadd.f32 %v6884, %v6912
    %v6914 = vpop.f32.mrf.mxu0
    %v6915 = vadd.f32 %v6886, %v6914
    %6916 = vdwg.mxu0
    %6917 = vmatpush.bf16.msra.mxu0 %v4930
    %6918 = vmatpush.bf16.msra.mxu0 %v4926
    %6919 = vmatpush.bf16.msra.mxu0 %v4922
    %6920 = vmatpush.bf16.msra.mxu0 %v4918
    %6921 = vmatpush.bf16.msra.mxu0 %v4914
    %6922 = vmatpush.bf16.msra.mxu0 %v4910
    %6923 = vmatpush.bf16.msra.mxu0 %v4906
    %6924 = vmatpush.bf16.msra.mxu0 %v4902
    %6925 = vmatmul.bf16.gmra.mxu0 %v327
    %v6926 = vpop.f32.mrf.mxu0
    %v6927 = vadd.f32 %v6898, %v6926
    %v6928 = vpop.f32.mrf.mxu0
    %v6929 = vadd.f32 %v6900, %v6928
    %6930 = vmatmul.bf16.gmra.mxu0 %v359
    %v6931 = vpop.f32.mrf.mxu0
    %v6932 = vadd.f32 %v6903, %v6931
    %v6933 = vpop.f32.mrf.mxu0
    %v6934 = vadd.f32 %v6905, %v6933
    %6935 = vmatmul.bf16.gmra.mxu0 %v391
    %v6936 = vpop.f32.mrf.mxu0
    %v6937 = vadd.f32 %v6908, %v6936
    %v6938 = vpop.f32.mrf.mxu0
    %v6939 = vadd.f32 %v6910, %v6938
    %6940 = vmatmul.bf16.gmra.mxu0 %v423
    %v6941 = vpop.f32.mrf.mxu0
    %v6942 = vadd.f32 %v6913, %v6941
    %v6943 = vpop.f32.mrf.mxu0
    %v6944 = vadd.f32 %v6915, %v6943
    %6945 = vdwg.mxu0
    %6946 = vmatpush.bf16.msra.mxu0 %v4962
    %6947 = vmatpush.bf16.msra.mxu0 %v4958
    %6948 = vmatpush.bf16.msra.mxu0 %v4954
    %6949 = vmatpush.bf16.msra.mxu0 %v4950
    %6950 = vmatpush.bf16.msra.mxu0 %v4946
    %6951 = vmatpush.bf16.msra.mxu0 %v4942
    %6952 = vmatpush.bf16.msra.mxu0 %v4938
    %6953 = vmatpush.bf16.msra.mxu0 %v4934
    %6954 = vmatmul.bf16.gmra.mxu0 %v328
    %v6955 = vpop.f32.mrf.mxu0
    %v6956 = vadd.f32 %v6927, %v6955
    %v6957 = vpop.f32.mrf.mxu0
    %v6958 = vadd.f32 %v6929, %v6957
    %6959 = vmatmul.bf16.gmra.mxu0 %v360
    %v6960 = vpop.f32.mrf.mxu0
    %v6961 = vadd.f32 %v6932, %v6960
    %v6962 = vpop.f32.mrf.mxu0
    %v6963 = vadd.f32 %v6934, %v6962
    %6964 = vmatmul.bf16.gmra.mxu0 %v392
    %v6965 = vpop.f32.mrf.mxu0
    %v6966 = vadd.f32 %v6937, %v6965
    %v6967 = vpop.f32.mrf.mxu0
    %v6968 = vadd.f32 %v6939, %v6967
    %6969 = vmatmul.bf16.gmra.mxu0 %v424
    %v6970 = vpop.f32.mrf.mxu0
    %v6971 = vadd.f32 %v6942, %v6970
    %v6972 = vpop.f32.mrf.mxu0
    %v6973 = vadd.f32 %v6944, %v6972
    %6974 = vdwg.mxu0
    %6975 = vmatpush.bf16.msra.mxu0 %v4994
    %6976 = vmatpush.bf16.msra.mxu0 %v4990
    %6977 = vmatpush.bf16.msra.mxu0 %v4986
    %6978 = vmatpush.bf16.msra.mxu0 %v4982
    %6979 = vmatpush.bf16.msra.mxu0 %v4978
    %6980 = vmatpush.bf16.msra.mxu0 %v4974
    %6981 = vmatpush.bf16.msra.mxu0 %v4970
    %6982 = vmatpush.bf16.msra.mxu0 %v4966
    %6983 = vmatmul.bf16.gmra.mxu0 %v329
    %v6984 = vpop.f32.mrf.mxu0
    %v6985 = vadd.f32 %v6956, %v6984
    %v6986 = vpop.f32.mrf.mxu0
    %v6987 = vadd.f32 %v6958, %v6986
    %6988 = vmatmul.bf16.gmra.mxu0 %v361
    %v6989 = vpop.f32.mrf.mxu0
    %v6990 = vadd.f32 %v6961, %v6989
    %v6991 = vpop.f32.mrf.mxu0
    %v6992 = vadd.f32 %v6963, %v6991
    %6993 = vmatmul.bf16.gmra.mxu0 %v393
    %v6994 = vpop.f32.mrf.mxu0
    %v6995 = vadd.f32 %v6966, %v6994
    %v6996 = vpop.f32.mrf.mxu0
    %v6997 = vadd.f32 %v6968, %v6996
    %6998 = vmatmul.bf16.gmra.mxu0 %v425
    %v6999 = vpop.f32.mrf.mxu0
    %v7000 = vadd.f32 %v6971, %v6999
    %v7001 = vpop.f32.mrf.mxu0
    %v7002 = vadd.f32 %v6973, %v7001
    %7003 = vdwg.mxu0
    %7004 = vmatpush.bf16.msra.mxu0 %v5026
    %7005 = vmatpush.bf16.msra.mxu0 %v5022
    %7006 = vmatpush.bf16.msra.mxu0 %v5018
    %7007 = vmatpush.bf16.msra.mxu0 %v5014
    %7008 = vmatpush.bf16.msra.mxu0 %v5010
    %7009 = vmatpush.bf16.msra.mxu0 %v5006
    %7010 = vmatpush.bf16.msra.mxu0 %v5002
    %7011 = vmatpush.bf16.msra.mxu0 %v4998
    %7012 = vmatmul.bf16.gmra.mxu0 %v330
    %v7013 = vpop.f32.mrf.mxu0
    %v7014 = vadd.f32 %v6985, %v7013
    %v7015 = vpop.f32.mrf.mxu0
    %v7016 = vadd.f32 %v6987, %v7015
    %7017 = vmatmul.bf16.gmra.mxu0 %v362
    %v7018 = vpop.f32.mrf.mxu0
    %v7019 = vadd.f32 %v6990, %v7018
    %v7020 = vpop.f32.mrf.mxu0
    %v7021 = vadd.f32 %v6992, %v7020
    %7022 = vmatmul.bf16.gmra.mxu0 %v394
    %v7023 = vpop.f32.mrf.mxu0
    %v7024 = vadd.f32 %v6995, %v7023
    %v7025 = vpop.f32.mrf.mxu0
    %v7026 = vadd.f32 %v6997, %v7025
    %7027 = vmatmul.bf16.gmra.mxu0 %v426
    %v7028 = vpop.f32.mrf.mxu0
    %v7029 = vadd.f32 %v7000, %v7028
    %v7030 = vpop.f32.mrf.mxu0
    %v7031 = vadd.f32 %v7002, %v7030
    %7032 = vdwg.mxu0
    %7033 = vmatpush.bf16.msra.mxu0 %v5058
    %7034 = vmatpush.bf16.msra.mxu0 %v5054
    %7035 = vmatpush.bf16.msra.mxu0 %v5050
    %7036 = vmatpush.bf16.msra.mxu0 %v5046
    %7037 = vmatpush.bf16.msra.mxu0 %v5042
    %7038 = vmatpush.bf16.msra.mxu0 %v5038
    %7039 = vmatpush.bf16.msra.mxu0 %v5034
    %7040 = vmatpush.bf16.msra.mxu0 %v5030
    %7041 = vmatmul.bf16.gmra.mxu0 %v331
    %v7042 = vpop.f32.mrf.mxu0
    %v7043 = vadd.f32 %v7014, %v7042
    %v7044 = vpop.f32.mrf.mxu0
    %v7045 = vadd.f32 %v7016, %v7044
    %7046 = vmatmul.bf16.gmra.mxu0 %v363
    %v7047 = vpop.f32.mrf.mxu0
    %v7048 = vadd.f32 %v7019, %v7047
    %v7049 = vpop.f32.mrf.mxu0
    %v7050 = vadd.f32 %v7021, %v7049
    %7051 = vmatmul.bf16.gmra.mxu0 %v395
    %v7052 = vpop.f32.mrf.mxu0
    %v7053 = vadd.f32 %v7024, %v7052
    %v7054 = vpop.f32.mrf.mxu0
    %v7055 = vadd.f32 %v7026, %v7054
    %7056 = vmatmul.bf16.gmra.mxu0 %v427
    %v7057 = vpop.f32.mrf.mxu0
    %v7058 = vadd.f32 %v7029, %v7057
    %v7059 = vpop.f32.mrf.mxu0
    %v7060 = vadd.f32 %v7031, %v7059
    %7061 = vdwg.mxu0
    %7062 = vmatpush.bf16.msra.mxu0 %v5090
    %7063 = vmatpush.bf16.msra.mxu0 %v5086
    %7064 = vmatpush.bf16.msra.mxu0 %v5082
    %7065 = vmatpush.bf16.msra.mxu0 %v5078
    %7066 = vmatpush.bf16.msra.mxu0 %v5074
    %7067 = vmatpush.bf16.msra.mxu0 %v5070
    %7068 = vmatpush.bf16.msra.mxu0 %v5066
    %7069 = vmatpush.bf16.msra.mxu0 %v5062
    %7070 = vmatmul.bf16.gmra.mxu0 %v332
    %v7071 = vpop.f32.mrf.mxu0
    %v7072 = vadd.f32 %v7043, %v7071
    %v7073 = vpop.f32.mrf.mxu0
    %v7074 = vadd.f32 %v7045, %v7073
    %7075 = vmatmul.bf16.gmra.mxu0 %v364
    %v7076 = vpop.f32.mrf.mxu0
    %v7077 = vadd.f32 %v7048, %v7076
    %v7078 = vpop.f32.mrf.mxu0
    %v7079 = vadd.f32 %v7050, %v7078
    %7080 = vmatmul.bf16.gmra.mxu0 %v396
    %v7081 = vpop.f32.mrf.mxu0
    %v7082 = vadd.f32 %v7053, %v7081
    %v7083 = vpop.f32.mrf.mxu0
    %v7084 = vadd.f32 %v7055, %v7083
    %7085 = vmatmul.bf16.gmra.mxu0 %v428
    %v7086 = vpop.f32.mrf.mxu0
    %v7087 = vadd.f32 %v7058, %v7086
    %v7088 = vpop.f32.mrf.mxu0
    %v7089 = vadd.f32 %v7060, %v7088
    %7090 = vdwg.mxu0
    %7091 = vmatpush.bf16.msra.mxu0 %v5122
    %7092 = vmatpush.bf16.msra.mxu0 %v5118
    %7093 = vmatpush.bf16.msra.mxu0 %v5114
    %7094 = vmatpush.bf16.msra.mxu0 %v5110
    %7095 = vmatpush.bf16.msra.mxu0 %v5106
    %7096 = vmatpush.bf16.msra.mxu0 %v5102
    %7097 = vmatpush.bf16.msra.mxu0 %v5098
    %7098 = vmatpush.bf16.msra.mxu0 %v5094
    %7099 = vmatmul.bf16.gmra.mxu0 %v333
    %v7100 = vpop.f32.mrf.mxu0
    %v7101 = vadd.f32 %v7072, %v7100
    %v7102 = vpop.f32.mrf.mxu0
    %v7103 = vadd.f32 %v7074, %v7102
    %7104 = vmatmul.bf16.gmra.mxu0 %v365
    %v7105 = vpop.f32.mrf.mxu0
    %v7106 = vadd.f32 %v7077, %v7105
    %v7107 = vpop.f32.mrf.mxu0
    %v7108 = vadd.f32 %v7079, %v7107
    %7109 = vmatmul.bf16.gmra.mxu0 %v397
    %v7110 = vpop.f32.mrf.mxu0
    %v7111 = vadd.f32 %v7082, %v7110
    %v7112 = vpop.f32.mrf.mxu0
    %v7113 = vadd.f32 %v7084, %v7112
    %7114 = vmatmul.bf16.gmra.mxu0 %v429
    %v7115 = vpop.f32.mrf.mxu0
    %v7116 = vadd.f32 %v7087, %v7115
    %v7117 = vpop.f32.mrf.mxu0
    %v7118 = vadd.f32 %v7089, %v7117
    %7119 = vdwg.mxu0
    %7120 = vmatpush.bf16.msra.mxu0 %v5154
    %7121 = vmatpush.bf16.msra.mxu0 %v5150
    %7122 = vmatpush.bf16.msra.mxu0 %v5146
    %7123 = vmatpush.bf16.msra.mxu0 %v5142
    %7124 = vmatpush.bf16.msra.mxu0 %v5138
    %7125 = vmatpush.bf16.msra.mxu0 %v5134
    %7126 = vmatpush.bf16.msra.mxu0 %v5130
    %7127 = vmatpush.bf16.msra.mxu0 %v5126
    %7128 = vmatmul.bf16.gmra.mxu0 %v334
    %v7129 = vpop.f32.mrf.mxu0
    %v7130 = vadd.f32 %v7101, %v7129
    %v7131 = vpop.f32.mrf.mxu0
    %v7132 = vadd.f32 %v7103, %v7131
    %7133 = vmatmul.bf16.gmra.mxu0 %v366
    %v7134 = vpop.f32.mrf.mxu0
    %v7135 = vadd.f32 %v7106, %v7134
    %v7136 = vpop.f32.mrf.mxu0
    %v7137 = vadd.f32 %v7108, %v7136
    %7138 = vmatmul.bf16.gmra.mxu0 %v398
    %v7139 = vpop.f32.mrf.mxu0
    %v7140 = vadd.f32 %v7111, %v7139
    %v7141 = vpop.f32.mrf.mxu0
    %v7142 = vadd.f32 %v7113, %v7141
    %7143 = vmatmul.bf16.gmra.mxu0 %v430
    %v7144 = vpop.f32.mrf.mxu0
    %v7145 = vadd.f32 %v7116, %v7144
    %v7146 = vpop.f32.mrf.mxu0
    %v7147 = vadd.f32 %v7118, %v7146
    %7148 = vdwg.mxu0
    %7149 = vmatpush.bf16.msra.mxu0 %v5186
    %7150 = vmatpush.bf16.msra.mxu0 %v5182
    %7151 = vmatpush.bf16.msra.mxu0 %v5178
    %7152 = vmatpush.bf16.msra.mxu0 %v5174
    %7153 = vmatpush.bf16.msra.mxu0 %v5170
    %7154 = vmatpush.bf16.msra.mxu0 %v5166
    %7155 = vmatpush.bf16.msra.mxu0 %v5162
    %7156 = vmatpush.bf16.msra.mxu0 %v5158
    %7157 = vmatmul.bf16.gmra.mxu0 %v335
    %v7158 = vpop.f32.mrf.mxu0
    %v7159 = vadd.f32 %v7130, %v7158
    %v7160 = vpop.f32.mrf.mxu0
    %v7161 = vadd.f32 %v7132, %v7160
    %7162 = vmatmul.bf16.gmra.mxu0 %v367
    %v7163 = vpop.f32.mrf.mxu0
    %v7164 = vadd.f32 %v7135, %v7163
    %v7165 = vpop.f32.mrf.mxu0
    %v7166 = vadd.f32 %v7137, %v7165
    %7167 = vmatmul.bf16.gmra.mxu0 %v399
    %v7168 = vpop.f32.mrf.mxu0
    %v7169 = vadd.f32 %v7140, %v7168
    %v7170 = vpop.f32.mrf.mxu0
    %v7171 = vadd.f32 %v7142, %v7170
    %7172 = vmatmul.bf16.gmra.mxu0 %v431
    %v7173 = vpop.f32.mrf.mxu0
    %v7174 = vadd.f32 %v7145, %v7173
    %v7175 = vpop.f32.mrf.mxu0
    %v7176 = vadd.f32 %v7147, %v7175
    %7177 = vdwg.mxu0
    %7178 = vmatpush.bf16.msra.mxu0 %v5218
    %7179 = vmatpush.bf16.msra.mxu0 %v5214
    %7180 = vmatpush.bf16.msra.mxu0 %v5210
    %7181 = vmatpush.bf16.msra.mxu0 %v5206
    %7182 = vmatpush.bf16.msra.mxu0 %v5202
    %7183 = vmatpush.bf16.msra.mxu0 %v5198
    %7184 = vmatpush.bf16.msra.mxu0 %v5194
    %7185 = vmatpush.bf16.msra.mxu0 %v5190
    %7186 = vmatmul.bf16.gmra.mxu0 %v336
    %v7187 = vpop.f32.mrf.mxu0
    %v7188 = vadd.f32 %v7159, %v7187
    %v7189 = vpop.f32.mrf.mxu0
    %v7190 = vadd.f32 %v7161, %v7189
    %7191 = vmatmul.bf16.gmra.mxu0 %v368
    %v7192 = vpop.f32.mrf.mxu0
    %v7193 = vadd.f32 %v7164, %v7192
    %v7194 = vpop.f32.mrf.mxu0
    %v7195 = vadd.f32 %v7166, %v7194
    %7196 = vmatmul.bf16.gmra.mxu0 %v400
    %v7197 = vpop.f32.mrf.mxu0
    %v7198 = vadd.f32 %v7169, %v7197
    %v7199 = vpop.f32.mrf.mxu0
    %v7200 = vadd.f32 %v7171, %v7199
    %7201 = vmatmul.bf16.gmra.mxu0 %v432
    %v7202 = vpop.f32.mrf.mxu0
    %v7203 = vadd.f32 %v7174, %v7202
    %v7204 = vpop.f32.mrf.mxu0
    %v7205 = vadd.f32 %v7176, %v7204
    %7206 = vdwg.mxu0
    %7207 = vmatpush.bf16.msra.mxu0 %v5250
    %7208 = vmatpush.bf16.msra.mxu0 %v5246
    %7209 = vmatpush.bf16.msra.mxu0 %v5242
    %7210 = vmatpush.bf16.msra.mxu0 %v5238
    %7211 = vmatpush.bf16.msra.mxu0 %v5234
    %7212 = vmatpush.bf16.msra.mxu0 %v5230
    %7213 = vmatpush.bf16.msra.mxu0 %v5226
    %7214 = vmatpush.bf16.msra.mxu0 %v5222
    %7215 = vmatmul.bf16.gmra.mxu0 %v337
    %v7216 = vpop.f32.mrf.mxu0
    %v7217 = vadd.f32 %v7188, %v7216
    %v7218 = vpop.f32.mrf.mxu0
    %v7219 = vadd.f32 %v7190, %v7218
    %7220 = vmatmul.bf16.gmra.mxu0 %v369
    %v7221 = vpop.f32.mrf.mxu0
    %v7222 = vadd.f32 %v7193, %v7221
    %v7223 = vpop.f32.mrf.mxu0
    %v7224 = vadd.f32 %v7195, %v7223
    %7225 = vmatmul.bf16.gmra.mxu0 %v401
    %v7226 = vpop.f32.mrf.mxu0
    %v7227 = vadd.f32 %v7198, %v7226
    %v7228 = vpop.f32.mrf.mxu0
    %v7229 = vadd.f32 %v7200, %v7228
    %7230 = vmatmul.bf16.gmra.mxu0 %v433
    %v7231 = vpop.f32.mrf.mxu0
    %v7232 = vadd.f32 %v7203, %v7231
    %v7233 = vpop.f32.mrf.mxu0
    %v7234 = vadd.f32 %v7205, %v7233
    %7235 = vdwg.mxu0
    %7236 = vmatpush.bf16.msra.mxu0 %v5282
    %7237 = vmatpush.bf16.msra.mxu0 %v5278
    %7238 = vmatpush.bf16.msra.mxu0 %v5274
    %7239 = vmatpush.bf16.msra.mxu0 %v5270
    %7240 = vmatpush.bf16.msra.mxu0 %v5266
    %7241 = vmatpush.bf16.msra.mxu0 %v5262
    %7242 = vmatpush.bf16.msra.mxu0 %v5258
    %7243 = vmatpush.bf16.msra.mxu0 %v5254
    %7244 = vmatmul.bf16.gmra.mxu0 %v338
    %v7245 = vpop.f32.mrf.mxu0
    %v7246 = vadd.f32 %v7217, %v7245
    %v7247 = vpop.f32.mrf.mxu0
    %v7248 = vadd.f32 %v7219, %v7247
    %7249 = vmatmul.bf16.gmra.mxu0 %v370
    %v7250 = vpop.f32.mrf.mxu0
    %v7251 = vadd.f32 %v7222, %v7250
    %v7252 = vpop.f32.mrf.mxu0
    %v7253 = vadd.f32 %v7224, %v7252
    %7254 = vmatmul.bf16.gmra.mxu0 %v402
    %v7255 = vpop.f32.mrf.mxu0
    %v7256 = vadd.f32 %v7227, %v7255
    %v7257 = vpop.f32.mrf.mxu0
    %v7258 = vadd.f32 %v7229, %v7257
    %7259 = vmatmul.bf16.gmra.mxu0 %v434
    %v7260 = vpop.f32.mrf.mxu0
    %v7261 = vadd.f32 %v7232, %v7260
    %v7262 = vpop.f32.mrf.mxu0
    %v7263 = vadd.f32 %v7234, %v7262
    %7264 = vdwg.mxu0
    %7265 = vmatpush.bf16.msra.mxu0 %v5314
    %7266 = vmatpush.bf16.msra.mxu0 %v5310
    %7267 = vmatpush.bf16.msra.mxu0 %v5306
    %7268 = vmatpush.bf16.msra.mxu0 %v5302
    %7269 = vmatpush.bf16.msra.mxu0 %v5298
    %7270 = vmatpush.bf16.msra.mxu0 %v5294
    %7271 = vmatpush.bf16.msra.mxu0 %v5290
    %7272 = vmatpush.bf16.msra.mxu0 %v5286
    %7273 = vmatmul.bf16.gmra.mxu0 %v339
    %v7274 = vpop.f32.mrf.mxu0
    %v7275 = vadd.f32 %v7246, %v7274
    %v7276 = vpop.f32.mrf.mxu0
    %v7277 = vadd.f32 %v7248, %v7276
    %7278 = vmatmul.bf16.gmra.mxu0 %v371
    %v7279 = vpop.f32.mrf.mxu0
    %v7280 = vadd.f32 %v7251, %v7279
    %v7281 = vpop.f32.mrf.mxu0
    %v7282 = vadd.f32 %v7253, %v7281
    %7283 = vmatmul.bf16.gmra.mxu0 %v403
    %v7284 = vpop.f32.mrf.mxu0
    %v7285 = vadd.f32 %v7256, %v7284
    %v7286 = vpop.f32.mrf.mxu0
    %v7287 = vadd.f32 %v7258, %v7286
    %7288 = vmatmul.bf16.gmra.mxu0 %v435
    %v7289 = vpop.f32.mrf.mxu0
    %v7290 = vadd.f32 %v7261, %v7289
    %v7291 = vpop.f32.mrf.mxu0
    %v7292 = vadd.f32 %v7263, %v7291
    %7293 = vdwg.mxu0
    %7294 = vmatpush.bf16.msra.mxu0 %v5346
    %7295 = vmatpush.bf16.msra.mxu0 %v5342
    %7296 = vmatpush.bf16.msra.mxu0 %v5338
    %7297 = vmatpush.bf16.msra.mxu0 %v5334
    %7298 = vmatpush.bf16.msra.mxu0 %v5330
    %7299 = vmatpush.bf16.msra.mxu0 %v5326
    %7300 = vmatpush.bf16.msra.mxu0 %v5322
    %7301 = vmatpush.bf16.msra.mxu0 %v5318
    %7302 = vmatmul.bf16.gmra.mxu0 %v340
    %v7303 = vpop.f32.mrf.mxu0
    %v7304 = vadd.f32 %v7275, %v7303
    %v7305 = vpop.f32.mrf.mxu0
    %v7306 = vadd.f32 %v7277, %v7305
    %7307 = vmatmul.bf16.gmra.mxu0 %v372
    %v7308 = vpop.f32.mrf.mxu0
    %v7309 = vadd.f32 %v7280, %v7308
    %v7310 = vpop.f32.mrf.mxu0
    %v7311 = vadd.f32 %v7282, %v7310
    %7312 = vmatmul.bf16.gmra.mxu0 %v404
    %v7313 = vpop.f32.mrf.mxu0
    %v7314 = vadd.f32 %v7285, %v7313
    %v7315 = vpop.f32.mrf.mxu0
    %v7316 = vadd.f32 %v7287, %v7315
    %7317 = vmatmul.bf16.gmra.mxu0 %v436
    %v7318 = vpop.f32.mrf.mxu0
    %v7319 = vadd.f32 %v7290, %v7318
    %v7320 = vpop.f32.mrf.mxu0
    %v7321 = vadd.f32 %v7292, %v7320
    %7322 = vdwg.mxu0
    %7323 = vmatpush.bf16.msra.mxu0 %v5378
    %7324 = vmatpush.bf16.msra.mxu0 %v5374
    %7325 = vmatpush.bf16.msra.mxu0 %v5370
    %7326 = vmatpush.bf16.msra.mxu0 %v5366
    %7327 = vmatpush.bf16.msra.mxu0 %v5362
    %7328 = vmatpush.bf16.msra.mxu0 %v5358
    %7329 = vmatpush.bf16.msra.mxu0 %v5354
    %7330 = vmatpush.bf16.msra.mxu0 %v5350
    %7331 = vmatmul.bf16.gmra.mxu0 %v341
    %v7332 = vpop.f32.mrf.mxu0
    %v7333 = vadd.f32 %v7304, %v7332
    %v7334 = vpop.f32.mrf.mxu0
    %v7335 = vadd.f32 %v7306, %v7334
    %7336 = vmatmul.bf16.gmra.mxu0 %v373
    %v7337 = vpop.f32.mrf.mxu0
    %v7338 = vadd.f32 %v7309, %v7337
    %v7339 = vpop.f32.mrf.mxu0
    %v7340 = vadd.f32 %v7311, %v7339
    %7341 = vmatmul.bf16.gmra.mxu0 %v405
    %v7342 = vpop.f32.mrf.mxu0
    %v7343 = vadd.f32 %v7314, %v7342
    %v7344 = vpop.f32.mrf.mxu0
    %v7345 = vadd.f32 %v7316, %v7344
    %7346 = vmatmul.bf16.gmra.mxu0 %v437
    %v7347 = vpop.f32.mrf.mxu0
    %v7348 = vadd.f32 %v7319, %v7347
    %v7349 = vpop.f32.mrf.mxu0
    %v7350 = vadd.f32 %v7321, %v7349
    %7351 = vdwg.mxu0
    %7352 = vmatpush.bf16.msra.mxu0 %v5410
    %7353 = vmatpush.bf16.msra.mxu0 %v5406
    %7354 = vmatpush.bf16.msra.mxu0 %v5402
    %7355 = vmatpush.bf16.msra.mxu0 %v5398
    %7356 = vmatpush.bf16.msra.mxu0 %v5394
    %7357 = vmatpush.bf16.msra.mxu0 %v5390
    %7358 = vmatpush.bf16.msra.mxu0 %v5386
    %7359 = vmatpush.bf16.msra.mxu0 %v5382
    %7360 = vmatmul.bf16.gmra.mxu0 %v342
    %v7361 = vpop.f32.mrf.mxu0
    %v7362 = vadd.f32 %v7333, %v7361
    %v7363 = vpop.f32.mrf.mxu0
    %v7364 = vadd.f32 %v7335, %v7363
    %7365 = vmatmul.bf16.gmra.mxu0 %v374
    %v7366 = vpop.f32.mrf.mxu0
    %v7367 = vadd.f32 %v7338, %v7366
    %v7368 = vpop.f32.mrf.mxu0
    %v7369 = vadd.f32 %v7340, %v7368
    %7370 = vmatmul.bf16.gmra.mxu0 %v406
    %v7371 = vpop.f32.mrf.mxu0
    %v7372 = vadd.f32 %v7343, %v7371
    %v7373 = vpop.f32.mrf.mxu0
    %v7374 = vadd.f32 %v7345, %v7373
    %7375 = vmatmul.bf16.gmra.mxu0 %v438
    %v7376 = vpop.f32.mrf.mxu0
    %v7377 = vadd.f32 %v7348, %v7376
    %v7378 = vpop.f32.mrf.mxu0
    %v7379 = vadd.f32 %v7350, %v7378
    %7380 = vdwg.mxu0
    %7381 = vmatpush.bf16.msra.mxu0 %v5442
    %7382 = vmatpush.bf16.msra.mxu0 %v5438
    %7383 = vmatpush.bf16.msra.mxu0 %v5434
    %7384 = vmatpush.bf16.msra.mxu0 %v5430
    %7385 = vmatpush.bf16.msra.mxu0 %v5426
    %7386 = vmatpush.bf16.msra.mxu0 %v5422
    %7387 = vmatpush.bf16.msra.mxu0 %v5418
    %7388 = vmatpush.bf16.msra.mxu0 %v5414
    %7389 = vmatmul.bf16.gmra.mxu0 %v343
    %v7390 = vpop.f32.mrf.mxu0
    %v7391 = vadd.f32 %v7362, %v7390
    %v7392 = vpop.f32.mrf.mxu0
    %v7393 = vadd.f32 %v7364, %v7392
    %7394 = vmatmul.bf16.gmra.mxu0 %v375
    %v7395 = vpop.f32.mrf.mxu0
    %v7396 = vadd.f32 %v7367, %v7395
    %v7397 = vpop.f32.mrf.mxu0
    %v7398 = vadd.f32 %v7369, %v7397
    %7399 = vmatmul.bf16.gmra.mxu0 %v407
    %v7400 = vpop.f32.mrf.mxu0
    %v7401 = vadd.f32 %v7372, %v7400
    %v7402 = vpop.f32.mrf.mxu0
    %v7403 = vadd.f32 %v7374, %v7402
    %7404 = vmatmul.bf16.gmra.mxu0 %v439
    %v7405 = vpop.f32.mrf.mxu0
    %v7406 = vadd.f32 %v7377, %v7405
    %v7407 = vpop.f32.mrf.mxu0
    %v7408 = vadd.f32 %v7379, %v7407
    %7409 = vdwg.mxu0
    %7410 = vmatpush.bf16.msra.mxu0 %v5474
    %7411 = vmatpush.bf16.msra.mxu0 %v5470
    %7412 = vmatpush.bf16.msra.mxu0 %v5466
    %7413 = vmatpush.bf16.msra.mxu0 %v5462
    %7414 = vmatpush.bf16.msra.mxu0 %v5458
    %7415 = vmatpush.bf16.msra.mxu0 %v5454
    %7416 = vmatpush.bf16.msra.mxu0 %v5450
    %7417 = vmatpush.bf16.msra.mxu0 %v5446
    %7418 = vmatmul.bf16.gmra.mxu0 %v344
    %v7419 = vpop.f32.mrf.mxu0
    %v7420 = vadd.f32 %v7391, %v7419
    %v7421 = vpop.f32.mrf.mxu0
    %v7422 = vadd.f32 %v7393, %v7421
    %7423 = vmatmul.bf16.gmra.mxu0 %v376
    %v7424 = vpop.f32.mrf.mxu0
    %v7425 = vadd.f32 %v7396, %v7424
    %v7426 = vpop.f32.mrf.mxu0
    %v7427 = vadd.f32 %v7398, %v7426
    %7428 = vmatmul.bf16.gmra.mxu0 %v408
    %v7429 = vpop.f32.mrf.mxu0
    %v7430 = vadd.f32 %v7401, %v7429
    %v7431 = vpop.f32.mrf.mxu0
    %v7432 = vadd.f32 %v7403, %v7431
    %7433 = vmatmul.bf16.gmra.mxu0 %v440
    %v7434 = vpop.f32.mrf.mxu0
    %v7435 = vadd.f32 %v7406, %v7434
    %v7436 = vpop.f32.mrf.mxu0
    %v7437 = vadd.f32 %v7408, %v7436
    %7438 = vdwg.mxu0
    %7439 = vmatpush.bf16.msra.mxu0 %v5506
    %7440 = vmatpush.bf16.msra.mxu0 %v5502
    %7441 = vmatpush.bf16.msra.mxu0 %v5498
    %7442 = vmatpush.bf16.msra.mxu0 %v5494
    %7443 = vmatpush.bf16.msra.mxu0 %v5490
    %7444 = vmatpush.bf16.msra.mxu0 %v5486
    %7445 = vmatpush.bf16.msra.mxu0 %v5482
    %7446 = vmatpush.bf16.msra.mxu0 %v5478
    %7447 = vmatmul.bf16.gmra.mxu0 %v345
    %v7448 = vpop.f32.mrf.mxu0
    %v7449 = vadd.f32 %v7420, %v7448
    %v7450 = vpop.f32.mrf.mxu0
    %v7451 = vadd.f32 %v7422, %v7450
    %7452 = vmatmul.bf16.gmra.mxu0 %v377
    %v7453 = vpop.f32.mrf.mxu0
    %v7454 = vadd.f32 %v7425, %v7453
    %v7455 = vpop.f32.mrf.mxu0
    %v7456 = vadd.f32 %v7427, %v7455
    %7457 = vmatmul.bf16.gmra.mxu0 %v409
    %v7458 = vpop.f32.mrf.mxu0
    %v7459 = vadd.f32 %v7430, %v7458
    %v7460 = vpop.f32.mrf.mxu0
    %v7461 = vadd.f32 %v7432, %v7460
    %7462 = vmatmul.bf16.gmra.mxu0 %v441
    %v7463 = vpop.f32.mrf.mxu0
    %v7464 = vadd.f32 %v7435, %v7463
    %v7465 = vpop.f32.mrf.mxu0
    %v7466 = vadd.f32 %v7437, %v7465
    %7467 = vdwg.mxu0
    %7468 = vmatpush.bf16.msra.mxu0 %v5538
    %7469 = vmatpush.bf16.msra.mxu0 %v5534
    %7470 = vmatpush.bf16.msra.mxu0 %v5530
    %7471 = vmatpush.bf16.msra.mxu0 %v5526
    %7472 = vmatpush.bf16.msra.mxu0 %v5522
    %7473 = vmatpush.bf16.msra.mxu0 %v5518
    %7474 = vmatpush.bf16.msra.mxu0 %v5514
    %7475 = vmatpush.bf16.msra.mxu0 %v5510
    %7476 = vmatmul.bf16.gmra.mxu0 %v346
    %v7477 = vpop.f32.mrf.mxu0
    %v7478 = vadd.f32 %v7449, %v7477
    %v7479 = vpop.f32.mrf.mxu0
    %v7480 = vadd.f32 %v7451, %v7479
    %7481 = vmatmul.bf16.gmra.mxu0 %v378
    %v7482 = vpop.f32.mrf.mxu0
    %v7483 = vadd.f32 %v7454, %v7482
    %v7484 = vpop.f32.mrf.mxu0
    %v7485 = vadd.f32 %v7456, %v7484
    %7486 = vmatmul.bf16.gmra.mxu0 %v410
    %v7487 = vpop.f32.mrf.mxu0
    %v7488 = vadd.f32 %v7459, %v7487
    %v7489 = vpop.f32.mrf.mxu0
    %v7490 = vadd.f32 %v7461, %v7489
    %7491 = vmatmul.bf16.gmra.mxu0 %v442
    %v7492 = vpop.f32.mrf.mxu0
    %v7493 = vadd.f32 %v7464, %v7492
    %v7494 = vpop.f32.mrf.mxu0
    %v7495 = vadd.f32 %v7466, %v7494
    %7496 = vdwg.mxu0
    %7497 = vmatpush.bf16.msra.mxu0 %v5570
    %7498 = vmatpush.bf16.msra.mxu0 %v5566
    %7499 = vmatpush.bf16.msra.mxu0 %v5562
    %7500 = vmatpush.bf16.msra.mxu0 %v5558
    %7501 = vmatpush.bf16.msra.mxu0 %v5554
    %7502 = vmatpush.bf16.msra.mxu0 %v5550
    %7503 = vmatpush.bf16.msra.mxu0 %v5546
    %7504 = vmatpush.bf16.msra.mxu0 %v5542
    %7505 = vmatmul.bf16.gmra.mxu0 %v347
    %v7506 = vpop.f32.mrf.mxu0
    %v7507 = vadd.f32 %v7478, %v7506
    %v7508 = vpop.f32.mrf.mxu0
    %v7509 = vadd.f32 %v7480, %v7508
    %7510 = vmatmul.bf16.gmra.mxu0 %v379
    %v7511 = vpop.f32.mrf.mxu0
    %v7512 = vadd.f32 %v7483, %v7511
    %v7513 = vpop.f32.mrf.mxu0
    %v7514 = vadd.f32 %v7485, %v7513
    %7515 = vmatmul.bf16.gmra.mxu0 %v411
    %v7516 = vpop.f32.mrf.mxu0
    %v7517 = vadd.f32 %v7488, %v7516
    %v7518 = vpop.f32.mrf.mxu0
    %v7519 = vadd.f32 %v7490, %v7518
    %7520 = vmatmul.bf16.gmra.mxu0 %v443
    %v7521 = vpop.f32.mrf.mxu0
    %v7522 = vadd.f32 %v7493, %v7521
    %v7523 = vpop.f32.mrf.mxu0
    %v7524 = vadd.f32 %v7495, %v7523
    %7525 = vdwg.mxu0
    %7526 = vmatpush.bf16.msra.mxu0 %v4579
    %7527 = vmatpush.bf16.msra.mxu0 %v4575
    %7528 = vmatpush.bf16.msra.mxu0 %v4571
    %7529 = vmatpush.bf16.msra.mxu0 %v4567
    %7530 = vmatpush.bf16.msra.mxu0 %v4563
    %7531 = vmatpush.bf16.msra.mxu0 %v4559
    %7532 = vmatpush.bf16.msra.mxu0 %v4555
    %7533 = vmatpush.bf16.msra.mxu0 %v4551
    %7534 = vmatmul.bf16.gmra.mxu0 %v316
    %v7535 = vpop.f32.mrf.mxu0
    %v7536 = vadd.f32 %v1471, %v7535
    %v7537 = vpop.f32.mrf.mxu0
    %v7538 = vadd.f32 %v1471, %v7537
    %7539 = vmatmul.bf16.gmra.mxu0 %v348
    %v7540 = vpop.f32.mrf.mxu0
    %v7541 = vadd.f32 %v1471, %v7540
    %v7542 = vpop.f32.mrf.mxu0
    %v7543 = vadd.f32 %v1471, %v7542
    %7544 = vmatmul.bf16.gmra.mxu0 %v380
    %v7545 = vpop.f32.mrf.mxu0
    %v7546 = vadd.f32 %v1471, %v7545
    %v7547 = vpop.f32.mrf.mxu0
    %v7548 = vadd.f32 %v1471, %v7547
    %7549 = vmatmul.bf16.gmra.mxu0 %v412
    %v7550 = vpop.f32.mrf.mxu0
    %v7551 = vadd.f32 %v1471, %v7550
    %v7552 = vpop.f32.mrf.mxu0
    %v7553 = vadd.f32 %v1471, %v7552
    %7554 = vdwg.mxu0
    %7555 = vmatpush.bf16.msra.mxu0 %v4611
    %7556 = vmatpush.bf16.msra.mxu0 %v4607
    %7557 = vmatpush.bf16.msra.mxu0 %v4603
    %7558 = vmatpush.bf16.msra.mxu0 %v4599
    %7559 = vmatpush.bf16.msra.mxu0 %v4595
    %7560 = vmatpush.bf16.msra.mxu0 %v4591
    %7561 = vmatpush.bf16.msra.mxu0 %v4587
    %7562 = vmatpush.bf16.msra.mxu0 %v4583
    %7563 = vmatmul.bf16.gmra.mxu0 %v317
    %v7564 = vpop.f32.mrf.mxu0
    %v7565 = vadd.f32 %v7536, %v7564
    %v7566 = vpop.f32.mrf.mxu0
    %v7567 = vadd.f32 %v7538, %v7566
    %7568 = vmatmul.bf16.gmra.mxu0 %v349
    %v7569 = vpop.f32.mrf.mxu0
    %v7570 = vadd.f32 %v7541, %v7569
    %v7571 = vpop.f32.mrf.mxu0
    %v7572 = vadd.f32 %v7543, %v7571
    %7573 = vmatmul.bf16.gmra.mxu0 %v381
    %v7574 = vpop.f32.mrf.mxu0
    %v7575 = vadd.f32 %v7546, %v7574
    %v7576 = vpop.f32.mrf.mxu0
    %v7577 = vadd.f32 %v7548, %v7576
    %7578 = vmatmul.bf16.gmra.mxu0 %v413
    %v7579 = vpop.f32.mrf.mxu0
    %v7580 = vadd.f32 %v7551, %v7579
    %v7581 = vpop.f32.mrf.mxu0
    %v7582 = vadd.f32 %v7553, %v7581
    %7583 = vdwg.mxu0
    %7584 = vmatpush.bf16.msra.mxu0 %v4643
    %7585 = vmatpush.bf16.msra.mxu0 %v4639
    %7586 = vmatpush.bf16.msra.mxu0 %v4635
    %7587 = vmatpush.bf16.msra.mxu0 %v4631
    %7588 = vmatpush.bf16.msra.mxu0 %v4627
    %7589 = vmatpush.bf16.msra.mxu0 %v4623
    %7590 = vmatpush.bf16.msra.mxu0 %v4619
    %7591 = vmatpush.bf16.msra.mxu0 %v4615
    %7592 = vmatmul.bf16.gmra.mxu0 %v318
    %v7593 = vpop.f32.mrf.mxu0
    %v7594 = vadd.f32 %v7565, %v7593
    %v7595 = vpop.f32.mrf.mxu0
    %v7596 = vadd.f32 %v7567, %v7595
    %7597 = vmatmul.bf16.gmra.mxu0 %v350
    %v7598 = vpop.f32.mrf.mxu0
    %v7599 = vadd.f32 %v7570, %v7598
    %v7600 = vpop.f32.mrf.mxu0
    %v7601 = vadd.f32 %v7572, %v7600
    %7602 = vmatmul.bf16.gmra.mxu0 %v382
    %v7603 = vpop.f32.mrf.mxu0
    %v7604 = vadd.f32 %v7575, %v7603
    %v7605 = vpop.f32.mrf.mxu0
    %v7606 = vadd.f32 %v7577, %v7605
    %7607 = vmatmul.bf16.gmra.mxu0 %v414
    %v7608 = vpop.f32.mrf.mxu0
    %v7609 = vadd.f32 %v7580, %v7608
    %v7610 = vpop.f32.mrf.mxu0
    %v7611 = vadd.f32 %v7582, %v7610
    %7612 = vdwg.mxu0
    %7613 = vmatpush.bf16.msra.mxu0 %v4675
    %7614 = vmatpush.bf16.msra.mxu0 %v4671
    %7615 = vmatpush.bf16.msra.mxu0 %v4667
    %7616 = vmatpush.bf16.msra.mxu0 %v4663
    %7617 = vmatpush.bf16.msra.mxu0 %v4659
    %7618 = vmatpush.bf16.msra.mxu0 %v4655
    %7619 = vmatpush.bf16.msra.mxu0 %v4651
    %7620 = vmatpush.bf16.msra.mxu0 %v4647
    %7621 = vmatmul.bf16.gmra.mxu0 %v319
    %v7622 = vpop.f32.mrf.mxu0
    %v7623 = vadd.f32 %v7594, %v7622
    %v7624 = vpop.f32.mrf.mxu0
    %v7625 = vadd.f32 %v7596, %v7624
    %7626 = vmatmul.bf16.gmra.mxu0 %v351
    %v7627 = vpop.f32.mrf.mxu0
    %v7628 = vadd.f32 %v7599, %v7627
    %v7629 = vpop.f32.mrf.mxu0
    %v7630 = vadd.f32 %v7601, %v7629
    %7631 = vmatmul.bf16.gmra.mxu0 %v383
    %v7632 = vpop.f32.mrf.mxu0
    %v7633 = vadd.f32 %v7604, %v7632
    %v7634 = vpop.f32.mrf.mxu0
    %v7635 = vadd.f32 %v7606, %v7634
    %7636 = vmatmul.bf16.gmra.mxu0 %v415
    %v7637 = vpop.f32.mrf.mxu0
    %v7638 = vadd.f32 %v7609, %v7637
    %v7639 = vpop.f32.mrf.mxu0
    %v7640 = vadd.f32 %v7611, %v7639
    %7641 = vdwg.mxu0
    %7642 = vmatpush.bf16.msra.mxu0 %v4707
    %7643 = vmatpush.bf16.msra.mxu0 %v4703
    %7644 = vmatpush.bf16.msra.mxu0 %v4699
    %7645 = vmatpush.bf16.msra.mxu0 %v4695
    %7646 = vmatpush.bf16.msra.mxu0 %v4691
    %7647 = vmatpush.bf16.msra.mxu0 %v4687
    %7648 = vmatpush.bf16.msra.mxu0 %v4683
    %7649 = vmatpush.bf16.msra.mxu0 %v4679
    %7650 = vmatmul.bf16.gmra.mxu0 %v320
    %v7651 = vpop.f32.mrf.mxu0
    %v7652 = vadd.f32 %v7623, %v7651
    %v7653 = vpop.f32.mrf.mxu0
    %v7654 = vadd.f32 %v7625, %v7653
    %7655 = vmatmul.bf16.gmra.mxu0 %v352
    %v7656 = vpop.f32.mrf.mxu0
    %v7657 = vadd.f32 %v7628, %v7656
    %v7658 = vpop.f32.mrf.mxu0
    %v7659 = vadd.f32 %v7630, %v7658
    %7660 = vmatmul.bf16.gmra.mxu0 %v384
    %v7661 = vpop.f32.mrf.mxu0
    %v7662 = vadd.f32 %v7633, %v7661
    %v7663 = vpop.f32.mrf.mxu0
    %v7664 = vadd.f32 %v7635, %v7663
    %7665 = vmatmul.bf16.gmra.mxu0 %v416
    %v7666 = vpop.f32.mrf.mxu0
    %v7667 = vadd.f32 %v7638, %v7666
    %v7668 = vpop.f32.mrf.mxu0
    %v7669 = vadd.f32 %v7640, %v7668
    %7670 = vdwg.mxu0
    %7671 = vmatpush.bf16.msra.mxu0 %v4739
    %7672 = vmatpush.bf16.msra.mxu0 %v4735
    %7673 = vmatpush.bf16.msra.mxu0 %v4731
    %7674 = vmatpush.bf16.msra.mxu0 %v4727
    %7675 = vmatpush.bf16.msra.mxu0 %v4723
    %7676 = vmatpush.bf16.msra.mxu0 %v4719
    %7677 = vmatpush.bf16.msra.mxu0 %v4715
    %7678 = vmatpush.bf16.msra.mxu0 %v4711
    %7679 = vmatmul.bf16.gmra.mxu0 %v321
    %v7680 = vpop.f32.mrf.mxu0
    %v7681 = vadd.f32 %v7652, %v7680
    %v7682 = vpop.f32.mrf.mxu0
    %v7683 = vadd.f32 %v7654, %v7682
    %7684 = vmatmul.bf16.gmra.mxu0 %v353
    %v7685 = vpop.f32.mrf.mxu0
    %v7686 = vadd.f32 %v7657, %v7685
    %v7687 = vpop.f32.mrf.mxu0
    %v7688 = vadd.f32 %v7659, %v7687
    %7689 = vmatmul.bf16.gmra.mxu0 %v385
    %v7690 = vpop.f32.mrf.mxu0
    %v7691 = vadd.f32 %v7662, %v7690
    %v7692 = vpop.f32.mrf.mxu0
    %v7693 = vadd.f32 %v7664, %v7692
    %7694 = vmatmul.bf16.gmra.mxu0 %v417
    %v7695 = vpop.f32.mrf.mxu0
    %v7696 = vadd.f32 %v7667, %v7695
    %v7697 = vpop.f32.mrf.mxu0
    %v7698 = vadd.f32 %v7669, %v7697
    %7699 = vdwg.mxu0
    %7700 = vmatpush.bf16.msra.mxu0 %v4771
    %7701 = vmatpush.bf16.msra.mxu0 %v4767
    %7702 = vmatpush.bf16.msra.mxu0 %v4763
    %7703 = vmatpush.bf16.msra.mxu0 %v4759
    %7704 = vmatpush.bf16.msra.mxu0 %v4755
    %7705 = vmatpush.bf16.msra.mxu0 %v4751
    %7706 = vmatpush.bf16.msra.mxu0 %v4747
    %7707 = vmatpush.bf16.msra.mxu0 %v4743
    %7708 = vmatmul.bf16.gmra.mxu0 %v322
    %v7709 = vpop.f32.mrf.mxu0
    %v7710 = vadd.f32 %v7681, %v7709
    %v7711 = vpop.f32.mrf.mxu0
    %v7712 = vadd.f32 %v7683, %v7711
    %7713 = vmatmul.bf16.gmra.mxu0 %v354
    %v7714 = vpop.f32.mrf.mxu0
    %v7715 = vadd.f32 %v7686, %v7714
    %v7716 = vpop.f32.mrf.mxu0
    %v7717 = vadd.f32 %v7688, %v7716
    %7718 = vmatmul.bf16.gmra.mxu0 %v386
    %v7719 = vpop.f32.mrf.mxu0
    %v7720 = vadd.f32 %v7691, %v7719
    %v7721 = vpop.f32.mrf.mxu0
    %v7722 = vadd.f32 %v7693, %v7721
    %7723 = vmatmul.bf16.gmra.mxu0 %v418
    %v7724 = vpop.f32.mrf.mxu0
    %v7725 = vadd.f32 %v7696, %v7724
    %v7726 = vpop.f32.mrf.mxu0
    %v7727 = vadd.f32 %v7698, %v7726
    %7728 = vdwg.mxu0
    %7729 = vmatpush.bf16.msra.mxu0 %v4803
    %7730 = vmatpush.bf16.msra.mxu0 %v4799
    %7731 = vmatpush.bf16.msra.mxu0 %v4795
    %7732 = vmatpush.bf16.msra.mxu0 %v4791
    %7733 = vmatpush.bf16.msra.mxu0 %v4787
    %7734 = vmatpush.bf16.msra.mxu0 %v4783
    %7735 = vmatpush.bf16.msra.mxu0 %v4779
    %7736 = vmatpush.bf16.msra.mxu0 %v4775
    %7737 = vmatmul.bf16.gmra.mxu0 %v323
    %v7738 = vpop.f32.mrf.mxu0
    %v7739 = vadd.f32 %v7710, %v7738
    %v7740 = vpop.f32.mrf.mxu0
    %v7741 = vadd.f32 %v7712, %v7740
    %7742 = vmatmul.bf16.gmra.mxu0 %v355
    %v7743 = vpop.f32.mrf.mxu0
    %v7744 = vadd.f32 %v7715, %v7743
    %v7745 = vpop.f32.mrf.mxu0
    %v7746 = vadd.f32 %v7717, %v7745
    %7747 = vmatmul.bf16.gmra.mxu0 %v387
    %v7748 = vpop.f32.mrf.mxu0
    %v7749 = vadd.f32 %v7720, %v7748
    %v7750 = vpop.f32.mrf.mxu0
    %v7751 = vadd.f32 %v7722, %v7750
    %7752 = vmatmul.bf16.gmra.mxu0 %v419
    %v7753 = vpop.f32.mrf.mxu0
    %v7754 = vadd.f32 %v7725, %v7753
    %v7755 = vpop.f32.mrf.mxu0
    %v7756 = vadd.f32 %v7727, %v7755
    %7757 = vdwg.mxu0
    %7758 = vmatpush.bf16.msra.mxu0 %v4835
    %7759 = vmatpush.bf16.msra.mxu0 %v4831
    %7760 = vmatpush.bf16.msra.mxu0 %v4827
    %7761 = vmatpush.bf16.msra.mxu0 %v4823
    %7762 = vmatpush.bf16.msra.mxu0 %v4819
    %7763 = vmatpush.bf16.msra.mxu0 %v4815
    %7764 = vmatpush.bf16.msra.mxu0 %v4811
    %7765 = vmatpush.bf16.msra.mxu0 %v4807
    %7766 = vmatmul.bf16.gmra.mxu0 %v324
    %v7767 = vpop.f32.mrf.mxu0
    %v7768 = vadd.f32 %v7739, %v7767
    %v7769 = vpop.f32.mrf.mxu0
    %v7770 = vadd.f32 %v7741, %v7769
    %7771 = vmatmul.bf16.gmra.mxu0 %v356
    %v7772 = vpop.f32.mrf.mxu0
    %v7773 = vadd.f32 %v7744, %v7772
    %v7774 = vpop.f32.mrf.mxu0
    %v7775 = vadd.f32 %v7746, %v7774
    %7776 = vmatmul.bf16.gmra.mxu0 %v388
    %v7777 = vpop.f32.mrf.mxu0
    %v7778 = vadd.f32 %v7749, %v7777
    %v7779 = vpop.f32.mrf.mxu0
    %v7780 = vadd.f32 %v7751, %v7779
    %7781 = vmatmul.bf16.gmra.mxu0 %v420
    %v7782 = vpop.f32.mrf.mxu0
    %v7783 = vadd.f32 %v7754, %v7782
    %v7784 = vpop.f32.mrf.mxu0
    %v7785 = vadd.f32 %v7756, %v7784
    %7786 = vdwg.mxu0
    %7787 = vmatpush.bf16.msra.mxu0 %v4867
    %7788 = vmatpush.bf16.msra.mxu0 %v4863
    %7789 = vmatpush.bf16.msra.mxu0 %v4859
    %7790 = vmatpush.bf16.msra.mxu0 %v4855
    %7791 = vmatpush.bf16.msra.mxu0 %v4851
    %7792 = vmatpush.bf16.msra.mxu0 %v4847
    %7793 = vmatpush.bf16.msra.mxu0 %v4843
    %7794 = vmatpush.bf16.msra.mxu0 %v4839
    %7795 = vmatmul.bf16.gmra.mxu0 %v325
    %v7796 = vpop.f32.mrf.mxu0
    %v7797 = vadd.f32 %v7768, %v7796
    %v7798 = vpop.f32.mrf.mxu0
    %v7799 = vadd.f32 %v7770, %v7798
    %7800 = vmatmul.bf16.gmra.mxu0 %v357
    %v7801 = vpop.f32.mrf.mxu0
    %v7802 = vadd.f32 %v7773, %v7801
    %v7803 = vpop.f32.mrf.mxu0
    %v7804 = vadd.f32 %v7775, %v7803
    %7805 = vmatmul.bf16.gmra.mxu0 %v389
    %v7806 = vpop.f32.mrf.mxu0
    %v7807 = vadd.f32 %v7778, %v7806
    %v7808 = vpop.f32.mrf.mxu0
    %v7809 = vadd.f32 %v7780, %v7808
    %7810 = vmatmul.bf16.gmra.mxu0 %v421
    %v7811 = vpop.f32.mrf.mxu0
    %v7812 = vadd.f32 %v7783, %v7811
    %v7813 = vpop.f32.mrf.mxu0
    %v7814 = vadd.f32 %v7785, %v7813
    %7815 = vdwg.mxu0
    %7816 = vmatpush.bf16.msra.mxu0 %v4899
    %7817 = vmatpush.bf16.msra.mxu0 %v4895
    %7818 = vmatpush.bf16.msra.mxu0 %v4891
    %7819 = vmatpush.bf16.msra.mxu0 %v4887
    %7820 = vmatpush.bf16.msra.mxu0 %v4883
    %7821 = vmatpush.bf16.msra.mxu0 %v4879
    %7822 = vmatpush.bf16.msra.mxu0 %v4875
    %7823 = vmatpush.bf16.msra.mxu0 %v4871
    %7824 = vmatmul.bf16.gmra.mxu0 %v326
    %v7825 = vpop.f32.mrf.mxu0
    %v7826 = vadd.f32 %v7797, %v7825
    %v7827 = vpop.f32.mrf.mxu0
    %v7828 = vadd.f32 %v7799, %v7827
    %7829 = vmatmul.bf16.gmra.mxu0 %v358
    %v7830 = vpop.f32.mrf.mxu0
    %v7831 = vadd.f32 %v7802, %v7830
    %v7832 = vpop.f32.mrf.mxu0
    %v7833 = vadd.f32 %v7804, %v7832
    %7834 = vmatmul.bf16.gmra.mxu0 %v390
    %v7835 = vpop.f32.mrf.mxu0
    %v7836 = vadd.f32 %v7807, %v7835
    %v7837 = vpop.f32.mrf.mxu0
    %v7838 = vadd.f32 %v7809, %v7837
    %7839 = vmatmul.bf16.gmra.mxu0 %v422
    %v7840 = vpop.f32.mrf.mxu0
    %v7841 = vadd.f32 %v7812, %v7840
    %v7842 = vpop.f32.mrf.mxu0
    %v7843 = vadd.f32 %v7814, %v7842
    %7844 = vdwg.mxu0
    %7845 = vmatpush.bf16.msra.mxu0 %v4931
    %7846 = vmatpush.bf16.msra.mxu0 %v4927
    %7847 = vmatpush.bf16.msra.mxu0 %v4923
    %7848 = vmatpush.bf16.msra.mxu0 %v4919
    %7849 = vmatpush.bf16.msra.mxu0 %v4915
    %7850 = vmatpush.bf16.msra.mxu0 %v4911
    %7851 = vmatpush.bf16.msra.mxu0 %v4907
    %7852 = vmatpush.bf16.msra.mxu0 %v4903
    %7853 = vmatmul.bf16.gmra.mxu0 %v327
    %v7854 = vpop.f32.mrf.mxu0
    %v7855 = vadd.f32 %v7826, %v7854
    %v7856 = vpop.f32.mrf.mxu0
    %v7857 = vadd.f32 %v7828, %v7856
    %7858 = vmatmul.bf16.gmra.mxu0 %v359
    %v7859 = vpop.f32.mrf.mxu0
    %v7860 = vadd.f32 %v7831, %v7859
    %v7861 = vpop.f32.mrf.mxu0
    %v7862 = vadd.f32 %v7833, %v7861
    %7863 = vmatmul.bf16.gmra.mxu0 %v391
    %v7864 = vpop.f32.mrf.mxu0
    %v7865 = vadd.f32 %v7836, %v7864
    %v7866 = vpop.f32.mrf.mxu0
    %v7867 = vadd.f32 %v7838, %v7866
    %7868 = vmatmul.bf16.gmra.mxu0 %v423
    %v7869 = vpop.f32.mrf.mxu0
    %v7870 = vadd.f32 %v7841, %v7869
    %v7871 = vpop.f32.mrf.mxu0
    %v7872 = vadd.f32 %v7843, %v7871
    %7873 = vdwg.mxu0
    %7874 = vmatpush.bf16.msra.mxu0 %v4963
    %7875 = vmatpush.bf16.msra.mxu0 %v4959
    %7876 = vmatpush.bf16.msra.mxu0 %v4955
    %7877 = vmatpush.bf16.msra.mxu0 %v4951
    %7878 = vmatpush.bf16.msra.mxu0 %v4947
    %7879 = vmatpush.bf16.msra.mxu0 %v4943
    %7880 = vmatpush.bf16.msra.mxu0 %v4939
    %7881 = vmatpush.bf16.msra.mxu0 %v4935
    %7882 = vmatmul.bf16.gmra.mxu0 %v328
    %v7883 = vpop.f32.mrf.mxu0
    %v7884 = vadd.f32 %v7855, %v7883
    %v7885 = vpop.f32.mrf.mxu0
    %v7886 = vadd.f32 %v7857, %v7885
    %7887 = vmatmul.bf16.gmra.mxu0 %v360
    %v7888 = vpop.f32.mrf.mxu0
    %v7889 = vadd.f32 %v7860, %v7888
    %v7890 = vpop.f32.mrf.mxu0
    %v7891 = vadd.f32 %v7862, %v7890
    %7892 = vmatmul.bf16.gmra.mxu0 %v392
    %v7893 = vpop.f32.mrf.mxu0
    %v7894 = vadd.f32 %v7865, %v7893
    %v7895 = vpop.f32.mrf.mxu0
    %v7896 = vadd.f32 %v7867, %v7895
    %7897 = vmatmul.bf16.gmra.mxu0 %v424
    %v7898 = vpop.f32.mrf.mxu0
    %v7899 = vadd.f32 %v7870, %v7898
    %v7900 = vpop.f32.mrf.mxu0
    %v7901 = vadd.f32 %v7872, %v7900
    %7902 = vdwg.mxu0
    %7903 = vmatpush.bf16.msra.mxu0 %v4995
    %7904 = vmatpush.bf16.msra.mxu0 %v4991
    %7905 = vmatpush.bf16.msra.mxu0 %v4987
    %7906 = vmatpush.bf16.msra.mxu0 %v4983
    %7907 = vmatpush.bf16.msra.mxu0 %v4979
    %7908 = vmatpush.bf16.msra.mxu0 %v4975
    %7909 = vmatpush.bf16.msra.mxu0 %v4971
    %7910 = vmatpush.bf16.msra.mxu0 %v4967
    %7911 = vmatmul.bf16.gmra.mxu0 %v329
    %v7912 = vpop.f32.mrf.mxu0
    %v7913 = vadd.f32 %v7884, %v7912
    %v7914 = vpop.f32.mrf.mxu0
    %v7915 = vadd.f32 %v7886, %v7914
    %7916 = vmatmul.bf16.gmra.mxu0 %v361
    %v7917 = vpop.f32.mrf.mxu0
    %v7918 = vadd.f32 %v7889, %v7917
    %v7919 = vpop.f32.mrf.mxu0
    %v7920 = vadd.f32 %v7891, %v7919
    %7921 = vmatmul.bf16.gmra.mxu0 %v393
    %v7922 = vpop.f32.mrf.mxu0
    %v7923 = vadd.f32 %v7894, %v7922
    %v7924 = vpop.f32.mrf.mxu0
    %v7925 = vadd.f32 %v7896, %v7924
    %7926 = vmatmul.bf16.gmra.mxu0 %v425
    %v7927 = vpop.f32.mrf.mxu0
    %v7928 = vadd.f32 %v7899, %v7927
    %v7929 = vpop.f32.mrf.mxu0
    %v7930 = vadd.f32 %v7901, %v7929
    %7931 = vdwg.mxu0
    %7932 = vmatpush.bf16.msra.mxu0 %v5027
    %7933 = vmatpush.bf16.msra.mxu0 %v5023
    %7934 = vmatpush.bf16.msra.mxu0 %v5019
    %7935 = vmatpush.bf16.msra.mxu0 %v5015
    %7936 = vmatpush.bf16.msra.mxu0 %v5011
    %7937 = vmatpush.bf16.msra.mxu0 %v5007
    %7938 = vmatpush.bf16.msra.mxu0 %v5003
    %7939 = vmatpush.bf16.msra.mxu0 %v4999
    %7940 = vmatmul.bf16.gmra.mxu0 %v330
    %v7941 = vpop.f32.mrf.mxu0
    %v7942 = vadd.f32 %v7913, %v7941
    %v7943 = vpop.f32.mrf.mxu0
    %v7944 = vadd.f32 %v7915, %v7943
    %7945 = vmatmul.bf16.gmra.mxu0 %v362
    %v7946 = vpop.f32.mrf.mxu0
    %v7947 = vadd.f32 %v7918, %v7946
    %v7948 = vpop.f32.mrf.mxu0
    %v7949 = vadd.f32 %v7920, %v7948
    %7950 = vmatmul.bf16.gmra.mxu0 %v394
    %v7951 = vpop.f32.mrf.mxu0
    %v7952 = vadd.f32 %v7923, %v7951
    %v7953 = vpop.f32.mrf.mxu0
    %v7954 = vadd.f32 %v7925, %v7953
    %7955 = vmatmul.bf16.gmra.mxu0 %v426
    %v7956 = vpop.f32.mrf.mxu0
    %v7957 = vadd.f32 %v7928, %v7956
    %v7958 = vpop.f32.mrf.mxu0
    %v7959 = vadd.f32 %v7930, %v7958
    %7960 = vdwg.mxu0
    %7961 = vmatpush.bf16.msra.mxu0 %v5059
    %7962 = vmatpush.bf16.msra.mxu0 %v5055
    %7963 = vmatpush.bf16.msra.mxu0 %v5051
    %7964 = vmatpush.bf16.msra.mxu0 %v5047
    %7965 = vmatpush.bf16.msra.mxu0 %v5043
    %7966 = vmatpush.bf16.msra.mxu0 %v5039
    %7967 = vmatpush.bf16.msra.mxu0 %v5035
    %7968 = vmatpush.bf16.msra.mxu0 %v5031
    %7969 = vmatmul.bf16.gmra.mxu0 %v331
    %v7970 = vpop.f32.mrf.mxu0
    %v7971 = vadd.f32 %v7942, %v7970
    %v7972 = vpop.f32.mrf.mxu0
    %v7973 = vadd.f32 %v7944, %v7972
    %7974 = vmatmul.bf16.gmra.mxu0 %v363
    %v7975 = vpop.f32.mrf.mxu0
    %v7976 = vadd.f32 %v7947, %v7975
    %v7977 = vpop.f32.mrf.mxu0
    %v7978 = vadd.f32 %v7949, %v7977
    %7979 = vmatmul.bf16.gmra.mxu0 %v395
    %v7980 = vpop.f32.mrf.mxu0
    %v7981 = vadd.f32 %v7952, %v7980
    %v7982 = vpop.f32.mrf.mxu0
    %v7983 = vadd.f32 %v7954, %v7982
    %7984 = vmatmul.bf16.gmra.mxu0 %v427
    %v7985 = vpop.f32.mrf.mxu0
    %v7986 = vadd.f32 %v7957, %v7985
    %v7987 = vpop.f32.mrf.mxu0
    %v7988 = vadd.f32 %v7959, %v7987
    %7989 = vdwg.mxu0
    %7990 = vmatpush.bf16.msra.mxu0 %v5091
    %7991 = vmatpush.bf16.msra.mxu0 %v5087
    %7992 = vmatpush.bf16.msra.mxu0 %v5083
    %7993 = vmatpush.bf16.msra.mxu0 %v5079
    %7994 = vmatpush.bf16.msra.mxu0 %v5075
    %7995 = vmatpush.bf16.msra.mxu0 %v5071
    %7996 = vmatpush.bf16.msra.mxu0 %v5067
    %7997 = vmatpush.bf16.msra.mxu0 %v5063
    %7998 = vmatmul.bf16.gmra.mxu0 %v332
    %v7999 = vpop.f32.mrf.mxu0
    %v8000 = vadd.f32 %v7971, %v7999
    %v8001 = vpop.f32.mrf.mxu0
    %v8002 = vadd.f32 %v7973, %v8001
    %8003 = vmatmul.bf16.gmra.mxu0 %v364
    %v8004 = vpop.f32.mrf.mxu0
    %v8005 = vadd.f32 %v7976, %v8004
    %v8006 = vpop.f32.mrf.mxu0
    %v8007 = vadd.f32 %v7978, %v8006
    %8008 = vmatmul.bf16.gmra.mxu0 %v396
    %v8009 = vpop.f32.mrf.mxu0
    %v8010 = vadd.f32 %v7981, %v8009
    %v8011 = vpop.f32.mrf.mxu0
    %v8012 = vadd.f32 %v7983, %v8011
    %8013 = vmatmul.bf16.gmra.mxu0 %v428
    %v8014 = vpop.f32.mrf.mxu0
    %v8015 = vadd.f32 %v7986, %v8014
    %v8016 = vpop.f32.mrf.mxu0
    %v8017 = vadd.f32 %v7988, %v8016
    %8018 = vdwg.mxu0
    %8019 = vmatpush.bf16.msra.mxu0 %v5123
    %8020 = vmatpush.bf16.msra.mxu0 %v5119
    %8021 = vmatpush.bf16.msra.mxu0 %v5115
    %8022 = vmatpush.bf16.msra.mxu0 %v5111
    %8023 = vmatpush.bf16.msra.mxu0 %v5107
    %8024 = vmatpush.bf16.msra.mxu0 %v5103
    %8025 = vmatpush.bf16.msra.mxu0 %v5099
    %8026 = vmatpush.bf16.msra.mxu0 %v5095
    %8027 = vmatmul.bf16.gmra.mxu0 %v333
    %v8028 = vpop.f32.mrf.mxu0
    %v8029 = vadd.f32 %v8000, %v8028
    %v8030 = vpop.f32.mrf.mxu0
    %v8031 = vadd.f32 %v8002, %v8030
    %8032 = vmatmul.bf16.gmra.mxu0 %v365
    %v8033 = vpop.f32.mrf.mxu0
    %v8034 = vadd.f32 %v8005, %v8033
    %v8035 = vpop.f32.mrf.mxu0
    %v8036 = vadd.f32 %v8007, %v8035
    %8037 = vmatmul.bf16.gmra.mxu0 %v397
    %v8038 = vpop.f32.mrf.mxu0
    %v8039 = vadd.f32 %v8010, %v8038
    %v8040 = vpop.f32.mrf.mxu0
    %v8041 = vadd.f32 %v8012, %v8040
    %8042 = vmatmul.bf16.gmra.mxu0 %v429
    %v8043 = vpop.f32.mrf.mxu0
    %v8044 = vadd.f32 %v8015, %v8043
    %v8045 = vpop.f32.mrf.mxu0
    %v8046 = vadd.f32 %v8017, %v8045
    %8047 = vdwg.mxu0
    %8048 = vmatpush.bf16.msra.mxu0 %v5155
    %8049 = vmatpush.bf16.msra.mxu0 %v5151
    %8050 = vmatpush.bf16.msra.mxu0 %v5147
    %8051 = vmatpush.bf16.msra.mxu0 %v5143
    %8052 = vmatpush.bf16.msra.mxu0 %v5139
    %8053 = vmatpush.bf16.msra.mxu0 %v5135
    %8054 = vmatpush.bf16.msra.mxu0 %v5131
    %8055 = vmatpush.bf16.msra.mxu0 %v5127
    %8056 = vmatmul.bf16.gmra.mxu0 %v334
    %v8057 = vpop.f32.mrf.mxu0
    %v8058 = vadd.f32 %v8029, %v8057
    %v8059 = vpop.f32.mrf.mxu0
    %v8060 = vadd.f32 %v8031, %v8059
    %8061 = vmatmul.bf16.gmra.mxu0 %v366
    %v8062 = vpop.f32.mrf.mxu0
    %v8063 = vadd.f32 %v8034, %v8062
    %v8064 = vpop.f32.mrf.mxu0
    %v8065 = vadd.f32 %v8036, %v8064
    %8066 = vmatmul.bf16.gmra.mxu0 %v398
    %v8067 = vpop.f32.mrf.mxu0
    %v8068 = vadd.f32 %v8039, %v8067
    %v8069 = vpop.f32.mrf.mxu0
    %v8070 = vadd.f32 %v8041, %v8069
    %8071 = vmatmul.bf16.gmra.mxu0 %v430
    %v8072 = vpop.f32.mrf.mxu0
    %v8073 = vadd.f32 %v8044, %v8072
    %v8074 = vpop.f32.mrf.mxu0
    %v8075 = vadd.f32 %v8046, %v8074
    %8076 = vdwg.mxu0
    %8077 = vmatpush.bf16.msra.mxu0 %v5187
    %8078 = vmatpush.bf16.msra.mxu0 %v5183
    %8079 = vmatpush.bf16.msra.mxu0 %v5179
    %8080 = vmatpush.bf16.msra.mxu0 %v5175
    %8081 = vmatpush.bf16.msra.mxu0 %v5171
    %8082 = vmatpush.bf16.msra.mxu0 %v5167
    %8083 = vmatpush.bf16.msra.mxu0 %v5163
    %8084 = vmatpush.bf16.msra.mxu0 %v5159
    %8085 = vmatmul.bf16.gmra.mxu0 %v335
    %v8086 = vpop.f32.mrf.mxu0
    %v8087 = vadd.f32 %v8058, %v8086
    %v8088 = vpop.f32.mrf.mxu0
    %v8089 = vadd.f32 %v8060, %v8088
    %8090 = vmatmul.bf16.gmra.mxu0 %v367
    %v8091 = vpop.f32.mrf.mxu0
    %v8092 = vadd.f32 %v8063, %v8091
    %v8093 = vpop.f32.mrf.mxu0
    %v8094 = vadd.f32 %v8065, %v8093
    %8095 = vmatmul.bf16.gmra.mxu0 %v399
    %v8096 = vpop.f32.mrf.mxu0
    %v8097 = vadd.f32 %v8068, %v8096
    %v8098 = vpop.f32.mrf.mxu0
    %v8099 = vadd.f32 %v8070, %v8098
    %8100 = vmatmul.bf16.gmra.mxu0 %v431
    %v8101 = vpop.f32.mrf.mxu0
    %v8102 = vadd.f32 %v8073, %v8101
    %v8103 = vpop.f32.mrf.mxu0
    %v8104 = vadd.f32 %v8075, %v8103
    %8105 = vdwg.mxu0
    %8106 = vmatpush.bf16.msra.mxu0 %v5219
    %8107 = vmatpush.bf16.msra.mxu0 %v5215
    %8108 = vmatpush.bf16.msra.mxu0 %v5211
    %8109 = vmatpush.bf16.msra.mxu0 %v5207
    %8110 = vmatpush.bf16.msra.mxu0 %v5203
    %8111 = vmatpush.bf16.msra.mxu0 %v5199
    %8112 = vmatpush.bf16.msra.mxu0 %v5195
    %8113 = vmatpush.bf16.msra.mxu0 %v5191
    %8114 = vmatmul.bf16.gmra.mxu0 %v336
    %v8115 = vpop.f32.mrf.mxu0
    %v8116 = vadd.f32 %v8087, %v8115
    %v8117 = vpop.f32.mrf.mxu0
    %v8118 = vadd.f32 %v8089, %v8117
    %8119 = vmatmul.bf16.gmra.mxu0 %v368
    %v8120 = vpop.f32.mrf.mxu0
    %v8121 = vadd.f32 %v8092, %v8120
    %v8122 = vpop.f32.mrf.mxu0
    %v8123 = vadd.f32 %v8094, %v8122
    %8124 = vmatmul.bf16.gmra.mxu0 %v400
    %v8125 = vpop.f32.mrf.mxu0
    %v8126 = vadd.f32 %v8097, %v8125
    %v8127 = vpop.f32.mrf.mxu0
    %v8128 = vadd.f32 %v8099, %v8127
    %8129 = vmatmul.bf16.gmra.mxu0 %v432
    %v8130 = vpop.f32.mrf.mxu0
    %v8131 = vadd.f32 %v8102, %v8130
    %v8132 = vpop.f32.mrf.mxu0
    %v8133 = vadd.f32 %v8104, %v8132
    %8134 = vdwg.mxu0
    %8135 = vmatpush.bf16.msra.mxu0 %v5251
    %8136 = vmatpush.bf16.msra.mxu0 %v5247
    %8137 = vmatpush.bf16.msra.mxu0 %v5243
    %8138 = vmatpush.bf16.msra.mxu0 %v5239
    %8139 = vmatpush.bf16.msra.mxu0 %v5235
    %8140 = vmatpush.bf16.msra.mxu0 %v5231
    %8141 = vmatpush.bf16.msra.mxu0 %v5227
    %8142 = vmatpush.bf16.msra.mxu0 %v5223
    %8143 = vmatmul.bf16.gmra.mxu0 %v337
    %v8144 = vpop.f32.mrf.mxu0
    %v8145 = vadd.f32 %v8116, %v8144
    %v8146 = vpop.f32.mrf.mxu0
    %v8147 = vadd.f32 %v8118, %v8146
    %8148 = vmatmul.bf16.gmra.mxu0 %v369
    %v8149 = vpop.f32.mrf.mxu0
    %v8150 = vadd.f32 %v8121, %v8149
    %v8151 = vpop.f32.mrf.mxu0
    %v8152 = vadd.f32 %v8123, %v8151
    %8153 = vmatmul.bf16.gmra.mxu0 %v401
    %v8154 = vpop.f32.mrf.mxu0
    %v8155 = vadd.f32 %v8126, %v8154
    %v8156 = vpop.f32.mrf.mxu0
    %v8157 = vadd.f32 %v8128, %v8156
    %8158 = vmatmul.bf16.gmra.mxu0 %v433
    %v8159 = vpop.f32.mrf.mxu0
    %v8160 = vadd.f32 %v8131, %v8159
    %v8161 = vpop.f32.mrf.mxu0
    %v8162 = vadd.f32 %v8133, %v8161
    %8163 = vdwg.mxu0
    %8164 = vmatpush.bf16.msra.mxu0 %v5283
    %8165 = vmatpush.bf16.msra.mxu0 %v5279
    %8166 = vmatpush.bf16.msra.mxu0 %v5275
    %8167 = vmatpush.bf16.msra.mxu0 %v5271
    %8168 = vmatpush.bf16.msra.mxu0 %v5267
    %8169 = vmatpush.bf16.msra.mxu0 %v5263
    %8170 = vmatpush.bf16.msra.mxu0 %v5259
    %8171 = vmatpush.bf16.msra.mxu0 %v5255
    %8172 = vmatmul.bf16.gmra.mxu0 %v338
    %v8173 = vpop.f32.mrf.mxu0
    %v8174 = vadd.f32 %v8145, %v8173
    %v8175 = vpop.f32.mrf.mxu0
    %v8176 = vadd.f32 %v8147, %v8175
    %8177 = vmatmul.bf16.gmra.mxu0 %v370
    %v8178 = vpop.f32.mrf.mxu0
    %v8179 = vadd.f32 %v8150, %v8178
    %v8180 = vpop.f32.mrf.mxu0
    %v8181 = vadd.f32 %v8152, %v8180
    %8182 = vmatmul.bf16.gmra.mxu0 %v402
    %v8183 = vpop.f32.mrf.mxu0
    %v8184 = vadd.f32 %v8155, %v8183
    %v8185 = vpop.f32.mrf.mxu0
    %v8186 = vadd.f32 %v8157, %v8185
    %8187 = vmatmul.bf16.gmra.mxu0 %v434
    %v8188 = vpop.f32.mrf.mxu0
    %v8189 = vadd.f32 %v8160, %v8188
    %v8190 = vpop.f32.mrf.mxu0
    %v8191 = vadd.f32 %v8162, %v8190
    %8192 = vdwg.mxu0
    %8193 = vmatpush.bf16.msra.mxu0 %v5315
    %8194 = vmatpush.bf16.msra.mxu0 %v5311
    %8195 = vmatpush.bf16.msra.mxu0 %v5307
    %8196 = vmatpush.bf16.msra.mxu0 %v5303
    %8197 = vmatpush.bf16.msra.mxu0 %v5299
    %8198 = vmatpush.bf16.msra.mxu0 %v5295
    %8199 = vmatpush.bf16.msra.mxu0 %v5291
    %8200 = vmatpush.bf16.msra.mxu0 %v5287
    %8201 = vmatmul.bf16.gmra.mxu0 %v339
    %v8202 = vpop.f32.mrf.mxu0
    %v8203 = vadd.f32 %v8174, %v8202
    %v8204 = vpop.f32.mrf.mxu0
    %v8205 = vadd.f32 %v8176, %v8204
    %8206 = vmatmul.bf16.gmra.mxu0 %v371
    %v8207 = vpop.f32.mrf.mxu0
    %v8208 = vadd.f32 %v8179, %v8207
    %v8209 = vpop.f32.mrf.mxu0
    %v8210 = vadd.f32 %v8181, %v8209
    %8211 = vmatmul.bf16.gmra.mxu0 %v403
    %v8212 = vpop.f32.mrf.mxu0
    %v8213 = vadd.f32 %v8184, %v8212
    %v8214 = vpop.f32.mrf.mxu0
    %v8215 = vadd.f32 %v8186, %v8214
    %8216 = vmatmul.bf16.gmra.mxu0 %v435
    %v8217 = vpop.f32.mrf.mxu0
    %v8218 = vadd.f32 %v8189, %v8217
    %v8219 = vpop.f32.mrf.mxu0
    %v8220 = vadd.f32 %v8191, %v8219
    %8221 = vdwg.mxu0
    %8222 = vmatpush.bf16.msra.mxu0 %v5347
    %8223 = vmatpush.bf16.msra.mxu0 %v5343
    %8224 = vmatpush.bf16.msra.mxu0 %v5339
    %8225 = vmatpush.bf16.msra.mxu0 %v5335
    %8226 = vmatpush.bf16.msra.mxu0 %v5331
    %8227 = vmatpush.bf16.msra.mxu0 %v5327
    %8228 = vmatpush.bf16.msra.mxu0 %v5323
    %8229 = vmatpush.bf16.msra.mxu0 %v5319
    %8230 = vmatmul.bf16.gmra.mxu0 %v340
    %v8231 = vpop.f32.mrf.mxu0
    %v8232 = vadd.f32 %v8203, %v8231
    %v8233 = vpop.f32.mrf.mxu0
    %v8234 = vadd.f32 %v8205, %v8233
    %8235 = vmatmul.bf16.gmra.mxu0 %v372
    %v8236 = vpop.f32.mrf.mxu0
    %v8237 = vadd.f32 %v8208, %v8236
    %v8238 = vpop.f32.mrf.mxu0
    %v8239 = vadd.f32 %v8210, %v8238
    %8240 = vmatmul.bf16.gmra.mxu0 %v404
    %v8241 = vpop.f32.mrf.mxu0
    %v8242 = vadd.f32 %v8213, %v8241
    %v8243 = vpop.f32.mrf.mxu0
    %v8244 = vadd.f32 %v8215, %v8243
    %8245 = vmatmul.bf16.gmra.mxu0 %v436
    %v8246 = vpop.f32.mrf.mxu0
    %v8247 = vadd.f32 %v8218, %v8246
    %v8248 = vpop.f32.mrf.mxu0
    %v8249 = vadd.f32 %v8220, %v8248
    %8250 = vdwg.mxu0
    %8251 = vmatpush.bf16.msra.mxu0 %v5379
    %8252 = vmatpush.bf16.msra.mxu0 %v5375
    %8253 = vmatpush.bf16.msra.mxu0 %v5371
    %8254 = vmatpush.bf16.msra.mxu0 %v5367
    %8255 = vmatpush.bf16.msra.mxu0 %v5363
    %8256 = vmatpush.bf16.msra.mxu0 %v5359
    %8257 = vmatpush.bf16.msra.mxu0 %v5355
    %8258 = vmatpush.bf16.msra.mxu0 %v5351
    %8259 = vmatmul.bf16.gmra.mxu0 %v341
    %v8260 = vpop.f32.mrf.mxu0
    %v8261 = vadd.f32 %v8232, %v8260
    %v8262 = vpop.f32.mrf.mxu0
    %v8263 = vadd.f32 %v8234, %v8262
    %8264 = vmatmul.bf16.gmra.mxu0 %v373
    %v8265 = vpop.f32.mrf.mxu0
    %v8266 = vadd.f32 %v8237, %v8265
    %v8267 = vpop.f32.mrf.mxu0
    %v8268 = vadd.f32 %v8239, %v8267
    %8269 = vmatmul.bf16.gmra.mxu0 %v405
    %v8270 = vpop.f32.mrf.mxu0
    %v8271 = vadd.f32 %v8242, %v8270
    %v8272 = vpop.f32.mrf.mxu0
    %v8273 = vadd.f32 %v8244, %v8272
    %8274 = vmatmul.bf16.gmra.mxu0 %v437
    %v8275 = vpop.f32.mrf.mxu0
    %v8276 = vadd.f32 %v8247, %v8275
    %v8277 = vpop.f32.mrf.mxu0
    %v8278 = vadd.f32 %v8249, %v8277
    %8279 = vdwg.mxu0
    %8280 = vmatpush.bf16.msra.mxu0 %v5411
    %8281 = vmatpush.bf16.msra.mxu0 %v5407
    %8282 = vmatpush.bf16.msra.mxu0 %v5403
    %8283 = vmatpush.bf16.msra.mxu0 %v5399
    %8284 = vmatpush.bf16.msra.mxu0 %v5395
    %8285 = vmatpush.bf16.msra.mxu0 %v5391
    %8286 = vmatpush.bf16.msra.mxu0 %v5387
    %8287 = vmatpush.bf16.msra.mxu0 %v5383
    %8288 = vmatmul.bf16.gmra.mxu0 %v342
    %v8289 = vpop.f32.mrf.mxu0
    %v8290 = vadd.f32 %v8261, %v8289
    %v8291 = vpop.f32.mrf.mxu0
    %v8292 = vadd.f32 %v8263, %v8291
    %8293 = vmatmul.bf16.gmra.mxu0 %v374
    %v8294 = vpop.f32.mrf.mxu0
    %v8295 = vadd.f32 %v8266, %v8294
    %v8296 = vpop.f32.mrf.mxu0
    %v8297 = vadd.f32 %v8268, %v8296
    %8298 = vmatmul.bf16.gmra.mxu0 %v406
    %v8299 = vpop.f32.mrf.mxu0
    %v8300 = vadd.f32 %v8271, %v8299
    %v8301 = vpop.f32.mrf.mxu0
    %v8302 = vadd.f32 %v8273, %v8301
    %8303 = vmatmul.bf16.gmra.mxu0 %v438
    %v8304 = vpop.f32.mrf.mxu0
    %v8305 = vadd.f32 %v8276, %v8304
    %v8306 = vpop.f32.mrf.mxu0
    %v8307 = vadd.f32 %v8278, %v8306
    %8308 = vdwg.mxu0
    %8309 = vmatpush.bf16.msra.mxu0 %v5443
    %8310 = vmatpush.bf16.msra.mxu0 %v5439
    %8311 = vmatpush.bf16.msra.mxu0 %v5435
    %8312 = vmatpush.bf16.msra.mxu0 %v5431
    %8313 = vmatpush.bf16.msra.mxu0 %v5427
    %8314 = vmatpush.bf16.msra.mxu0 %v5423
    %8315 = vmatpush.bf16.msra.mxu0 %v5419
    %8316 = vmatpush.bf16.msra.mxu0 %v5415
    %8317 = vmatmul.bf16.gmra.mxu0 %v343
    %v8318 = vpop.f32.mrf.mxu0
    %v8319 = vadd.f32 %v8290, %v8318
    %v8320 = vpop.f32.mrf.mxu0
    %v8321 = vadd.f32 %v8292, %v8320
    %8322 = vmatmul.bf16.gmra.mxu0 %v375
    %v8323 = vpop.f32.mrf.mxu0
    %v8324 = vadd.f32 %v8295, %v8323
    %v8325 = vpop.f32.mrf.mxu0
    %v8326 = vadd.f32 %v8297, %v8325
    %8327 = vmatmul.bf16.gmra.mxu0 %v407
    %v8328 = vpop.f32.mrf.mxu0
    %v8329 = vadd.f32 %v8300, %v8328
    %v8330 = vpop.f32.mrf.mxu0
    %v8331 = vadd.f32 %v8302, %v8330
    %8332 = vmatmul.bf16.gmra.mxu0 %v439
    %v8333 = vpop.f32.mrf.mxu0
    %v8334 = vadd.f32 %v8305, %v8333
    %v8335 = vpop.f32.mrf.mxu0
    %v8336 = vadd.f32 %v8307, %v8335
    %8337 = vdwg.mxu0
    %8338 = vmatpush.bf16.msra.mxu0 %v5475
    %8339 = vmatpush.bf16.msra.mxu0 %v5471
    %8340 = vmatpush.bf16.msra.mxu0 %v5467
    %8341 = vmatpush.bf16.msra.mxu0 %v5463
    %8342 = vmatpush.bf16.msra.mxu0 %v5459
    %8343 = vmatpush.bf16.msra.mxu0 %v5455
    %8344 = vmatpush.bf16.msra.mxu0 %v5451
    %8345 = vmatpush.bf16.msra.mxu0 %v5447
    %8346 = vmatmul.bf16.gmra.mxu0 %v344
    %v8347 = vpop.f32.mrf.mxu0
    %v8348 = vadd.f32 %v8319, %v8347
    %v8349 = vpop.f32.mrf.mxu0
    %v8350 = vadd.f32 %v8321, %v8349
    %8351 = vmatmul.bf16.gmra.mxu0 %v376
    %v8352 = vpop.f32.mrf.mxu0
    %v8353 = vadd.f32 %v8324, %v8352
    %v8354 = vpop.f32.mrf.mxu0
    %v8355 = vadd.f32 %v8326, %v8354
    %8356 = vmatmul.bf16.gmra.mxu0 %v408
    %v8357 = vpop.f32.mrf.mxu0
    %v8358 = vadd.f32 %v8329, %v8357
    %v8359 = vpop.f32.mrf.mxu0
    %v8360 = vadd.f32 %v8331, %v8359
    %8361 = vmatmul.bf16.gmra.mxu0 %v440
    %v8362 = vpop.f32.mrf.mxu0
    %v8363 = vadd.f32 %v8334, %v8362
    %v8364 = vpop.f32.mrf.mxu0
    %v8365 = vadd.f32 %v8336, %v8364
    %8366 = vdwg.mxu0
    %8367 = vmatpush.bf16.msra.mxu0 %v5507
    %8368 = vmatpush.bf16.msra.mxu0 %v5503
    %8369 = vmatpush.bf16.msra.mxu0 %v5499
    %8370 = vmatpush.bf16.msra.mxu0 %v5495
    %8371 = vmatpush.bf16.msra.mxu0 %v5491
    %8372 = vmatpush.bf16.msra.mxu0 %v5487
    %8373 = vmatpush.bf16.msra.mxu0 %v5483
    %8374 = vmatpush.bf16.msra.mxu0 %v5479
    %8375 = vmatmul.bf16.gmra.mxu0 %v345
    %v8376 = vpop.f32.mrf.mxu0
    %v8377 = vadd.f32 %v8348, %v8376
    %v8378 = vpop.f32.mrf.mxu0
    %v8379 = vadd.f32 %v8350, %v8378
    %8380 = vmatmul.bf16.gmra.mxu0 %v377
    %v8381 = vpop.f32.mrf.mxu0
    %v8382 = vadd.f32 %v8353, %v8381
    %v8383 = vpop.f32.mrf.mxu0
    %v8384 = vadd.f32 %v8355, %v8383
    %8385 = vmatmul.bf16.gmra.mxu0 %v409
    %v8386 = vpop.f32.mrf.mxu0
    %v8387 = vadd.f32 %v8358, %v8386
    %v8388 = vpop.f32.mrf.mxu0
    %v8389 = vadd.f32 %v8360, %v8388
    %8390 = vmatmul.bf16.gmra.mxu0 %v441
    %v8391 = vpop.f32.mrf.mxu0
    %v8392 = vadd.f32 %v8363, %v8391
    %v8393 = vpop.f32.mrf.mxu0
    %v8394 = vadd.f32 %v8365, %v8393
    %8395 = vdwg.mxu0
    %8396 = vmatpush.bf16.msra.mxu0 %v5539
    %8397 = vmatpush.bf16.msra.mxu0 %v5535
    %8398 = vmatpush.bf16.msra.mxu0 %v5531
    %8399 = vmatpush.bf16.msra.mxu0 %v5527
    %8400 = vmatpush.bf16.msra.mxu0 %v5523
    %8401 = vmatpush.bf16.msra.mxu0 %v5519
    %8402 = vmatpush.bf16.msra.mxu0 %v5515
    %8403 = vmatpush.bf16.msra.mxu0 %v5511
    %8404 = vmatmul.bf16.gmra.mxu0 %v346
    %v8405 = vpop.f32.mrf.mxu0
    %v8406 = vadd.f32 %v8377, %v8405
    %v8407 = vpop.f32.mrf.mxu0
    %v8408 = vadd.f32 %v8379, %v8407
    %8409 = vmatmul.bf16.gmra.mxu0 %v378
    %v8410 = vpop.f32.mrf.mxu0
    %v8411 = vadd.f32 %v8382, %v8410
    %v8412 = vpop.f32.mrf.mxu0
    %v8413 = vadd.f32 %v8384, %v8412
    %8414 = vmatmul.bf16.gmra.mxu0 %v410
    %v8415 = vpop.f32.mrf.mxu0
    %v8416 = vadd.f32 %v8387, %v8415
    %v8417 = vpop.f32.mrf.mxu0
    %v8418 = vadd.f32 %v8389, %v8417
    %8419 = vmatmul.bf16.gmra.mxu0 %v442
    %v8420 = vpop.f32.mrf.mxu0
    %v8421 = vadd.f32 %v8392, %v8420
    %v8422 = vpop.f32.mrf.mxu0
    %v8423 = vadd.f32 %v8394, %v8422
    %8424 = vdwg.mxu0
    %8425 = vmatpush.bf16.msra.mxu0 %v5571
    %8426 = vmatpush.bf16.msra.mxu0 %v5567
    %8427 = vmatpush.bf16.msra.mxu0 %v5563
    %8428 = vmatpush.bf16.msra.mxu0 %v5559
    %8429 = vmatpush.bf16.msra.mxu0 %v5555
    %8430 = vmatpush.bf16.msra.mxu0 %v5551
    %8431 = vmatpush.bf16.msra.mxu0 %v5547
    %8432 = vmatpush.bf16.msra.mxu0 %v5543
    %8433 = vmatmul.bf16.gmra.mxu0 %v347
    %v8434 = vpop.f32.mrf.mxu0
    %v8435 = vadd.f32 %v8406, %v8434
    %v8436 = vpop.f32.mrf.mxu0
    %v8437 = vadd.f32 %v8408, %v8436
    %8438 = vmatmul.bf16.gmra.mxu0 %v379
    %v8439 = vpop.f32.mrf.mxu0
    %v8440 = vadd.f32 %v8411, %v8439
    %v8441 = vpop.f32.mrf.mxu0
    %v8442 = vadd.f32 %v8413, %v8441
    %8443 = vmatmul.bf16.gmra.mxu0 %v411
    %v8444 = vpop.f32.mrf.mxu0
    %v8445 = vadd.f32 %v8416, %v8444
    %v8446 = vpop.f32.mrf.mxu0
    %v8447 = vadd.f32 %v8418, %v8446
    %8448 = vmatmul.bf16.gmra.mxu0 %v443
    %v8449 = vpop.f32.mrf.mxu0
    %v8450 = vadd.f32 %v8421, %v8449
    %v8451 = vpop.f32.mrf.mxu0
    %v8452 = vadd.f32 %v8423, %v8451
    %8453 = vdwg.mxu0
    %8454 = vmatpush.bf16.msra.mxu0 %v4580
    %8455 = vmatpush.bf16.msra.mxu0 %v4576
    %8456 = vmatpush.bf16.msra.mxu0 %v4572
    %8457 = vmatpush.bf16.msra.mxu0 %v4568
    %8458 = vmatpush.bf16.msra.mxu0 %v4564
    %8459 = vmatpush.bf16.msra.mxu0 %v4560
    %8460 = vmatpush.bf16.msra.mxu0 %v4556
    %8461 = vmatpush.bf16.msra.mxu0 %v4552
    %8462 = vmatmul.bf16.gmra.mxu0 %v316
    %v8463 = vpop.f32.mrf.mxu0
    %v8464 = vadd.f32 %v1472, %v8463
    %v8465 = vpop.f32.mrf.mxu0
    %v8466 = vadd.f32 %v1472, %v8465
    %8467 = vmatmul.bf16.gmra.mxu0 %v348
    %v8468 = vpop.f32.mrf.mxu0
    %v8469 = vadd.f32 %v1472, %v8468
    %v8470 = vpop.f32.mrf.mxu0
    %v8471 = vadd.f32 %v1472, %v8470
    %8472 = vmatmul.bf16.gmra.mxu0 %v380
    %v8473 = vpop.f32.mrf.mxu0
    %v8474 = vadd.f32 %v1472, %v8473
    %v8475 = vpop.f32.mrf.mxu0
    %v8476 = vadd.f32 %v1472, %v8475
    %8477 = vmatmul.bf16.gmra.mxu0 %v412
    %v8478 = vpop.f32.mrf.mxu0
    %v8479 = vadd.f32 %v1472, %v8478
    %v8480 = vpop.f32.mrf.mxu0
    %v8481 = vadd.f32 %v1472, %v8480
    %8482 = vdwg.mxu0
    %8483 = vmatpush.bf16.msra.mxu0 %v4612
    %8484 = vmatpush.bf16.msra.mxu0 %v4608
    %8485 = vmatpush.bf16.msra.mxu0 %v4604
    %8486 = vmatpush.bf16.msra.mxu0 %v4600
    %8487 = vmatpush.bf16.msra.mxu0 %v4596
    %8488 = vmatpush.bf16.msra.mxu0 %v4592
    %8489 = vmatpush.bf16.msra.mxu0 %v4588
    %8490 = vmatpush.bf16.msra.mxu0 %v4584
    %8491 = vmatmul.bf16.gmra.mxu0 %v317
    %v8492 = vpop.f32.mrf.mxu0
    %v8493 = vadd.f32 %v8464, %v8492
    %v8494 = vpop.f32.mrf.mxu0
    %v8495 = vadd.f32 %v8466, %v8494
    %8496 = vmatmul.bf16.gmra.mxu0 %v349
    %v8497 = vpop.f32.mrf.mxu0
    %v8498 = vadd.f32 %v8469, %v8497
    %v8499 = vpop.f32.mrf.mxu0
    %v8500 = vadd.f32 %v8471, %v8499
    %8501 = vmatmul.bf16.gmra.mxu0 %v381
    %v8502 = vpop.f32.mrf.mxu0
    %v8503 = vadd.f32 %v8474, %v8502
    %v8504 = vpop.f32.mrf.mxu0
    %v8505 = vadd.f32 %v8476, %v8504
    %8506 = vmatmul.bf16.gmra.mxu0 %v413
    %v8507 = vpop.f32.mrf.mxu0
    %v8508 = vadd.f32 %v8479, %v8507
    %v8509 = vpop.f32.mrf.mxu0
    %v8510 = vadd.f32 %v8481, %v8509
    %8511 = vdwg.mxu0
    %8512 = vmatpush.bf16.msra.mxu0 %v4644
    %8513 = vmatpush.bf16.msra.mxu0 %v4640
    %8514 = vmatpush.bf16.msra.mxu0 %v4636
    %8515 = vmatpush.bf16.msra.mxu0 %v4632
    %8516 = vmatpush.bf16.msra.mxu0 %v4628
    %8517 = vmatpush.bf16.msra.mxu0 %v4624
    %8518 = vmatpush.bf16.msra.mxu0 %v4620
    %8519 = vmatpush.bf16.msra.mxu0 %v4616
    %8520 = vmatmul.bf16.gmra.mxu0 %v318
    %v8521 = vpop.f32.mrf.mxu0
    %v8522 = vadd.f32 %v8493, %v8521
    %v8523 = vpop.f32.mrf.mxu0
    %v8524 = vadd.f32 %v8495, %v8523
    %8525 = vmatmul.bf16.gmra.mxu0 %v350
    %v8526 = vpop.f32.mrf.mxu0
    %v8527 = vadd.f32 %v8498, %v8526
    %v8528 = vpop.f32.mrf.mxu0
    %v8529 = vadd.f32 %v8500, %v8528
    %8530 = vmatmul.bf16.gmra.mxu0 %v382
    %v8531 = vpop.f32.mrf.mxu0
    %v8532 = vadd.f32 %v8503, %v8531
    %v8533 = vpop.f32.mrf.mxu0
    %v8534 = vadd.f32 %v8505, %v8533
    %8535 = vmatmul.bf16.gmra.mxu0 %v414
    %v8536 = vpop.f32.mrf.mxu0
    %v8537 = vadd.f32 %v8508, %v8536
    %v8538 = vpop.f32.mrf.mxu0
    %v8539 = vadd.f32 %v8510, %v8538
    %8540 = vdwg.mxu0
    %8541 = vmatpush.bf16.msra.mxu0 %v4676
    %8542 = vmatpush.bf16.msra.mxu0 %v4672
    %8543 = vmatpush.bf16.msra.mxu0 %v4668
    %8544 = vmatpush.bf16.msra.mxu0 %v4664
    %8545 = vmatpush.bf16.msra.mxu0 %v4660
    %8546 = vmatpush.bf16.msra.mxu0 %v4656
    %8547 = vmatpush.bf16.msra.mxu0 %v4652
    %8548 = vmatpush.bf16.msra.mxu0 %v4648
    %8549 = vmatmul.bf16.gmra.mxu0 %v319
    %v8550 = vpop.f32.mrf.mxu0
    %v8551 = vadd.f32 %v8522, %v8550
    %v8552 = vpop.f32.mrf.mxu0
    %v8553 = vadd.f32 %v8524, %v8552
    %8554 = vmatmul.bf16.gmra.mxu0 %v351
    %v8555 = vpop.f32.mrf.mxu0
    %v8556 = vadd.f32 %v8527, %v8555
    %v8557 = vpop.f32.mrf.mxu0
    %v8558 = vadd.f32 %v8529, %v8557
    %8559 = vmatmul.bf16.gmra.mxu0 %v383
    %v8560 = vpop.f32.mrf.mxu0
    %v8561 = vadd.f32 %v8532, %v8560
    %v8562 = vpop.f32.mrf.mxu0
    %v8563 = vadd.f32 %v8534, %v8562
    %8564 = vmatmul.bf16.gmra.mxu0 %v415
    %v8565 = vpop.f32.mrf.mxu0
    %v8566 = vadd.f32 %v8537, %v8565
    %v8567 = vpop.f32.mrf.mxu0
    %v8568 = vadd.f32 %v8539, %v8567
    %8569 = vdwg.mxu0
    %8570 = vmatpush.bf16.msra.mxu0 %v4708
    %8571 = vmatpush.bf16.msra.mxu0 %v4704
    %8572 = vmatpush.bf16.msra.mxu0 %v4700
    %8573 = vmatpush.bf16.msra.mxu0 %v4696
    %8574 = vmatpush.bf16.msra.mxu0 %v4692
    %8575 = vmatpush.bf16.msra.mxu0 %v4688
    %8576 = vmatpush.bf16.msra.mxu0 %v4684
    %8577 = vmatpush.bf16.msra.mxu0 %v4680
    %8578 = vmatmul.bf16.gmra.mxu0 %v320
    %v8579 = vpop.f32.mrf.mxu0
    %v8580 = vadd.f32 %v8551, %v8579
    %v8581 = vpop.f32.mrf.mxu0
    %v8582 = vadd.f32 %v8553, %v8581
    %8583 = vmatmul.bf16.gmra.mxu0 %v352
    %v8584 = vpop.f32.mrf.mxu0
    %v8585 = vadd.f32 %v8556, %v8584
    %v8586 = vpop.f32.mrf.mxu0
    %v8587 = vadd.f32 %v8558, %v8586
    %8588 = vmatmul.bf16.gmra.mxu0 %v384
    %v8589 = vpop.f32.mrf.mxu0
    %v8590 = vadd.f32 %v8561, %v8589
    %v8591 = vpop.f32.mrf.mxu0
    %v8592 = vadd.f32 %v8563, %v8591
    %8593 = vmatmul.bf16.gmra.mxu0 %v416
    %v8594 = vpop.f32.mrf.mxu0
    %v8595 = vadd.f32 %v8566, %v8594
    %v8596 = vpop.f32.mrf.mxu0
    %v8597 = vadd.f32 %v8568, %v8596
    %8598 = vdwg.mxu0
    %8599 = vmatpush.bf16.msra.mxu0 %v4740
    %8600 = vmatpush.bf16.msra.mxu0 %v4736
    %8601 = vmatpush.bf16.msra.mxu0 %v4732
    %8602 = vmatpush.bf16.msra.mxu0 %v4728
    %8603 = vmatpush.bf16.msra.mxu0 %v4724
    %8604 = vmatpush.bf16.msra.mxu0 %v4720
    %8605 = vmatpush.bf16.msra.mxu0 %v4716
    %8606 = vmatpush.bf16.msra.mxu0 %v4712
    %8607 = vmatmul.bf16.gmra.mxu0 %v321
    %v8608 = vpop.f32.mrf.mxu0
    %v8609 = vadd.f32 %v8580, %v8608
    %v8610 = vpop.f32.mrf.mxu0
    %v8611 = vadd.f32 %v8582, %v8610
    %8612 = vmatmul.bf16.gmra.mxu0 %v353
    %v8613 = vpop.f32.mrf.mxu0
    %v8614 = vadd.f32 %v8585, %v8613
    %v8615 = vpop.f32.mrf.mxu0
    %v8616 = vadd.f32 %v8587, %v8615
    %8617 = vmatmul.bf16.gmra.mxu0 %v385
    %v8618 = vpop.f32.mrf.mxu0
    %v8619 = vadd.f32 %v8590, %v8618
    %v8620 = vpop.f32.mrf.mxu0
    %v8621 = vadd.f32 %v8592, %v8620
    %8622 = vmatmul.bf16.gmra.mxu0 %v417
    %v8623 = vpop.f32.mrf.mxu0
    %v8624 = vadd.f32 %v8595, %v8623
    %v8625 = vpop.f32.mrf.mxu0
    %v8626 = vadd.f32 %v8597, %v8625
    %8627 = vdwg.mxu0
    %8628 = vmatpush.bf16.msra.mxu0 %v4772
    %8629 = vmatpush.bf16.msra.mxu0 %v4768
    %8630 = vmatpush.bf16.msra.mxu0 %v4764
    %8631 = vmatpush.bf16.msra.mxu0 %v4760
    %8632 = vmatpush.bf16.msra.mxu0 %v4756
    %8633 = vmatpush.bf16.msra.mxu0 %v4752
    %8634 = vmatpush.bf16.msra.mxu0 %v4748
    %8635 = vmatpush.bf16.msra.mxu0 %v4744
    %8636 = vmatmul.bf16.gmra.mxu0 %v322
    %v8637 = vpop.f32.mrf.mxu0
    %v8638 = vadd.f32 %v8609, %v8637
    %v8639 = vpop.f32.mrf.mxu0
    %v8640 = vadd.f32 %v8611, %v8639
    %8641 = vmatmul.bf16.gmra.mxu0 %v354
    %v8642 = vpop.f32.mrf.mxu0
    %v8643 = vadd.f32 %v8614, %v8642
    %v8644 = vpop.f32.mrf.mxu0
    %v8645 = vadd.f32 %v8616, %v8644
    %8646 = vmatmul.bf16.gmra.mxu0 %v386
    %v8647 = vpop.f32.mrf.mxu0
    %v8648 = vadd.f32 %v8619, %v8647
    %v8649 = vpop.f32.mrf.mxu0
    %v8650 = vadd.f32 %v8621, %v8649
    %8651 = vmatmul.bf16.gmra.mxu0 %v418
    %v8652 = vpop.f32.mrf.mxu0
    %v8653 = vadd.f32 %v8624, %v8652
    %v8654 = vpop.f32.mrf.mxu0
    %v8655 = vadd.f32 %v8626, %v8654
    %8656 = vdwg.mxu0
    %8657 = vmatpush.bf16.msra.mxu0 %v4804
    %8658 = vmatpush.bf16.msra.mxu0 %v4800
    %8659 = vmatpush.bf16.msra.mxu0 %v4796
    %8660 = vmatpush.bf16.msra.mxu0 %v4792
    %8661 = vmatpush.bf16.msra.mxu0 %v4788
    %8662 = vmatpush.bf16.msra.mxu0 %v4784
    %8663 = vmatpush.bf16.msra.mxu0 %v4780
    %8664 = vmatpush.bf16.msra.mxu0 %v4776
    %8665 = vmatmul.bf16.gmra.mxu0 %v323
    %v8666 = vpop.f32.mrf.mxu0
    %v8667 = vadd.f32 %v8638, %v8666
    %v8668 = vpop.f32.mrf.mxu0
    %v8669 = vadd.f32 %v8640, %v8668
    %8670 = vmatmul.bf16.gmra.mxu0 %v355
    %v8671 = vpop.f32.mrf.mxu0
    %v8672 = vadd.f32 %v8643, %v8671
    %v8673 = vpop.f32.mrf.mxu0
    %v8674 = vadd.f32 %v8645, %v8673
    %8675 = vmatmul.bf16.gmra.mxu0 %v387
    %v8676 = vpop.f32.mrf.mxu0
    %v8677 = vadd.f32 %v8648, %v8676
    %v8678 = vpop.f32.mrf.mxu0
    %v8679 = vadd.f32 %v8650, %v8678
    %8680 = vmatmul.bf16.gmra.mxu0 %v419
    %v8681 = vpop.f32.mrf.mxu0
    %v8682 = vadd.f32 %v8653, %v8681
    %v8683 = vpop.f32.mrf.mxu0
    %v8684 = vadd.f32 %v8655, %v8683
    %8685 = vdwg.mxu0
    %8686 = vmatpush.bf16.msra.mxu0 %v4836
    %8687 = vmatpush.bf16.msra.mxu0 %v4832
    %8688 = vmatpush.bf16.msra.mxu0 %v4828
    %8689 = vmatpush.bf16.msra.mxu0 %v4824
    %8690 = vmatpush.bf16.msra.mxu0 %v4820
    %8691 = vmatpush.bf16.msra.mxu0 %v4816
    %8692 = vmatpush.bf16.msra.mxu0 %v4812
    %8693 = vmatpush.bf16.msra.mxu0 %v4808
    %8694 = vmatmul.bf16.gmra.mxu0 %v324
    %v8695 = vpop.f32.mrf.mxu0
    %v8696 = vadd.f32 %v8667, %v8695
    %v8697 = vpop.f32.mrf.mxu0
    %v8698 = vadd.f32 %v8669, %v8697
    %8699 = vmatmul.bf16.gmra.mxu0 %v356
    %v8700 = vpop.f32.mrf.mxu0
    %v8701 = vadd.f32 %v8672, %v8700
    %v8702 = vpop.f32.mrf.mxu0
    %v8703 = vadd.f32 %v8674, %v8702
    %8704 = vmatmul.bf16.gmra.mxu0 %v388
    %v8705 = vpop.f32.mrf.mxu0
    %v8706 = vadd.f32 %v8677, %v8705
    %v8707 = vpop.f32.mrf.mxu0
    %v8708 = vadd.f32 %v8679, %v8707
    %8709 = vmatmul.bf16.gmra.mxu0 %v420
    %v8710 = vpop.f32.mrf.mxu0
    %v8711 = vadd.f32 %v8682, %v8710
    %v8712 = vpop.f32.mrf.mxu0
    %v8713 = vadd.f32 %v8684, %v8712
    %8714 = vdwg.mxu0
    %8715 = vmatpush.bf16.msra.mxu0 %v4868
    %8716 = vmatpush.bf16.msra.mxu0 %v4864
    %8717 = vmatpush.bf16.msra.mxu0 %v4860
    %8718 = vmatpush.bf16.msra.mxu0 %v4856
    %8719 = vmatpush.bf16.msra.mxu0 %v4852
    %8720 = vmatpush.bf16.msra.mxu0 %v4848
    %8721 = vmatpush.bf16.msra.mxu0 %v4844
    %8722 = vmatpush.bf16.msra.mxu0 %v4840
    %8723 = vmatmul.bf16.gmra.mxu0 %v325
    %v8724 = vpop.f32.mrf.mxu0
    %v8725 = vadd.f32 %v8696, %v8724
    %v8726 = vpop.f32.mrf.mxu0
    %v8727 = vadd.f32 %v8698, %v8726
    %8728 = vmatmul.bf16.gmra.mxu0 %v357
    %v8729 = vpop.f32.mrf.mxu0
    %v8730 = vadd.f32 %v8701, %v8729
    %v8731 = vpop.f32.mrf.mxu0
    %v8732 = vadd.f32 %v8703, %v8731
    %8733 = vmatmul.bf16.gmra.mxu0 %v389
    %v8734 = vpop.f32.mrf.mxu0
    %v8735 = vadd.f32 %v8706, %v8734
    %v8736 = vpop.f32.mrf.mxu0
    %v8737 = vadd.f32 %v8708, %v8736
    %8738 = vmatmul.bf16.gmra.mxu0 %v421
    %v8739 = vpop.f32.mrf.mxu0
    %v8740 = vadd.f32 %v8711, %v8739
    %v8741 = vpop.f32.mrf.mxu0
    %v8742 = vadd.f32 %v8713, %v8741
    %8743 = vdwg.mxu0
    %8744 = vmatpush.bf16.msra.mxu0 %v4900
    %8745 = vmatpush.bf16.msra.mxu0 %v4896
    %8746 = vmatpush.bf16.msra.mxu0 %v4892
    %8747 = vmatpush.bf16.msra.mxu0 %v4888
    %8748 = vmatpush.bf16.msra.mxu0 %v4884
    %8749 = vmatpush.bf16.msra.mxu0 %v4880
    %8750 = vmatpush.bf16.msra.mxu0 %v4876
    %8751 = vmatpush.bf16.msra.mxu0 %v4872
    %8752 = vmatmul.bf16.gmra.mxu0 %v326
    %v8753 = vpop.f32.mrf.mxu0
    %v8754 = vadd.f32 %v8725, %v8753
    %v8755 = vpop.f32.mrf.mxu0
    %v8756 = vadd.f32 %v8727, %v8755
    %8757 = vmatmul.bf16.gmra.mxu0 %v358
    %v8758 = vpop.f32.mrf.mxu0
    %v8759 = vadd.f32 %v8730, %v8758
    %v8760 = vpop.f32.mrf.mxu0
    %v8761 = vadd.f32 %v8732, %v8760
    %8762 = vmatmul.bf16.gmra.mxu0 %v390
    %v8763 = vpop.f32.mrf.mxu0
    %v8764 = vadd.f32 %v8735, %v8763
    %v8765 = vpop.f32.mrf.mxu0
    %v8766 = vadd.f32 %v8737, %v8765
    %8767 = vmatmul.bf16.gmra.mxu0 %v422
    %v8768 = vpop.f32.mrf.mxu0
    %v8769 = vadd.f32 %v8740, %v8768
    %v8770 = vpop.f32.mrf.mxu0
    %v8771 = vadd.f32 %v8742, %v8770
    %8772 = vdwg.mxu0
    %8773 = vmatpush.bf16.msra.mxu0 %v4932
    %8774 = vmatpush.bf16.msra.mxu0 %v4928
    %8775 = vmatpush.bf16.msra.mxu0 %v4924
    %8776 = vmatpush.bf16.msra.mxu0 %v4920
    %8777 = vmatpush.bf16.msra.mxu0 %v4916
    %8778 = vmatpush.bf16.msra.mxu0 %v4912
    %8779 = vmatpush.bf16.msra.mxu0 %v4908
    %8780 = vmatpush.bf16.msra.mxu0 %v4904
    %8781 = vmatmul.bf16.gmra.mxu0 %v327
    %v8782 = vpop.f32.mrf.mxu0
    %v8783 = vadd.f32 %v8754, %v8782
    %v8784 = vpop.f32.mrf.mxu0
    %v8785 = vadd.f32 %v8756, %v8784
    %8786 = vmatmul.bf16.gmra.mxu0 %v359
    %v8787 = vpop.f32.mrf.mxu0
    %v8788 = vadd.f32 %v8759, %v8787
    %v8789 = vpop.f32.mrf.mxu0
    %v8790 = vadd.f32 %v8761, %v8789
    %8791 = vmatmul.bf16.gmra.mxu0 %v391
    %v8792 = vpop.f32.mrf.mxu0
    %v8793 = vadd.f32 %v8764, %v8792
    %v8794 = vpop.f32.mrf.mxu0
    %v8795 = vadd.f32 %v8766, %v8794
    %8796 = vmatmul.bf16.gmra.mxu0 %v423
    %v8797 = vpop.f32.mrf.mxu0
    %v8798 = vadd.f32 %v8769, %v8797
    %v8799 = vpop.f32.mrf.mxu0
    %v8800 = vadd.f32 %v8771, %v8799
    %8801 = vdwg.mxu0
    %8802 = vmatpush.bf16.msra.mxu0 %v4964
    %8803 = vmatpush.bf16.msra.mxu0 %v4960
    %8804 = vmatpush.bf16.msra.mxu0 %v4956
    %8805 = vmatpush.bf16.msra.mxu0 %v4952
    %8806 = vmatpush.bf16.msra.mxu0 %v4948
    %8807 = vmatpush.bf16.msra.mxu0 %v4944
    %8808 = vmatpush.bf16.msra.mxu0 %v4940
    %8809 = vmatpush.bf16.msra.mxu0 %v4936
    %8810 = vmatmul.bf16.gmra.mxu0 %v328
    %v8811 = vpop.f32.mrf.mxu0
    %v8812 = vadd.f32 %v8783, %v8811
    %v8813 = vpop.f32.mrf.mxu0
    %v8814 = vadd.f32 %v8785, %v8813
    %8815 = vmatmul.bf16.gmra.mxu0 %v360
    %v8816 = vpop.f32.mrf.mxu0
    %v8817 = vadd.f32 %v8788, %v8816
    %v8818 = vpop.f32.mrf.mxu0
    %v8819 = vadd.f32 %v8790, %v8818
    %8820 = vmatmul.bf16.gmra.mxu0 %v392
    %v8821 = vpop.f32.mrf.mxu0
    %v8822 = vadd.f32 %v8793, %v8821
    %v8823 = vpop.f32.mrf.mxu0
    %v8824 = vadd.f32 %v8795, %v8823
    %8825 = vmatmul.bf16.gmra.mxu0 %v424
    %v8826 = vpop.f32.mrf.mxu0
    %v8827 = vadd.f32 %v8798, %v8826
    %v8828 = vpop.f32.mrf.mxu0
    %v8829 = vadd.f32 %v8800, %v8828
    %8830 = vdwg.mxu0
    %8831 = vmatpush.bf16.msra.mxu0 %v4996
    %8832 = vmatpush.bf16.msra.mxu0 %v4992
    %8833 = vmatpush.bf16.msra.mxu0 %v4988
    %8834 = vmatpush.bf16.msra.mxu0 %v4984
    %8835 = vmatpush.bf16.msra.mxu0 %v4980
    %8836 = vmatpush.bf16.msra.mxu0 %v4976
    %8837 = vmatpush.bf16.msra.mxu0 %v4972
    %8838 = vmatpush.bf16.msra.mxu0 %v4968
    %8839 = vmatmul.bf16.gmra.mxu0 %v329
    %v8840 = vpop.f32.mrf.mxu0
    %v8841 = vadd.f32 %v8812, %v8840
    %v8842 = vpop.f32.mrf.mxu0
    %v8843 = vadd.f32 %v8814, %v8842
    %8844 = vmatmul.bf16.gmra.mxu0 %v361
    %v8845 = vpop.f32.mrf.mxu0
    %v8846 = vadd.f32 %v8817, %v8845
    %v8847 = vpop.f32.mrf.mxu0
    %v8848 = vadd.f32 %v8819, %v8847
    %8849 = vmatmul.bf16.gmra.mxu0 %v393
    %v8850 = vpop.f32.mrf.mxu0
    %v8851 = vadd.f32 %v8822, %v8850
    %v8852 = vpop.f32.mrf.mxu0
    %v8853 = vadd.f32 %v8824, %v8852
    %8854 = vmatmul.bf16.gmra.mxu0 %v425
    %v8855 = vpop.f32.mrf.mxu0
    %v8856 = vadd.f32 %v8827, %v8855
    %v8857 = vpop.f32.mrf.mxu0
    %v8858 = vadd.f32 %v8829, %v8857
    %8859 = vdwg.mxu0
    %8860 = vmatpush.bf16.msra.mxu0 %v5028
    %8861 = vmatpush.bf16.msra.mxu0 %v5024
    %8862 = vmatpush.bf16.msra.mxu0 %v5020
    %8863 = vmatpush.bf16.msra.mxu0 %v5016
    %8864 = vmatpush.bf16.msra.mxu0 %v5012
    %8865 = vmatpush.bf16.msra.mxu0 %v5008
    %8866 = vmatpush.bf16.msra.mxu0 %v5004
    %8867 = vmatpush.bf16.msra.mxu0 %v5000
    %8868 = vmatmul.bf16.gmra.mxu0 %v330
    %v8869 = vpop.f32.mrf.mxu0
    %v8870 = vadd.f32 %v8841, %v8869
    %v8871 = vpop.f32.mrf.mxu0
    %v8872 = vadd.f32 %v8843, %v8871
    %8873 = vmatmul.bf16.gmra.mxu0 %v362
    %v8874 = vpop.f32.mrf.mxu0
    %v8875 = vadd.f32 %v8846, %v8874
    %v8876 = vpop.f32.mrf.mxu0
    %v8877 = vadd.f32 %v8848, %v8876
    %8878 = vmatmul.bf16.gmra.mxu0 %v394
    %v8879 = vpop.f32.mrf.mxu0
    %v8880 = vadd.f32 %v8851, %v8879
    %v8881 = vpop.f32.mrf.mxu0
    %v8882 = vadd.f32 %v8853, %v8881
    %8883 = vmatmul.bf16.gmra.mxu0 %v426
    %v8884 = vpop.f32.mrf.mxu0
    %v8885 = vadd.f32 %v8856, %v8884
    %v8886 = vpop.f32.mrf.mxu0
    %v8887 = vadd.f32 %v8858, %v8886
    %8888 = vdwg.mxu0
    %8889 = vmatpush.bf16.msra.mxu0 %v5060
    %8890 = vmatpush.bf16.msra.mxu0 %v5056
    %8891 = vmatpush.bf16.msra.mxu0 %v5052
    %8892 = vmatpush.bf16.msra.mxu0 %v5048
    %8893 = vmatpush.bf16.msra.mxu0 %v5044
    %8894 = vmatpush.bf16.msra.mxu0 %v5040
    %8895 = vmatpush.bf16.msra.mxu0 %v5036
    %8896 = vmatpush.bf16.msra.mxu0 %v5032
    %8897 = vmatmul.bf16.gmra.mxu0 %v331
    %v8898 = vpop.f32.mrf.mxu0
    %v8899 = vadd.f32 %v8870, %v8898
    %v8900 = vpop.f32.mrf.mxu0
    %v8901 = vadd.f32 %v8872, %v8900
    %8902 = vmatmul.bf16.gmra.mxu0 %v363
    %v8903 = vpop.f32.mrf.mxu0
    %v8904 = vadd.f32 %v8875, %v8903
    %v8905 = vpop.f32.mrf.mxu0
    %v8906 = vadd.f32 %v8877, %v8905
    %8907 = vmatmul.bf16.gmra.mxu0 %v395
    %v8908 = vpop.f32.mrf.mxu0
    %v8909 = vadd.f32 %v8880, %v8908
    %v8910 = vpop.f32.mrf.mxu0
    %v8911 = vadd.f32 %v8882, %v8910
    %8912 = vmatmul.bf16.gmra.mxu0 %v427
    %v8913 = vpop.f32.mrf.mxu0
    %v8914 = vadd.f32 %v8885, %v8913
    %v8915 = vpop.f32.mrf.mxu0
    %v8916 = vadd.f32 %v8887, %v8915
    %8917 = vdwg.mxu0
    %8918 = vmatpush.bf16.msra.mxu0 %v5092
    %8919 = vmatpush.bf16.msra.mxu0 %v5088
    %8920 = vmatpush.bf16.msra.mxu0 %v5084
    %8921 = vmatpush.bf16.msra.mxu0 %v5080
    %8922 = vmatpush.bf16.msra.mxu0 %v5076
    %8923 = vmatpush.bf16.msra.mxu0 %v5072
    %8924 = vmatpush.bf16.msra.mxu0 %v5068
    %8925 = vmatpush.bf16.msra.mxu0 %v5064
    %8926 = vmatmul.bf16.gmra.mxu0 %v332
    %v8927 = vpop.f32.mrf.mxu0
    %v8928 = vadd.f32 %v8899, %v8927
    %v8929 = vpop.f32.mrf.mxu0
    %v8930 = vadd.f32 %v8901, %v8929
    %8931 = vmatmul.bf16.gmra.mxu0 %v364
    %v8932 = vpop.f32.mrf.mxu0
    %v8933 = vadd.f32 %v8904, %v8932
    %v8934 = vpop.f32.mrf.mxu0
    %v8935 = vadd.f32 %v8906, %v8934
    %8936 = vmatmul.bf16.gmra.mxu0 %v396
    %v8937 = vpop.f32.mrf.mxu0
    %v8938 = vadd.f32 %v8909, %v8937
    %v8939 = vpop.f32.mrf.mxu0
    %v8940 = vadd.f32 %v8911, %v8939
    %8941 = vmatmul.bf16.gmra.mxu0 %v428
    %v8942 = vpop.f32.mrf.mxu0
    %v8943 = vadd.f32 %v8914, %v8942
    %v8944 = vpop.f32.mrf.mxu0
    %v8945 = vadd.f32 %v8916, %v8944
    %8946 = vdwg.mxu0
    %8947 = vmatpush.bf16.msra.mxu0 %v5124
    %8948 = vmatpush.bf16.msra.mxu0 %v5120
    %8949 = vmatpush.bf16.msra.mxu0 %v5116
    %8950 = vmatpush.bf16.msra.mxu0 %v5112
    %8951 = vmatpush.bf16.msra.mxu0 %v5108
    %8952 = vmatpush.bf16.msra.mxu0 %v5104
    %8953 = vmatpush.bf16.msra.mxu0 %v5100
    %8954 = vmatpush.bf16.msra.mxu0 %v5096
    %8955 = vmatmul.bf16.gmra.mxu0 %v333
    %v8956 = vpop.f32.mrf.mxu0
    %v8957 = vadd.f32 %v8928, %v8956
    %v8958 = vpop.f32.mrf.mxu0
    %v8959 = vadd.f32 %v8930, %v8958
    %8960 = vmatmul.bf16.gmra.mxu0 %v365
    %v8961 = vpop.f32.mrf.mxu0
    %v8962 = vadd.f32 %v8933, %v8961
    %v8963 = vpop.f32.mrf.mxu0
    %v8964 = vadd.f32 %v8935, %v8963
    %8965 = vmatmul.bf16.gmra.mxu0 %v397
    %v8966 = vpop.f32.mrf.mxu0
    %v8967 = vadd.f32 %v8938, %v8966
    %v8968 = vpop.f32.mrf.mxu0
    %v8969 = vadd.f32 %v8940, %v8968
    %8970 = vmatmul.bf16.gmra.mxu0 %v429
    %v8971 = vpop.f32.mrf.mxu0
    %v8972 = vadd.f32 %v8943, %v8971
    %v8973 = vpop.f32.mrf.mxu0
    %v8974 = vadd.f32 %v8945, %v8973
    %8975 = vdwg.mxu0
    %8976 = vmatpush.bf16.msra.mxu0 %v5156
    %8977 = vmatpush.bf16.msra.mxu0 %v5152
    %8978 = vmatpush.bf16.msra.mxu0 %v5148
    %8979 = vmatpush.bf16.msra.mxu0 %v5144
    %8980 = vmatpush.bf16.msra.mxu0 %v5140
    %8981 = vmatpush.bf16.msra.mxu0 %v5136
    %8982 = vmatpush.bf16.msra.mxu0 %v5132
    %8983 = vmatpush.bf16.msra.mxu0 %v5128
    %8984 = vmatmul.bf16.gmra.mxu0 %v334
    %v8985 = vpop.f32.mrf.mxu0
    %v8986 = vadd.f32 %v8957, %v8985
    %v8987 = vpop.f32.mrf.mxu0
    %v8988 = vadd.f32 %v8959, %v8987
    %8989 = vmatmul.bf16.gmra.mxu0 %v366
    %v8990 = vpop.f32.mrf.mxu0
    %v8991 = vadd.f32 %v8962, %v8990
    %v8992 = vpop.f32.mrf.mxu0
    %v8993 = vadd.f32 %v8964, %v8992
    %8994 = vmatmul.bf16.gmra.mxu0 %v398
    %v8995 = vpop.f32.mrf.mxu0
    %v8996 = vadd.f32 %v8967, %v8995
    %v8997 = vpop.f32.mrf.mxu0
    %v8998 = vadd.f32 %v8969, %v8997
    %8999 = vmatmul.bf16.gmra.mxu0 %v430
    %v9000 = vpop.f32.mrf.mxu0
    %v9001 = vadd.f32 %v8972, %v9000
    %v9002 = vpop.f32.mrf.mxu0
    %v9003 = vadd.f32 %v8974, %v9002
    %9004 = vdwg.mxu0
    %9005 = vmatpush.bf16.msra.mxu0 %v5188
    %9006 = vmatpush.bf16.msra.mxu0 %v5184
    %9007 = vmatpush.bf16.msra.mxu0 %v5180
    %9008 = vmatpush.bf16.msra.mxu0 %v5176
    %9009 = vmatpush.bf16.msra.mxu0 %v5172
    %9010 = vmatpush.bf16.msra.mxu0 %v5168
    %9011 = vmatpush.bf16.msra.mxu0 %v5164
    %9012 = vmatpush.bf16.msra.mxu0 %v5160
    %9013 = vmatmul.bf16.gmra.mxu0 %v335
    %v9014 = vpop.f32.mrf.mxu0
    %v9015 = vadd.f32 %v8986, %v9014
    %v9016 = vpop.f32.mrf.mxu0
    %v9017 = vadd.f32 %v8988, %v9016
    %9018 = vmatmul.bf16.gmra.mxu0 %v367
    %v9019 = vpop.f32.mrf.mxu0
    %v9020 = vadd.f32 %v8991, %v9019
    %v9021 = vpop.f32.mrf.mxu0
    %v9022 = vadd.f32 %v8993, %v9021
    %9023 = vmatmul.bf16.gmra.mxu0 %v399
    %v9024 = vpop.f32.mrf.mxu0
    %v9025 = vadd.f32 %v8996, %v9024
    %v9026 = vpop.f32.mrf.mxu0
    %v9027 = vadd.f32 %v8998, %v9026
    %9028 = vmatmul.bf16.gmra.mxu0 %v431
    %v9029 = vpop.f32.mrf.mxu0
    %v9030 = vadd.f32 %v9001, %v9029
    %v9031 = vpop.f32.mrf.mxu0
    %v9032 = vadd.f32 %v9003, %v9031
    %9033 = vdwg.mxu0
    %9034 = vmatpush.bf16.msra.mxu0 %v5220
    %9035 = vmatpush.bf16.msra.mxu0 %v5216
    %9036 = vmatpush.bf16.msra.mxu0 %v5212
    %9037 = vmatpush.bf16.msra.mxu0 %v5208
    %9038 = vmatpush.bf16.msra.mxu0 %v5204
    %9039 = vmatpush.bf16.msra.mxu0 %v5200
    %9040 = vmatpush.bf16.msra.mxu0 %v5196
    %9041 = vmatpush.bf16.msra.mxu0 %v5192
    %9042 = vmatmul.bf16.gmra.mxu0 %v336
    %v9043 = vpop.f32.mrf.mxu0
    %v9044 = vadd.f32 %v9015, %v9043
    %v9045 = vpop.f32.mrf.mxu0
    %v9046 = vadd.f32 %v9017, %v9045
    %9047 = vmatmul.bf16.gmra.mxu0 %v368
    %v9048 = vpop.f32.mrf.mxu0
    %v9049 = vadd.f32 %v9020, %v9048
    %v9050 = vpop.f32.mrf.mxu0
    %v9051 = vadd.f32 %v9022, %v9050
    %9052 = vmatmul.bf16.gmra.mxu0 %v400
    %v9053 = vpop.f32.mrf.mxu0
    %v9054 = vadd.f32 %v9025, %v9053
    %v9055 = vpop.f32.mrf.mxu0
    %v9056 = vadd.f32 %v9027, %v9055
    %9057 = vmatmul.bf16.gmra.mxu0 %v432
    %v9058 = vpop.f32.mrf.mxu0
    %v9059 = vadd.f32 %v9030, %v9058
    %v9060 = vpop.f32.mrf.mxu0
    %v9061 = vadd.f32 %v9032, %v9060
    %9062 = vdwg.mxu0
    %9063 = vmatpush.bf16.msra.mxu0 %v5252
    %9064 = vmatpush.bf16.msra.mxu0 %v5248
    %9065 = vmatpush.bf16.msra.mxu0 %v5244
    %9066 = vmatpush.bf16.msra.mxu0 %v5240
    %9067 = vmatpush.bf16.msra.mxu0 %v5236
    %9068 = vmatpush.bf16.msra.mxu0 %v5232
    %9069 = vmatpush.bf16.msra.mxu0 %v5228
    %9070 = vmatpush.bf16.msra.mxu0 %v5224
    %9071 = vmatmul.bf16.gmra.mxu0 %v337
    %v9072 = vpop.f32.mrf.mxu0
    %v9073 = vadd.f32 %v9044, %v9072
    %v9074 = vpop.f32.mrf.mxu0
    %v9075 = vadd.f32 %v9046, %v9074
    %9076 = vmatmul.bf16.gmra.mxu0 %v369
    %v9077 = vpop.f32.mrf.mxu0
    %v9078 = vadd.f32 %v9049, %v9077
    %v9079 = vpop.f32.mrf.mxu0
    %v9080 = vadd.f32 %v9051, %v9079
    %9081 = vmatmul.bf16.gmra.mxu0 %v401
    %v9082 = vpop.f32.mrf.mxu0
    %v9083 = vadd.f32 %v9054, %v9082
    %v9084 = vpop.f32.mrf.mxu0
    %v9085 = vadd.f32 %v9056, %v9084
    %9086 = vmatmul.bf16.gmra.mxu0 %v433
    %v9087 = vpop.f32.mrf.mxu0
    %v9088 = vadd.f32 %v9059, %v9087
    %v9089 = vpop.f32.mrf.mxu0
    %v9090 = vadd.f32 %v9061, %v9089
    %9091 = vdwg.mxu0
    %9092 = vmatpush.bf16.msra.mxu0 %v5284
    %9093 = vmatpush.bf16.msra.mxu0 %v5280
    %9094 = vmatpush.bf16.msra.mxu0 %v5276
    %9095 = vmatpush.bf16.msra.mxu0 %v5272
    %9096 = vmatpush.bf16.msra.mxu0 %v5268
    %9097 = vmatpush.bf16.msra.mxu0 %v5264
    %9098 = vmatpush.bf16.msra.mxu0 %v5260
    %9099 = vmatpush.bf16.msra.mxu0 %v5256
    %9100 = vmatmul.bf16.gmra.mxu0 %v338
    %v9101 = vpop.f32.mrf.mxu0
    %v9102 = vadd.f32 %v9073, %v9101
    %v9103 = vpop.f32.mrf.mxu0
    %v9104 = vadd.f32 %v9075, %v9103
    %9105 = vmatmul.bf16.gmra.mxu0 %v370
    %v9106 = vpop.f32.mrf.mxu0
    %v9107 = vadd.f32 %v9078, %v9106
    %v9108 = vpop.f32.mrf.mxu0
    %v9109 = vadd.f32 %v9080, %v9108
    %9110 = vmatmul.bf16.gmra.mxu0 %v402
    %v9111 = vpop.f32.mrf.mxu0
    %v9112 = vadd.f32 %v9083, %v9111
    %v9113 = vpop.f32.mrf.mxu0
    %v9114 = vadd.f32 %v9085, %v9113
    %9115 = vmatmul.bf16.gmra.mxu0 %v434
    %v9116 = vpop.f32.mrf.mxu0
    %v9117 = vadd.f32 %v9088, %v9116
    %v9118 = vpop.f32.mrf.mxu0
    %v9119 = vadd.f32 %v9090, %v9118
    %9120 = vdwg.mxu0
    %9121 = vmatpush.bf16.msra.mxu0 %v5316
    %9122 = vmatpush.bf16.msra.mxu0 %v5312
    %9123 = vmatpush.bf16.msra.mxu0 %v5308
    %9124 = vmatpush.bf16.msra.mxu0 %v5304
    %9125 = vmatpush.bf16.msra.mxu0 %v5300
    %9126 = vmatpush.bf16.msra.mxu0 %v5296
    %9127 = vmatpush.bf16.msra.mxu0 %v5292
    %9128 = vmatpush.bf16.msra.mxu0 %v5288
    %9129 = vmatmul.bf16.gmra.mxu0 %v339
    %v9130 = vpop.f32.mrf.mxu0
    %v9131 = vadd.f32 %v9102, %v9130
    %v9132 = vpop.f32.mrf.mxu0
    %v9133 = vadd.f32 %v9104, %v9132
    %9134 = vmatmul.bf16.gmra.mxu0 %v371
    %v9135 = vpop.f32.mrf.mxu0
    %v9136 = vadd.f32 %v9107, %v9135
    %v9137 = vpop.f32.mrf.mxu0
    %v9138 = vadd.f32 %v9109, %v9137
    %9139 = vmatmul.bf16.gmra.mxu0 %v403
    %v9140 = vpop.f32.mrf.mxu0
    %v9141 = vadd.f32 %v9112, %v9140
    %v9142 = vpop.f32.mrf.mxu0
    %v9143 = vadd.f32 %v9114, %v9142
    %9144 = vmatmul.bf16.gmra.mxu0 %v435
    %v9145 = vpop.f32.mrf.mxu0
    %v9146 = vadd.f32 %v9117, %v9145
    %v9147 = vpop.f32.mrf.mxu0
    %v9148 = vadd.f32 %v9119, %v9147
    %9149 = vdwg.mxu0
    %9150 = vmatpush.bf16.msra.mxu0 %v5348
    %9151 = vmatpush.bf16.msra.mxu0 %v5344
    %9152 = vmatpush.bf16.msra.mxu0 %v5340
    %9153 = vmatpush.bf16.msra.mxu0 %v5336
    %9154 = vmatpush.bf16.msra.mxu0 %v5332
    %9155 = vmatpush.bf16.msra.mxu0 %v5328
    %9156 = vmatpush.bf16.msra.mxu0 %v5324
    %9157 = vmatpush.bf16.msra.mxu0 %v5320
    %9158 = vmatmul.bf16.gmra.mxu0 %v340
    %v9159 = vpop.f32.mrf.mxu0
    %v9160 = vadd.f32 %v9131, %v9159
    %v9161 = vpop.f32.mrf.mxu0
    %v9162 = vadd.f32 %v9133, %v9161
    %9163 = vmatmul.bf16.gmra.mxu0 %v372
    %v9164 = vpop.f32.mrf.mxu0
    %v9165 = vadd.f32 %v9136, %v9164
    %v9166 = vpop.f32.mrf.mxu0
    %v9167 = vadd.f32 %v9138, %v9166
    %9168 = vmatmul.bf16.gmra.mxu0 %v404
    %v9169 = vpop.f32.mrf.mxu0
    %v9170 = vadd.f32 %v9141, %v9169
    %v9171 = vpop.f32.mrf.mxu0
    %v9172 = vadd.f32 %v9143, %v9171
    %9173 = vmatmul.bf16.gmra.mxu0 %v436
    %v9174 = vpop.f32.mrf.mxu0
    %v9175 = vadd.f32 %v9146, %v9174
    %v9176 = vpop.f32.mrf.mxu0
    %v9177 = vadd.f32 %v9148, %v9176
    %9178 = vdwg.mxu0
    %9179 = vmatpush.bf16.msra.mxu0 %v5380
    %9180 = vmatpush.bf16.msra.mxu0 %v5376
    %9181 = vmatpush.bf16.msra.mxu0 %v5372
    %9182 = vmatpush.bf16.msra.mxu0 %v5368
    %9183 = vmatpush.bf16.msra.mxu0 %v5364
    %9184 = vmatpush.bf16.msra.mxu0 %v5360
    %9185 = vmatpush.bf16.msra.mxu0 %v5356
    %9186 = vmatpush.bf16.msra.mxu0 %v5352
    %9187 = vmatmul.bf16.gmra.mxu0 %v341
    %v9188 = vpop.f32.mrf.mxu0
    %v9189 = vadd.f32 %v9160, %v9188
    %v9190 = vpop.f32.mrf.mxu0
    %v9191 = vadd.f32 %v9162, %v9190
    %9192 = vmatmul.bf16.gmra.mxu0 %v373
    %v9193 = vpop.f32.mrf.mxu0
    %v9194 = vadd.f32 %v9165, %v9193
    %v9195 = vpop.f32.mrf.mxu0
    %v9196 = vadd.f32 %v9167, %v9195
    %9197 = vmatmul.bf16.gmra.mxu0 %v405
    %v9198 = vpop.f32.mrf.mxu0
    %v9199 = vadd.f32 %v9170, %v9198
    %v9200 = vpop.f32.mrf.mxu0
    %v9201 = vadd.f32 %v9172, %v9200
    %9202 = vmatmul.bf16.gmra.mxu0 %v437
    %v9203 = vpop.f32.mrf.mxu0
    %v9204 = vadd.f32 %v9175, %v9203
    %v9205 = vpop.f32.mrf.mxu0
    %v9206 = vadd.f32 %v9177, %v9205
    %9207 = vdwg.mxu0
    %9208 = vmatpush.bf16.msra.mxu0 %v5412
    %9209 = vmatpush.bf16.msra.mxu0 %v5408
    %9210 = vmatpush.bf16.msra.mxu0 %v5404
    %9211 = vmatpush.bf16.msra.mxu0 %v5400
    %9212 = vmatpush.bf16.msra.mxu0 %v5396
    %9213 = vmatpush.bf16.msra.mxu0 %v5392
    %9214 = vmatpush.bf16.msra.mxu0 %v5388
    %9215 = vmatpush.bf16.msra.mxu0 %v5384
    %9216 = vmatmul.bf16.gmra.mxu0 %v342
    %v9217 = vpop.f32.mrf.mxu0
    %v9218 = vadd.f32 %v9189, %v9217
    %v9219 = vpop.f32.mrf.mxu0
    %v9220 = vadd.f32 %v9191, %v9219
    %9221 = vmatmul.bf16.gmra.mxu0 %v374
    %v9222 = vpop.f32.mrf.mxu0
    %v9223 = vadd.f32 %v9194, %v9222
    %v9224 = vpop.f32.mrf.mxu0
    %v9225 = vadd.f32 %v9196, %v9224
    %9226 = vmatmul.bf16.gmra.mxu0 %v406
    %v9227 = vpop.f32.mrf.mxu0
    %v9228 = vadd.f32 %v9199, %v9227
    %v9229 = vpop.f32.mrf.mxu0
    %v9230 = vadd.f32 %v9201, %v9229
    %9231 = vmatmul.bf16.gmra.mxu0 %v438
    %v9232 = vpop.f32.mrf.mxu0
    %v9233 = vadd.f32 %v9204, %v9232
    %v9234 = vpop.f32.mrf.mxu0
    %v9235 = vadd.f32 %v9206, %v9234
    %9236 = vdwg.mxu0
    %9237 = vmatpush.bf16.msra.mxu0 %v5444
    %9238 = vmatpush.bf16.msra.mxu0 %v5440
    %9239 = vmatpush.bf16.msra.mxu0 %v5436
    %9240 = vmatpush.bf16.msra.mxu0 %v5432
    %9241 = vmatpush.bf16.msra.mxu0 %v5428
    %9242 = vmatpush.bf16.msra.mxu0 %v5424
    %9243 = vmatpush.bf16.msra.mxu0 %v5420
    %9244 = vmatpush.bf16.msra.mxu0 %v5416
    %9245 = vmatmul.bf16.gmra.mxu0 %v343
    %v9246 = vpop.f32.mrf.mxu0
    %v9247 = vadd.f32 %v9218, %v9246
    %v9248 = vpop.f32.mrf.mxu0
    %v9249 = vadd.f32 %v9220, %v9248
    %9250 = vmatmul.bf16.gmra.mxu0 %v375
    %v9251 = vpop.f32.mrf.mxu0
    %v9252 = vadd.f32 %v9223, %v9251
    %v9253 = vpop.f32.mrf.mxu0
    %v9254 = vadd.f32 %v9225, %v9253
    %9255 = vmatmul.bf16.gmra.mxu0 %v407
    %v9256 = vpop.f32.mrf.mxu0
    %v9257 = vadd.f32 %v9228, %v9256
    %v9258 = vpop.f32.mrf.mxu0
    %v9259 = vadd.f32 %v9230, %v9258
    %9260 = vmatmul.bf16.gmra.mxu0 %v439
    %v9261 = vpop.f32.mrf.mxu0
    %v9262 = vadd.f32 %v9233, %v9261
    %v9263 = vpop.f32.mrf.mxu0
    %v9264 = vadd.f32 %v9235, %v9263
    %9265 = vdwg.mxu0
    %9266 = vmatpush.bf16.msra.mxu0 %v5476
    %9267 = vmatpush.bf16.msra.mxu0 %v5472
    %9268 = vmatpush.bf16.msra.mxu0 %v5468
    %9269 = vmatpush.bf16.msra.mxu0 %v5464
    %9270 = vmatpush.bf16.msra.mxu0 %v5460
    %9271 = vmatpush.bf16.msra.mxu0 %v5456
    %9272 = vmatpush.bf16.msra.mxu0 %v5452
    %9273 = vmatpush.bf16.msra.mxu0 %v5448
    %9274 = vmatmul.bf16.gmra.mxu0 %v344
    %v9275 = vpop.f32.mrf.mxu0
    %v9276 = vadd.f32 %v9247, %v9275
    %v9277 = vpop.f32.mrf.mxu0
    %v9278 = vadd.f32 %v9249, %v9277
    %9279 = vmatmul.bf16.gmra.mxu0 %v376
    %v9280 = vpop.f32.mrf.mxu0
    %v9281 = vadd.f32 %v9252, %v9280
    %v9282 = vpop.f32.mrf.mxu0
    %v9283 = vadd.f32 %v9254, %v9282
    %9284 = vmatmul.bf16.gmra.mxu0 %v408
    %v9285 = vpop.f32.mrf.mxu0
    %v9286 = vadd.f32 %v9257, %v9285
    %v9287 = vpop.f32.mrf.mxu0
    %v9288 = vadd.f32 %v9259, %v9287
    %9289 = vmatmul.bf16.gmra.mxu0 %v440
    %v9290 = vpop.f32.mrf.mxu0
    %v9291 = vadd.f32 %v9262, %v9290
    %v9292 = vpop.f32.mrf.mxu0
    %v9293 = vadd.f32 %v9264, %v9292
    %9294 = vdwg.mxu0
    %9295 = vmatpush.bf16.msra.mxu0 %v5508
    %9296 = vmatpush.bf16.msra.mxu0 %v5504
    %9297 = vmatpush.bf16.msra.mxu0 %v5500
    %9298 = vmatpush.bf16.msra.mxu0 %v5496
    %9299 = vmatpush.bf16.msra.mxu0 %v5492
    %9300 = vmatpush.bf16.msra.mxu0 %v5488
    %9301 = vmatpush.bf16.msra.mxu0 %v5484
    %9302 = vmatpush.bf16.msra.mxu0 %v5480
    %9303 = vmatmul.bf16.gmra.mxu0 %v345
    %v9304 = vpop.f32.mrf.mxu0
    %v9305 = vadd.f32 %v9276, %v9304
    %v9306 = vpop.f32.mrf.mxu0
    %v9307 = vadd.f32 %v9278, %v9306
    %9308 = vmatmul.bf16.gmra.mxu0 %v377
    %v9309 = vpop.f32.mrf.mxu0
    %v9310 = vadd.f32 %v9281, %v9309
    %v9311 = vpop.f32.mrf.mxu0
    %v9312 = vadd.f32 %v9283, %v9311
    %9313 = vmatmul.bf16.gmra.mxu0 %v409
    %v9314 = vpop.f32.mrf.mxu0
    %v9315 = vadd.f32 %v9286, %v9314
    %v9316 = vpop.f32.mrf.mxu0
    %v9317 = vadd.f32 %v9288, %v9316
    %9318 = vmatmul.bf16.gmra.mxu0 %v441
    %v9319 = vpop.f32.mrf.mxu0
    %v9320 = vadd.f32 %v9291, %v9319
    %v9321 = vpop.f32.mrf.mxu0
    %v9322 = vadd.f32 %v9293, %v9321
    %9323 = vdwg.mxu0
    %9324 = vmatpush.bf16.msra.mxu0 %v5540
    %9325 = vmatpush.bf16.msra.mxu0 %v5536
    %9326 = vmatpush.bf16.msra.mxu0 %v5532
    %9327 = vmatpush.bf16.msra.mxu0 %v5528
    %9328 = vmatpush.bf16.msra.mxu0 %v5524
    %9329 = vmatpush.bf16.msra.mxu0 %v5520
    %9330 = vmatpush.bf16.msra.mxu0 %v5516
    %9331 = vmatpush.bf16.msra.mxu0 %v5512
    %9332 = vmatmul.bf16.gmra.mxu0 %v346
    %v9333 = vpop.f32.mrf.mxu0
    %v9334 = vadd.f32 %v9305, %v9333
    %v9335 = vpop.f32.mrf.mxu0
    %v9336 = vadd.f32 %v9307, %v9335
    %9337 = vmatmul.bf16.gmra.mxu0 %v378
    %v9338 = vpop.f32.mrf.mxu0
    %v9339 = vadd.f32 %v9310, %v9338
    %v9340 = vpop.f32.mrf.mxu0
    %v9341 = vadd.f32 %v9312, %v9340
    %9342 = vmatmul.bf16.gmra.mxu0 %v410
    %v9343 = vpop.f32.mrf.mxu0
    %v9344 = vadd.f32 %v9315, %v9343
    %v9345 = vpop.f32.mrf.mxu0
    %v9346 = vadd.f32 %v9317, %v9345
    %9347 = vmatmul.bf16.gmra.mxu0 %v442
    %v9348 = vpop.f32.mrf.mxu0
    %v9349 = vadd.f32 %v9320, %v9348
    %v9350 = vpop.f32.mrf.mxu0
    %v9351 = vadd.f32 %v9322, %v9350
    %9352 = vdwg.mxu0
    %9353 = vmatpush.bf16.msra.mxu0 %v5572
    %9354 = vmatpush.bf16.msra.mxu0 %v5568
    %9355 = vmatpush.bf16.msra.mxu0 %v5564
    %9356 = vmatpush.bf16.msra.mxu0 %v5560
    %9357 = vmatpush.bf16.msra.mxu0 %v5556
    %9358 = vmatpush.bf16.msra.mxu0 %v5552
    %9359 = vmatpush.bf16.msra.mxu0 %v5548
    %9360 = vmatpush.bf16.msra.mxu0 %v5544
    %9361 = vmatmul.bf16.gmra.mxu0 %v347
    %v9362 = vpop.f32.mrf.mxu0
    %v9363 = vadd.f32 %v9334, %v9362
    %v9364 = vpop.f32.mrf.mxu0
    %v9365 = vadd.f32 %v9336, %v9364
    %9366 = vmatmul.bf16.gmra.mxu0 %v379
    %v9367 = vpop.f32.mrf.mxu0
    %v9368 = vadd.f32 %v9339, %v9367
    %v9369 = vpop.f32.mrf.mxu0
    %v9370 = vadd.f32 %v9341, %v9369
    %9371 = vmatmul.bf16.gmra.mxu0 %v411
    %v9372 = vpop.f32.mrf.mxu0
    %v9373 = vadd.f32 %v9344, %v9372
    %v9374 = vpop.f32.mrf.mxu0
    %v9375 = vadd.f32 %v9346, %v9374
    %9376 = vmatmul.bf16.gmra.mxu0 %v443
    %v9377 = vpop.f32.mrf.mxu0
    %v9378 = vadd.f32 %v9349, %v9377
    %v9379 = vpop.f32.mrf.mxu0
    %v9380 = vadd.f32 %v9351, %v9379
    %9381 = vdwg.mxu0
    %9382 = vmatpush.bf16.msra.mxu0 %v4581
    %9383 = vmatpush.bf16.msra.mxu0 %v4577
    %9384 = vmatpush.bf16.msra.mxu0 %v4573
    %9385 = vmatpush.bf16.msra.mxu0 %v4569
    %9386 = vmatpush.bf16.msra.mxu0 %v4565
    %9387 = vmatpush.bf16.msra.mxu0 %v4561
    %9388 = vmatpush.bf16.msra.mxu0 %v4557
    %9389 = vmatpush.bf16.msra.mxu0 %v4553
    %9390 = vmatmul.bf16.gmra.mxu0 %v316
    %v9391 = vpop.f32.mrf.mxu0
    %v9392 = vadd.f32 %v1473, %v9391
    %v9393 = vpop.f32.mrf.mxu0
    %v9394 = vadd.f32 %v1473, %v9393
    %9395 = vmatmul.bf16.gmra.mxu0 %v348
    %v9396 = vpop.f32.mrf.mxu0
    %v9397 = vadd.f32 %v1473, %v9396
    %v9398 = vpop.f32.mrf.mxu0
    %v9399 = vadd.f32 %v1473, %v9398
    %9400 = vmatmul.bf16.gmra.mxu0 %v380
    %v9401 = vpop.f32.mrf.mxu0
    %v9402 = vadd.f32 %v1473, %v9401
    %v9403 = vpop.f32.mrf.mxu0
    %v9404 = vadd.f32 %v1473, %v9403
    %9405 = vmatmul.bf16.gmra.mxu0 %v412
    %v9406 = vpop.f32.mrf.mxu0
    %v9407 = vadd.f32 %v1473, %v9406
    %v9408 = vpop.f32.mrf.mxu0
    %v9409 = vadd.f32 %v1473, %v9408
    %9410 = vdwg.mxu0
    %9411 = vmatpush.bf16.msra.mxu0 %v4613
    %9412 = vmatpush.bf16.msra.mxu0 %v4609
    %9413 = vmatpush.bf16.msra.mxu0 %v4605
    %9414 = vmatpush.bf16.msra.mxu0 %v4601
    %9415 = vmatpush.bf16.msra.mxu0 %v4597
    %9416 = vmatpush.bf16.msra.mxu0 %v4593
    %9417 = vmatpush.bf16.msra.mxu0 %v4589
    %9418 = vmatpush.bf16.msra.mxu0 %v4585
    %9419 = vmatmul.bf16.gmra.mxu0 %v317
    %v9420 = vpop.f32.mrf.mxu0
    %v9421 = vadd.f32 %v9392, %v9420
    %v9422 = vpop.f32.mrf.mxu0
    %v9423 = vadd.f32 %v9394, %v9422
    %9424 = vmatmul.bf16.gmra.mxu0 %v349
    %v9425 = vpop.f32.mrf.mxu0
    %v9426 = vadd.f32 %v9397, %v9425
    %v9427 = vpop.f32.mrf.mxu0
    %v9428 = vadd.f32 %v9399, %v9427
    %9429 = vmatmul.bf16.gmra.mxu0 %v381
    %v9430 = vpop.f32.mrf.mxu0
    %v9431 = vadd.f32 %v9402, %v9430
    %v9432 = vpop.f32.mrf.mxu0
    %v9433 = vadd.f32 %v9404, %v9432
    %9434 = vmatmul.bf16.gmra.mxu0 %v413
    %v9435 = vpop.f32.mrf.mxu0
    %v9436 = vadd.f32 %v9407, %v9435
    %v9437 = vpop.f32.mrf.mxu0
    %v9438 = vadd.f32 %v9409, %v9437
    %9439 = vdwg.mxu0
    %9440 = vmatpush.bf16.msra.mxu0 %v4645
    %9441 = vmatpush.bf16.msra.mxu0 %v4641
    %9442 = vmatpush.bf16.msra.mxu0 %v4637
    %9443 = vmatpush.bf16.msra.mxu0 %v4633
    %9444 = vmatpush.bf16.msra.mxu0 %v4629
    %9445 = vmatpush.bf16.msra.mxu0 %v4625
    %9446 = vmatpush.bf16.msra.mxu0 %v4621
    %9447 = vmatpush.bf16.msra.mxu0 %v4617
    %9448 = vmatmul.bf16.gmra.mxu0 %v318
    %v9449 = vpop.f32.mrf.mxu0
    %v9450 = vadd.f32 %v9421, %v9449
    %v9451 = vpop.f32.mrf.mxu0
    %v9452 = vadd.f32 %v9423, %v9451
    %9453 = vmatmul.bf16.gmra.mxu0 %v350
    %v9454 = vpop.f32.mrf.mxu0
    %v9455 = vadd.f32 %v9426, %v9454
    %v9456 = vpop.f32.mrf.mxu0
    %v9457 = vadd.f32 %v9428, %v9456
    %9458 = vmatmul.bf16.gmra.mxu0 %v382
    %v9459 = vpop.f32.mrf.mxu0
    %v9460 = vadd.f32 %v9431, %v9459
    %v9461 = vpop.f32.mrf.mxu0
    %v9462 = vadd.f32 %v9433, %v9461
    %9463 = vmatmul.bf16.gmra.mxu0 %v414
    %v9464 = vpop.f32.mrf.mxu0
    %v9465 = vadd.f32 %v9436, %v9464
    %v9466 = vpop.f32.mrf.mxu0
    %v9467 = vadd.f32 %v9438, %v9466
    %9468 = vdwg.mxu0
    %9469 = vmatpush.bf16.msra.mxu0 %v4677
    %9470 = vmatpush.bf16.msra.mxu0 %v4673
    %9471 = vmatpush.bf16.msra.mxu0 %v4669
    %9472 = vmatpush.bf16.msra.mxu0 %v4665
    %9473 = vmatpush.bf16.msra.mxu0 %v4661
    %9474 = vmatpush.bf16.msra.mxu0 %v4657
    %9475 = vmatpush.bf16.msra.mxu0 %v4653
    %9476 = vmatpush.bf16.msra.mxu0 %v4649
    %9477 = vmatmul.bf16.gmra.mxu0 %v319
    %v9478 = vpop.f32.mrf.mxu0
    %v9479 = vadd.f32 %v9450, %v9478
    %v9480 = vpop.f32.mrf.mxu0
    %v9481 = vadd.f32 %v9452, %v9480
    %9482 = vmatmul.bf16.gmra.mxu0 %v351
    %v9483 = vpop.f32.mrf.mxu0
    %v9484 = vadd.f32 %v9455, %v9483
    %v9485 = vpop.f32.mrf.mxu0
    %v9486 = vadd.f32 %v9457, %v9485
    %9487 = vmatmul.bf16.gmra.mxu0 %v383
    %v9488 = vpop.f32.mrf.mxu0
    %v9489 = vadd.f32 %v9460, %v9488
    %v9490 = vpop.f32.mrf.mxu0
    %v9491 = vadd.f32 %v9462, %v9490
    %9492 = vmatmul.bf16.gmra.mxu0 %v415
    %v9493 = vpop.f32.mrf.mxu0
    %v9494 = vadd.f32 %v9465, %v9493
    %v9495 = vpop.f32.mrf.mxu0
    %v9496 = vadd.f32 %v9467, %v9495
    %9497 = vdwg.mxu0
    %9498 = vmatpush.bf16.msra.mxu0 %v4709
    %9499 = vmatpush.bf16.msra.mxu0 %v4705
    %9500 = vmatpush.bf16.msra.mxu0 %v4701
    %9501 = vmatpush.bf16.msra.mxu0 %v4697
    %9502 = vmatpush.bf16.msra.mxu0 %v4693
    %9503 = vmatpush.bf16.msra.mxu0 %v4689
    %9504 = vmatpush.bf16.msra.mxu0 %v4685
    %9505 = vmatpush.bf16.msra.mxu0 %v4681
    %9506 = vmatmul.bf16.gmra.mxu0 %v320
    %v9507 = vpop.f32.mrf.mxu0
    %v9508 = vadd.f32 %v9479, %v9507
    %v9509 = vpop.f32.mrf.mxu0
    %v9510 = vadd.f32 %v9481, %v9509
    %9511 = vmatmul.bf16.gmra.mxu0 %v352
    %v9512 = vpop.f32.mrf.mxu0
    %v9513 = vadd.f32 %v9484, %v9512
    %v9514 = vpop.f32.mrf.mxu0
    %v9515 = vadd.f32 %v9486, %v9514
    %9516 = vmatmul.bf16.gmra.mxu0 %v384
    %v9517 = vpop.f32.mrf.mxu0
    %v9518 = vadd.f32 %v9489, %v9517
    %v9519 = vpop.f32.mrf.mxu0
    %v9520 = vadd.f32 %v9491, %v9519
    %9521 = vmatmul.bf16.gmra.mxu0 %v416
    %v9522 = vpop.f32.mrf.mxu0
    %v9523 = vadd.f32 %v9494, %v9522
    %v9524 = vpop.f32.mrf.mxu0
    %v9525 = vadd.f32 %v9496, %v9524
    %9526 = vdwg.mxu0
    %9527 = vmatpush.bf16.msra.mxu0 %v4741
    %9528 = vmatpush.bf16.msra.mxu0 %v4737
    %9529 = vmatpush.bf16.msra.mxu0 %v4733
    %9530 = vmatpush.bf16.msra.mxu0 %v4729
    %9531 = vmatpush.bf16.msra.mxu0 %v4725
    %9532 = vmatpush.bf16.msra.mxu0 %v4721
    %9533 = vmatpush.bf16.msra.mxu0 %v4717
    %9534 = vmatpush.bf16.msra.mxu0 %v4713
    %9535 = vmatmul.bf16.gmra.mxu0 %v321
    %v9536 = vpop.f32.mrf.mxu0
    %v9537 = vadd.f32 %v9508, %v9536
    %v9538 = vpop.f32.mrf.mxu0
    %v9539 = vadd.f32 %v9510, %v9538
    %9540 = vmatmul.bf16.gmra.mxu0 %v353
    %v9541 = vpop.f32.mrf.mxu0
    %v9542 = vadd.f32 %v9513, %v9541
    %v9543 = vpop.f32.mrf.mxu0
    %v9544 = vadd.f32 %v9515, %v9543
    %9545 = vmatmul.bf16.gmra.mxu0 %v385
    %v9546 = vpop.f32.mrf.mxu0
    %v9547 = vadd.f32 %v9518, %v9546
    %v9548 = vpop.f32.mrf.mxu0
    %v9549 = vadd.f32 %v9520, %v9548
    %9550 = vmatmul.bf16.gmra.mxu0 %v417
    %v9551 = vpop.f32.mrf.mxu0
    %v9552 = vadd.f32 %v9523, %v9551
    %v9553 = vpop.f32.mrf.mxu0
    %v9554 = vadd.f32 %v9525, %v9553
    %9555 = vdwg.mxu0
    %9556 = vmatpush.bf16.msra.mxu0 %v4773
    %9557 = vmatpush.bf16.msra.mxu0 %v4769
    %9558 = vmatpush.bf16.msra.mxu0 %v4765
    %9559 = vmatpush.bf16.msra.mxu0 %v4761
    %9560 = vmatpush.bf16.msra.mxu0 %v4757
    %9561 = vmatpush.bf16.msra.mxu0 %v4753
    %9562 = vmatpush.bf16.msra.mxu0 %v4749
    %9563 = vmatpush.bf16.msra.mxu0 %v4745
    %9564 = vmatmul.bf16.gmra.mxu0 %v322
    %v9565 = vpop.f32.mrf.mxu0
    %v9566 = vadd.f32 %v9537, %v9565
    %v9567 = vpop.f32.mrf.mxu0
    %v9568 = vadd.f32 %v9539, %v9567
    %9569 = vmatmul.bf16.gmra.mxu0 %v354
    %v9570 = vpop.f32.mrf.mxu0
    %v9571 = vadd.f32 %v9542, %v9570
    %v9572 = vpop.f32.mrf.mxu0
    %v9573 = vadd.f32 %v9544, %v9572
    %9574 = vmatmul.bf16.gmra.mxu0 %v386
    %v9575 = vpop.f32.mrf.mxu0
    %v9576 = vadd.f32 %v9547, %v9575
    %v9577 = vpop.f32.mrf.mxu0
    %v9578 = vadd.f32 %v9549, %v9577
    %9579 = vmatmul.bf16.gmra.mxu0 %v418
    %v9580 = vpop.f32.mrf.mxu0
    %v9581 = vadd.f32 %v9552, %v9580
    %v9582 = vpop.f32.mrf.mxu0
    %v9583 = vadd.f32 %v9554, %v9582
    %9584 = vdwg.mxu0
    %9585 = vmatpush.bf16.msra.mxu0 %v4805
    %9586 = vmatpush.bf16.msra.mxu0 %v4801
    %9587 = vmatpush.bf16.msra.mxu0 %v4797
    %9588 = vmatpush.bf16.msra.mxu0 %v4793
    %9589 = vmatpush.bf16.msra.mxu0 %v4789
    %9590 = vmatpush.bf16.msra.mxu0 %v4785
    %9591 = vmatpush.bf16.msra.mxu0 %v4781
    %9592 = vmatpush.bf16.msra.mxu0 %v4777
    %9593 = vmatmul.bf16.gmra.mxu0 %v323
    %v9594 = vpop.f32.mrf.mxu0
    %v9595 = vadd.f32 %v9566, %v9594
    %v9596 = vpop.f32.mrf.mxu0
    %v9597 = vadd.f32 %v9568, %v9596
    %9598 = vmatmul.bf16.gmra.mxu0 %v355
    %v9599 = vpop.f32.mrf.mxu0
    %v9600 = vadd.f32 %v9571, %v9599
    %v9601 = vpop.f32.mrf.mxu0
    %v9602 = vadd.f32 %v9573, %v9601
    %9603 = vmatmul.bf16.gmra.mxu0 %v387
    %v9604 = vpop.f32.mrf.mxu0
    %v9605 = vadd.f32 %v9576, %v9604
    %v9606 = vpop.f32.mrf.mxu0
    %v9607 = vadd.f32 %v9578, %v9606
    %9608 = vmatmul.bf16.gmra.mxu0 %v419
    %v9609 = vpop.f32.mrf.mxu0
    %v9610 = vadd.f32 %v9581, %v9609
    %v9611 = vpop.f32.mrf.mxu0
    %v9612 = vadd.f32 %v9583, %v9611
    %9613 = vdwg.mxu0
    %9614 = vmatpush.bf16.msra.mxu0 %v4837
    %9615 = vmatpush.bf16.msra.mxu0 %v4833
    %9616 = vmatpush.bf16.msra.mxu0 %v4829
    %9617 = vmatpush.bf16.msra.mxu0 %v4825
    %9618 = vmatpush.bf16.msra.mxu0 %v4821
    %9619 = vmatpush.bf16.msra.mxu0 %v4817
    %9620 = vmatpush.bf16.msra.mxu0 %v4813
    %9621 = vmatpush.bf16.msra.mxu0 %v4809
    %9622 = vmatmul.bf16.gmra.mxu0 %v324
    %v9623 = vpop.f32.mrf.mxu0
    %v9624 = vadd.f32 %v9595, %v9623
    %v9625 = vpop.f32.mrf.mxu0
    %v9626 = vadd.f32 %v9597, %v9625
    %9627 = vmatmul.bf16.gmra.mxu0 %v356
    %v9628 = vpop.f32.mrf.mxu0
    %v9629 = vadd.f32 %v9600, %v9628
    %v9630 = vpop.f32.mrf.mxu0
    %v9631 = vadd.f32 %v9602, %v9630
    %9632 = vmatmul.bf16.gmra.mxu0 %v388
    %v9633 = vpop.f32.mrf.mxu0
    %v9634 = vadd.f32 %v9605, %v9633
    %v9635 = vpop.f32.mrf.mxu0
    %v9636 = vadd.f32 %v9607, %v9635
    %9637 = vmatmul.bf16.gmra.mxu0 %v420
    %v9638 = vpop.f32.mrf.mxu0
    %v9639 = vadd.f32 %v9610, %v9638
    %v9640 = vpop.f32.mrf.mxu0
    %v9641 = vadd.f32 %v9612, %v9640
    %9642 = vdwg.mxu0
    %9643 = vmatpush.bf16.msra.mxu0 %v4869
    %9644 = vmatpush.bf16.msra.mxu0 %v4865
    %9645 = vmatpush.bf16.msra.mxu0 %v4861
    %9646 = vmatpush.bf16.msra.mxu0 %v4857
    %9647 = vmatpush.bf16.msra.mxu0 %v4853
    %9648 = vmatpush.bf16.msra.mxu0 %v4849
    %9649 = vmatpush.bf16.msra.mxu0 %v4845
    %9650 = vmatpush.bf16.msra.mxu0 %v4841
    %9651 = vmatmul.bf16.gmra.mxu0 %v325
    %v9652 = vpop.f32.mrf.mxu0
    %v9653 = vadd.f32 %v9624, %v9652
    %v9654 = vpop.f32.mrf.mxu0
    %v9655 = vadd.f32 %v9626, %v9654
    %9656 = vmatmul.bf16.gmra.mxu0 %v357
    %v9657 = vpop.f32.mrf.mxu0
    %v9658 = vadd.f32 %v9629, %v9657
    %v9659 = vpop.f32.mrf.mxu0
    %v9660 = vadd.f32 %v9631, %v9659
    %9661 = vmatmul.bf16.gmra.mxu0 %v389
    %v9662 = vpop.f32.mrf.mxu0
    %v9663 = vadd.f32 %v9634, %v9662
    %v9664 = vpop.f32.mrf.mxu0
    %v9665 = vadd.f32 %v9636, %v9664
    %9666 = vmatmul.bf16.gmra.mxu0 %v421
    %v9667 = vpop.f32.mrf.mxu0
    %v9668 = vadd.f32 %v9639, %v9667
    %v9669 = vpop.f32.mrf.mxu0
    %v9670 = vadd.f32 %v9641, %v9669
    %9671 = vdwg.mxu0
    %9672 = vmatpush.bf16.msra.mxu0 %v4901
    %9673 = vmatpush.bf16.msra.mxu0 %v4897
    %9674 = vmatpush.bf16.msra.mxu0 %v4893
    %9675 = vmatpush.bf16.msra.mxu0 %v4889
    %9676 = vmatpush.bf16.msra.mxu0 %v4885
    %9677 = vmatpush.bf16.msra.mxu0 %v4881
    %9678 = vmatpush.bf16.msra.mxu0 %v4877
    %9679 = vmatpush.bf16.msra.mxu0 %v4873
    %9680 = vmatmul.bf16.gmra.mxu0 %v326
    %v9681 = vpop.f32.mrf.mxu0
    %v9682 = vadd.f32 %v9653, %v9681
    %v9683 = vpop.f32.mrf.mxu0
    %v9684 = vadd.f32 %v9655, %v9683
    %9685 = vmatmul.bf16.gmra.mxu0 %v358
    %v9686 = vpop.f32.mrf.mxu0
    %v9687 = vadd.f32 %v9658, %v9686
    %v9688 = vpop.f32.mrf.mxu0
    %v9689 = vadd.f32 %v9660, %v9688
    %9690 = vmatmul.bf16.gmra.mxu0 %v390
    %v9691 = vpop.f32.mrf.mxu0
    %v9692 = vadd.f32 %v9663, %v9691
    %v9693 = vpop.f32.mrf.mxu0
    %v9694 = vadd.f32 %v9665, %v9693
    %9695 = vmatmul.bf16.gmra.mxu0 %v422
    %v9696 = vpop.f32.mrf.mxu0
    %v9697 = vadd.f32 %v9668, %v9696
    %v9698 = vpop.f32.mrf.mxu0
    %v9699 = vadd.f32 %v9670, %v9698
    %9700 = vdwg.mxu0
    %9701 = vmatpush.bf16.msra.mxu0 %v4933
    %9702 = vmatpush.bf16.msra.mxu0 %v4929
    %9703 = vmatpush.bf16.msra.mxu0 %v4925
    %9704 = vmatpush.bf16.msra.mxu0 %v4921
    %9705 = vmatpush.bf16.msra.mxu0 %v4917
    %9706 = vmatpush.bf16.msra.mxu0 %v4913
    %9707 = vmatpush.bf16.msra.mxu0 %v4909
    %9708 = vmatpush.bf16.msra.mxu0 %v4905
    %9709 = vmatmul.bf16.gmra.mxu0 %v327
    %v9710 = vpop.f32.mrf.mxu0
    %v9711 = vadd.f32 %v9682, %v9710
    %v9712 = vpop.f32.mrf.mxu0
    %v9713 = vadd.f32 %v9684, %v9712
    %9714 = vmatmul.bf16.gmra.mxu0 %v359
    %v9715 = vpop.f32.mrf.mxu0
    %v9716 = vadd.f32 %v9687, %v9715
    %v9717 = vpop.f32.mrf.mxu0
    %v9718 = vadd.f32 %v9689, %v9717
    %9719 = vmatmul.bf16.gmra.mxu0 %v391
    %v9720 = vpop.f32.mrf.mxu0
    %v9721 = vadd.f32 %v9692, %v9720
    %v9722 = vpop.f32.mrf.mxu0
    %v9723 = vadd.f32 %v9694, %v9722
    %9724 = vmatmul.bf16.gmra.mxu0 %v423
    %v9725 = vpop.f32.mrf.mxu0
    %v9726 = vadd.f32 %v9697, %v9725
    %v9727 = vpop.f32.mrf.mxu0
    %v9728 = vadd.f32 %v9699, %v9727
    %9729 = vdwg.mxu0
    %9730 = vmatpush.bf16.msra.mxu0 %v4965
    %9731 = vmatpush.bf16.msra.mxu0 %v4961
    %9732 = vmatpush.bf16.msra.mxu0 %v4957
    %9733 = vmatpush.bf16.msra.mxu0 %v4953
    %9734 = vmatpush.bf16.msra.mxu0 %v4949
    %9735 = vmatpush.bf16.msra.mxu0 %v4945
    %9736 = vmatpush.bf16.msra.mxu0 %v4941
    %9737 = vmatpush.bf16.msra.mxu0 %v4937
    %9738 = vmatmul.bf16.gmra.mxu0 %v328
    %v9739 = vpop.f32.mrf.mxu0
    %v9740 = vadd.f32 %v9711, %v9739
    %v9741 = vpop.f32.mrf.mxu0
    %v9742 = vadd.f32 %v9713, %v9741
    %9743 = vmatmul.bf16.gmra.mxu0 %v360
    %v9744 = vpop.f32.mrf.mxu0
    %v9745 = vadd.f32 %v9716, %v9744
    %v9746 = vpop.f32.mrf.mxu0
    %v9747 = vadd.f32 %v9718, %v9746
    %9748 = vmatmul.bf16.gmra.mxu0 %v392
    %v9749 = vpop.f32.mrf.mxu0
    %v9750 = vadd.f32 %v9721, %v9749
    %v9751 = vpop.f32.mrf.mxu0
    %v9752 = vadd.f32 %v9723, %v9751
    %9753 = vmatmul.bf16.gmra.mxu0 %v424
    %v9754 = vpop.f32.mrf.mxu0
    %v9755 = vadd.f32 %v9726, %v9754
    %v9756 = vpop.f32.mrf.mxu0
    %v9757 = vadd.f32 %v9728, %v9756
    %9758 = vdwg.mxu0
    %9759 = vmatpush.bf16.msra.mxu0 %v4997
    %9760 = vmatpush.bf16.msra.mxu0 %v4993
    %9761 = vmatpush.bf16.msra.mxu0 %v4989
    %9762 = vmatpush.bf16.msra.mxu0 %v4985
    %9763 = vmatpush.bf16.msra.mxu0 %v4981
    %9764 = vmatpush.bf16.msra.mxu0 %v4977
    %9765 = vmatpush.bf16.msra.mxu0 %v4973
    %9766 = vmatpush.bf16.msra.mxu0 %v4969
    %9767 = vmatmul.bf16.gmra.mxu0 %v329
    %v9768 = vpop.f32.mrf.mxu0
    %v9769 = vadd.f32 %v9740, %v9768
    %v9770 = vpop.f32.mrf.mxu0
    %v9771 = vadd.f32 %v9742, %v9770
    %9772 = vmatmul.bf16.gmra.mxu0 %v361
    %v9773 = vpop.f32.mrf.mxu0
    %v9774 = vadd.f32 %v9745, %v9773
    %v9775 = vpop.f32.mrf.mxu0
    %v9776 = vadd.f32 %v9747, %v9775
    %9777 = vmatmul.bf16.gmra.mxu0 %v393
    %v9778 = vpop.f32.mrf.mxu0
    %v9779 = vadd.f32 %v9750, %v9778
    %v9780 = vpop.f32.mrf.mxu0
    %v9781 = vadd.f32 %v9752, %v9780
    %9782 = vmatmul.bf16.gmra.mxu0 %v425
    %v9783 = vpop.f32.mrf.mxu0
    %v9784 = vadd.f32 %v9755, %v9783
    %v9785 = vpop.f32.mrf.mxu0
    %v9786 = vadd.f32 %v9757, %v9785
    %9787 = vdwg.mxu0
    %9788 = vmatpush.bf16.msra.mxu0 %v5029
    %9789 = vmatpush.bf16.msra.mxu0 %v5025
    %9790 = vmatpush.bf16.msra.mxu0 %v5021
    %9791 = vmatpush.bf16.msra.mxu0 %v5017
    %9792 = vmatpush.bf16.msra.mxu0 %v5013
    %9793 = vmatpush.bf16.msra.mxu0 %v5009
    %9794 = vmatpush.bf16.msra.mxu0 %v5005
    %9795 = vmatpush.bf16.msra.mxu0 %v5001
    %9796 = vmatmul.bf16.gmra.mxu0 %v330
    %v9797 = vpop.f32.mrf.mxu0
    %v9798 = vadd.f32 %v9769, %v9797
    %v9799 = vpop.f32.mrf.mxu0
    %v9800 = vadd.f32 %v9771, %v9799
    %9801 = vmatmul.bf16.gmra.mxu0 %v362
    %v9802 = vpop.f32.mrf.mxu0
    %v9803 = vadd.f32 %v9774, %v9802
    %v9804 = vpop.f32.mrf.mxu0
    %v9805 = vadd.f32 %v9776, %v9804
    %9806 = vmatmul.bf16.gmra.mxu0 %v394
    %v9807 = vpop.f32.mrf.mxu0
    %v9808 = vadd.f32 %v9779, %v9807
    %v9809 = vpop.f32.mrf.mxu0
    %v9810 = vadd.f32 %v9781, %v9809
    %9811 = vmatmul.bf16.gmra.mxu0 %v426
    %v9812 = vpop.f32.mrf.mxu0
    %v9813 = vadd.f32 %v9784, %v9812
    %v9814 = vpop.f32.mrf.mxu0
    %v9815 = vadd.f32 %v9786, %v9814
    %9816 = vdwg.mxu0
    %9817 = vmatpush.bf16.msra.mxu0 %v5061
    %9818 = vmatpush.bf16.msra.mxu0 %v5057
    %9819 = vmatpush.bf16.msra.mxu0 %v5053
    %9820 = vmatpush.bf16.msra.mxu0 %v5049
    %9821 = vmatpush.bf16.msra.mxu0 %v5045
    %9822 = vmatpush.bf16.msra.mxu0 %v5041
    %9823 = vmatpush.bf16.msra.mxu0 %v5037
    %9824 = vmatpush.bf16.msra.mxu0 %v5033
    %9825 = vmatmul.bf16.gmra.mxu0 %v331
    %v9826 = vpop.f32.mrf.mxu0
    %v9827 = vadd.f32 %v9798, %v9826
    %v9828 = vpop.f32.mrf.mxu0
    %v9829 = vadd.f32 %v9800, %v9828
    %9830 = vmatmul.bf16.gmra.mxu0 %v363
    %v9831 = vpop.f32.mrf.mxu0
    %v9832 = vadd.f32 %v9803, %v9831
    %v9833 = vpop.f32.mrf.mxu0
    %v9834 = vadd.f32 %v9805, %v9833
    %9835 = vmatmul.bf16.gmra.mxu0 %v395
    %v9836 = vpop.f32.mrf.mxu0
    %v9837 = vadd.f32 %v9808, %v9836
    %v9838 = vpop.f32.mrf.mxu0
    %v9839 = vadd.f32 %v9810, %v9838
    %9840 = vmatmul.bf16.gmra.mxu0 %v427
    %v9841 = vpop.f32.mrf.mxu0
    %v9842 = vadd.f32 %v9813, %v9841
    %v9843 = vpop.f32.mrf.mxu0
    %v9844 = vadd.f32 %v9815, %v9843
    %9845 = vdwg.mxu0
    %9846 = vmatpush.bf16.msra.mxu0 %v5093
    %9847 = vmatpush.bf16.msra.mxu0 %v5089
    %9848 = vmatpush.bf16.msra.mxu0 %v5085
    %9849 = vmatpush.bf16.msra.mxu0 %v5081
    %9850 = vmatpush.bf16.msra.mxu0 %v5077
    %9851 = vmatpush.bf16.msra.mxu0 %v5073
    %9852 = vmatpush.bf16.msra.mxu0 %v5069
    %9853 = vmatpush.bf16.msra.mxu0 %v5065
    %9854 = vmatmul.bf16.gmra.mxu0 %v332
    %v9855 = vpop.f32.mrf.mxu0
    %v9856 = vadd.f32 %v9827, %v9855
    %v9857 = vpop.f32.mrf.mxu0
    %v9858 = vadd.f32 %v9829, %v9857
    %9859 = vmatmul.bf16.gmra.mxu0 %v364
    %v9860 = vpop.f32.mrf.mxu0
    %v9861 = vadd.f32 %v9832, %v9860
    %v9862 = vpop.f32.mrf.mxu0
    %v9863 = vadd.f32 %v9834, %v9862
    %9864 = vmatmul.bf16.gmra.mxu0 %v396
    %v9865 = vpop.f32.mrf.mxu0
    %v9866 = vadd.f32 %v9837, %v9865
    %v9867 = vpop.f32.mrf.mxu0
    %v9868 = vadd.f32 %v9839, %v9867
    %9869 = vmatmul.bf16.gmra.mxu0 %v428
    %v9870 = vpop.f32.mrf.mxu0
    %v9871 = vadd.f32 %v9842, %v9870
    %v9872 = vpop.f32.mrf.mxu0
    %v9873 = vadd.f32 %v9844, %v9872
    %9874 = vdwg.mxu0
    %9875 = vmatpush.bf16.msra.mxu0 %v5125
    %9876 = vmatpush.bf16.msra.mxu0 %v5121
    %9877 = vmatpush.bf16.msra.mxu0 %v5117
    %9878 = vmatpush.bf16.msra.mxu0 %v5113
    %9879 = vmatpush.bf16.msra.mxu0 %v5109
    %9880 = vmatpush.bf16.msra.mxu0 %v5105
    %9881 = vmatpush.bf16.msra.mxu0 %v5101
    %9882 = vmatpush.bf16.msra.mxu0 %v5097
    %9883 = vmatmul.bf16.gmra.mxu0 %v333
    %v9884 = vpop.f32.mrf.mxu0
    %v9885 = vadd.f32 %v9856, %v9884
    %v9886 = vpop.f32.mrf.mxu0
    %v9887 = vadd.f32 %v9858, %v9886
    %9888 = vmatmul.bf16.gmra.mxu0 %v365
    %v9889 = vpop.f32.mrf.mxu0
    %v9890 = vadd.f32 %v9861, %v9889
    %v9891 = vpop.f32.mrf.mxu0
    %v9892 = vadd.f32 %v9863, %v9891
    %9893 = vmatmul.bf16.gmra.mxu0 %v397
    %v9894 = vpop.f32.mrf.mxu0
    %v9895 = vadd.f32 %v9866, %v9894
    %v9896 = vpop.f32.mrf.mxu0
    %v9897 = vadd.f32 %v9868, %v9896
    %9898 = vmatmul.bf16.gmra.mxu0 %v429
    %v9899 = vpop.f32.mrf.mxu0
    %v9900 = vadd.f32 %v9871, %v9899
    %v9901 = vpop.f32.mrf.mxu0
    %v9902 = vadd.f32 %v9873, %v9901
    %9903 = vdwg.mxu0
    %9904 = vmatpush.bf16.msra.mxu0 %v5157
    %9905 = vmatpush.bf16.msra.mxu0 %v5153
    %9906 = vmatpush.bf16.msra.mxu0 %v5149
    %9907 = vmatpush.bf16.msra.mxu0 %v5145
    %9908 = vmatpush.bf16.msra.mxu0 %v5141
    %9909 = vmatpush.bf16.msra.mxu0 %v5137
    %9910 = vmatpush.bf16.msra.mxu0 %v5133
    %9911 = vmatpush.bf16.msra.mxu0 %v5129
    %9912 = vmatmul.bf16.gmra.mxu0 %v334
    %v9913 = vpop.f32.mrf.mxu0
    %v9914 = vadd.f32 %v9885, %v9913
    %v9915 = vpop.f32.mrf.mxu0
    %v9916 = vadd.f32 %v9887, %v9915
    %9917 = vmatmul.bf16.gmra.mxu0 %v366
    %v9918 = vpop.f32.mrf.mxu0
    %v9919 = vadd.f32 %v9890, %v9918
    %v9920 = vpop.f32.mrf.mxu0
    %v9921 = vadd.f32 %v9892, %v9920
    %9922 = vmatmul.bf16.gmra.mxu0 %v398
    %v9923 = vpop.f32.mrf.mxu0
    %v9924 = vadd.f32 %v9895, %v9923
    %v9925 = vpop.f32.mrf.mxu0
    %v9926 = vadd.f32 %v9897, %v9925
    %9927 = vmatmul.bf16.gmra.mxu0 %v430
    %v9928 = vpop.f32.mrf.mxu0
    %v9929 = vadd.f32 %v9900, %v9928
    %v9930 = vpop.f32.mrf.mxu0
    %v9931 = vadd.f32 %v9902, %v9930
    %9932 = vdwg.mxu0
    %9933 = vmatpush.bf16.msra.mxu0 %v5189
    %9934 = vmatpush.bf16.msra.mxu0 %v5185
    %9935 = vmatpush.bf16.msra.mxu0 %v5181
    %9936 = vmatpush.bf16.msra.mxu0 %v5177
    %9937 = vmatpush.bf16.msra.mxu0 %v5173
    %9938 = vmatpush.bf16.msra.mxu0 %v5169
    %9939 = vmatpush.bf16.msra.mxu0 %v5165
    %9940 = vmatpush.bf16.msra.mxu0 %v5161
    %9941 = vmatmul.bf16.gmra.mxu0 %v335
    %v9942 = vpop.f32.mrf.mxu0
    %v9943 = vadd.f32 %v9914, %v9942
    %v9944 = vpop.f32.mrf.mxu0
    %v9945 = vadd.f32 %v9916, %v9944
    %9946 = vmatmul.bf16.gmra.mxu0 %v367
    %v9947 = vpop.f32.mrf.mxu0
    %v9948 = vadd.f32 %v9919, %v9947
    %v9949 = vpop.f32.mrf.mxu0
    %v9950 = vadd.f32 %v9921, %v9949
    %9951 = vmatmul.bf16.gmra.mxu0 %v399
    %v9952 = vpop.f32.mrf.mxu0
    %v9953 = vadd.f32 %v9924, %v9952
    %v9954 = vpop.f32.mrf.mxu0
    %v9955 = vadd.f32 %v9926, %v9954
    %9956 = vmatmul.bf16.gmra.mxu0 %v431
    %v9957 = vpop.f32.mrf.mxu0
    %v9958 = vadd.f32 %v9929, %v9957
    %v9959 = vpop.f32.mrf.mxu0
    %v9960 = vadd.f32 %v9931, %v9959
    %9961 = vdwg.mxu0
    %9962 = vmatpush.bf16.msra.mxu0 %v5221
    %9963 = vmatpush.bf16.msra.mxu0 %v5217
    %9964 = vmatpush.bf16.msra.mxu0 %v5213
    %9965 = vmatpush.bf16.msra.mxu0 %v5209
    %9966 = vmatpush.bf16.msra.mxu0 %v5205
    %9967 = vmatpush.bf16.msra.mxu0 %v5201
    %9968 = vmatpush.bf16.msra.mxu0 %v5197
    %9969 = vmatpush.bf16.msra.mxu0 %v5193
    %9970 = vmatmul.bf16.gmra.mxu0 %v336
    %v9971 = vpop.f32.mrf.mxu0
    %v9972 = vadd.f32 %v9943, %v9971
    %v9973 = vpop.f32.mrf.mxu0
    %v9974 = vadd.f32 %v9945, %v9973
    %9975 = vmatmul.bf16.gmra.mxu0 %v368
    %v9976 = vpop.f32.mrf.mxu0
    %v9977 = vadd.f32 %v9948, %v9976
    %v9978 = vpop.f32.mrf.mxu0
    %v9979 = vadd.f32 %v9950, %v9978
    %9980 = vmatmul.bf16.gmra.mxu0 %v400
    %v9981 = vpop.f32.mrf.mxu0
    %v9982 = vadd.f32 %v9953, %v9981
    %v9983 = vpop.f32.mrf.mxu0
    %v9984 = vadd.f32 %v9955, %v9983
    %9985 = vmatmul.bf16.gmra.mxu0 %v432
    %v9986 = vpop.f32.mrf.mxu0
    %v9987 = vadd.f32 %v9958, %v9986
    %v9988 = vpop.f32.mrf.mxu0
    %v9989 = vadd.f32 %v9960, %v9988
    %9990 = vdwg.mxu0
    %9991 = vmatpush.bf16.msra.mxu0 %v5253
    %9992 = vmatpush.bf16.msra.mxu0 %v5249
    %9993 = vmatpush.bf16.msra.mxu0 %v5245
    %9994 = vmatpush.bf16.msra.mxu0 %v5241
    %9995 = vmatpush.bf16.msra.mxu0 %v5237
    %9996 = vmatpush.bf16.msra.mxu0 %v5233
    %9997 = vmatpush.bf16.msra.mxu0 %v5229
    %9998 = vmatpush.bf16.msra.mxu0 %v5225
    %9999 = vmatmul.bf16.gmra.mxu0 %v337
    %v10000 = vpop.f32.mrf.mxu0
    %v10001 = vadd.f32 %v9972, %v10000
    %v10002 = vpop.f32.mrf.mxu0
    %v10003 = vadd.f32 %v9974, %v10002
    %10004 = vmatmul.bf16.gmra.mxu0 %v369
    %v10005 = vpop.f32.mrf.mxu0
    %v10006 = vadd.f32 %v9977, %v10005
    %v10007 = vpop.f32.mrf.mxu0
    %v10008 = vadd.f32 %v9979, %v10007
    %10009 = vmatmul.bf16.gmra.mxu0 %v401
    %v10010 = vpop.f32.mrf.mxu0
    %v10011 = vadd.f32 %v9982, %v10010
    %v10012 = vpop.f32.mrf.mxu0
    %v10013 = vadd.f32 %v9984, %v10012
    %10014 = vmatmul.bf16.gmra.mxu0 %v433
    %v10015 = vpop.f32.mrf.mxu0
    %v10016 = vadd.f32 %v9987, %v10015
    %v10017 = vpop.f32.mrf.mxu0
    %v10018 = vadd.f32 %v9989, %v10017
    %10019 = vdwg.mxu0
    %10020 = vmatpush.bf16.msra.mxu0 %v5285
    %10021 = vmatpush.bf16.msra.mxu0 %v5281
    %10022 = vmatpush.bf16.msra.mxu0 %v5277
    %10023 = vmatpush.bf16.msra.mxu0 %v5273
    %10024 = vmatpush.bf16.msra.mxu0 %v5269
    %10025 = vmatpush.bf16.msra.mxu0 %v5265
    %10026 = vmatpush.bf16.msra.mxu0 %v5261
    %10027 = vmatpush.bf16.msra.mxu0 %v5257
    %10028 = vmatmul.bf16.gmra.mxu0 %v338
    %v10029 = vpop.f32.mrf.mxu0
    %v10030 = vadd.f32 %v10001, %v10029
    %v10031 = vpop.f32.mrf.mxu0
    %v10032 = vadd.f32 %v10003, %v10031
    %10033 = vmatmul.bf16.gmra.mxu0 %v370
    %v10034 = vpop.f32.mrf.mxu0
    %v10035 = vadd.f32 %v10006, %v10034
    %v10036 = vpop.f32.mrf.mxu0
    %v10037 = vadd.f32 %v10008, %v10036
    %10038 = vmatmul.bf16.gmra.mxu0 %v402
    %v10039 = vpop.f32.mrf.mxu0
    %v10040 = vadd.f32 %v10011, %v10039
    %v10041 = vpop.f32.mrf.mxu0
    %v10042 = vadd.f32 %v10013, %v10041
    %10043 = vmatmul.bf16.gmra.mxu0 %v434
    %v10044 = vpop.f32.mrf.mxu0
    %v10045 = vadd.f32 %v10016, %v10044
    %v10046 = vpop.f32.mrf.mxu0
    %v10047 = vadd.f32 %v10018, %v10046
    %10048 = vdwg.mxu0
    %10049 = vmatpush.bf16.msra.mxu0 %v5317
    %10050 = vmatpush.bf16.msra.mxu0 %v5313
    %10051 = vmatpush.bf16.msra.mxu0 %v5309
    %10052 = vmatpush.bf16.msra.mxu0 %v5305
    %10053 = vmatpush.bf16.msra.mxu0 %v5301
    %10054 = vmatpush.bf16.msra.mxu0 %v5297
    %10055 = vmatpush.bf16.msra.mxu0 %v5293
    %10056 = vmatpush.bf16.msra.mxu0 %v5289
    %10057 = vmatmul.bf16.gmra.mxu0 %v339
    %v10058 = vpop.f32.mrf.mxu0
    %v10059 = vadd.f32 %v10030, %v10058
    %v10060 = vpop.f32.mrf.mxu0
    %v10061 = vadd.f32 %v10032, %v10060
    %10062 = vmatmul.bf16.gmra.mxu0 %v371
    %v10063 = vpop.f32.mrf.mxu0
    %v10064 = vadd.f32 %v10035, %v10063
    %v10065 = vpop.f32.mrf.mxu0
    %v10066 = vadd.f32 %v10037, %v10065
    %10067 = vmatmul.bf16.gmra.mxu0 %v403
    %v10068 = vpop.f32.mrf.mxu0
    %v10069 = vadd.f32 %v10040, %v10068
    %v10070 = vpop.f32.mrf.mxu0
    %v10071 = vadd.f32 %v10042, %v10070
    %10072 = vmatmul.bf16.gmra.mxu0 %v435
    %v10073 = vpop.f32.mrf.mxu0
    %v10074 = vadd.f32 %v10045, %v10073
    %v10075 = vpop.f32.mrf.mxu0
    %v10076 = vadd.f32 %v10047, %v10075
    %10077 = vdwg.mxu0
    %10078 = vmatpush.bf16.msra.mxu0 %v5349
    %10079 = vmatpush.bf16.msra.mxu0 %v5345
    %10080 = vmatpush.bf16.msra.mxu0 %v5341
    %10081 = vmatpush.bf16.msra.mxu0 %v5337
    %10082 = vmatpush.bf16.msra.mxu0 %v5333
    %10083 = vmatpush.bf16.msra.mxu0 %v5329
    %10084 = vmatpush.bf16.msra.mxu0 %v5325
    %10085 = vmatpush.bf16.msra.mxu0 %v5321
    %10086 = vmatmul.bf16.gmra.mxu0 %v340
    %v10087 = vpop.f32.mrf.mxu0
    %v10088 = vadd.f32 %v10059, %v10087
    %v10089 = vpop.f32.mrf.mxu0
    %v10090 = vadd.f32 %v10061, %v10089
    %10091 = vmatmul.bf16.gmra.mxu0 %v372
    %v10092 = vpop.f32.mrf.mxu0
    %v10093 = vadd.f32 %v10064, %v10092
    %v10094 = vpop.f32.mrf.mxu0
    %v10095 = vadd.f32 %v10066, %v10094
    %10096 = vmatmul.bf16.gmra.mxu0 %v404
    %v10097 = vpop.f32.mrf.mxu0
    %v10098 = vadd.f32 %v10069, %v10097
    %v10099 = vpop.f32.mrf.mxu0
    %v10100 = vadd.f32 %v10071, %v10099
    %10101 = vmatmul.bf16.gmra.mxu0 %v436
    %v10102 = vpop.f32.mrf.mxu0
    %v10103 = vadd.f32 %v10074, %v10102
    %v10104 = vpop.f32.mrf.mxu0
    %v10105 = vadd.f32 %v10076, %v10104
    %10106 = vdwg.mxu0
    %10107 = vmatpush.bf16.msra.mxu0 %v5381
    %10108 = vmatpush.bf16.msra.mxu0 %v5377
    %10109 = vmatpush.bf16.msra.mxu0 %v5373
    %10110 = vmatpush.bf16.msra.mxu0 %v5369
    %10111 = vmatpush.bf16.msra.mxu0 %v5365
    %10112 = vmatpush.bf16.msra.mxu0 %v5361
    %10113 = vmatpush.bf16.msra.mxu0 %v5357
    %10114 = vmatpush.bf16.msra.mxu0 %v5353
    %10115 = vmatmul.bf16.gmra.mxu0 %v341
    %v10116 = vpop.f32.mrf.mxu0
    %v10117 = vadd.f32 %v10088, %v10116
    %v10118 = vpop.f32.mrf.mxu0
    %v10119 = vadd.f32 %v10090, %v10118
    %10120 = vmatmul.bf16.gmra.mxu0 %v373
    %v10121 = vpop.f32.mrf.mxu0
    %v10122 = vadd.f32 %v10093, %v10121
    %v10123 = vpop.f32.mrf.mxu0
    %v10124 = vadd.f32 %v10095, %v10123
    %10125 = vmatmul.bf16.gmra.mxu0 %v405
    %v10126 = vpop.f32.mrf.mxu0
    %v10127 = vadd.f32 %v10098, %v10126
    %v10128 = vpop.f32.mrf.mxu0
    %v10129 = vadd.f32 %v10100, %v10128
    %10130 = vmatmul.bf16.gmra.mxu0 %v437
    %v10131 = vpop.f32.mrf.mxu0
    %v10132 = vadd.f32 %v10103, %v10131
    %v10133 = vpop.f32.mrf.mxu0
    %v10134 = vadd.f32 %v10105, %v10133
    %10135 = vdwg.mxu0
    %10136 = vmatpush.bf16.msra.mxu0 %v5413
    %10137 = vmatpush.bf16.msra.mxu0 %v5409
    %10138 = vmatpush.bf16.msra.mxu0 %v5405
    %10139 = vmatpush.bf16.msra.mxu0 %v5401
    %10140 = vmatpush.bf16.msra.mxu0 %v5397
    %10141 = vmatpush.bf16.msra.mxu0 %v5393
    %10142 = vmatpush.bf16.msra.mxu0 %v5389
    %10143 = vmatpush.bf16.msra.mxu0 %v5385
    %10144 = vmatmul.bf16.gmra.mxu0 %v342
    %v10145 = vpop.f32.mrf.mxu0
    %v10146 = vadd.f32 %v10117, %v10145
    %v10147 = vpop.f32.mrf.mxu0
    %v10148 = vadd.f32 %v10119, %v10147
    %10149 = vmatmul.bf16.gmra.mxu0 %v374
    %v10150 = vpop.f32.mrf.mxu0
    %v10151 = vadd.f32 %v10122, %v10150
    %v10152 = vpop.f32.mrf.mxu0
    %v10153 = vadd.f32 %v10124, %v10152
    %10154 = vmatmul.bf16.gmra.mxu0 %v406
    %v10155 = vpop.f32.mrf.mxu0
    %v10156 = vadd.f32 %v10127, %v10155
    %v10157 = vpop.f32.mrf.mxu0
    %v10158 = vadd.f32 %v10129, %v10157
    %10159 = vmatmul.bf16.gmra.mxu0 %v438
    %v10160 = vpop.f32.mrf.mxu0
    %v10161 = vadd.f32 %v10132, %v10160
    %v10162 = vpop.f32.mrf.mxu0
    %v10163 = vadd.f32 %v10134, %v10162
    %10164 = vdwg.mxu0
    %10165 = vmatpush.bf16.msra.mxu0 %v5445
    %10166 = vmatpush.bf16.msra.mxu0 %v5441
    %10167 = vmatpush.bf16.msra.mxu0 %v5437
    %10168 = vmatpush.bf16.msra.mxu0 %v5433
    %10169 = vmatpush.bf16.msra.mxu0 %v5429
    %10170 = vmatpush.bf16.msra.mxu0 %v5425
    %10171 = vmatpush.bf16.msra.mxu0 %v5421
    %10172 = vmatpush.bf16.msra.mxu0 %v5417
    %10173 = vmatmul.bf16.gmra.mxu0 %v343
    %v10174 = vpop.f32.mrf.mxu0
    %v10175 = vadd.f32 %v10146, %v10174
    %v10176 = vpop.f32.mrf.mxu0
    %v10177 = vadd.f32 %v10148, %v10176
    %10178 = vmatmul.bf16.gmra.mxu0 %v375
    %v10179 = vpop.f32.mrf.mxu0
    %v10180 = vadd.f32 %v10151, %v10179
    %v10181 = vpop.f32.mrf.mxu0
    %v10182 = vadd.f32 %v10153, %v10181
    %10183 = vmatmul.bf16.gmra.mxu0 %v407
    %v10184 = vpop.f32.mrf.mxu0
    %v10185 = vadd.f32 %v10156, %v10184
    %v10186 = vpop.f32.mrf.mxu0
    %v10187 = vadd.f32 %v10158, %v10186
    %10188 = vmatmul.bf16.gmra.mxu0 %v439
    %v10189 = vpop.f32.mrf.mxu0
    %v10190 = vadd.f32 %v10161, %v10189
    %v10191 = vpop.f32.mrf.mxu0
    %v10192 = vadd.f32 %v10163, %v10191
    %10193 = vdwg.mxu0
    %10194 = vmatpush.bf16.msra.mxu0 %v5477
    %10195 = vmatpush.bf16.msra.mxu0 %v5473
    %10196 = vmatpush.bf16.msra.mxu0 %v5469
    %10197 = vmatpush.bf16.msra.mxu0 %v5465
    %10198 = vmatpush.bf16.msra.mxu0 %v5461
    %10199 = vmatpush.bf16.msra.mxu0 %v5457
    %10200 = vmatpush.bf16.msra.mxu0 %v5453
    %10201 = vmatpush.bf16.msra.mxu0 %v5449
    %10202 = vmatmul.bf16.gmra.mxu0 %v344
    %v10203 = vpop.f32.mrf.mxu0
    %v10204 = vadd.f32 %v10175, %v10203
    %v10205 = vpop.f32.mrf.mxu0
    %v10206 = vadd.f32 %v10177, %v10205
    %10207 = vmatmul.bf16.gmra.mxu0 %v376
    %v10208 = vpop.f32.mrf.mxu0
    %v10209 = vadd.f32 %v10180, %v10208
    %v10210 = vpop.f32.mrf.mxu0
    %v10211 = vadd.f32 %v10182, %v10210
    %10212 = vmatmul.bf16.gmra.mxu0 %v408
    %v10213 = vpop.f32.mrf.mxu0
    %v10214 = vadd.f32 %v10185, %v10213
    %v10215 = vpop.f32.mrf.mxu0
    %v10216 = vadd.f32 %v10187, %v10215
    %10217 = vmatmul.bf16.gmra.mxu0 %v440
    %v10218 = vpop.f32.mrf.mxu0
    %v10219 = vadd.f32 %v10190, %v10218
    %v10220 = vpop.f32.mrf.mxu0
    %v10221 = vadd.f32 %v10192, %v10220
    %10222 = vdwg.mxu0
    %10223 = vmatpush.bf16.msra.mxu0 %v5509
    %10224 = vmatpush.bf16.msra.mxu0 %v5505
    %10225 = vmatpush.bf16.msra.mxu0 %v5501
    %10226 = vmatpush.bf16.msra.mxu0 %v5497
    %10227 = vmatpush.bf16.msra.mxu0 %v5493
    %10228 = vmatpush.bf16.msra.mxu0 %v5489
    %10229 = vmatpush.bf16.msra.mxu0 %v5485
    %10230 = vmatpush.bf16.msra.mxu0 %v5481
    %10231 = vmatmul.bf16.gmra.mxu0 %v345
    %v10232 = vpop.f32.mrf.mxu0
    %v10233 = vadd.f32 %v10204, %v10232
    %v10234 = vpop.f32.mrf.mxu0
    %v10235 = vadd.f32 %v10206, %v10234
    %10236 = vmatmul.bf16.gmra.mxu0 %v377
    %v10237 = vpop.f32.mrf.mxu0
    %v10238 = vadd.f32 %v10209, %v10237
    %v10239 = vpop.f32.mrf.mxu0
    %v10240 = vadd.f32 %v10211, %v10239
    %10241 = vmatmul.bf16.gmra.mxu0 %v409
    %v10242 = vpop.f32.mrf.mxu0
    %v10243 = vadd.f32 %v10214, %v10242
    %v10244 = vpop.f32.mrf.mxu0
    %v10245 = vadd.f32 %v10216, %v10244
    %10246 = vmatmul.bf16.gmra.mxu0 %v441
    %v10247 = vpop.f32.mrf.mxu0
    %v10248 = vadd.f32 %v10219, %v10247
    %v10249 = vpop.f32.mrf.mxu0
    %v10250 = vadd.f32 %v10221, %v10249
    %10251 = vdwg.mxu0
    %10252 = vmatpush.bf16.msra.mxu0 %v5541
    %10253 = vmatpush.bf16.msra.mxu0 %v5537
    %10254 = vmatpush.bf16.msra.mxu0 %v5533
    %10255 = vmatpush.bf16.msra.mxu0 %v5529
    %10256 = vmatpush.bf16.msra.mxu0 %v5525
    %10257 = vmatpush.bf16.msra.mxu0 %v5521
    %10258 = vmatpush.bf16.msra.mxu0 %v5517
    %10259 = vmatpush.bf16.msra.mxu0 %v5513
    %10260 = vmatmul.bf16.gmra.mxu0 %v346
    %v10261 = vpop.f32.mrf.mxu0
    %v10262 = vadd.f32 %v10233, %v10261
    %v10263 = vpop.f32.mrf.mxu0
    %v10264 = vadd.f32 %v10235, %v10263
    %10265 = vmatmul.bf16.gmra.mxu0 %v378
    %v10266 = vpop.f32.mrf.mxu0
    %v10267 = vadd.f32 %v10238, %v10266
    %v10268 = vpop.f32.mrf.mxu0
    %v10269 = vadd.f32 %v10240, %v10268
    %10270 = vmatmul.bf16.gmra.mxu0 %v410
    %v10271 = vpop.f32.mrf.mxu0
    %v10272 = vadd.f32 %v10243, %v10271
    %v10273 = vpop.f32.mrf.mxu0
    %v10274 = vadd.f32 %v10245, %v10273
    %10275 = vmatmul.bf16.gmra.mxu0 %v442
    %v10276 = vpop.f32.mrf.mxu0
    %v10277 = vadd.f32 %v10248, %v10276
    %v10278 = vpop.f32.mrf.mxu0
    %v10279 = vadd.f32 %v10250, %v10278
    %10280 = vdwg.mxu0
    %10281 = vmatpush.bf16.msra.mxu0 %v5573
    %10282 = vmatpush.bf16.msra.mxu0 %v5569
    %10283 = vmatpush.bf16.msra.mxu0 %v5565
    %10284 = vmatpush.bf16.msra.mxu0 %v5561
    %10285 = vmatpush.bf16.msra.mxu0 %v5557
    %10286 = vmatpush.bf16.msra.mxu0 %v5553
    %10287 = vmatpush.bf16.msra.mxu0 %v5549
    %10288 = vmatpush.bf16.msra.mxu0 %v5545
    %10289 = vmatmul.bf16.gmra.mxu0 %v347
    %v10290 = vpop.f32.mrf.mxu0
    %v10291 = vadd.f32 %v10262, %v10290
    %v10292 = vpop.f32.mrf.mxu0
    %v10293 = vadd.f32 %v10264, %v10292
    %10294 = vmatmul.bf16.gmra.mxu0 %v379
    %v10295 = vpop.f32.mrf.mxu0
    %v10296 = vadd.f32 %v10267, %v10295
    %v10297 = vpop.f32.mrf.mxu0
    %v10298 = vadd.f32 %v10269, %v10297
    %10299 = vmatmul.bf16.gmra.mxu0 %v411
    %v10300 = vpop.f32.mrf.mxu0
    %v10301 = vadd.f32 %v10272, %v10300
    %v10302 = vpop.f32.mrf.mxu0
    %v10303 = vadd.f32 %v10274, %v10302
    %10304 = vmatmul.bf16.gmra.mxu0 %v443
    %v10305 = vpop.f32.mrf.mxu0
    %v10306 = vadd.f32 %v10277, %v10305
    %v10307 = vpop.f32.mrf.mxu0
    %v10308 = vadd.f32 %v10279, %v10307
    %10309 = vdwg.mxu0
    %v10310 = vpack.c.bf16 %v8435, %v7507
    %v10311 = vpack.c.bf16 %v10291, %v9363
    %v10312 = vpack.c.bf16 %v8437, %v7509
    %v10313 = vpack.c.bf16 %v10293, %v9365
    %v10314 = vpack.c.bf16 %v8440, %v7512
    %v10315 = vpack.c.bf16 %v10296, %v9368
    %v10316 = vpack.c.bf16 %v8442, %v7514
    %v10317 = vpack.c.bf16 %v10298, %v9370
    %v10318 = vpack.c.bf16 %v8445, %v7517
    %v10319 = vpack.c.bf16 %v10301, %v9373
    %v10320 = vpack.c.bf16 %v8447, %v7519
    %v10321 = vpack.c.bf16 %v10303, %v9375
    %v10322 = vpack.c.bf16 %v8450, %v7522
    %v10323 = vpack.c.bf16 %v10306, %v9378
    %v10324 = vpack.c.bf16 %v8452, %v7524
    %v10325 = vpack.c.bf16 %v10308, %v9380
    %10326 = vst [vmem:[#allocation8] sm:$0xff] %v10310
    %10327 = vst [vmem:[#allocation8 + $0x8] sm:$0xff] %v10311
    %10328 = vst [vmem:[#allocation8 + $0x10] sm:$0xff] %v10312
    %10329 = vst [vmem:[#allocation8 + $0x18] sm:$0xff] %v10313
    %10330 = vst [vmem:[#allocation8 + $0x20] sm:$0xff] %v10314
    %10331 = vst [vmem:[#allocation8 + $0x28] sm:$0xff] %v10315
    %10332 = vst [vmem:[#allocation8 + $0x30] sm:$0xff] %v10316
    %10333 = vst [vmem:[#allocation8 + $0x38] sm:$0xff] %v10317
    %10334 = vst [vmem:[#allocation8 + $0x40] sm:$0xff] %v10318
    %10335 = vst [vmem:[#allocation8 + $0x48] sm:$0xff] %v10319
    %10336 = vst [vmem:[#allocation8 + $0x50] sm:$0xff] %v10320
    %10337 = vst [vmem:[#allocation8 + $0x58] sm:$0xff] %v10321
    %10338 = vst [vmem:[#allocation8 + $0x60] sm:$0xff] %v10322
    %10339 = vst [vmem:[#allocation8 + $0x68] sm:$0xff] %v10323
    %10340 = vst [vmem:[#allocation8 + $0x70] sm:$0xff] %v10324
    %10341 = vst [vmem:[#allocation8 + $0x78] sm:$0xff] %v10325
    // Predicated region
    $region26: #{tpu_custom_call.1} parent=1 // pred_check
      _
    $region27: #{tpu_custom_call.1} parent=1 // pred_check_branch
      %10343 = sbr.rel (0) target = $region29
    $region28: #{tpu_custom_call.1} parent=1 // pred_region
      %10345 = vsyncadd [#allocation4], 0
      %s10346 = sshll.u32 [#allocation8], 4
      %s10347 = int_to_ptr.vmem [resolvable:$true] %s10346
      %s10348 = sshll.u32 %s3, 4
      %s10349 = int_to_ptr.hbm [resolvable:$true] %s10348
      %10354 = dma.vmem_to_hbm [thread:$0]  %s10347, 2048, %s10349, [#allocation4], 256, 256, 16
    $region29: #{tpu_custom_call.1} parent=1 // pred_fallthru
      _
    // Predicated region
    $region30: #{tpu_custom_call.1} parent=1 // pred_check
      _
    $region31: #{tpu_custom_call.1} parent=1 // pred_check_branch
      %10356 = sbr.rel (0) target = $region33
    $region32: #{tpu_custom_call.1} parent=1 // pred_region
      %10358 = dma.done [#allocation4], 2048
    $region33: #{tpu_custom_call.1} parent=1 // pred_fallthru
      _
    %10359 = vsyncpa [#allocation3], 1
    %10360 = vsyncpa [#allocation6], 1
    %10361 = vsyncpa [#allocation4], 1

</llo_original>
